<compile_context>
chip_gen: v7x
topology: tpu7x:2x2x1
jax: 0.10.0
libtpu: 0.0.40
codegen_flags: <defaults>
</compile_context>

<pallas_src>
import jax
import jax.numpy as jnp
from jax.experimental import pallas as pl
from jax.experimental.pallas import tpu as pltpu

K1_PAD = 32     # conv1 contraction: 25 taps -> 32
C1_PAD = 32     # conv1 out channels: 10 -> 32
C2_PAD = 32     # conv2 out channels: 20 -> 32
H1_PAD = 64     # fc1 outputs: 50 -> 64
NOUT_PAD = 128  # logits: 10 -> 128 (lane-dense output tile)


# ----------------------------- Pallas kernel -----------------------------

def _net_kernel(cols_ref, w1_ref, b1_ref, w2_ref, b2_ref,
                wf1_ref, bf1_ref, wf2_ref, bf2_ref, out_ref):
    """Whole Net forward for one small batch, fully resident in VMEM.

    cols_ref : (4*144*B, 32)  conv1 patches; rows = (pool phase, U, V, b),
                              lanes = conv1 tap (i*5+j), zero padded 25->32
    w1_ref   : (32, 32)       conv1 weight  (tap, out-ch), zero padded
    w2_ref   : (25, 32, 32)   conv2 weight  (tap, in-ch, out-ch)
    wf1_ref  : (16, 32, 64)   fc1 weight    (spatial s=p*4+q, in-ch, out)
    wf2_ref  : (64, 128)      fc2 weight
    b*_ref   : (1, C)         biases, zero padded
    out_ref  : (B, 128)       logits (first 10 lanes are real)
    """
    B = out_ref.shape[0]
    R1 = 144 * B           # rows per conv1 pool-phase block, ordered (U, V, b)
    RB = 8 * B             # rows per conv2 output row h, ordered (w, b)
    f32 = jnp.float32

    # ---- conv1 over the de-duplicated 24x24 grid: ONE fused matmul.
    y1 = jnp.dot(cols_ref[...], w1_ref[...], preferred_element_type=f32)

    # ---- 2x2 max-pool = max over the 4 aligned phase blocks; +bias, ReLU.
    m = jnp.maximum(jnp.maximum(y1[0:R1], y1[R1:2 * R1]),
                    jnp.maximum(y1[2 * R1:3 * R1], y1[3 * R1:4 * R1]))
    p1 = jnp.maximum(m + b1_ref[...], 0.0)           # (144B, C1), rows (U, V, b)
    p1v = p1.reshape(12, 12 * B, C1_PAD)             # (U, V*b, C1) -- free reshape

    # ---- conv2: per column offset j build one cropped slab q_j (the only
    #      sublane-shifted copy); every tap LHS is an ALIGNED row slice of it.
    acc2 = None
    for j in range(5):
        qj = p1v[:, j * B:(j + 8) * B, :].reshape(12 * RB, C1_PAD)  # rows (U, w, b)
        for i in range(5):
            lhs = qj[i * RB:(i + 8) * RB, :]                        # (64B, C1) aligned
            y = jnp.dot(lhs, w2_ref[i * 5 + j], preferred_element_type=f32)
            acc2 = y if acc2 is None else acc2 + y
    c2 = acc2 + b2_ref[...]                          # (64B, C2), rows (h, w, b)
    # nn.Dropout2d on conv2 output: identity at inference.
    # TODO(synk): training-mode Dropout2d / F.dropout masking not implemented.

    # ---- 2x2 max-pool over h-parity (aligned halves), then per pooled
    #      position: pool over w-parity, ReLU, and accumulate straight into fc1.
    c2v = c2.reshape(4, 2 * RB, C2_PAD)              # (p, a2*RB + w*B + b, C2)
    m1 = jnp.maximum(c2v[:, :RB, :], c2v[:, RB:, :])  # (4, RB, C2), rows (w, b)

    acc1 = None
    for pr in range(4):
        for qc in range(4):
            blk_a = m1[pr, (2 * qc) * B:(2 * qc + 1) * B, :]       # w = 2q
            blk_b = m1[pr, (2 * qc + 1) * B:(2 * qc + 2) * B, :]   # w = 2q+1
            xs = jnp.maximum(jnp.maximum(blk_a, blk_b), 0.0)       # (B, C2)
            y = jnp.dot(xs, wf1_ref[pr * 4 + qc], preferred_element_type=f32)
            acc1 = y if acc1 is None else acc1 + y
    h1 = jnp.maximum(acc1 + bf1_ref[...], 0.0)        # (B, H1)
    # F.dropout: identity at inference.

    # ---- fc2 (lane-dense (B,128) output; real logits are lanes 0..9).
    out_ref[...] = (jnp.dot(h1, wf2_ref[...], preferred_element_type=f32)
                    + bf2_ref[...])


# --------------------------- wrapper / XLA glue ---------------------------

def _vmem_full(shape):
    nd = len(shape)
    return pl.BlockSpec(shape, lambda i, _nd=nd: (0,) * _nd)


def _build_cols(x_nchw):
    """conv1 im2col of the raw input with a single exact identity-kernel conv.

    Returns (4*144*B, 32) f32:
      row = ph1*144*B + U*12*B + V*B + b   (ph1 = a1*2 + c1 is the conv1
                                            2x2-pool phase; U,V in 0..11)
      col = conv1 tap (i*5+j), padded 25 -> 32
      value = x[b, 0, 2*U + a1 + i, 2*V + c1 + j]
    """
    B = x_nchw.shape[0]
    assert x_nchw.shape[1:] == (1, 28, 28)
    xf = x_nchw.astype(jnp.float32)

    # Identity "im2col" convolution: output channel i*5+j holds x[.., r+i, c+j].
    eye = jnp.eye(25, dtype=jnp.float32).reshape(25, 1, 5, 5)
    pat = jax.lax.conv_general_dilated(
        xf, eye, (1, 1), 'VALID',
        dimension_numbers=('NCHW', 'OIHW', 'NCHW'),
        precision=jax.lax.Precision.HIGHEST)          # (B, 25, 24, 24), exact

    pat = pat.reshape(B, 25, 12, 2, 12, 2)            # (b, t, U, a1, V, c1)
    pat = jnp.transpose(pat, (3, 5, 2, 4, 0, 1))      # (a1, c1, U, V, b, t)
    cols = pat.reshape(4 * 144 * B, 25)
    return jnp.pad(cols, ((0, 0), (0, K1_PAD - 25)))


def pack_params(p):
    """One-time padding / pre-permutation of the torch-layout weights."""
    w1p = jnp.transpose(p['w1'], (2, 3, 1, 0)).reshape(25, 10)       # (tap, co)
    w1p = jnp.pad(w1p, ((0, K1_PAD - 25), (0, C1_PAD - 10)))
    b1p = jnp.pad(p['b1'], (0, C1_PAD - 10)).reshape(1, C1_PAD)

    w2p = jnp.transpose(p['w2'], (2, 3, 1, 0)).reshape(25, 10, 20)   # (tap, ci, co)
    w2p = jnp.pad(w2p, ((0, 0), (0, C1_PAD - 10), (0, C2_PAD - 20)))
    b2p = jnp.pad(p['b2'], (0, C2_PAD - 20)).reshape(1, C2_PAD)

    # fc1 input index in torch is c*16 + s (s = p*4 + q); re-pack per spatial s.
    wf1p = p['wf1'].reshape(20, 16, 50).transpose(1, 0, 2)           # (s, c, n)
    wf1p = jnp.pad(wf1p, ((0, 0), (0, C2_PAD - 20), (0, H1_PAD - 50)))
    bf1p = jnp.pad(p['bf1'], (0, H1_PAD - 50)).reshape(1, H1_PAD)

    wf2p = jnp.pad(p['wf2'], ((0, H1_PAD - 50), (0, NOUT_PAD - 10)))
    bf2p = jnp.pad(p['bf2'], (0, NOUT_PAD - 10)).reshape(1, NOUT_PAD)
    return (w1p, b1p, w2p, b2p, wf1p, bf1p, wf2p, bf2p)


def net_forward(packed, x_nchw):
    (w1p, b1p, w2p, b2p, wf1p, bf1p, wf2p, bf2p) = packed
    B = x_nchw.shape[0]
    cols = _build_cols(x_nchw)
    args = (cols, w1p, b1p, w2p, b2p, wf1p, bf1p, wf2p, bf2p)
    out = pl.pallas_call(
        _net_kernel,
        out_shape=jax.ShapeDtypeStruct((B, NOUT_PAD), jnp.float32),
        grid=(1,),
        in_specs=[_vmem_full(a.shape) for a in args],
        out_specs=_vmem_full((B, NOUT_PAD)),
        compiler_params=pltpu.CompilerParams(
            dimension_semantics=("arbitrary",),
        ),
    )(*args)
    return out[:, :10]


# --------------------- deterministic params & reference -------------------

def init_params(key):
    def uniform(k, shape, fan_in):
        bound = 1.0 / (fan_in ** 0.5)
        return jax.random.uniform(k, shape, jnp.float32, -bound, bound)

    ks = jax.random.split(key, 8)
    return dict(
        w1=uniform(ks[0], (10, 1, 5, 5), 1 * 5 * 5),     # conv1 (out, in, kh, kw)
        b1=uniform(ks[1], (10,), 1 * 5 * 5),
        w2=uniform(ks[2], (20, 10, 5, 5), 10 * 5 * 5),   # conv2
        b2=uniform(ks[3], (20,), 10 * 5 * 5),
        wf1=uniform(ks[4], (320, 50), 320),              # fc1 stored (in, out)
        bf1=uniform(ks[5], (50,), 320),
        wf2=uniform(ks[6], (50, 10), 50),                # fc2 stored (in, out)
        bf2=uniform(ks[7], (10,), 50),
    )


def reference_forward(params, x):
    dn = ('NCHW', 'OIHW', 'NCHW')
    hp = jax.lax.Precision.HIGHEST
    y = jax.lax.conv_general_dilated(x, params['w1'], (1, 1), 'VALID',
                                     dimension_numbers=dn, precision=hp)
    y = y + params['b1'][None, :, None, None]
    y = jax.lax.reduce_window(y, -jnp.inf, jax.lax.max,
                              (1, 1, 2, 2), (1, 1, 2, 2), 'VALID')
    y = jax.nn.relu(y)
    y = jax.lax.conv_general_dilated(y, params['w2'], (1, 1), 'VALID',
                                     dimension_numbers=dn, precision=hp)
    y = y + params['b2'][None, :, None, None]
    y = jax.lax.reduce_window(y, -jnp.inf, jax.lax.max,
                              (1, 1, 2, 2), (1, 1, 2, 2), 'VALID')
    y = jax.nn.relu(y)
    y = y.reshape(y.shape[0], 320)
    y = jax.nn.relu(jnp.dot(y, params['wf1'], precision=hp) + params['bf1'])
    return jnp.dot(y, params['wf2'], precision=hp) + params['bf2']


if __name__ == "__main__":
    x = jax.random.normal(jax.random.PRNGKey(0), (2, 1, 28, 28), jnp.float32)
    params = init_params(jax.random.PRNGKey(42))
    packed = pack_params(params)

    out = jax.block_until_ready(jax.jit(net_forward)(packed, x))
    assert out.shape == (2, 10) and out.dtype == jnp.float32

    ref = jax.block_until_ready(jax.jit(reference_forward)(params, x))
    err = float(jnp.max(jnp.abs(out - ref)))
    assert err < 2e-2, f"mismatch vs reference: max abs err = {err}"

    print("KERNEL_OK")
</pallas_src>

<mosaic_0001>
module attributes {stable_mosaic.version = 11 : i64} {
  func.func @_net_kernel(%arg0: i32, %arg1: memref<1152x32xf32, #tpu.memory_space<vmem>>, %arg2: memref<32x32xf32, #tpu.memory_space<vmem>>, %arg3: memref<1x32xf32, #tpu.memory_space<vmem>>, %arg4: memref<25x32x32xf32, #tpu.memory_space<vmem>>, %arg5: memref<1x32xf32, #tpu.memory_space<vmem>>, %arg6: memref<16x32x64xf32, #tpu.memory_space<vmem>>, %arg7: memref<1x64xf32, #tpu.memory_space<vmem>>, %arg8: memref<64x128xf32, #tpu.memory_space<vmem>>, %arg9: memref<1x128xf32, #tpu.memory_space<vmem>>, %arg10: memref<2x128xf32, #tpu.memory_space<vmem>>) attributes {dimension_semantics = [#tpu.dimension_semantics<arbitrary>], iteration_bounds = array<i64: 1>, scalar_prefetch = 0 : i64, scratch_operands = 0 : i64, tpu.core_type = #tpu.core_type<tc>, window_params = [{pipeline_mode = #tpu.pipeline_mode<synchronous>, transform_indices = @transform_0, window_bounds = array<i64: 1152, 32>}, {pipeline_mode = #tpu.pipeline_mode<synchronous>, transform_indices = @transform_1, window_bounds = array<i64: 32, 32>}, {pipeline_mode = #tpu.pipeline_mode<synchronous>, transform_indices = @transform_2, window_bounds = array<i64: 1, 32>}, {pipeline_mode = #tpu.pipeline_mode<synchronous>, transform_indices = @transform_3, window_bounds = array<i64: 25, 32, 32>}, {pipeline_mode = #tpu.pipeline_mode<synchronous>, transform_indices = @transform_4, window_bounds = array<i64: 1, 32>}, {pipeline_mode = #tpu.pipeline_mode<synchronous>, transform_indices = @transform_5, window_bounds = array<i64: 16, 32, 64>}, {pipeline_mode = #tpu.pipeline_mode<synchronous>, transform_indices = @transform_6, window_bounds = array<i64: 1, 64>}, {pipeline_mode = #tpu.pipeline_mode<synchronous>, transform_indices = @transform_7, window_bounds = array<i64: 64, 128>}, {pipeline_mode = #tpu.pipeline_mode<synchronous>, transform_indices = @transform_8, window_bounds = array<i64: 1, 128>}, {pipeline_mode = #tpu.pipeline_mode<synchronous>, transform_indices = @transform_9, window_bounds = array<i64: 2, 128>}]} {
    %c0 = arith.constant 0 : index
    %c0_0 = arith.constant 0 : index
    %0 = vector.load %arg1[%c0, %c0_0] : memref<1152x32xf32, #tpu.memory_space<vmem>>, vector<1152x32xf32>
    %c0_1 = arith.constant 0 : index
    %c0_2 = arith.constant 0 : index
    %1 = vector.load %arg2[%c0_1, %c0_2] : memref<32x32xf32, #tpu.memory_space<vmem>>, vector<32x32xf32>
    %cst = arith.constant dense<0.000000e+00> : vector<1152x32xf32>
    %2 = tpu.matmul %0, %1, %cst {dimension_numbers = #tpu.dot_dimension_numbers<[1], [0], [0], [1], [0, 0, 1, 1], [], []>} : vector<1152x32xf32>, vector<32x32xf32>, vector<1152x32xf32> -> vector<1152x32xf32>
    %3 = vector.extract_strided_slice %2 {offsets = [0, 0], sizes = [288, 32], strides = [1, 1]} : vector<1152x32xf32> to vector<288x32xf32>
    %4 = vector.extract_strided_slice %2 {offsets = [288, 0], sizes = [288, 32], strides = [1, 1]} : vector<1152x32xf32> to vector<288x32xf32>
    %5 = arith.maximumf %3, %4 : vector<288x32xf32>
    %6 = vector.extract_strided_slice %2 {offsets = [576, 0], sizes = [288, 32], strides = [1, 1]} : vector<1152x32xf32> to vector<288x32xf32>
    %7 = vector.extract_strided_slice %2 {offsets = [864, 0], sizes = [288, 32], strides = [1, 1]} : vector<1152x32xf32> to vector<288x32xf32>
    %8 = arith.maximumf %6, %7 : vector<288x32xf32>
    %9 = arith.maximumf %5, %8 : vector<288x32xf32>
    %c0_3 = arith.constant 0 : index
    %c0_4 = arith.constant 0 : index
    %10 = vector.load %arg3[%c0_3, %c0_4] : memref<1x32xf32, #tpu.memory_space<vmem>>, vector<1x32xf32>
    %11 = vector.broadcast %10 : vector<1x32xf32> to vector<288x32xf32>
    %12 = arith.addf %9, %11 : vector<288x32xf32>
    %cst_5 = arith.constant 0.000000e+00 : f32
    %13 = vector.broadcast %cst_5 : f32 to vector<288x32xf32>
    %14 = arith.maximumf %12, %13 : vector<288x32xf32>
    %15 = vector.shape_cast %14 : vector<288x32xf32> to vector<12x24x32xf32>
    %16 = vector.extract_strided_slice %15 {offsets = [0, 0, 0], sizes = [12, 16, 32], strides = [1, 1, 1]} : vector<12x24x32xf32> to vector<12x16x32xf32>
    %17 = vector.shape_cast %16 : vector<12x16x32xf32> to vector<192x32xf32>
    %18 = vector.extract_strided_slice %17 {offsets = [0, 0], sizes = [128, 32], strides = [1, 1]} : vector<192x32xf32> to vector<128x32xf32>
    %c0_6 = arith.constant 0 : index
    %c0_7 = arith.constant 0 : index
    %c0_8 = arith.constant 0 : index
    %19 = vector.load %arg4[%c0_6, %c0_7, %c0_8] : memref<25x32x32xf32, #tpu.memory_space<vmem>>, vector<1x32x32xf32>
    %20 = vector.shape_cast %19 : vector<1x32x32xf32> to vector<32x32xf32>
    %cst_9 = arith.constant dense<0.000000e+00> : vector<128x32xf32>
    %21 = tpu.matmul %18, %20, %cst_9 {dimension_numbers = #tpu.dot_dimension_numbers<[1], [0], [0], [1], [0, 0, 1, 1], [], []>} : vector<128x32xf32>, vector<32x32xf32>, vector<128x32xf32> -> vector<128x32xf32>
    %22 = vector.extract_strided_slice %17 {offsets = [16, 0], sizes = [128, 32], strides = [1, 1]} : vector<192x32xf32> to vector<128x32xf32>
    %c5 = arith.constant 5 : index
    %c0_10 = arith.constant 0 : index
    %c0_11 = arith.constant 0 : index
    %23 = vector.load %arg4[%c5, %c0_10, %c0_11] : memref<25x32x32xf32, #tpu.memory_space<vmem>>, vector<1x32x32xf32>
    %24 = vector.shape_cast %23 : vector<1x32x32xf32> to vector<32x32xf32>
    %cst_12 = arith.constant dense<0.000000e+00> : vector<128x32xf32>
    %25 = tpu.matmul %22, %24, %cst_12 {dimension_numbers = #tpu.dot_dimension_numbers<[1], [0], [0], [1], [0, 0, 1, 1], [], []>} : vector<128x32xf32>, vector<32x32xf32>, vector<128x32xf32> -> vector<128x32xf32>
    %26 = arith.addf %21, %25 : vector<128x32xf32>
    %27 = vector.extract_strided_slice %17 {offsets = [32, 0], sizes = [128, 32], strides = [1, 1]} : vector<192x32xf32> to vector<128x32xf32>
    %c10 = arith.constant 10 : index
    %c0_13 = arith.constant 0 : index
    %c0_14 = arith.constant 0 : index
    %28 = vector.load %arg4[%c10, %c0_13, %c0_14] : memref<25x32x32xf32, #tpu.memory_space<vmem>>, vector<1x32x32xf32>
    %29 = vector.shape_cast %28 : vector<1x32x32xf32> to vector<32x32xf32>
    %cst_15 = arith.constant dense<0.000000e+00> : vector<128x32xf32>
    %30 = tpu.matmul %27, %29, %cst_15 {dimension_numbers = #tpu.dot_dimension_numbers<[1], [0], [0], [1], [0, 0, 1, 1], [], []>} : vector<128x32xf32>, vector<32x32xf32>, vector<128x32xf32> -> vector<128x32xf32>
    %31 = arith.addf %26, %30 : vector<128x32xf32>
    %32 = vector.extract_strided_slice %17 {offsets = [48, 0], sizes = [128, 32], strides = [1, 1]} : vector<192x32xf32> to vector<128x32xf32>
    %c15 = arith.constant 15 : index
    %c0_16 = arith.constant 0 : index
    %c0_17 = arith.constant 0 : index
    %33 = vector.load %arg4[%c15, %c0_16, %c0_17] : memref<25x32x32xf32, #tpu.memory_space<vmem>>, vector<1x32x32xf32>
    %34 = vector.shape_cast %33 : vector<1x32x32xf32> to vector<32x32xf32>
    %cst_18 = arith.constant dense<0.000000e+00> : vector<128x32xf32>
    %35 = tpu.matmul %32, %34, %cst_18 {dimension_numbers = #tpu.dot_dimension_numbers<[1], [0], [0], [1], [0, 0, 1, 1], [], []>} : vector<128x32xf32>, vector<32x32xf32>, vector<128x32xf32> -> vector<128x32xf32>
    %36 = arith.addf %31, %35 : vector<128x32xf32>
    %37 = vector.extract_strided_slice %17 {offsets = [64, 0], sizes = [128, 32], strides = [1, 1]} : vector<192x32xf32> to vector<128x32xf32>
    %c20 = arith.constant 20 : index
    %c0_19 = arith.constant 0 : index
    %c0_20 = arith.constant 0 : index
    %38 = vector.load %arg4[%c20, %c0_19, %c0_20] : memref<25x32x32xf32, #tpu.memory_space<vmem>>, vector<1x32x32xf32>
    %39 = vector.shape_cast %38 : vector<1x32x32xf32> to vector<32x32xf32>
    %cst_21 = arith.constant dense<0.000000e+00> : vector<128x32xf32>
    %40 = tpu.matmul %37, %39, %cst_21 {dimension_numbers = #tpu.dot_dimension_numbers<[1], [0], [0], [1], [0, 0, 1, 1], [], []>} : vector<128x32xf32>, vector<32x32xf32>, vector<128x32xf32> -> vector<128x32xf32>
    %41 = arith.addf %36, %40 : vector<128x32xf32>
    %42 = vector.extract_strided_slice %15 {offsets = [0, 2, 0], sizes = [12, 16, 32], strides = [1, 1, 1]} : vector<12x24x32xf32> to vector<12x16x32xf32>
    %43 = vector.shape_cast %42 : vector<12x16x32xf32> to vector<192x32xf32>
    %44 = vector.extract_strided_slice %43 {offsets = [0, 0], sizes = [128, 32], strides = [1, 1]} : vector<192x32xf32> to vector<128x32xf32>
    %c1 = arith.constant 1 : index
    %c0_22 = arith.constant 0 : index
    %c0_23 = arith.constant 0 : index
    %45 = vector.load %arg4[%c1, %c0_22, %c0_23] : memref<25x32x32xf32, #tpu.memory_space<vmem>>, vector<1x32x32xf32>
    %46 = vector.shape_cast %45 : vector<1x32x32xf32> to vector<32x32xf32>
    %cst_24 = arith.constant dense<0.000000e+00> : vector<128x32xf32>
    %47 = tpu.matmul %44, %46, %cst_24 {dimension_numbers = #tpu.dot_dimension_numbers<[1], [0], [0], [1], [0, 0, 1, 1], [], []>} : vector<128x32xf32>, vector<32x32xf32>, vector<128x32xf32> -> vector<128x32xf32>
    %48 = arith.addf %41, %47 : vector<128x32xf32>
    %49 = vector.extract_strided_slice %43 {offsets = [16, 0], sizes = [128, 32], strides = [1, 1]} : vector<192x32xf32> to vector<128x32xf32>
    %c6 = arith.constant 6 : index
    %c0_25 = arith.constant 0 : index
    %c0_26 = arith.constant 0 : index
    %50 = vector.load %arg4[%c6, %c0_25, %c0_26] : memref<25x32x32xf32, #tpu.memory_space<vmem>>, vector<1x32x32xf32>
    %51 = vector.shape_cast %50 : vector<1x32x32xf32> to vector<32x32xf32>
    %cst_27 = arith.constant dense<0.000000e+00> : vector<128x32xf32>
    %52 = tpu.matmul %49, %51, %cst_27 {dimension_numbers = #tpu.dot_dimension_numbers<[1], [0], [0], [1], [0, 0, 1, 1], [], []>} : vector<128x32xf32>, vector<32x32xf32>, vector<128x32xf32> -> vector<128x32xf32>
    %53 = arith.addf %48, %52 : vector<128x32xf32>
    %54 = vector.extract_strided_slice %43 {offsets = [32, 0], sizes = [128, 32], strides = [1, 1]} : vector<192x32xf32> to vector<128x32xf32>
    %c11 = arith.constant 11 : index
    %c0_28 = arith.constant 0 : index
    %c0_29 = arith.constant 0 : index
    %55 = vector.load %arg4[%c11, %c0_28, %c0_29] : memref<25x32x32xf32, #tpu.memory_space<vmem>>, vector<1x32x32xf32>
    %56 = vector.shape_cast %55 : vector<1x32x32xf32> to vector<32x32xf32>
    %cst_30 = arith.constant dense<0.000000e+00> : vector<128x32xf32>
    %57 = tpu.matmul %54, %56, %cst_30 {dimension_numbers = #tpu.dot_dimension_numbers<[1], [0], [0], [1], [0, 0, 1, 1], [], []>} : vector<128x32xf32>, vector<32x32xf32>, vector<128x32xf32> -> vector<128x32xf32>
    %58 = arith.addf %53, %57 : vector<128x32xf32>
    %59 = vector.extract_strided_slice %43 {offsets = [48, 0], sizes = [128, 32], strides = [1, 1]} : vector<192x32xf32> to vector<128x32xf32>
    %c16 = arith.constant 16 : index
    %c0_31 = arith.constant 0 : index
    %c0_32 = arith.constant 0 : index
    %60 = vector.load %arg4[%c16, %c0_31, %c0_32] : memref<25x32x32xf32, #tpu.memory_space<vmem>>, vector<1x32x32xf32>
    %61 = vector.shape_cast %60 : vector<1x32x32xf32> to vector<32x32xf32>
    %cst_33 = arith.constant dense<0.000000e+00> : vector<128x32xf32>
    %62 = tpu.matmul %59, %61, %cst_33 {dimension_numbers = #tpu.dot_dimension_numbers<[1], [0], [0], [1], [0, 0, 1, 1], [], []>} : vector<128x32xf32>, vector<32x32xf32>, vector<128x32xf32> -> vector<128x32xf32>
    %63 = arith.addf %58, %62 : vector<128x32xf32>
    %64 = vector.extract_strided_slice %43 {offsets = [64, 0], sizes = [128, 32], strides = [1, 1]} : vector<192x32xf32> to vector<128x32xf32>
    %c21 = arith.constant 21 : index
    %c0_34 = arith.constant 0 : index
    %c0_35 = arith.constant 0 : index
    %65 = vector.load %arg4[%c21, %c0_34, %c0_35] : memref<25x32x32xf32, #tpu.memory_space<vmem>>, vector<1x32x32xf32>
    %66 = vector.shape_cast %65 : vector<1x32x32xf32> to vector<32x32xf32>
    %cst_36 = arith.constant dense<0.000000e+00> : vector<128x32xf32>
    %67 = tpu.matmul %64, %66, %cst_36 {dimension_numbers = #tpu.dot_dimension_numbers<[1], [0], [0], [1], [0, 0, 1, 1], [], []>} : vector<128x32xf32>, vector<32x32xf32>, vector<128x32xf32> -> vector<128x32xf32>
    %68 = arith.addf %63, %67 : vector<128x32xf32>
    %69 = vector.extract_strided_slice %15 {offsets = [0, 4, 0], sizes = [12, 16, 32], strides = [1, 1, 1]} : vector<12x24x32xf32> to vector<12x16x32xf32>
    %70 = vector.shape_cast %69 : vector<12x16x32xf32> to vector<192x32xf32>
    %71 = vector.extract_strided_slice %70 {offsets = [0, 0], sizes = [128, 32], strides = [1, 1]} : vector<192x32xf32> to vector<128x32xf32>
    %c2 = arith.constant 2 : index
    %c0_37 = arith.constant 0 : index
    %c0_38 = arith.constant 0 : index
    %72 = vector.load %arg4[%c2, %c0_37, %c0_38] : memref<25x32x32xf32, #tpu.memory_space<vmem>>, vector<1x32x32xf32>
    %73 = vector.shape_cast %72 : vector<1x32x32xf32> to vector<32x32xf32>
    %cst_39 = arith.constant dense<0.000000e+00> : vector<128x32xf32>
    %74 = tpu.matmul %71, %73, %cst_39 {dimension_numbers = #tpu.dot_dimension_numbers<[1], [0], [0], [1], [0, 0, 1, 1], [], []>} : vector<128x32xf32>, vector<32x32xf32>, vector<128x32xf32> -> vector<128x32xf32>
    %75 = arith.addf %68, %74 : vector<128x32xf32>
    %76 = vector.extract_strided_slice %70 {offsets = [16, 0], sizes = [128, 32], strides = [1, 1]} : vector<192x32xf32> to vector<128x32xf32>
    %c7 = arith.constant 7 : index
    %c0_40 = arith.constant 0 : index
    %c0_41 = arith.constant 0 : index
    %77 = vector.load %arg4[%c7, %c0_40, %c0_41] : memref<25x32x32xf32, #tpu.memory_space<vmem>>, vector<1x32x32xf32>
    %78 = vector.shape_cast %77 : vector<1x32x32xf32> to vector<32x32xf32>
    %cst_42 = arith.constant dense<0.000000e+00> : vector<128x32xf32>
    %79 = tpu.matmul %76, %78, %cst_42 {dimension_numbers = #tpu.dot_dimension_numbers<[1], [0], [0], [1], [0, 0, 1, 1], [], []>} : vector<128x32xf32>, vector<32x32xf32>, vector<128x32xf32> -> vector<128x32xf32>
    %80 = arith.addf %75, %79 : vector<128x32xf32>
    %81 = vector.extract_strided_slice %70 {offsets = [32, 0], sizes = [128, 32], strides = [1, 1]} : vector<192x32xf32> to vector<128x32xf32>
    %c12 = arith.constant 12 : index
    %c0_43 = arith.constant 0 : index
    %c0_44 = arith.constant 0 : index
    %82 = vector.load %arg4[%c12, %c0_43, %c0_44] : memref<25x32x32xf32, #tpu.memory_space<vmem>>, vector<1x32x32xf32>
    %83 = vector.shape_cast %82 : vector<1x32x32xf32> to vector<32x32xf32>
    %cst_45 = arith.constant dense<0.000000e+00> : vector<128x32xf32>
    %84 = tpu.matmul %81, %83, %cst_45 {dimension_numbers = #tpu.dot_dimension_numbers<[1], [0], [0], [1], [0, 0, 1, 1], [], []>} : vector<128x32xf32>, vector<32x32xf32>, vector<128x32xf32> -> vector<128x32xf32>
    %85 = arith.addf %80, %84 : vector<128x32xf32>
    %86 = vector.extract_strided_slice %70 {offsets = [48, 0], sizes = [128, 32], strides = [1, 1]} : vector<192x32xf32> to vector<128x32xf32>
    %c17 = arith.constant 17 : index
    %c0_46 = arith.constant 0 : index
    %c0_47 = arith.constant 0 : index
    %87 = vector.load %arg4[%c17, %c0_46, %c0_47] : memref<25x32x32xf32, #tpu.memory_space<vmem>>, vector<1x32x32xf32>
    %88 = vector.shape_cast %87 : vector<1x32x32xf32> to vector<32x32xf32>
    %cst_48 = arith.constant dense<0.000000e+00> : vector<128x32xf32>
    %89 = tpu.matmul %86, %88, %cst_48 {dimension_numbers = #tpu.dot_dimension_numbers<[1], [0], [0], [1], [0, 0, 1, 1], [], []>} : vector<128x32xf32>, vector<32x32xf32>, vector<128x32xf32> -> vector<128x32xf32>
    %90 = arith.addf %85, %89 : vector<128x32xf32>
    %91 = vector.extract_strided_slice %70 {offsets = [64, 0], sizes = [128, 32], strides = [1, 1]} : vector<192x32xf32> to vector<128x32xf32>
    %c22 = arith.constant 22 : index
    %c0_49 = arith.constant 0 : index
    %c0_50 = arith.constant 0 : index
    %92 = vector.load %arg4[%c22, %c0_49, %c0_50] : memref<25x32x32xf32, #tpu.memory_space<vmem>>, vector<1x32x32xf32>
    %93 = vector.shape_cast %92 : vector<1x32x32xf32> to vector<32x32xf32>
    %cst_51 = arith.constant dense<0.000000e+00> : vector<128x32xf32>
    %94 = tpu.matmul %91, %93, %cst_51 {dimension_numbers = #tpu.dot_dimension_numbers<[1], [0], [0], [1], [0, 0, 1, 1], [], []>} : vector<128x32xf32>, vector<32x32xf32>, vector<128x32xf32> -> vector<128x32xf32>
    %95 = arith.addf %90, %94 : vector<128x32xf32>
    %96 = vector.extract_strided_slice %15 {offsets = [0, 6, 0], sizes = [12, 16, 32], strides = [1, 1, 1]} : vector<12x24x32xf32> to vector<12x16x32xf32>
    %97 = vector.shape_cast %96 : vector<12x16x32xf32> to vector<192x32xf32>
    %98 = vector.extract_strided_slice %97 {offsets = [0, 0], sizes = [128, 32], strides = [1, 1]} : vector<192x32xf32> to vector<128x32xf32>
    %c3 = arith.constant 3 : index
    %c0_52 = arith.constant 0 : index
    %c0_53 = arith.constant 0 : index
    %99 = vector.load %arg4[%c3, %c0_52, %c0_53] : memref<25x32x32xf32, #tpu.memory_space<vmem>>, vector<1x32x32xf32>
    %100 = vector.shape_cast %99 : vector<1x32x32xf32> to vector<32x32xf32>
    %cst_54 = arith.constant dense<0.000000e+00> : vector<128x32xf32>
    %101 = tpu.matmul %98, %100, %cst_54 {dimension_numbers = #tpu.dot_dimension_numbers<[1], [0], [0], [1], [0, 0, 1, 1], [], []>} : vector<128x32xf32>, vector<32x32xf32>, vector<128x32xf32> -> vector<128x32xf32>
    %102 = arith.addf %95, %101 : vector<128x32xf32>
    %103 = vector.extract_strided_slice %97 {offsets = [16, 0], sizes = [128, 32], strides = [1, 1]} : vector<192x32xf32> to vector<128x32xf32>
    %c8 = arith.constant 8 : index
    %c0_55 = arith.constant 0 : index
    %c0_56 = arith.constant 0 : index
    %104 = vector.load %arg4[%c8, %c0_55, %c0_56] : memref<25x32x32xf32, #tpu.memory_space<vmem>>, vector<1x32x32xf32>
    %105 = vector.shape_cast %104 : vector<1x32x32xf32> to vector<32x32xf32>
    %cst_57 = arith.constant dense<0.000000e+00> : vector<128x32xf32>
    %106 = tpu.matmul %103, %105, %cst_57 {dimension_numbers = #tpu.dot_dimension_numbers<[1], [0], [0], [1], [0, 0, 1, 1], [], []>} : vector<128x32xf32>, vector<32x32xf32>, vector<128x32xf32> -> vector<128x32xf32>
    %107 = arith.addf %102, %106 : vector<128x32xf32>
    %108 = vector.extract_strided_slice %97 {offsets = [32, 0], sizes = [128, 32], strides = [1, 1]} : vector<192x32xf32> to vector<128x32xf32>
    %c13 = arith.constant 13 : index
    %c0_58 = arith.constant 0 : index
    %c0_59 = arith.constant 0 : index
    %109 = vector.load %arg4[%c13, %c0_58, %c0_59] : memref<25x32x32xf32, #tpu.memory_space<vmem>>, vector<1x32x32xf32>
    %110 = vector.shape_cast %109 : vector<1x32x32xf32> to vector<32x32xf32>
    %cst_60 = arith.constant dense<0.000000e+00> : vector<128x32xf32>
    %111 = tpu.matmul %108, %110, %cst_60 {dimension_numbers = #tpu.dot_dimension_numbers<[1], [0], [0], [1], [0, 0, 1, 1], [], []>} : vector<128x32xf32>, vector<32x32xf32>, vector<128x32xf32> -> vector<128x32xf32>
    %112 = arith.addf %107, %111 : vector<128x32xf32>
    %113 = vector.extract_strided_slice %97 {offsets = [48, 0], sizes = [128, 32], strides = [1, 1]} : vector<192x32xf32> to vector<128x32xf32>
    %c18 = arith.constant 18 : index
    %c0_61 = arith.constant 0 : index
    %c0_62 = arith.constant 0 : index
    %114 = vector.load %arg4[%c18, %c0_61, %c0_62] : memref<25x32x32xf32, #tpu.memory_space<vmem>>, vector<1x32x32xf32>
    %115 = vector.shape_cast %114 : vector<1x32x32xf32> to vector<32x32xf32>
    %cst_63 = arith.constant dense<0.000000e+00> : vector<128x32xf32>
    %116 = tpu.matmul %113, %115, %cst_63 {dimension_numbers = #tpu.dot_dimension_numbers<[1], [0], [0], [1], [0, 0, 1, 1], [], []>} : vector<128x32xf32>, vector<32x32xf32>, vector<128x32xf32> -> vector<128x32xf32>
    %117 = arith.addf %112, %116 : vector<128x32xf32>
    %118 = vector.extract_strided_slice %97 {offsets = [64, 0], sizes = [128, 32], strides = [1, 1]} : vector<192x32xf32> to vector<128x32xf32>
    %c23 = arith.constant 23 : index
    %c0_64 = arith.constant 0 : index
    %c0_65 = arith.constant 0 : index
    %119 = vector.load %arg4[%c23, %c0_64, %c0_65] : memref<25x32x32xf32, #tpu.memory_space<vmem>>, vector<1x32x32xf32>
    %120 = vector.shape_cast %119 : vector<1x32x32xf32> to vector<32x32xf32>
    %cst_66 = arith.constant dense<0.000000e+00> : vector<128x32xf32>
    %121 = tpu.matmul %118, %120, %cst_66 {dimension_numbers = #tpu.dot_dimension_numbers<[1], [0], [0], [1], [0, 0, 1, 1], [], []>} : vector<128x32xf32>, vector<32x32xf32>, vector<128x32xf32> -> vector<128x32xf32>
    %122 = arith.addf %117, %121 : vector<128x32xf32>
    %123 = vector.extract_strided_slice %15 {offsets = [0, 8, 0], sizes = [12, 16, 32], strides = [1, 1, 1]} : vector<12x24x32xf32> to vector<12x16x32xf32>
    %124 = vector.shape_cast %123 : vector<12x16x32xf32> to vector<192x32xf32>
    %125 = vector.extract_strided_slice %124 {offsets = [0, 0], sizes = [128, 32], strides = [1, 1]} : vector<192x32xf32> to vector<128x32xf32>
    %c4 = arith.constant 4 : index
    %c0_67 = arith.constant 0 : index
    %c0_68 = arith.constant 0 : index
    %126 = vector.load %arg4[%c4, %c0_67, %c0_68] : memref<25x32x32xf32, #tpu.memory_space<vmem>>, vector<1x32x32xf32>
    %127 = vector.shape_cast %126 : vector<1x32x32xf32> to vector<32x32xf32>
    %cst_69 = arith.constant dense<0.000000e+00> : vector<128x32xf32>
    %128 = tpu.matmul %125, %127, %cst_69 {dimension_numbers = #tpu.dot_dimension_numbers<[1], [0], [0], [1], [0, 0, 1, 1], [], []>} : vector<128x32xf32>, vector<32x32xf32>, vector<128x32xf32> -> vector<128x32xf32>
    %129 = arith.addf %122, %128 : vector<128x32xf32>
    %130 = vector.extract_strided_slice %124 {offsets = [16, 0], sizes = [128, 32], strides = [1, 1]} : vector<192x32xf32> to vector<128x32xf32>
    %c9 = arith.constant 9 : index
    %c0_70 = arith.constant 0 : index
    %c0_71 = arith.constant 0 : index
    %131 = vector.load %arg4[%c9, %c0_70, %c0_71] : memref<25x32x32xf32, #tpu.memory_space<vmem>>, vector<1x32x32xf32>
    %132 = vector.shape_cast %131 : vector<1x32x32xf32> to vector<32x32xf32>
    %cst_72 = arith.constant dense<0.000000e+00> : vector<128x32xf32>
    %133 = tpu.matmul %130, %132, %cst_72 {dimension_numbers = #tpu.dot_dimension_numbers<[1], [0], [0], [1], [0, 0, 1, 1], [], []>} : vector<128x32xf32>, vector<32x32xf32>, vector<128x32xf32> -> vector<128x32xf32>
    %134 = arith.addf %129, %133 : vector<128x32xf32>
    %135 = vector.extract_strided_slice %124 {offsets = [32, 0], sizes = [128, 32], strides = [1, 1]} : vector<192x32xf32> to vector<128x32xf32>
    %c14 = arith.constant 14 : index
    %c0_73 = arith.constant 0 : index
    %c0_74 = arith.constant 0 : index
    %136 = vector.load %arg4[%c14, %c0_73, %c0_74] : memref<25x32x32xf32, #tpu.memory_space<vmem>>, vector<1x32x32xf32>
    %137 = vector.shape_cast %136 : vector<1x32x32xf32> to vector<32x32xf32>
    %cst_75 = arith.constant dense<0.000000e+00> : vector<128x32xf32>
    %138 = tpu.matmul %135, %137, %cst_75 {dimension_numbers = #tpu.dot_dimension_numbers<[1], [0], [0], [1], [0, 0, 1, 1], [], []>} : vector<128x32xf32>, vector<32x32xf32>, vector<128x32xf32> -> vector<128x32xf32>
    %139 = arith.addf %134, %138 : vector<128x32xf32>
    %140 = vector.extract_strided_slice %124 {offsets = [48, 0], sizes = [128, 32], strides = [1, 1]} : vector<192x32xf32> to vector<128x32xf32>
    %c19 = arith.constant 19 : index
    %c0_76 = arith.constant 0 : index
    %c0_77 = arith.constant 0 : index
    %141 = vector.load %arg4[%c19, %c0_76, %c0_77] : memref<25x32x32xf32, #tpu.memory_space<vmem>>, vector<1x32x32xf32>
    %142 = vector.shape_cast %141 : vector<1x32x32xf32> to vector<32x32xf32>
    %cst_78 = arith.constant dense<0.000000e+00> : vector<128x32xf32>
    %143 = tpu.matmul %140, %142, %cst_78 {dimension_numbers = #tpu.dot_dimension_numbers<[1], [0], [0], [1], [0, 0, 1, 1], [], []>} : vector<128x32xf32>, vector<32x32xf32>, vector<128x32xf32> -> vector<128x32xf32>
    %144 = arith.addf %139, %143 : vector<128x32xf32>
    %145 = vector.extract_strided_slice %124 {offsets = [64, 0], sizes = [128, 32], strides = [1, 1]} : vector<192x32xf32> to vector<128x32xf32>
    %c24 = arith.constant 24 : index
    %c0_79 = arith.constant 0 : index
    %c0_80 = arith.constant 0 : index
    %146 = vector.load %arg4[%c24, %c0_79, %c0_80] : memref<25x32x32xf32, #tpu.memory_space<vmem>>, vector<1x32x32xf32>
    %147 = vector.shape_cast %146 : vector<1x32x32xf32> to vector<32x32xf32>
    %cst_81 = arith.constant dense<0.000000e+00> : vector<128x32xf32>
    %148 = tpu.matmul %145, %147, %cst_81 {dimension_numbers = #tpu.dot_dimension_numbers<[1], [0], [0], [1], [0, 0, 1, 1], [], []>} : vector<128x32xf32>, vector<32x32xf32>, vector<128x32xf32> -> vector<128x32xf32>
    %149 = arith.addf %144, %148 : vector<128x32xf32>
    %c0_82 = arith.constant 0 : index
    %c0_83 = arith.constant 0 : index
    %150 = vector.load %arg5[%c0_82, %c0_83] : memref<1x32xf32, #tpu.memory_space<vmem>>, vector<1x32xf32>
    %151 = vector.broadcast %150 : vector<1x32xf32> to vector<128x32xf32>
    %152 = arith.addf %149, %151 : vector<128x32xf32>
    %153 = vector.shape_cast %152 : vector<128x32xf32> to vector<4x32x32xf32>
    %154 = vector.extract_strided_slice %153 {offsets = [0, 0, 0], sizes = [4, 16, 32], strides = [1, 1, 1]} : vector<4x32x32xf32> to vector<4x16x32xf32>
    %155 = vector.extract_strided_slice %153 {offsets = [0, 16, 0], sizes = [4, 16, 32], strides = [1, 1, 1]} : vector<4x32x32xf32> to vector<4x16x32xf32>
    %156 = arith.maximumf %154, %155 : vector<4x16x32xf32>
    %157 = vector.extract_strided_slice %156 {offsets = [0, 0, 0], sizes = [1, 2, 32], strides = [1, 1, 1]} : vector<4x16x32xf32> to vector<1x2x32xf32>
    %158 = vector.shape_cast %157 : vector<1x2x32xf32> to vector<2x32xf32>
    %159 = vector.extract_strided_slice %156 {offsets = [0, 2, 0], sizes = [1, 2, 32], strides = [1, 1, 1]} : vector<4x16x32xf32> to vector<1x2x32xf32>
    %160 = vector.shape_cast %159 : vector<1x2x32xf32> to vector<2x32xf32>
    %161 = arith.maximumf %158, %160 : vector<2x32xf32>
    %cst_84 = arith.constant 0.000000e+00 : f32
    %162 = vector.broadcast %cst_84 : f32 to vector<2x32xf32>
    %163 = arith.maximumf %161, %162 : vector<2x32xf32>
    %c0_85 = arith.constant 0 : index
    %c0_86 = arith.constant 0 : index
    %c0_87 = arith.constant 0 : index
    %164 = vector.load %arg6[%c0_85, %c0_86, %c0_87] : memref<16x32x64xf32, #tpu.memory_space<vmem>>, vector<1x32x64xf32>
    %165 = vector.shape_cast %164 : vector<1x32x64xf32> to vector<32x64xf32>
    %cst_88 = arith.constant dense<0.000000e+00> : vector<2x64xf32>
    %166 = tpu.matmul %163, %165, %cst_88 {dimension_numbers = #tpu.dot_dimension_numbers<[1], [0], [0], [1], [0, 0, 1, 1], [], []>} : vector<2x32xf32>, vector<32x64xf32>, vector<2x64xf32> -> vector<2x64xf32>
    %167 = vector.extract_strided_slice %156 {offsets = [0, 4, 0], sizes = [1, 2, 32], strides = [1, 1, 1]} : vector<4x16x32xf32> to vector<1x2x32xf32>
    %168 = vector.shape_cast %167 : vector<1x2x32xf32> to vector<2x32xf32>
    %169 = vector.extract_strided_slice %156 {offsets = [0, 6, 0], sizes = [1, 2, 32], strides = [1, 1, 1]} : vector<4x16x32xf32> to vector<1x2x32xf32>
    %170 = vector.shape_cast %169 : vector<1x2x32xf32> to vector<2x32xf32>
    %171 = arith.maximumf %168, %170 : vector<2x32xf32>
    %cst_89 = arith.constant 0.000000e+00 : f32
    %172 = vector.broadcast %cst_89 : f32 to vector<2x32xf32>
    %173 = arith.maximumf %171, %172 : vector<2x32xf32>
    %c1_90 = arith.constant 1 : index
    %c0_91 = arith.constant 0 : index
    %c0_92 = arith.constant 0 : index
    %174 = vector.load %arg6[%c1_90, %c0_91, %c0_92] : memref<16x32x64xf32, #tpu.memory_space<vmem>>, vector<1x32x64xf32>
    %175 = vector.shape_cast %174 : vector<1x32x64xf32> to vector<32x64xf32>
    %cst_93 = arith.constant dense<0.000000e+00> : vector<2x64xf32>
    %176 = tpu.matmul %173, %175, %cst_93 {dimension_numbers = #tpu.dot_dimension_numbers<[1], [0], [0], [1], [0, 0, 1, 1], [], []>} : vector<2x32xf32>, vector<32x64xf32>, vector<2x64xf32> -> vector<2x64xf32>
    %177 = arith.addf %166, %176 : vector<2x64xf32>
    %178 = vector.extract_strided_slice %156 {offsets = [0, 8, 0], sizes = [1, 2, 32], strides = [1, 1, 1]} : vector<4x16x32xf32> to vector<1x2x32xf32>
    %179 = vector.shape_cast %178 : vector<1x2x32xf32> to vector<2x32xf32>
    %180 = vector.extract_strided_slice %156 {offsets = [0, 10, 0], sizes = [1, 2, 32], strides = [1, 1, 1]} : vector<4x16x32xf32> to vector<1x2x32xf32>
    %181 = vector.shape_cast %180 : vector<1x2x32xf32> to vector<2x32xf32>
    %182 = arith.maximumf %179, %181 : vector<2x32xf32>
    %cst_94 = arith.constant 0.000000e+00 : f32
    %183 = vector.broadcast %cst_94 : f32 to vector<2x32xf32>
    %184 = arith.maximumf %182, %183 : vector<2x32xf32>
    %c2_95 = arith.constant 2 : index
    %c0_96 = arith.constant 0 : index
    %c0_97 = arith.constant 0 : index
    %185 = vector.load %arg6[%c2_95, %c0_96, %c0_97] : memref<16x32x64xf32, #tpu.memory_space<vmem>>, vector<1x32x64xf32>
    %186 = vector.shape_cast %185 : vector<1x32x64xf32> to vector<32x64xf32>
    %cst_98 = arith.constant dense<0.000000e+00> : vector<2x64xf32>
    %187 = tpu.matmul %184, %186, %cst_98 {dimension_numbers = #tpu.dot_dimension_numbers<[1], [0], [0], [1], [0, 0, 1, 1], [], []>} : vector<2x32xf32>, vector<32x64xf32>, vector<2x64xf32> -> vector<2x64xf32>
    %188 = arith.addf %177, %187 : vector<2x64xf32>
    %189 = vector.extract_strided_slice %156 {offsets = [0, 12, 0], sizes = [1, 2, 32], strides = [1, 1, 1]} : vector<4x16x32xf32> to vector<1x2x32xf32>
    %190 = vector.shape_cast %189 : vector<1x2x32xf32> to vector<2x32xf32>
    %191 = vector.extract_strided_slice %156 {offsets = [0, 14, 0], sizes = [1, 2, 32], strides = [1, 1, 1]} : vector<4x16x32xf32> to vector<1x2x32xf32>
    %192 = vector.shape_cast %191 : vector<1x2x32xf32> to vector<2x32xf32>
    %193 = arith.maximumf %190, %192 : vector<2x32xf32>
    %cst_99 = arith.constant 0.000000e+00 : f32
    %194 = vector.broadcast %cst_99 : f32 to vector<2x32xf32>
    %195 = arith.maximumf %193, %194 : vector<2x32xf32>
    %c3_100 = arith.constant 3 : index
    %c0_101 = arith.constant 0 : index
    %c0_102 = arith.constant 0 : index
    %196 = vector.load %arg6[%c3_100, %c0_101, %c0_102] : memref<16x32x64xf32, #tpu.memory_space<vmem>>, vector<1x32x64xf32>
    %197 = vector.shape_cast %196 : vector<1x32x64xf32> to vector<32x64xf32>
    %cst_103 = arith.constant dense<0.000000e+00> : vector<2x64xf32>
    %198 = tpu.matmul %195, %197, %cst_103 {dimension_numbers = #tpu.dot_dimension_numbers<[1], [0], [0], [1], [0, 0, 1, 1], [], []>} : vector<2x32xf32>, vector<32x64xf32>, vector<2x64xf32> -> vector<2x64xf32>
    %199 = arith.addf %188, %198 : vector<2x64xf32>
    %200 = vector.extract_strided_slice %156 {offsets = [1, 0, 0], sizes = [1, 2, 32], strides = [1, 1, 1]} : vector<4x16x32xf32> to vector<1x2x32xf32>
    %201 = vector.shape_cast %200 : vector<1x2x32xf32> to vector<2x32xf32>
    %202 = vector.extract_strided_slice %156 {offsets = [1, 2, 0], sizes = [1, 2, 32], strides = [1, 1, 1]} : vector<4x16x32xf32> to vector<1x2x32xf32>
    %203 = vector.shape_cast %202 : vector<1x2x32xf32> to vector<2x32xf32>
    %204 = arith.maximumf %201, %203 : vector<2x32xf32>
    %cst_104 = arith.constant 0.000000e+00 : f32
    %205 = vector.broadcast %cst_104 : f32 to vector<2x32xf32>
    %206 = arith.maximumf %204, %205 : vector<2x32xf32>
    %c4_105 = arith.constant 4 : index
    %c0_106 = arith.constant 0 : index
    %c0_107 = arith.constant 0 : index
    %207 = vector.load %arg6[%c4_105, %c0_106, %c0_107] : memref<16x32x64xf32, #tpu.memory_space<vmem>>, vector<1x32x64xf32>
    %208 = vector.shape_cast %207 : vector<1x32x64xf32> to vector<32x64xf32>
    %cst_108 = arith.constant dense<0.000000e+00> : vector<2x64xf32>
    %209 = tpu.matmul %206, %208, %cst_108 {dimension_numbers = #tpu.dot_dimension_numbers<[1], [0], [0], [1], [0, 0, 1, 1], [], []>} : vector<2x32xf32>, vector<32x64xf32>, vector<2x64xf32> -> vector<2x64xf32>
    %210 = arith.addf %199, %209 : vector<2x64xf32>
    %211 = vector.extract_strided_slice %156 {offsets = [1, 4, 0], sizes = [1, 2, 32], strides = [1, 1, 1]} : vector<4x16x32xf32> to vector<1x2x32xf32>
    %212 = vector.shape_cast %211 : vector<1x2x32xf32> to vector<2x32xf32>
    %213 = vector.extract_strided_slice %156 {offsets = [1, 6, 0], sizes = [1, 2, 32], strides = [1, 1, 1]} : vector<4x16x32xf32> to vector<1x2x32xf32>
    %214 = vector.shape_cast %213 : vector<1x2x32xf32> to vector<2x32xf32>
    %215 = arith.maximumf %212, %214 : vector<2x32xf32>
    %cst_109 = arith.constant 0.000000e+00 : f32
    %216 = vector.broadcast %cst_109 : f32 to vector<2x32xf32>
    %217 = arith.maximumf %215, %216 : vector<2x32xf32>
    %c5_110 = arith.constant 5 : index
    %c0_111 = arith.constant 0 : index
    %c0_112 = arith.constant 0 : index
    %218 = vector.load %arg6[%c5_110, %c0_111, %c0_112] : memref<16x32x64xf32, #tpu.memory_space<vmem>>, vector<1x32x64xf32>
    %219 = vector.shape_cast %218 : vector<1x32x64xf32> to vector<32x64xf32>
    %cst_113 = arith.constant dense<0.000000e+00> : vector<2x64xf32>
    %220 = tpu.matmul %217, %219, %cst_113 {dimension_numbers = #tpu.dot_dimension_numbers<[1], [0], [0], [1], [0, 0, 1, 1], [], []>} : vector<2x32xf32>, vector<32x64xf32>, vector<2x64xf32> -> vector<2x64xf32>
    %221 = arith.addf %210, %220 : vector<2x64xf32>
    %222 = vector.extract_strided_slice %156 {offsets = [1, 8, 0], sizes = [1, 2, 32], strides = [1, 1, 1]} : vector<4x16x32xf32> to vector<1x2x32xf32>
    %223 = vector.shape_cast %222 : vector<1x2x32xf32> to vector<2x32xf32>
    %224 = vector.extract_strided_slice %156 {offsets = [1, 10, 0], sizes = [1, 2, 32], strides = [1, 1, 1]} : vector<4x16x32xf32> to vector<1x2x32xf32>
    %225 = vector.shape_cast %224 : vector<1x2x32xf32> to vector<2x32xf32>
    %226 = arith.maximumf %223, %225 : vector<2x32xf32>
    %cst_114 = arith.constant 0.000000e+00 : f32
    %227 = vector.broadcast %cst_114 : f32 to vector<2x32xf32>
    %228 = arith.maximumf %226, %227 : vector<2x32xf32>
    %c6_115 = arith.constant 6 : index
    %c0_116 = arith.constant 0 : index
    %c0_117 = arith.constant 0 : index
    %229 = vector.load %arg6[%c6_115, %c0_116, %c0_117] : memref<16x32x64xf32, #tpu.memory_space<vmem>>, vector<1x32x64xf32>
    %230 = vector.shape_cast %229 : vector<1x32x64xf32> to vector<32x64xf32>
    %cst_118 = arith.constant dense<0.000000e+00> : vector<2x64xf32>
    %231 = tpu.matmul %228, %230, %cst_118 {dimension_numbers = #tpu.dot_dimension_numbers<[1], [0], [0], [1], [0, 0, 1, 1], [], []>} : vector<2x32xf32>, vector<32x64xf32>, vector<2x64xf32> -> vector<2x64xf32>
    %232 = arith.addf %221, %231 : vector<2x64xf32>
    %233 = vector.extract_strided_slice %156 {offsets = [1, 12, 0], sizes = [1, 2, 32], strides = [1, 1, 1]} : vector<4x16x32xf32> to vector<1x2x32xf32>
    %234 = vector.shape_cast %233 : vector<1x2x32xf32> to vector<2x32xf32>
    %235 = vector.extract_strided_slice %156 {offsets = [1, 14, 0], sizes = [1, 2, 32], strides = [1, 1, 1]} : vector<4x16x32xf32> to vector<1x2x32xf32>
    %236 = vector.shape_cast %235 : vector<1x2x32xf32> to vector<2x32xf32>
    %237 = arith.maximumf %234, %236 : vector<2x32xf32>
    %cst_119 = arith.constant 0.000000e+00 : f32
    %238 = vector.broadcast %cst_119 : f32 to vector<2x32xf32>
    %239 = arith.maximumf %237, %238 : vector<2x32xf32>
    %c7_120 = arith.constant 7 : index
    %c0_121 = arith.constant 0 : index
    %c0_122 = arith.constant 0 : index
    %240 = vector.load %arg6[%c7_120, %c0_121, %c0_122] : memref<16x32x64xf32, #tpu.memory_space<vmem>>, vector<1x32x64xf32>
    %241 = vector.shape_cast %240 : vector<1x32x64xf32> to vector<32x64xf32>
    %cst_123 = arith.constant dense<0.000000e+00> : vector<2x64xf32>
    %242 = tpu.matmul %239, %241, %cst_123 {dimension_numbers = #tpu.dot_dimension_numbers<[1], [0], [0], [1], [0, 0, 1, 1], [], []>} : vector<2x32xf32>, vector<32x64xf32>, vector<2x64xf32> -> vector<2x64xf32>
    %243 = arith.addf %232, %242 : vector<2x64xf32>
    %244 = vector.extract_strided_slice %156 {offsets = [2, 0, 0], sizes = [1, 2, 32], strides = [1, 1, 1]} : vector<4x16x32xf32> to vector<1x2x32xf32>
    %245 = vector.shape_cast %244 : vector<1x2x32xf32> to vector<2x32xf32>
    %246 = vector.extract_strided_slice %156 {offsets = [2, 2, 0], sizes = [1, 2, 32], strides = [1, 1, 1]} : vector<4x16x32xf32> to vector<1x2x32xf32>
    %247 = vector.shape_cast %246 : vector<1x2x32xf32> to vector<2x32xf32>
    %248 = arith.maximumf %245, %247 : vector<2x32xf32>
    %cst_124 = arith.constant 0.000000e+00 : f32
    %249 = vector.broadcast %cst_124 : f32 to vector<2x32xf32>
    %250 = arith.maximumf %248, %249 : vector<2x32xf32>
    %c8_125 = arith.constant 8 : index
    %c0_126 = arith.constant 0 : index
    %c0_127 = arith.constant 0 : index
    %251 = vector.load %arg6[%c8_125, %c0_126, %c0_127] : memref<16x32x64xf32, #tpu.memory_space<vmem>>, vector<1x32x64xf32>
    %252 = vector.shape_cast %251 : vector<1x32x64xf32> to vector<32x64xf32>
    %cst_128 = arith.constant dense<0.000000e+00> : vector<2x64xf32>
    %253 = tpu.matmul %250, %252, %cst_128 {dimension_numbers = #tpu.dot_dimension_numbers<[1], [0], [0], [1], [0, 0, 1, 1], [], []>} : vector<2x32xf32>, vector<32x64xf32>, vector<2x64xf32> -> vector<2x64xf32>
    %254 = arith.addf %243, %253 : vector<2x64xf32>
    %255 = vector.extract_strided_slice %156 {offsets = [2, 4, 0], sizes = [1, 2, 32], strides = [1, 1, 1]} : vector<4x16x32xf32> to vector<1x2x32xf32>
    %256 = vector.shape_cast %255 : vector<1x2x32xf32> to vector<2x32xf32>
    %257 = vector.extract_strided_slice %156 {offsets = [2, 6, 0], sizes = [1, 2, 32], strides = [1, 1, 1]} : vector<4x16x32xf32> to vector<1x2x32xf32>
    %258 = vector.shape_cast %257 : vector<1x2x32xf32> to vector<2x32xf32>
    %259 = arith.maximumf %256, %258 : vector<2x32xf32>
    %cst_129 = arith.constant 0.000000e+00 : f32
    %260 = vector.broadcast %cst_129 : f32 to vector<2x32xf32>
    %261 = arith.maximumf %259, %260 : vector<2x32xf32>
    %c9_130 = arith.constant 9 : index
    %c0_131 = arith.constant 0 : index
    %c0_132 = arith.constant 0 : index
    %262 = vector.load %arg6[%c9_130, %c0_131, %c0_132] : memref<16x32x64xf32, #tpu.memory_space<vmem>>, vector<1x32x64xf32>
    %263 = vector.shape_cast %262 : vector<1x32x64xf32> to vector<32x64xf32>
    %cst_133 = arith.constant dense<0.000000e+00> : vector<2x64xf32>
    %264 = tpu.matmul %261, %263, %cst_133 {dimension_numbers = #tpu.dot_dimension_numbers<[1], [0], [0], [1], [0, 0, 1, 1], [], []>} : vector<2x32xf32>, vector<32x64xf32>, vector<2x64xf32> -> vector<2x64xf32>
    %265 = arith.addf %254, %264 : vector<2x64xf32>
    %266 = vector.extract_strided_slice %156 {offsets = [2, 8, 0], sizes = [1, 2, 32], strides = [1, 1, 1]} : vector<4x16x32xf32> to vector<1x2x32xf32>
    %267 = vector.shape_cast %266 : vector<1x2x32xf32> to vector<2x32xf32>
    %268 = vector.extract_strided_slice %156 {offsets = [2, 10, 0], sizes = [1, 2, 32], strides = [1, 1, 1]} : vector<4x16x32xf32> to vector<1x2x32xf32>
    %269 = vector.shape_cast %268 : vector<1x2x32xf32> to vector<2x32xf32>
    %270 = arith.maximumf %267, %269 : vector<2x32xf32>
    %cst_134 = arith.constant 0.000000e+00 : f32
    %271 = vector.broadcast %cst_134 : f32 to vector<2x32xf32>
    %272 = arith.maximumf %270, %271 : vector<2x32xf32>
    %c10_135 = arith.constant 10 : index
    %c0_136 = arith.constant 0 : index
    %c0_137 = arith.constant 0 : index
    %273 = vector.load %arg6[%c10_135, %c0_136, %c0_137] : memref<16x32x64xf32, #tpu.memory_space<vmem>>, vector<1x32x64xf32>
    %274 = vector.shape_cast %273 : vector<1x32x64xf32> to vector<32x64xf32>
    %cst_138 = arith.constant dense<0.000000e+00> : vector<2x64xf32>
    %275 = tpu.matmul %272, %274, %cst_138 {dimension_numbers = #tpu.dot_dimension_numbers<[1], [0], [0], [1], [0, 0, 1, 1], [], []>} : vector<2x32xf32>, vector<32x64xf32>, vector<2x64xf32> -> vector<2x64xf32>
    %276 = arith.addf %265, %275 : vector<2x64xf32>
    %277 = vector.extract_strided_slice %156 {offsets = [2, 12, 0], sizes = [1, 2, 32], strides = [1, 1, 1]} : vector<4x16x32xf32> to vector<1x2x32xf32>
    %278 = vector.shape_cast %277 : vector<1x2x32xf32> to vector<2x32xf32>
    %279 = vector.extract_strided_slice %156 {offsets = [2, 14, 0], sizes = [1, 2, 32], strides = [1, 1, 1]} : vector<4x16x32xf32> to vector<1x2x32xf32>
    %280 = vector.shape_cast %279 : vector<1x2x32xf32> to vector<2x32xf32>
    %281 = arith.maximumf %278, %280 : vector<2x32xf32>
    %cst_139 = arith.constant 0.000000e+00 : f32
    %282 = vector.broadcast %cst_139 : f32 to vector<2x32xf32>
    %283 = arith.maximumf %281, %282 : vector<2x32xf32>
    %c11_140 = arith.constant 11 : index
    %c0_141 = arith.constant 0 : index
    %c0_142 = arith.constant 0 : index
    %284 = vector.load %arg6[%c11_140, %c0_141, %c0_142] : memref<16x32x64xf32, #tpu.memory_space<vmem>>, vector<1x32x64xf32>
    %285 = vector.shape_cast %284 : vector<1x32x64xf32> to vector<32x64xf32>
    %cst_143 = arith.constant dense<0.000000e+00> : vector<2x64xf32>
    %286 = tpu.matmul %283, %285, %cst_143 {dimension_numbers = #tpu.dot_dimension_numbers<[1], [0], [0], [1], [0, 0, 1, 1], [], []>} : vector<2x32xf32>, vector<32x64xf32>, vector<2x64xf32> -> vector<2x64xf32>
    %287 = arith.addf %276, %286 : vector<2x64xf32>
    %288 = vector.extract_strided_slice %156 {offsets = [3, 0, 0], sizes = [1, 2, 32], strides = [1, 1, 1]} : vector<4x16x32xf32> to vector<1x2x32xf32>
    %289 = vector.shape_cast %288 : vector<1x2x32xf32> to vector<2x32xf32>
    %290 = vector.extract_strided_slice %156 {offsets = [3, 2, 0], sizes = [1, 2, 32], strides = [1, 1, 1]} : vector<4x16x32xf32> to vector<1x2x32xf32>
    %291 = vector.shape_cast %290 : vector<1x2x32xf32> to vector<2x32xf32>
    %292 = arith.maximumf %289, %291 : vector<2x32xf32>
    %cst_144 = arith.constant 0.000000e+00 : f32
    %293 = vector.broadcast %cst_144 : f32 to vector<2x32xf32>
    %294 = arith.maximumf %292, %293 : vector<2x32xf32>
    %c12_145 = arith.constant 12 : index
    %c0_146 = arith.constant 0 : index
    %c0_147 = arith.constant 0 : index
    %295 = vector.load %arg6[%c12_145, %c0_146, %c0_147] : memref<16x32x64xf32, #tpu.memory_space<vmem>>, vector<1x32x64xf32>
    %296 = vector.shape_cast %295 : vector<1x32x64xf32> to vector<32x64xf32>
    %cst_148 = arith.constant dense<0.000000e+00> : vector<2x64xf32>
    %297 = tpu.matmul %294, %296, %cst_148 {dimension_numbers = #tpu.dot_dimension_numbers<[1], [0], [0], [1], [0, 0, 1, 1], [], []>} : vector<2x32xf32>, vector<32x64xf32>, vector<2x64xf32> -> vector<2x64xf32>
    %298 = arith.addf %287, %297 : vector<2x64xf32>
    %299 = vector.extract_strided_slice %156 {offsets = [3, 4, 0], sizes = [1, 2, 32], strides = [1, 1, 1]} : vector<4x16x32xf32> to vector<1x2x32xf32>
    %300 = vector.shape_cast %299 : vector<1x2x32xf32> to vector<2x32xf32>
    %301 = vector.extract_strided_slice %156 {offsets = [3, 6, 0], sizes = [1, 2, 32], strides = [1, 1, 1]} : vector<4x16x32xf32> to vector<1x2x32xf32>
    %302 = vector.shape_cast %301 : vector<1x2x32xf32> to vector<2x32xf32>
    %303 = arith.maximumf %300, %302 : vector<2x32xf32>
    %cst_149 = arith.constant 0.000000e+00 : f32
    %304 = vector.broadcast %cst_149 : f32 to vector<2x32xf32>
    %305 = arith.maximumf %303, %304 : vector<2x32xf32>
    %c13_150 = arith.constant 13 : index
    %c0_151 = arith.constant 0 : index
    %c0_152 = arith.constant 0 : index
    %306 = vector.load %arg6[%c13_150, %c0_151, %c0_152] : memref<16x32x64xf32, #tpu.memory_space<vmem>>, vector<1x32x64xf32>
    %307 = vector.shape_cast %306 : vector<1x32x64xf32> to vector<32x64xf32>
    %cst_153 = arith.constant dense<0.000000e+00> : vector<2x64xf32>
    %308 = tpu.matmul %305, %307, %cst_153 {dimension_numbers = #tpu.dot_dimension_numbers<[1], [0], [0], [1], [0, 0, 1, 1], [], []>} : vector<2x32xf32>, vector<32x64xf32>, vector<2x64xf32> -> vector<2x64xf32>
    %309 = arith.addf %298, %308 : vector<2x64xf32>
    %310 = vector.extract_strided_slice %156 {offsets = [3, 8, 0], sizes = [1, 2, 32], strides = [1, 1, 1]} : vector<4x16x32xf32> to vector<1x2x32xf32>
    %311 = vector.shape_cast %310 : vector<1x2x32xf32> to vector<2x32xf32>
    %312 = vector.extract_strided_slice %156 {offsets = [3, 10, 0], sizes = [1, 2, 32], strides = [1, 1, 1]} : vector<4x16x32xf32> to vector<1x2x32xf32>
    %313 = vector.shape_cast %312 : vector<1x2x32xf32> to vector<2x32xf32>
    %314 = arith.maximumf %311, %313 : vector<2x32xf32>
    %cst_154 = arith.constant 0.000000e+00 : f32
    %315 = vector.broadcast %cst_154 : f32 to vector<2x32xf32>
    %316 = arith.maximumf %314, %315 : vector<2x32xf32>
    %c14_155 = arith.constant 14 : index
    %c0_156 = arith.constant 0 : index
    %c0_157 = arith.constant 0 : index
    %317 = vector.load %arg6[%c14_155, %c0_156, %c0_157] : memref<16x32x64xf32, #tpu.memory_space<vmem>>, vector<1x32x64xf32>
    %318 = vector.shape_cast %317 : vector<1x32x64xf32> to vector<32x64xf32>
    %cst_158 = arith.constant dense<0.000000e+00> : vector<2x64xf32>
    %319 = tpu.matmul %316, %318, %cst_158 {dimension_numbers = #tpu.dot_dimension_numbers<[1], [0], [0], [1], [0, 0, 1, 1], [], []>} : vector<2x32xf32>, vector<32x64xf32>, vector<2x64xf32> -> vector<2x64xf32>
    %320 = arith.addf %309, %319 : vector<2x64xf32>
    %321 = vector.extract_strided_slice %156 {offsets = [3, 12, 0], sizes = [1, 2, 32], strides = [1, 1, 1]} : vector<4x16x32xf32> to vector<1x2x32xf32>
    %322 = vector.shape_cast %321 : vector<1x2x32xf32> to vector<2x32xf32>
    %323 = vector.extract_strided_slice %156 {offsets = [3, 14, 0], sizes = [1, 2, 32], strides = [1, 1, 1]} : vector<4x16x32xf32> to vector<1x2x32xf32>
    %324 = vector.shape_cast %323 : vector<1x2x32xf32> to vector<2x32xf32>
    %325 = arith.maximumf %322, %324 : vector<2x32xf32>
    %cst_159 = arith.constant 0.000000e+00 : f32
    %326 = vector.broadcast %cst_159 : f32 to vector<2x32xf32>
    %327 = arith.maximumf %325, %326 : vector<2x32xf32>
    %c15_160 = arith.constant 15 : index
    %c0_161 = arith.constant 0 : index
    %c0_162 = arith.constant 0 : index
    %328 = vector.load %arg6[%c15_160, %c0_161, %c0_162] : memref<16x32x64xf32, #tpu.memory_space<vmem>>, vector<1x32x64xf32>
    %329 = vector.shape_cast %328 : vector<1x32x64xf32> to vector<32x64xf32>
    %cst_163 = arith.constant dense<0.000000e+00> : vector<2x64xf32>
    %330 = tpu.matmul %327, %329, %cst_163 {dimension_numbers = #tpu.dot_dimension_numbers<[1], [0], [0], [1], [0, 0, 1, 1], [], []>} : vector<2x32xf32>, vector<32x64xf32>, vector<2x64xf32> -> vector<2x64xf32>
    %331 = arith.addf %320, %330 : vector<2x64xf32>
    %c0_164 = arith.constant 0 : index
    %c0_165 = arith.constant 0 : index
    %332 = vector.load %arg7[%c0_164, %c0_165] : memref<1x64xf32, #tpu.memory_space<vmem>>, vector<1x64xf32>
    %333 = vector.broadcast %332 : vector<1x64xf32> to vector<2x64xf32>
    %334 = arith.addf %331, %333 : vector<2x64xf32>
    %cst_166 = arith.constant 0.000000e+00 : f32
    %335 = vector.broadcast %cst_166 : f32 to vector<2x64xf32>
    %336 = arith.maximumf %334, %335 : vector<2x64xf32>
    %c0_167 = arith.constant 0 : index
    %c0_168 = arith.constant 0 : index
    %337 = vector.load %arg8[%c0_167, %c0_168] : memref<64x128xf32, #tpu.memory_space<vmem>>, vector<64x128xf32>
    %cst_169 = arith.constant dense<0.000000e+00> : vector<2x128xf32>
    %338 = tpu.matmul %336, %337, %cst_169 {dimension_numbers = #tpu.dot_dimension_numbers<[1], [0], [0], [1], [0, 0, 1, 1], [], []>} : vector<2x64xf32>, vector<64x128xf32>, vector<2x128xf32> -> vector<2x128xf32>
    %c0_170 = arith.constant 0 : index
    %c0_171 = arith.constant 0 : index
    %339 = vector.load %arg9[%c0_170, %c0_171] : memref<1x128xf32, #tpu.memory_space<vmem>>, vector<1x128xf32>
    %340 = vector.broadcast %339 : vector<1x128xf32> to vector<2x128xf32>
    %341 = arith.addf %338, %340 : vector<2x128xf32>
    %c0_172 = arith.constant 0 : index
    %c0_173 = arith.constant 0 : index
    %342 = vector.load %arg10[%c0_172, %c0_173] : memref<2x128xf32, #tpu.memory_space<vmem>>, vector<2x128xf32>
    tpu.vector_store %arg10[%c0_172, %c0_173], %341 {strides = array<i32>} : memref<2x128xf32, #tpu.memory_space<vmem>>, vector<2x128xf32>,
    return
  }
  func.func @transform_0(%arg0: i32) -> (i32, i32) {
    %c0_i32 = arith.constant 0 : i32
    %c0_i32_0 = arith.constant 0 : i32
    %c0_i32_1 = arith.constant 0 : i32
    return %c0_i32, %c0_i32_0 : i32, i32
  }
  func.func @transform_1(%arg0: i32) -> (i32, i32) {
    %c0_i32 = arith.constant 0 : i32
    %c0_i32_0 = arith.constant 0 : i32
    %c0_i32_1 = arith.constant 0 : i32
    return %c0_i32, %c0_i32_0 : i32, i32
  }
  func.func @transform_2(%arg0: i32) -> (i32, i32) {
    %c0_i32 = arith.constant 0 : i32
    %c0_i32_0 = arith.constant 0 : i32
    %c0_i32_1 = arith.constant 0 : i32
    return %c0_i32, %c0_i32_0 : i32, i32
  }
  func.func @transform_3(%arg0: i32) -> (i32, i32, i32) {
    %c0_i32 = arith.constant 0 : i32
    %c0_i32_0 = arith.constant 0 : i32
    %c0_i32_1 = arith.constant 0 : i32
    %c0_i32_2 = arith.constant 0 : i32
    return %c0_i32, %c0_i32_0, %c0_i32_1 : i32, i32, i32
  }
  func.func @transform_4(%arg0: i32) -> (i32, i32) {
    %c0_i32 = arith.constant 0 : i32
    %c0_i32_0 = arith.constant 0 : i32
    %c0_i32_1 = arith.constant 0 : i32
    return %c0_i32, %c0_i32_0 : i32, i32
  }
  func.func @transform_5(%arg0: i32) -> (i32, i32, i32) {
    %c0_i32 = arith.constant 0 : i32
    %c0_i32_0 = arith.constant 0 : i32
    %c0_i32_1 = arith.constant 0 : i32
    %c0_i32_2 = arith.constant 0 : i32
    return %c0_i32, %c0_i32_0, %c0_i32_1 : i32, i32, i32
  }
  func.func @transform_6(%arg0: i32) -> (i32, i32) {
    %c0_i32 = arith.constant 0 : i32
    %c0_i32_0 = arith.constant 0 : i32
    %c0_i32_1 = arith.constant 0 : i32
    return %c0_i32, %c0_i32_0 : i32, i32
  }
  func.func @transform_7(%arg0: i32) -> (i32, i32) {
    %c0_i32 = arith.constant 0 : i32
    %c0_i32_0 = arith.constant 0 : i32
    %c0_i32_1 = arith.constant 0 : i32
    return %c0_i32, %c0_i32_0 : i32, i32
  }
  func.func @transform_8(%arg0: i32) -> (i32, i32) {
    %c0_i32 = arith.constant 0 : i32
    %c0_i32_0 = arith.constant 0 : i32
    %c0_i32_1 = arith.constant 0 : i32
    return %c0_i32, %c0_i32_0 : i32, i32
  }
  func.func @transform_9(%arg0: i32) -> (i32, i32) {
    %c0_i32 = arith.constant 0 : i32
    %c0_i32_0 = arith.constant 0 : i32
    %c0_i32_1 = arith.constant 0 : i32
    return %c0_i32, %c0_i32_0 : i32, i32
  }
}

</mosaic_0001>

<llo_original>
// kernel: net_forward.1
$region0: #{net_forward.1}
  #allocation0 [shape = 'u32[]', space=smem, size = 0x4, offset = 0x4, fixed_abs, tag = 'smem constant byte address 0x4 - core index']
  #allocation1 [shape = 'u32[144,128]{1,0:T(1,128)}', space=vmem, size = 0x12000, scoped, tag = 'internal scratch']
  %s0 = inlined_call_operand.vmem [shape: f32[1152,32], index: 0, kind: input, shape index: {}]
  %s1 = inlined_call_operand.vmem [shape: f32[32,32], index: 1, kind: input, shape index: {}]
  %s2 = inlined_call_operand.vmem [shape: f32[1,32], index: 2, kind: input, shape index: {}]
  %s3 = inlined_call_operand.vmem [shape: f32[25,32,32], index: 3, kind: input, shape index: {}]
  %s4 = inlined_call_operand.vmem [shape: f32[1,32], index: 4, kind: input, shape index: {}]
  %s5 = inlined_call_operand.vmem [shape: f32[16,32,64], index: 5, kind: input, shape index: {}]
  %s6 = inlined_call_operand.vmem [shape: f32[1,64], index: 6, kind: input, shape index: {}]
  %s7 = inlined_call_operand.vmem [shape: f32[64,128], index: 7, kind: input, shape index: {}]
  %s8 = inlined_call_operand.vmem [shape: f32[1,128], index: 8, kind: input, shape index: {}]
  %s9 = inlined_call_operand.hbm [shape: f32[2,128], index: 9, kind: output, shape index: {}]
  %s10 = sld [smem:[#allocation0]]
  $region46: #{net_forward.1} parent=0
    _
  %s12 = ssub.s32 1, %s10
  %s13 = scalar_select 0, %s12, %s10
  $region1: #{net_forward.1} parent=0
    #allocation2 [shape = 'u8[1024]{0}', space=vmem, size = 0x400, scoped, tag = 'output window, operand 0, single buffered']
    #allocation3 [shape = 's32[1]{0}', space=sflag, size = 0x4, scoped, tag = 'scoped memory for net_forward.1']
    %14 = vsyncpa [#allocation3], 0
    // Predicated region
    $region2: #{net_forward.1} parent=1 // pred_check
      _
    $region3: #{net_forward.1} parent=1 // pred_check_branch
      %16 = sbr.rel (0) target = $region5
    $region4: #{net_forward.1} parent=1 // pred_region
      _
    $region5: #{net_forward.1} parent=1 // pred_fallthru
      _
    // Predicated region
    $region6: #{net_forward.1} parent=1 // pred_check
      _
    $region7: #{net_forward.1} parent=1 // pred_check_branch
      %18 = sbr.rel (0) target = $region9
    $region8: #{net_forward.1} parent=1 // pred_region
      _
    $region9: #{net_forward.1} parent=1 // pred_fallthru
      _
    // Predicated region
    $region10: #{net_forward.1} parent=1 // pred_check
      _
    $region11: #{net_forward.1} parent=1 // pred_check_branch
      %20 = sbr.rel (0) target = $region13
    $region12: #{net_forward.1} parent=1 // pred_region
      _
    $region13: #{net_forward.1} parent=1 // pred_fallthru
      _
    // Predicated region
    $region14: #{net_forward.1} parent=1 // pred_check
      _
    $region15: #{net_forward.1} parent=1 // pred_check_branch
      %22 = sbr.rel (0) target = $region17
    $region16: #{net_forward.1} parent=1 // pred_region
      _
    $region17: #{net_forward.1} parent=1 // pred_fallthru
      _
    // Predicated region
    $region18: #{net_forward.1} parent=1 // pred_check
      _
    $region19: #{net_forward.1} parent=1 // pred_check_branch
      %24 = sbr.rel (0) target = $region21
    $region20: #{net_forward.1} parent=1 // pred_region
      _
    $region21: #{net_forward.1} parent=1 // pred_fallthru
      _
    // Predicated region
    $region22: #{net_forward.1} parent=1 // pred_check
      _
    $region23: #{net_forward.1} parent=1 // pred_check_branch
      %26 = sbr.rel (0) target = $region25
    $region24: #{net_forward.1} parent=1 // pred_region
      _
    $region25: #{net_forward.1} parent=1 // pred_fallthru
      _
    // Predicated region
    $region26: #{net_forward.1} parent=1 // pred_check
      _
    $region27: #{net_forward.1} parent=1 // pred_check_branch
      %28 = sbr.rel (0) target = $region29
    $region28: #{net_forward.1} parent=1 // pred_region
      _
    $region29: #{net_forward.1} parent=1 // pred_fallthru
      _
    // Predicated region
    $region30: #{net_forward.1} parent=1 // pred_check
      _
    $region31: #{net_forward.1} parent=1 // pred_check_branch
      %30 = sbr.rel (0) target = $region33
    $region32: #{net_forward.1} parent=1 // pred_region
      _
    $region33: #{net_forward.1} parent=1 // pred_fallthru
      _
    // Predicated region
    $region34: #{net_forward.1} parent=1 // pred_check
      _
    $region35: #{net_forward.1} parent=1 // pred_check_branch
      %32 = sbr.rel (0) target = $region37
    $region36: #{net_forward.1} parent=1 // pred_region
      _
    $region37: #{net_forward.1} parent=1 // pred_fallthru
      _
    %v33 = vld [vmem:[%s0] sm:$0xff]
    %v34 = vld [vmem:[%s0 + $0x8] sm:$0xff]
    %v35 = vld [vmem:[%s0 + $0x10] sm:$0xff]
    %v36 = vld [vmem:[%s0 + $0x18] sm:$0xff]
    %v37 = vld [vmem:[%s0 + $0x20] sm:$0xff]
    %v38 = vld [vmem:[%s0 + $0x28] sm:$0xff]
    %v39 = vld [vmem:[%s0 + $0x30] sm:$0xff]
    %v40 = vld [vmem:[%s0 + $0x38] sm:$0xff]
    %v41 = vld [vmem:[%s0 + $0x40] sm:$0xff]
    %v42 = vld [vmem:[%s0 + $0x48] sm:$0xff]
    %v43 = vld [vmem:[%s0 + $0x50] sm:$0xff]
    %v44 = vld [vmem:[%s0 + $0x58] sm:$0xff]
    %v45 = vld [vmem:[%s0 + $0x60] sm:$0xff]
    %v46 = vld [vmem:[%s0 + $0x68] sm:$0xff]
    %v47 = vld [vmem:[%s0 + $0x70] sm:$0xff]
    %v48 = vld [vmem:[%s0 + $0x78] sm:$0xff]
    %v49 = vld [vmem:[%s0 + $0x80] sm:$0xff]
    %v50 = vld [vmem:[%s0 + $0x88] sm:$0xff]
    %v51 = vld [vmem:[%s0 + $0x90] sm:$0xff]
    %v52 = vld [vmem:[%s0 + $0x98] sm:$0xff]
    %v53 = vld [vmem:[%s0 + $0xa0] sm:$0xff]
    %v54 = vld [vmem:[%s0 + $0xa8] sm:$0xff]
    %v55 = vld [vmem:[%s0 + $0xb0] sm:$0xff]
    %v56 = vld [vmem:[%s0 + $0xb8] sm:$0xff]
    %v57 = vld [vmem:[%s0 + $0xc0] sm:$0xff]
    %v58 = vld [vmem:[%s0 + $0xc8] sm:$0xff]
    %v59 = vld [vmem:[%s0 + $0xd0] sm:$0xff]
    %v60 = vld [vmem:[%s0 + $0xd8] sm:$0xff]
    %v61 = vld [vmem:[%s0 + $0xe0] sm:$0xff]
    %v62 = vld [vmem:[%s0 + $0xe8] sm:$0xff]
    %v63 = vld [vmem:[%s0 + $0xf0] sm:$0xff]
    %v64 = vld [vmem:[%s0 + $0xf8] sm:$0xff]
    %v65 = vld [vmem:[%s0 + $0x100] sm:$0xff]
    %v66 = vld [vmem:[%s0 + $0x108] sm:$0xff]
    %v67 = vld [vmem:[%s0 + $0x110] sm:$0xff]
    %v68 = vld [vmem:[%s0 + $0x118] sm:$0xff]
    %v69 = vld [vmem:[%s0 + $0x120] sm:$0xff]
    %v70 = vld [vmem:[%s0 + $0x128] sm:$0xff]
    %v71 = vld [vmem:[%s0 + $0x130] sm:$0xff]
    %v72 = vld [vmem:[%s0 + $0x138] sm:$0xff]
    %v73 = vld [vmem:[%s0 + $0x140] sm:$0xff]
    %v74 = vld [vmem:[%s0 + $0x148] sm:$0xff]
    %v75 = vld [vmem:[%s0 + $0x150] sm:$0xff]
    %v76 = vld [vmem:[%s0 + $0x158] sm:$0xff]
    %v77 = vld [vmem:[%s0 + $0x160] sm:$0xff]
    %v78 = vld [vmem:[%s0 + $0x168] sm:$0xff]
    %v79 = vld [vmem:[%s0 + $0x170] sm:$0xff]
    %v80 = vld [vmem:[%s0 + $0x178] sm:$0xff]
    %v81 = vld [vmem:[%s0 + $0x180] sm:$0xff]
    %v82 = vld [vmem:[%s0 + $0x188] sm:$0xff]
    %v83 = vld [vmem:[%s0 + $0x190] sm:$0xff]
    %v84 = vld [vmem:[%s0 + $0x198] sm:$0xff]
    %v85 = vld [vmem:[%s0 + $0x1a0] sm:$0xff]
    %v86 = vld [vmem:[%s0 + $0x1a8] sm:$0xff]
    %v87 = vld [vmem:[%s0 + $0x1b0] sm:$0xff]
    %v88 = vld [vmem:[%s0 + $0x1b8] sm:$0xff]
    %v89 = vld [vmem:[%s0 + $0x1c0] sm:$0xff]
    %v90 = vld [vmem:[%s0 + $0x1c8] sm:$0xff]
    %v91 = vld [vmem:[%s0 + $0x1d0] sm:$0xff]
    %v92 = vld [vmem:[%s0 + $0x1d8] sm:$0xff]
    %v93 = vld [vmem:[%s0 + $0x1e0] sm:$0xff]
    %v94 = vld [vmem:[%s0 + $0x1e8] sm:$0xff]
    %v95 = vld [vmem:[%s0 + $0x1f0] sm:$0xff]
    %v96 = vld [vmem:[%s0 + $0x1f8] sm:$0xff]
    %v97 = vld [vmem:[%s0 + $0x200] sm:$0xff]
    %v98 = vld [vmem:[%s0 + $0x208] sm:$0xff]
    %v99 = vld [vmem:[%s0 + $0x210] sm:$0xff]
    %v100 = vld [vmem:[%s0 + $0x218] sm:$0xff]
    %v101 = vld [vmem:[%s0 + $0x220] sm:$0xff]
    %v102 = vld [vmem:[%s0 + $0x228] sm:$0xff]
    %v103 = vld [vmem:[%s0 + $0x230] sm:$0xff]
    %v104 = vld [vmem:[%s0 + $0x238] sm:$0xff]
    %v105 = vld [vmem:[%s0 + $0x240] sm:$0xff]
    %v106 = vld [vmem:[%s0 + $0x248] sm:$0xff]
    %v107 = vld [vmem:[%s0 + $0x250] sm:$0xff]
    %v108 = vld [vmem:[%s0 + $0x258] sm:$0xff]
    %v109 = vld [vmem:[%s0 + $0x260] sm:$0xff]
    %v110 = vld [vmem:[%s0 + $0x268] sm:$0xff]
    %v111 = vld [vmem:[%s0 + $0x270] sm:$0xff]
    %v112 = vld [vmem:[%s0 + $0x278] sm:$0xff]
    %v113 = vld [vmem:[%s0 + $0x280] sm:$0xff]
    %v114 = vld [vmem:[%s0 + $0x288] sm:$0xff]
    %v115 = vld [vmem:[%s0 + $0x290] sm:$0xff]
    %v116 = vld [vmem:[%s0 + $0x298] sm:$0xff]
    %v117 = vld [vmem:[%s0 + $0x2a0] sm:$0xff]
    %v118 = vld [vmem:[%s0 + $0x2a8] sm:$0xff]
    %v119 = vld [vmem:[%s0 + $0x2b0] sm:$0xff]
    %v120 = vld [vmem:[%s0 + $0x2b8] sm:$0xff]
    %v121 = vld [vmem:[%s0 + $0x2c0] sm:$0xff]
    %v122 = vld [vmem:[%s0 + $0x2c8] sm:$0xff]
    %v123 = vld [vmem:[%s0 + $0x2d0] sm:$0xff]
    %v124 = vld [vmem:[%s0 + $0x2d8] sm:$0xff]
    %v125 = vld [vmem:[%s0 + $0x2e0] sm:$0xff]
    %v126 = vld [vmem:[%s0 + $0x2e8] sm:$0xff]
    %v127 = vld [vmem:[%s0 + $0x2f0] sm:$0xff]
    %v128 = vld [vmem:[%s0 + $0x2f8] sm:$0xff]
    %v129 = vld [vmem:[%s0 + $0x300] sm:$0xff]
    %v130 = vld [vmem:[%s0 + $0x308] sm:$0xff]
    %v131 = vld [vmem:[%s0 + $0x310] sm:$0xff]
    %v132 = vld [vmem:[%s0 + $0x318] sm:$0xff]
    %v133 = vld [vmem:[%s0 + $0x320] sm:$0xff]
    %v134 = vld [vmem:[%s0 + $0x328] sm:$0xff]
    %v135 = vld [vmem:[%s0 + $0x330] sm:$0xff]
    %v136 = vld [vmem:[%s0 + $0x338] sm:$0xff]
    %v137 = vld [vmem:[%s0 + $0x340] sm:$0xff]
    %v138 = vld [vmem:[%s0 + $0x348] sm:$0xff]
    %v139 = vld [vmem:[%s0 + $0x350] sm:$0xff]
    %v140 = vld [vmem:[%s0 + $0x358] sm:$0xff]
    %v141 = vld [vmem:[%s0 + $0x360] sm:$0xff]
    %v142 = vld [vmem:[%s0 + $0x368] sm:$0xff]
    %v143 = vld [vmem:[%s0 + $0x370] sm:$0xff]
    %v144 = vld [vmem:[%s0 + $0x378] sm:$0xff]
    %v145 = vld [vmem:[%s0 + $0x380] sm:$0xff]
    %v146 = vld [vmem:[%s0 + $0x388] sm:$0xff]
    %v147 = vld [vmem:[%s0 + $0x390] sm:$0xff]
    %v148 = vld [vmem:[%s0 + $0x398] sm:$0xff]
    %v149 = vld [vmem:[%s0 + $0x3a0] sm:$0xff]
    %v150 = vld [vmem:[%s0 + $0x3a8] sm:$0xff]
    %v151 = vld [vmem:[%s0 + $0x3b0] sm:$0xff]
    %v152 = vld [vmem:[%s0 + $0x3b8] sm:$0xff]
    %v153 = vld [vmem:[%s0 + $0x3c0] sm:$0xff]
    %v154 = vld [vmem:[%s0 + $0x3c8] sm:$0xff]
    %v155 = vld [vmem:[%s0 + $0x3d0] sm:$0xff]
    %v156 = vld [vmem:[%s0 + $0x3d8] sm:$0xff]
    %v157 = vld [vmem:[%s0 + $0x3e0] sm:$0xff]
    %v158 = vld [vmem:[%s0 + $0x3e8] sm:$0xff]
    %v159 = vld [vmem:[%s0 + $0x3f0] sm:$0xff]
    %v160 = vld [vmem:[%s0 + $0x3f8] sm:$0xff]
    %v161 = vld [vmem:[%s0 + $0x400] sm:$0xff]
    %v162 = vld [vmem:[%s0 + $0x408] sm:$0xff]
    %v163 = vld [vmem:[%s0 + $0x410] sm:$0xff]
    %v164 = vld [vmem:[%s0 + $0x418] sm:$0xff]
    %v165 = vld [vmem:[%s0 + $0x420] sm:$0xff]
    %v166 = vld [vmem:[%s0 + $0x428] sm:$0xff]
    %v167 = vld [vmem:[%s0 + $0x430] sm:$0xff]
    %v168 = vld [vmem:[%s0 + $0x438] sm:$0xff]
    %v169 = vld [vmem:[%s0 + $0x440] sm:$0xff]
    %v170 = vld [vmem:[%s0 + $0x448] sm:$0xff]
    %v171 = vld [vmem:[%s0 + $0x450] sm:$0xff]
    %v172 = vld [vmem:[%s0 + $0x458] sm:$0xff]
    %v173 = vld [vmem:[%s0 + $0x460] sm:$0xff]
    %v174 = vld [vmem:[%s0 + $0x468] sm:$0xff]
    %v175 = vld [vmem:[%s0 + $0x470] sm:$0xff]
    %v176 = vld [vmem:[%s0 + $0x478] sm:$0xff]
    %v177 = vld [vmem:[%s1] sm:$0xff]
    %v178 = vld [vmem:[%s1 + $0x8] sm:$0xff]
    %v179 = vld [vmem:[%s1 + $0x10] sm:$0xff]
    %v180 = vld [vmem:[%s1 + $0x18] sm:$0xff]
    %vm181 = vcmask 261120
    %v183 = vsel %vm181, %v33, 0
    %v186 = vsel %vm181, %v34, 0
    %v189 = vsel %vm181, %v35, 0
    %v192 = vsel %vm181, %v36, 0
    %v195 = vsel %vm181, %v37, 0
    %v198 = vsel %vm181, %v38, 0
    %v201 = vsel %vm181, %v39, 0
    %v204 = vsel %vm181, %v40, 0
    %v207 = vsel %vm181, %v41, 0
    %v210 = vsel %vm181, %v42, 0
    %v213 = vsel %vm181, %v43, 0
    %v216 = vsel %vm181, %v44, 0
    %v219 = vsel %vm181, %v45, 0
    %v222 = vsel %vm181, %v46, 0
    %v225 = vsel %vm181, %v47, 0
    %v228 = vsel %vm181, %v48, 0
    %v231 = vsel %vm181, %v49, 0
    %v234 = vsel %vm181, %v50, 0
    %v237 = vsel %vm181, %v51, 0
    %v240 = vsel %vm181, %v52, 0
    %v243 = vsel %vm181, %v53, 0
    %v246 = vsel %vm181, %v54, 0
    %v249 = vsel %vm181, %v55, 0
    %v252 = vsel %vm181, %v56, 0
    %v255 = vsel %vm181, %v57, 0
    %v258 = vsel %vm181, %v58, 0
    %v261 = vsel %vm181, %v59, 0
    %v264 = vsel %vm181, %v60, 0
    %v267 = vsel %vm181, %v61, 0
    %v270 = vsel %vm181, %v62, 0
    %v273 = vsel %vm181, %v63, 0
    %v276 = vsel %vm181, %v64, 0
    %v279 = vsel %vm181, %v65, 0
    %v282 = vsel %vm181, %v66, 0
    %v285 = vsel %vm181, %v67, 0
    %v288 = vsel %vm181, %v68, 0
    %v291 = vsel %vm181, %v69, 0
    %v294 = vsel %vm181, %v70, 0
    %v297 = vsel %vm181, %v71, 0
    %v300 = vsel %vm181, %v72, 0
    %v303 = vsel %vm181, %v73, 0
    %v306 = vsel %vm181, %v74, 0
    %v309 = vsel %vm181, %v75, 0
    %v312 = vsel %vm181, %v76, 0
    %v315 = vsel %vm181, %v77, 0
    %v318 = vsel %vm181, %v78, 0
    %v321 = vsel %vm181, %v79, 0
    %v324 = vsel %vm181, %v80, 0
    %v327 = vsel %vm181, %v81, 0
    %v330 = vsel %vm181, %v82, 0
    %v333 = vsel %vm181, %v83, 0
    %v336 = vsel %vm181, %v84, 0
    %v339 = vsel %vm181, %v85, 0
    %v342 = vsel %vm181, %v86, 0
    %v345 = vsel %vm181, %v87, 0
    %v348 = vsel %vm181, %v88, 0
    %v351 = vsel %vm181, %v89, 0
    %v354 = vsel %vm181, %v90, 0
    %v357 = vsel %vm181, %v91, 0
    %v360 = vsel %vm181, %v92, 0
    %v363 = vsel %vm181, %v93, 0
    %v366 = vsel %vm181, %v94, 0
    %v369 = vsel %vm181, %v95, 0
    %v372 = vsel %vm181, %v96, 0
    %v375 = vsel %vm181, %v97, 0
    %v378 = vsel %vm181, %v98, 0
    %v381 = vsel %vm181, %v99, 0
    %v384 = vsel %vm181, %v100, 0
    %v387 = vsel %vm181, %v101, 0
    %v390 = vsel %vm181, %v102, 0
    %v393 = vsel %vm181, %v103, 0
    %v396 = vsel %vm181, %v104, 0
    %v399 = vsel %vm181, %v105, 0
    %v402 = vsel %vm181, %v106, 0
    %v405 = vsel %vm181, %v107, 0
    %v408 = vsel %vm181, %v108, 0
    %v411 = vsel %vm181, %v109, 0
    %v414 = vsel %vm181, %v110, 0
    %v417 = vsel %vm181, %v111, 0
    %v420 = vsel %vm181, %v112, 0
    %v423 = vsel %vm181, %v113, 0
    %v426 = vsel %vm181, %v114, 0
    %v429 = vsel %vm181, %v115, 0
    %v432 = vsel %vm181, %v116, 0
    %v435 = vsel %vm181, %v117, 0
    %v438 = vsel %vm181, %v118, 0
    %v441 = vsel %vm181, %v119, 0
    %v444 = vsel %vm181, %v120, 0
    %v447 = vsel %vm181, %v121, 0
    %v450 = vsel %vm181, %v122, 0
    %v453 = vsel %vm181, %v123, 0
    %v456 = vsel %vm181, %v124, 0
    %v459 = vsel %vm181, %v125, 0
    %v462 = vsel %vm181, %v126, 0
    %v465 = vsel %vm181, %v127, 0
    %v468 = vsel %vm181, %v128, 0
    %v471 = vsel %vm181, %v129, 0
    %v474 = vsel %vm181, %v130, 0
    %v477 = vsel %vm181, %v131, 0
    %v480 = vsel %vm181, %v132, 0
    %v483 = vsel %vm181, %v133, 0
    %v486 = vsel %vm181, %v134, 0
    %v489 = vsel %vm181, %v135, 0
    %v492 = vsel %vm181, %v136, 0
    %v495 = vsel %vm181, %v137, 0
    %v498 = vsel %vm181, %v138, 0
    %v501 = vsel %vm181, %v139, 0
    %v504 = vsel %vm181, %v140, 0
    %v507 = vsel %vm181, %v141, 0
    %v510 = vsel %vm181, %v142, 0
    %v513 = vsel %vm181, %v143, 0
    %v516 = vsel %vm181, %v144, 0
    %v519 = vsel %vm181, %v145, 0
    %v522 = vsel %vm181, %v146, 0
    %v525 = vsel %vm181, %v147, 0
    %v528 = vsel %vm181, %v148, 0
    %v531 = vsel %vm181, %v149, 0
    %v534 = vsel %vm181, %v150, 0
    %v537 = vsel %vm181, %v151, 0
    %v540 = vsel %vm181, %v152, 0
    %v543 = vsel %vm181, %v153, 0
    %v546 = vsel %vm181, %v154, 0
    %v549 = vsel %vm181, %v155, 0
    %v552 = vsel %vm181, %v156, 0
    %v555 = vsel %vm181, %v157, 0
    %v558 = vsel %vm181, %v158, 0
    %v561 = vsel %vm181, %v159, 0
    %v564 = vsel %vm181, %v160, 0
    %v567 = vsel %vm181, %v161, 0
    %v570 = vsel %vm181, %v162, 0
    %v573 = vsel %vm181, %v163, 0
    %v576 = vsel %vm181, %v164, 0
    %v579 = vsel %vm181, %v165, 0
    %v582 = vsel %vm181, %v166, 0
    %v585 = vsel %vm181, %v167, 0
    %v588 = vsel %vm181, %v168, 0
    %v591 = vsel %vm181, %v169, 0
    %v594 = vsel %vm181, %v170, 0
    %v597 = vsel %vm181, %v171, 0
    %v600 = vsel %vm181, %v172, 0
    %v603 = vsel %vm181, %v173, 0
    %v606 = vsel %vm181, %v174, 0
    %v609 = vsel %vm181, %v175, 0
    %v612 = vsel %vm181, %v176, 0
    %614 = vmatprep.subr.mxu0 0.0
    %615 = vmatpush1.msra.mxu0 %v177
    %616 = vmatprep.subr.mxu0 0.0
    %617 = vmatpush1.msra.mxu0 %v178
    %618 = vmatprep.subr.mxu0 0.0
    %619 = vmatpush1.msra.mxu0 %v179
    %620 = vmatprep.subr.mxu0 0.0
    %621 = vmatpush1.msra.mxu0 %v180
    %622 = vmatprep.subr.mxu0 0.0
    %623 = vmatpush1.msra.mxu0 0.0
    %624 = vmatprep.subr.mxu0 0.0
    %625 = vmatpush1.msra.mxu0 0.0
    %626 = vmatprep.subr.mxu0 0.0
    %627 = vmatpush1.msra.mxu0 0.0
    %628 = vmatprep.subr.mxu0 0.0
    %629 = vmatpush1.msra.mxu0 0.0
    %630 = vmatprep.subr.mxu0 0.0
    %631 = vmatpush1.msra.mxu0 0.0
    %632 = vmatprep.subr.mxu0 0.0
    %633 = vmatpush1.msra.mxu0 0.0
    %634 = vmatprep.subr.mxu0 0.0
    %635 = vmatpush1.msra.mxu0 0.0
    %636 = vmatprep.subr.mxu0 0.0
    %637 = vmatpush1.msra.mxu0 0.0
    %638 = vmatprep.subr.mxu0 0.0
    %639 = vmatpush1.msra.mxu0 0.0
    %640 = vmatprep.subr.mxu0 0.0
    %641 = vmatpush1.msra.mxu0 0.0
    %642 = vmatprep.subr.mxu0 0.0
    %643 = vmatpush1.msra.mxu0 0.0
    %644 = vmatprep.subr.mxu0 0.0
    %645 = vmatpush1.msra.mxu0 0.0
    %646 = vmatprep.subr.mxu0 0.0
    %647 = vmatpush1.msra.mxu0 0.0
    %648 = vmatprep.subr.mxu0 0.0
    %649 = vmatpush1.msra.mxu0 0.0
    %650 = vmatprep.subr.mxu0 0.0
    %651 = vmatpush1.msra.mxu0 0.0
    %652 = vmatprep.subr.mxu0 0.0
    %653 = vmatpush1.msra.mxu0 0.0
    %654 = vmatprep.subr.mxu0 0.0
    %655 = vmatpush1.msra.mxu0 0.0
    %656 = vmatprep.subr.mxu0 0.0
    %657 = vmatpush1.msra.mxu0 0.0
    %658 = vmatprep.subr.mxu0 0.0
    %659 = vmatpush1.msra.mxu0 0.0
    %660 = vmatprep.subr.mxu0 0.0
    %661 = vmatpush1.msra.mxu0 0.0
    %662 = vmatprep.subr.mxu0 0.0
    %663 = vmatpush1.msra.mxu0 0.0
    %664 = vmatprep.subr.mxu0 0.0
    %665 = vmatpush1.msra.mxu0 0.0
    %666 = vmatprep.subr.mxu0 0.0
    %667 = vmatpush1.msra.mxu0 0.0
    %668 = vmatprep.subr.mxu0 0.0
    %669 = vmatpush1.msra.mxu0 0.0
    %670 = vmatprep.subr.mxu0 0.0
    %671 = vmatpush1.msra.mxu0 0.0
    %672 = vmatprep.subr.mxu0 0.0
    %673 = vmatpush1.msra.mxu0 0.0
    %674 = vmatprep.subr.mxu0 0.0
    %675 = vmatpush1.msra.mxu0 0.0
    %676 = vmatprep.subr.mxu0 0.0
    %677 = vmatpush1.msra.mxu0 0.0
    %678 = vmatprep.mubr.f32.mxu0 0.0
    %679 = vmatmul.mubr.f32.gmra.mrb[0].mxu0 %v183
    %v680 = vpop.f32.mrb[0].mxu0
    %v681 = vadd.f32 0.0, %v680
    %v682 = vpop.f32.mrb[0].mxu0
    %683 = vmatprep.mubr.f32.mxu0 0.0
    %684 = vmatmul.mubr.f32.gmra.mrb[0].mxu0 %v186
    %v685 = vpop.f32.mrb[0].mxu0
    %v686 = vadd.f32 0.0, %v685
    %v687 = vpop.f32.mrb[0].mxu0
    %688 = vmatprep.mubr.f32.mxu0 0.0
    %689 = vmatmul.mubr.f32.gmra.mrb[0].mxu0 %v189
    %v690 = vpop.f32.mrb[0].mxu0
    %v691 = vadd.f32 0.0, %v690
    %v692 = vpop.f32.mrb[0].mxu0
    %693 = vmatprep.mubr.f32.mxu0 0.0
    %694 = vmatmul.mubr.f32.gmra.mrb[0].mxu0 %v192
    %v695 = vpop.f32.mrb[0].mxu0
    %v696 = vadd.f32 0.0, %v695
    %v697 = vpop.f32.mrb[0].mxu0
    %698 = vmatprep.mubr.f32.mxu0 0.0
    %699 = vmatmul.mubr.f32.gmra.mrb[0].mxu0 %v195
    %v700 = vpop.f32.mrb[0].mxu0
    %v701 = vadd.f32 0.0, %v700
    %v702 = vpop.f32.mrb[0].mxu0
    %703 = vmatprep.mubr.f32.mxu0 0.0
    %704 = vmatmul.mubr.f32.gmra.mrb[0].mxu0 %v198
    %v705 = vpop.f32.mrb[0].mxu0
    %v706 = vadd.f32 0.0, %v705
    %v707 = vpop.f32.mrb[0].mxu0
    %708 = vmatprep.mubr.f32.mxu0 0.0
    %709 = vmatmul.mubr.f32.gmra.mrb[0].mxu0 %v201
    %v710 = vpop.f32.mrb[0].mxu0
    %v711 = vadd.f32 0.0, %v710
    %v712 = vpop.f32.mrb[0].mxu0
    %713 = vmatprep.mubr.f32.mxu0 0.0
    %714 = vmatmul.mubr.f32.gmra.mrb[0].mxu0 %v204
    %v715 = vpop.f32.mrb[0].mxu0
    %v716 = vadd.f32 0.0, %v715
    %v717 = vpop.f32.mrb[0].mxu0
    %718 = vmatprep.mubr.f32.mxu0 0.0
    %719 = vmatmul.mubr.f32.gmra.mrb[0].mxu0 %v207
    %v720 = vpop.f32.mrb[0].mxu0
    %v721 = vadd.f32 0.0, %v720
    %v722 = vpop.f32.mrb[0].mxu0
    %723 = vmatprep.mubr.f32.mxu0 0.0
    %724 = vmatmul.mubr.f32.gmra.mrb[0].mxu0 %v210
    %v725 = vpop.f32.mrb[0].mxu0
    %v726 = vadd.f32 0.0, %v725
    %v727 = vpop.f32.mrb[0].mxu0
    %728 = vmatprep.mubr.f32.mxu0 0.0
    %729 = vmatmul.mubr.f32.gmra.mrb[0].mxu0 %v213
    %v730 = vpop.f32.mrb[0].mxu0
    %v731 = vadd.f32 0.0, %v730
    %v732 = vpop.f32.mrb[0].mxu0
    %733 = vmatprep.mubr.f32.mxu0 0.0
    %734 = vmatmul.mubr.f32.gmra.mrb[0].mxu0 %v216
    %v735 = vpop.f32.mrb[0].mxu0
    %v736 = vadd.f32 0.0, %v735
    %v737 = vpop.f32.mrb[0].mxu0
    %738 = vmatprep.mubr.f32.mxu0 0.0
    %739 = vmatmul.mubr.f32.gmra.mrb[0].mxu0 %v219
    %v740 = vpop.f32.mrb[0].mxu0
    %v741 = vadd.f32 0.0, %v740
    %v742 = vpop.f32.mrb[0].mxu0
    %743 = vmatprep.mubr.f32.mxu0 0.0
    %744 = vmatmul.mubr.f32.gmra.mrb[0].mxu0 %v222
    %v745 = vpop.f32.mrb[0].mxu0
    %v746 = vadd.f32 0.0, %v745
    %v747 = vpop.f32.mrb[0].mxu0
    %748 = vmatprep.mubr.f32.mxu0 0.0
    %749 = vmatmul.mubr.f32.gmra.mrb[0].mxu0 %v225
    %v750 = vpop.f32.mrb[0].mxu0
    %v751 = vadd.f32 0.0, %v750
    %v752 = vpop.f32.mrb[0].mxu0
    %753 = vmatprep.mubr.f32.mxu0 0.0
    %754 = vmatmul.mubr.f32.gmra.mrb[0].mxu0 %v228
    %v755 = vpop.f32.mrb[0].mxu0
    %v756 = vadd.f32 0.0, %v755
    %v757 = vpop.f32.mrb[0].mxu0
    %758 = vmatprep.mubr.f32.mxu0 0.0
    %759 = vmatmul.mubr.f32.gmra.mrb[0].mxu0 %v231
    %v760 = vpop.f32.mrb[0].mxu0
    %v761 = vadd.f32 0.0, %v760
    %v762 = vpop.f32.mrb[0].mxu0
    %763 = vmatprep.mubr.f32.mxu0 0.0
    %764 = vmatmul.mubr.f32.gmra.mrb[0].mxu0 %v234
    %v765 = vpop.f32.mrb[0].mxu0
    %v766 = vadd.f32 0.0, %v765
    %v767 = vpop.f32.mrb[0].mxu0
    %768 = vmatprep.mubr.f32.mxu0 0.0
    %769 = vmatmul.mubr.f32.gmra.mrb[0].mxu0 %v237
    %v770 = vpop.f32.mrb[0].mxu0
    %v771 = vadd.f32 0.0, %v770
    %v772 = vpop.f32.mrb[0].mxu0
    %773 = vmatprep.mubr.f32.mxu0 0.0
    %774 = vmatmul.mubr.f32.gmra.mrb[0].mxu0 %v240
    %v775 = vpop.f32.mrb[0].mxu0
    %v776 = vadd.f32 0.0, %v775
    %v777 = vpop.f32.mrb[0].mxu0
    %778 = vmatprep.mubr.f32.mxu0 0.0
    %779 = vmatmul.mubr.f32.gmra.mrb[0].mxu0 %v243
    %v780 = vpop.f32.mrb[0].mxu0
    %v781 = vadd.f32 0.0, %v780
    %v782 = vpop.f32.mrb[0].mxu0
    %783 = vmatprep.mubr.f32.mxu0 0.0
    %784 = vmatmul.mubr.f32.gmra.mrb[0].mxu0 %v246
    %v785 = vpop.f32.mrb[0].mxu0
    %v786 = vadd.f32 0.0, %v785
    %v787 = vpop.f32.mrb[0].mxu0
    %788 = vmatprep.mubr.f32.mxu0 0.0
    %789 = vmatmul.mubr.f32.gmra.mrb[0].mxu0 %v249
    %v790 = vpop.f32.mrb[0].mxu0
    %v791 = vadd.f32 0.0, %v790
    %v792 = vpop.f32.mrb[0].mxu0
    %793 = vmatprep.mubr.f32.mxu0 0.0
    %794 = vmatmul.mubr.f32.gmra.mrb[0].mxu0 %v252
    %v795 = vpop.f32.mrb[0].mxu0
    %v796 = vadd.f32 0.0, %v795
    %v797 = vpop.f32.mrb[0].mxu0
    %798 = vmatprep.mubr.f32.mxu0 0.0
    %799 = vmatmul.mubr.f32.gmra.mrb[0].mxu0 %v255
    %v800 = vpop.f32.mrb[0].mxu0
    %v801 = vadd.f32 0.0, %v800
    %v802 = vpop.f32.mrb[0].mxu0
    %803 = vmatprep.mubr.f32.mxu0 0.0
    %804 = vmatmul.mubr.f32.gmra.mrb[0].mxu0 %v258
    %v805 = vpop.f32.mrb[0].mxu0
    %v806 = vadd.f32 0.0, %v805
    %v807 = vpop.f32.mrb[0].mxu0
    %808 = vmatprep.mubr.f32.mxu0 0.0
    %809 = vmatmul.mubr.f32.gmra.mrb[0].mxu0 %v261
    %v810 = vpop.f32.mrb[0].mxu0
    %v811 = vadd.f32 0.0, %v810
    %v812 = vpop.f32.mrb[0].mxu0
    %813 = vmatprep.mubr.f32.mxu0 0.0
    %814 = vmatmul.mubr.f32.gmra.mrb[0].mxu0 %v264
    %v815 = vpop.f32.mrb[0].mxu0
    %v816 = vadd.f32 0.0, %v815
    %v817 = vpop.f32.mrb[0].mxu0
    %818 = vmatprep.mubr.f32.mxu0 0.0
    %819 = vmatmul.mubr.f32.gmra.mrb[0].mxu0 %v267
    %v820 = vpop.f32.mrb[0].mxu0
    %v821 = vadd.f32 0.0, %v820
    %v822 = vpop.f32.mrb[0].mxu0
    %823 = vmatprep.mubr.f32.mxu0 0.0
    %824 = vmatmul.mubr.f32.gmra.mrb[0].mxu0 %v270
    %v825 = vpop.f32.mrb[0].mxu0
    %v826 = vadd.f32 0.0, %v825
    %v827 = vpop.f32.mrb[0].mxu0
    %828 = vmatprep.mubr.f32.mxu0 0.0
    %829 = vmatmul.mubr.f32.gmra.mrb[0].mxu0 %v273
    %v830 = vpop.f32.mrb[0].mxu0
    %v831 = vadd.f32 0.0, %v830
    %v832 = vpop.f32.mrb[0].mxu0
    %833 = vmatprep.mubr.f32.mxu0 0.0
    %834 = vmatmul.mubr.f32.gmra.mrb[0].mxu0 %v276
    %v835 = vpop.f32.mrb[0].mxu0
    %v836 = vadd.f32 0.0, %v835
    %v837 = vpop.f32.mrb[0].mxu0
    %838 = vmatprep.mubr.f32.mxu0 0.0
    %839 = vmatmul.mubr.f32.gmra.mrb[0].mxu0 %v279
    %v840 = vpop.f32.mrb[0].mxu0
    %v841 = vadd.f32 0.0, %v840
    %v842 = vpop.f32.mrb[0].mxu0
    %843 = vmatprep.mubr.f32.mxu0 0.0
    %844 = vmatmul.mubr.f32.gmra.mrb[0].mxu0 %v282
    %v845 = vpop.f32.mrb[0].mxu0
    %v846 = vadd.f32 0.0, %v845
    %v847 = vpop.f32.mrb[0].mxu0
    %848 = vmatprep.mubr.f32.mxu0 0.0
    %849 = vmatmul.mubr.f32.gmra.mrb[0].mxu0 %v285
    %v850 = vpop.f32.mrb[0].mxu0
    %v851 = vadd.f32 0.0, %v850
    %v852 = vpop.f32.mrb[0].mxu0
    %853 = vmatprep.mubr.f32.mxu0 0.0
    %854 = vmatmul.mubr.f32.gmra.mrb[0].mxu0 %v288
    %v855 = vpop.f32.mrb[0].mxu0
    %v856 = vadd.f32 0.0, %v855
    %v857 = vpop.f32.mrb[0].mxu0
    %858 = vmatprep.mubr.f32.mxu0 0.0
    %859 = vmatmul.mubr.f32.gmra.mrb[0].mxu0 %v291
    %v860 = vpop.f32.mrb[0].mxu0
    %v861 = vadd.f32 0.0, %v860
    %v862 = vpop.f32.mrb[0].mxu0
    %863 = vmatprep.mubr.f32.mxu0 0.0
    %864 = vmatmul.mubr.f32.gmra.mrb[0].mxu0 %v294
    %v865 = vpop.f32.mrb[0].mxu0
    %v866 = vadd.f32 0.0, %v865
    %v867 = vpop.f32.mrb[0].mxu0
    %868 = vmatprep.mubr.f32.mxu0 0.0
    %869 = vmatmul.mubr.f32.gmra.mrb[0].mxu0 %v297
    %v870 = vpop.f32.mrb[0].mxu0
    %v871 = vadd.f32 0.0, %v870
    %v872 = vpop.f32.mrb[0].mxu0
    %873 = vmatprep.mubr.f32.mxu0 0.0
    %874 = vmatmul.mubr.f32.gmra.mrb[0].mxu0 %v300
    %v875 = vpop.f32.mrb[0].mxu0
    %v876 = vadd.f32 0.0, %v875
    %v877 = vpop.f32.mrb[0].mxu0
    %878 = vmatprep.mubr.f32.mxu0 0.0
    %879 = vmatmul.mubr.f32.gmra.mrb[0].mxu0 %v303
    %v880 = vpop.f32.mrb[0].mxu0
    %v881 = vadd.f32 0.0, %v880
    %v882 = vpop.f32.mrb[0].mxu0
    %883 = vmatprep.mubr.f32.mxu0 0.0
    %884 = vmatmul.mubr.f32.gmra.mrb[0].mxu0 %v306
    %v885 = vpop.f32.mrb[0].mxu0
    %v886 = vadd.f32 0.0, %v885
    %v887 = vpop.f32.mrb[0].mxu0
    %888 = vmatprep.mubr.f32.mxu0 0.0
    %889 = vmatmul.mubr.f32.gmra.mrb[0].mxu0 %v309
    %v890 = vpop.f32.mrb[0].mxu0
    %v891 = vadd.f32 0.0, %v890
    %v892 = vpop.f32.mrb[0].mxu0
    %893 = vmatprep.mubr.f32.mxu0 0.0
    %894 = vmatmul.mubr.f32.gmra.mrb[0].mxu0 %v312
    %v895 = vpop.f32.mrb[0].mxu0
    %v896 = vadd.f32 0.0, %v895
    %v897 = vpop.f32.mrb[0].mxu0
    %898 = vmatprep.mubr.f32.mxu0 0.0
    %899 = vmatmul.mubr.f32.gmra.mrb[0].mxu0 %v315
    %v900 = vpop.f32.mrb[0].mxu0
    %v901 = vadd.f32 0.0, %v900
    %v902 = vpop.f32.mrb[0].mxu0
    %903 = vmatprep.mubr.f32.mxu0 0.0
    %904 = vmatmul.mubr.f32.gmra.mrb[0].mxu0 %v318
    %v905 = vpop.f32.mrb[0].mxu0
    %v906 = vadd.f32 0.0, %v905
    %v907 = vpop.f32.mrb[0].mxu0
    %908 = vmatprep.mubr.f32.mxu0 0.0
    %909 = vmatmul.mubr.f32.gmra.mrb[0].mxu0 %v321
    %v910 = vpop.f32.mrb[0].mxu0
    %v911 = vadd.f32 0.0, %v910
    %v912 = vpop.f32.mrb[0].mxu0
    %913 = vmatprep.mubr.f32.mxu0 0.0
    %914 = vmatmul.mubr.f32.gmra.mrb[0].mxu0 %v324
    %v915 = vpop.f32.mrb[0].mxu0
    %v916 = vadd.f32 0.0, %v915
    %v917 = vpop.f32.mrb[0].mxu0
    %918 = vmatprep.mubr.f32.mxu0 0.0
    %919 = vmatmul.mubr.f32.gmra.mrb[0].mxu0 %v327
    %v920 = vpop.f32.mrb[0].mxu0
    %v921 = vadd.f32 0.0, %v920
    %v922 = vpop.f32.mrb[0].mxu0
    %923 = vmatprep.mubr.f32.mxu0 0.0
    %924 = vmatmul.mubr.f32.gmra.mrb[0].mxu0 %v330
    %v925 = vpop.f32.mrb[0].mxu0
    %v926 = vadd.f32 0.0, %v925
    %v927 = vpop.f32.mrb[0].mxu0
    %928 = vmatprep.mubr.f32.mxu0 0.0
    %929 = vmatmul.mubr.f32.gmra.mrb[0].mxu0 %v333
    %v930 = vpop.f32.mrb[0].mxu0
    %v931 = vadd.f32 0.0, %v930
    %v932 = vpop.f32.mrb[0].mxu0
    %933 = vmatprep.mubr.f32.mxu0 0.0
    %934 = vmatmul.mubr.f32.gmra.mrb[0].mxu0 %v336
    %v935 = vpop.f32.mrb[0].mxu0
    %v936 = vadd.f32 0.0, %v935
    %v937 = vpop.f32.mrb[0].mxu0
    %938 = vmatprep.mubr.f32.mxu0 0.0
    %939 = vmatmul.mubr.f32.gmra.mrb[0].mxu0 %v339
    %v940 = vpop.f32.mrb[0].mxu0
    %v941 = vadd.f32 0.0, %v940
    %v942 = vpop.f32.mrb[0].mxu0
    %943 = vmatprep.mubr.f32.mxu0 0.0
    %944 = vmatmul.mubr.f32.gmra.mrb[0].mxu0 %v342
    %v945 = vpop.f32.mrb[0].mxu0
    %v946 = vadd.f32 0.0, %v945
    %v947 = vpop.f32.mrb[0].mxu0
    %948 = vmatprep.mubr.f32.mxu0 0.0
    %949 = vmatmul.mubr.f32.gmra.mrb[0].mxu0 %v345
    %v950 = vpop.f32.mrb[0].mxu0
    %v951 = vadd.f32 0.0, %v950
    %v952 = vpop.f32.mrb[0].mxu0
    %953 = vmatprep.mubr.f32.mxu0 0.0
    %954 = vmatmul.mubr.f32.gmra.mrb[0].mxu0 %v348
    %v955 = vpop.f32.mrb[0].mxu0
    %v956 = vadd.f32 0.0, %v955
    %v957 = vpop.f32.mrb[0].mxu0
    %958 = vmatprep.mubr.f32.mxu0 0.0
    %959 = vmatmul.mubr.f32.gmra.mrb[0].mxu0 %v351
    %v960 = vpop.f32.mrb[0].mxu0
    %v961 = vadd.f32 0.0, %v960
    %v962 = vpop.f32.mrb[0].mxu0
    %963 = vmatprep.mubr.f32.mxu0 0.0
    %964 = vmatmul.mubr.f32.gmra.mrb[0].mxu0 %v354
    %v965 = vpop.f32.mrb[0].mxu0
    %v966 = vadd.f32 0.0, %v965
    %v967 = vpop.f32.mrb[0].mxu0
    %968 = vmatprep.mubr.f32.mxu0 0.0
    %969 = vmatmul.mubr.f32.gmra.mrb[0].mxu0 %v357
    %v970 = vpop.f32.mrb[0].mxu0
    %v971 = vadd.f32 0.0, %v970
    %v972 = vpop.f32.mrb[0].mxu0
    %973 = vmatprep.mubr.f32.mxu0 0.0
    %974 = vmatmul.mubr.f32.gmra.mrb[0].mxu0 %v360
    %v975 = vpop.f32.mrb[0].mxu0
    %v976 = vadd.f32 0.0, %v975
    %v977 = vpop.f32.mrb[0].mxu0
    %978 = vmatprep.mubr.f32.mxu0 0.0
    %979 = vmatmul.mubr.f32.gmra.mrb[0].mxu0 %v363
    %v980 = vpop.f32.mrb[0].mxu0
    %v981 = vadd.f32 0.0, %v980
    %v982 = vpop.f32.mrb[0].mxu0
    %983 = vmatprep.mubr.f32.mxu0 0.0
    %984 = vmatmul.mubr.f32.gmra.mrb[0].mxu0 %v366
    %v985 = vpop.f32.mrb[0].mxu0
    %v986 = vadd.f32 0.0, %v985
    %v987 = vpop.f32.mrb[0].mxu0
    %988 = vmatprep.mubr.f32.mxu0 0.0
    %989 = vmatmul.mubr.f32.gmra.mrb[0].mxu0 %v369
    %v990 = vpop.f32.mrb[0].mxu0
    %v991 = vadd.f32 0.0, %v990
    %v992 = vpop.f32.mrb[0].mxu0
    %993 = vmatprep.mubr.f32.mxu0 0.0
    %994 = vmatmul.mubr.f32.gmra.mrb[0].mxu0 %v372
    %v995 = vpop.f32.mrb[0].mxu0
    %v996 = vadd.f32 0.0, %v995
    %v997 = vpop.f32.mrb[0].mxu0
    %998 = vmatprep.mubr.f32.mxu0 0.0
    %999 = vmatmul.mubr.f32.gmra.mrb[0].mxu0 %v375
    %v1000 = vpop.f32.mrb[0].mxu0
    %v1001 = vadd.f32 0.0, %v1000
    %v1002 = vpop.f32.mrb[0].mxu0
    %1003 = vmatprep.mubr.f32.mxu0 0.0
    %1004 = vmatmul.mubr.f32.gmra.mrb[0].mxu0 %v378
    %v1005 = vpop.f32.mrb[0].mxu0
    %v1006 = vadd.f32 0.0, %v1005
    %v1007 = vpop.f32.mrb[0].mxu0
    %1008 = vmatprep.mubr.f32.mxu0 0.0
    %1009 = vmatmul.mubr.f32.gmra.mrb[0].mxu0 %v381
    %v1010 = vpop.f32.mrb[0].mxu0
    %v1011 = vadd.f32 0.0, %v1010
    %v1012 = vpop.f32.mrb[0].mxu0
    %1013 = vmatprep.mubr.f32.mxu0 0.0
    %1014 = vmatmul.mubr.f32.gmra.mrb[0].mxu0 %v384
    %v1015 = vpop.f32.mrb[0].mxu0
    %v1016 = vadd.f32 0.0, %v1015
    %v1017 = vpop.f32.mrb[0].mxu0
    %1018 = vmatprep.mubr.f32.mxu0 0.0
    %1019 = vmatmul.mubr.f32.gmra.mrb[0].mxu0 %v387
    %v1020 = vpop.f32.mrb[0].mxu0
    %v1021 = vadd.f32 0.0, %v1020
    %v1022 = vpop.f32.mrb[0].mxu0
    %1023 = vmatprep.mubr.f32.mxu0 0.0
    %1024 = vmatmul.mubr.f32.gmra.mrb[0].mxu0 %v390
    %v1025 = vpop.f32.mrb[0].mxu0
    %v1026 = vadd.f32 0.0, %v1025
    %v1027 = vpop.f32.mrb[0].mxu0
    %1028 = vmatprep.mubr.f32.mxu0 0.0
    %1029 = vmatmul.mubr.f32.gmra.mrb[0].mxu0 %v393
    %v1030 = vpop.f32.mrb[0].mxu0
    %v1031 = vadd.f32 0.0, %v1030
    %v1032 = vpop.f32.mrb[0].mxu0
    %1033 = vmatprep.mubr.f32.mxu0 0.0
    %1034 = vmatmul.mubr.f32.gmra.mrb[0].mxu0 %v396
    %v1035 = vpop.f32.mrb[0].mxu0
    %v1036 = vadd.f32 0.0, %v1035
    %v1037 = vpop.f32.mrb[0].mxu0
    %1038 = vmatprep.mubr.f32.mxu0 0.0
    %1039 = vmatmul.mubr.f32.gmra.mrb[0].mxu0 %v399
    %v1040 = vpop.f32.mrb[0].mxu0
    %v1041 = vadd.f32 0.0, %v1040
    %v1042 = vpop.f32.mrb[0].mxu0
    %1043 = vmatprep.mubr.f32.mxu0 0.0
    %1044 = vmatmul.mubr.f32.gmra.mrb[0].mxu0 %v402
    %v1045 = vpop.f32.mrb[0].mxu0
    %v1046 = vadd.f32 0.0, %v1045
    %v1047 = vpop.f32.mrb[0].mxu0
    %1048 = vmatprep.mubr.f32.mxu0 0.0
    %1049 = vmatmul.mubr.f32.gmra.mrb[0].mxu0 %v405
    %v1050 = vpop.f32.mrb[0].mxu0
    %v1051 = vadd.f32 0.0, %v1050
    %v1052 = vpop.f32.mrb[0].mxu0
    %1053 = vmatprep.mubr.f32.mxu0 0.0
    %1054 = vmatmul.mubr.f32.gmra.mrb[0].mxu0 %v408
    %v1055 = vpop.f32.mrb[0].mxu0
    %v1056 = vadd.f32 0.0, %v1055
    %v1057 = vpop.f32.mrb[0].mxu0
    %1058 = vmatprep.mubr.f32.mxu0 0.0
    %1059 = vmatmul.mubr.f32.gmra.mrb[0].mxu0 %v411
    %v1060 = vpop.f32.mrb[0].mxu0
    %v1061 = vadd.f32 0.0, %v1060
    %v1062 = vpop.f32.mrb[0].mxu0
    %1063 = vmatprep.mubr.f32.mxu0 0.0
    %1064 = vmatmul.mubr.f32.gmra.mrb[0].mxu0 %v414
    %v1065 = vpop.f32.mrb[0].mxu0
    %v1066 = vadd.f32 0.0, %v1065
    %v1067 = vpop.f32.mrb[0].mxu0
    %1068 = vmatprep.mubr.f32.mxu0 0.0
    %1069 = vmatmul.mubr.f32.gmra.mrb[0].mxu0 %v417
    %v1070 = vpop.f32.mrb[0].mxu0
    %v1071 = vadd.f32 0.0, %v1070
    %v1072 = vpop.f32.mrb[0].mxu0
    %1073 = vmatprep.mubr.f32.mxu0 0.0
    %1074 = vmatmul.mubr.f32.gmra.mrb[0].mxu0 %v420
    %v1075 = vpop.f32.mrb[0].mxu0
    %v1076 = vadd.f32 0.0, %v1075
    %v1077 = vpop.f32.mrb[0].mxu0
    %1078 = vmatprep.mubr.f32.mxu0 0.0
    %1079 = vmatmul.mubr.f32.gmra.mrb[0].mxu0 %v423
    %v1080 = vpop.f32.mrb[0].mxu0
    %v1081 = vadd.f32 0.0, %v1080
    %v1082 = vpop.f32.mrb[0].mxu0
    %1083 = vmatprep.mubr.f32.mxu0 0.0
    %1084 = vmatmul.mubr.f32.gmra.mrb[0].mxu0 %v426
    %v1085 = vpop.f32.mrb[0].mxu0
    %v1086 = vadd.f32 0.0, %v1085
    %v1087 = vpop.f32.mrb[0].mxu0
    %1088 = vmatprep.mubr.f32.mxu0 0.0
    %1089 = vmatmul.mubr.f32.gmra.mrb[0].mxu0 %v429
    %v1090 = vpop.f32.mrb[0].mxu0
    %v1091 = vadd.f32 0.0, %v1090
    %v1092 = vpop.f32.mrb[0].mxu0
    %1093 = vmatprep.mubr.f32.mxu0 0.0
    %1094 = vmatmul.mubr.f32.gmra.mrb[0].mxu0 %v432
    %v1095 = vpop.f32.mrb[0].mxu0
    %v1096 = vadd.f32 0.0, %v1095
    %v1097 = vpop.f32.mrb[0].mxu0
    %1098 = vmatprep.mubr.f32.mxu0 0.0
    %1099 = vmatmul.mubr.f32.gmra.mrb[0].mxu0 %v435
    %v1100 = vpop.f32.mrb[0].mxu0
    %v1101 = vadd.f32 0.0, %v1100
    %v1102 = vpop.f32.mrb[0].mxu0
    %1103 = vmatprep.mubr.f32.mxu0 0.0
    %1104 = vmatmul.mubr.f32.gmra.mrb[0].mxu0 %v438
    %v1105 = vpop.f32.mrb[0].mxu0
    %v1106 = vadd.f32 0.0, %v1105
    %v1107 = vpop.f32.mrb[0].mxu0
    %1108 = vmatprep.mubr.f32.mxu0 0.0
    %1109 = vmatmul.mubr.f32.gmra.mrb[0].mxu0 %v441
    %v1110 = vpop.f32.mrb[0].mxu0
    %v1111 = vadd.f32 0.0, %v1110
    %v1112 = vpop.f32.mrb[0].mxu0
    %1113 = vmatprep.mubr.f32.mxu0 0.0
    %1114 = vmatmul.mubr.f32.gmra.mrb[0].mxu0 %v444
    %v1115 = vpop.f32.mrb[0].mxu0
    %v1116 = vadd.f32 0.0, %v1115
    %v1117 = vpop.f32.mrb[0].mxu0
    %1118 = vmatprep.mubr.f32.mxu0 0.0
    %1119 = vmatmul.mubr.f32.gmra.mrb[0].mxu0 %v447
    %v1120 = vpop.f32.mrb[0].mxu0
    %v1121 = vadd.f32 0.0, %v1120
    %v1122 = vpop.f32.mrb[0].mxu0
    %1123 = vmatprep.mubr.f32.mxu0 0.0
    %1124 = vmatmul.mubr.f32.gmra.mrb[0].mxu0 %v450
    %v1125 = vpop.f32.mrb[0].mxu0
    %v1126 = vadd.f32 0.0, %v1125
    %v1127 = vpop.f32.mrb[0].mxu0
    %1128 = vmatprep.mubr.f32.mxu0 0.0
    %1129 = vmatmul.mubr.f32.gmra.mrb[0].mxu0 %v453
    %v1130 = vpop.f32.mrb[0].mxu0
    %v1131 = vadd.f32 0.0, %v1130
    %v1132 = vpop.f32.mrb[0].mxu0
    %1133 = vmatprep.mubr.f32.mxu0 0.0
    %1134 = vmatmul.mubr.f32.gmra.mrb[0].mxu0 %v456
    %v1135 = vpop.f32.mrb[0].mxu0
    %v1136 = vadd.f32 0.0, %v1135
    %v1137 = vpop.f32.mrb[0].mxu0
    %1138 = vmatprep.mubr.f32.mxu0 0.0
    %1139 = vmatmul.mubr.f32.gmra.mrb[0].mxu0 %v459
    %v1140 = vpop.f32.mrb[0].mxu0
    %v1141 = vadd.f32 0.0, %v1140
    %v1142 = vpop.f32.mrb[0].mxu0
    %1143 = vmatprep.mubr.f32.mxu0 0.0
    %1144 = vmatmul.mubr.f32.gmra.mrb[0].mxu0 %v462
    %v1145 = vpop.f32.mrb[0].mxu0
    %v1146 = vadd.f32 0.0, %v1145
    %v1147 = vpop.f32.mrb[0].mxu0
    %1148 = vmatprep.mubr.f32.mxu0 0.0
    %1149 = vmatmul.mubr.f32.gmra.mrb[0].mxu0 %v465
    %v1150 = vpop.f32.mrb[0].mxu0
    %v1151 = vadd.f32 0.0, %v1150
    %v1152 = vpop.f32.mrb[0].mxu0
    %1153 = vmatprep.mubr.f32.mxu0 0.0
    %1154 = vmatmul.mubr.f32.gmra.mrb[0].mxu0 %v468
    %v1155 = vpop.f32.mrb[0].mxu0
    %v1156 = vadd.f32 0.0, %v1155
    %v1157 = vpop.f32.mrb[0].mxu0
    %1158 = vmatprep.mubr.f32.mxu0 0.0
    %1159 = vmatmul.mubr.f32.gmra.mrb[0].mxu0 %v471
    %v1160 = vpop.f32.mrb[0].mxu0
    %v1161 = vadd.f32 0.0, %v1160
    %v1162 = vpop.f32.mrb[0].mxu0
    %1163 = vmatprep.mubr.f32.mxu0 0.0
    %1164 = vmatmul.mubr.f32.gmra.mrb[0].mxu0 %v474
    %v1165 = vpop.f32.mrb[0].mxu0
    %v1166 = vadd.f32 0.0, %v1165
    %v1167 = vpop.f32.mrb[0].mxu0
    %1168 = vmatprep.mubr.f32.mxu0 0.0
    %1169 = vmatmul.mubr.f32.gmra.mrb[0].mxu0 %v477
    %v1170 = vpop.f32.mrb[0].mxu0
    %v1171 = vadd.f32 0.0, %v1170
    %v1172 = vpop.f32.mrb[0].mxu0
    %1173 = vmatprep.mubr.f32.mxu0 0.0
    %1174 = vmatmul.mubr.f32.gmra.mrb[0].mxu0 %v480
    %v1175 = vpop.f32.mrb[0].mxu0
    %v1176 = vadd.f32 0.0, %v1175
    %v1177 = vpop.f32.mrb[0].mxu0
    %1178 = vmatprep.mubr.f32.mxu0 0.0
    %1179 = vmatmul.mubr.f32.gmra.mrb[0].mxu0 %v483
    %v1180 = vpop.f32.mrb[0].mxu0
    %v1181 = vadd.f32 0.0, %v1180
    %v1182 = vpop.f32.mrb[0].mxu0
    %1183 = vmatprep.mubr.f32.mxu0 0.0
    %1184 = vmatmul.mubr.f32.gmra.mrb[0].mxu0 %v486
    %v1185 = vpop.f32.mrb[0].mxu0
    %v1186 = vadd.f32 0.0, %v1185
    %v1187 = vpop.f32.mrb[0].mxu0
    %1188 = vmatprep.mubr.f32.mxu0 0.0
    %1189 = vmatmul.mubr.f32.gmra.mrb[0].mxu0 %v489
    %v1190 = vpop.f32.mrb[0].mxu0
    %v1191 = vadd.f32 0.0, %v1190
    %v1192 = vpop.f32.mrb[0].mxu0
    %1193 = vmatprep.mubr.f32.mxu0 0.0
    %1194 = vmatmul.mubr.f32.gmra.mrb[0].mxu0 %v492
    %v1195 = vpop.f32.mrb[0].mxu0
    %v1196 = vadd.f32 0.0, %v1195
    %v1197 = vpop.f32.mrb[0].mxu0
    %1198 = vmatprep.mubr.f32.mxu0 0.0
    %1199 = vmatmul.mubr.f32.gmra.mrb[0].mxu0 %v495
    %v1200 = vpop.f32.mrb[0].mxu0
    %v1201 = vadd.f32 0.0, %v1200
    %v1202 = vpop.f32.mrb[0].mxu0
    %1203 = vmatprep.mubr.f32.mxu0 0.0
    %1204 = vmatmul.mubr.f32.gmra.mrb[0].mxu0 %v498
    %v1205 = vpop.f32.mrb[0].mxu0
    %v1206 = vadd.f32 0.0, %v1205
    %v1207 = vpop.f32.mrb[0].mxu0
    %1208 = vmatprep.mubr.f32.mxu0 0.0
    %1209 = vmatmul.mubr.f32.gmra.mrb[0].mxu0 %v501
    %v1210 = vpop.f32.mrb[0].mxu0
    %v1211 = vadd.f32 0.0, %v1210
    %v1212 = vpop.f32.mrb[0].mxu0
    %1213 = vmatprep.mubr.f32.mxu0 0.0
    %1214 = vmatmul.mubr.f32.gmra.mrb[0].mxu0 %v504
    %v1215 = vpop.f32.mrb[0].mxu0
    %v1216 = vadd.f32 0.0, %v1215
    %v1217 = vpop.f32.mrb[0].mxu0
    %1218 = vmatprep.mubr.f32.mxu0 0.0
    %1219 = vmatmul.mubr.f32.gmra.mrb[0].mxu0 %v507
    %v1220 = vpop.f32.mrb[0].mxu0
    %v1221 = vadd.f32 0.0, %v1220
    %v1222 = vpop.f32.mrb[0].mxu0
    %1223 = vmatprep.mubr.f32.mxu0 0.0
    %1224 = vmatmul.mubr.f32.gmra.mrb[0].mxu0 %v510
    %v1225 = vpop.f32.mrb[0].mxu0
    %v1226 = vadd.f32 0.0, %v1225
    %v1227 = vpop.f32.mrb[0].mxu0
    %1228 = vmatprep.mubr.f32.mxu0 0.0
    %1229 = vmatmul.mubr.f32.gmra.mrb[0].mxu0 %v513
    %v1230 = vpop.f32.mrb[0].mxu0
    %v1231 = vadd.f32 0.0, %v1230
    %v1232 = vpop.f32.mrb[0].mxu0
    %1233 = vmatprep.mubr.f32.mxu0 0.0
    %1234 = vmatmul.mubr.f32.gmra.mrb[0].mxu0 %v516
    %v1235 = vpop.f32.mrb[0].mxu0
    %v1236 = vadd.f32 0.0, %v1235
    %v1237 = vpop.f32.mrb[0].mxu0
    %1238 = vmatprep.mubr.f32.mxu0 0.0
    %1239 = vmatmul.mubr.f32.gmra.mrb[0].mxu0 %v519
    %v1240 = vpop.f32.mrb[0].mxu0
    %v1241 = vadd.f32 0.0, %v1240
    %v1242 = vpop.f32.mrb[0].mxu0
    %1243 = vmatprep.mubr.f32.mxu0 0.0
    %1244 = vmatmul.mubr.f32.gmra.mrb[0].mxu0 %v522
    %v1245 = vpop.f32.mrb[0].mxu0
    %v1246 = vadd.f32 0.0, %v1245
    %v1247 = vpop.f32.mrb[0].mxu0
    %1248 = vmatprep.mubr.f32.mxu0 0.0
    %1249 = vmatmul.mubr.f32.gmra.mrb[0].mxu0 %v525
    %v1250 = vpop.f32.mrb[0].mxu0
    %v1251 = vadd.f32 0.0, %v1250
    %v1252 = vpop.f32.mrb[0].mxu0
    %1253 = vmatprep.mubr.f32.mxu0 0.0
    %1254 = vmatmul.mubr.f32.gmra.mrb[0].mxu0 %v528
    %v1255 = vpop.f32.mrb[0].mxu0
    %v1256 = vadd.f32 0.0, %v1255
    %v1257 = vpop.f32.mrb[0].mxu0
    %1258 = vmatprep.mubr.f32.mxu0 0.0
    %1259 = vmatmul.mubr.f32.gmra.mrb[0].mxu0 %v531
    %v1260 = vpop.f32.mrb[0].mxu0
    %v1261 = vadd.f32 0.0, %v1260
    %v1262 = vpop.f32.mrb[0].mxu0
    %1263 = vmatprep.mubr.f32.mxu0 0.0
    %1264 = vmatmul.mubr.f32.gmra.mrb[0].mxu0 %v534
    %v1265 = vpop.f32.mrb[0].mxu0
    %v1266 = vadd.f32 0.0, %v1265
    %v1267 = vpop.f32.mrb[0].mxu0
    %1268 = vmatprep.mubr.f32.mxu0 0.0
    %1269 = vmatmul.mubr.f32.gmra.mrb[0].mxu0 %v537
    %v1270 = vpop.f32.mrb[0].mxu0
    %v1271 = vadd.f32 0.0, %v1270
    %v1272 = vpop.f32.mrb[0].mxu0
    %1273 = vmatprep.mubr.f32.mxu0 0.0
    %1274 = vmatmul.mubr.f32.gmra.mrb[0].mxu0 %v540
    %v1275 = vpop.f32.mrb[0].mxu0
    %v1276 = vadd.f32 0.0, %v1275
    %v1277 = vpop.f32.mrb[0].mxu0
    %1278 = vmatprep.mubr.f32.mxu0 0.0
    %1279 = vmatmul.mubr.f32.gmra.mrb[0].mxu0 %v543
    %v1280 = vpop.f32.mrb[0].mxu0
    %v1281 = vadd.f32 0.0, %v1280
    %v1282 = vpop.f32.mrb[0].mxu0
    %1283 = vmatprep.mubr.f32.mxu0 0.0
    %1284 = vmatmul.mubr.f32.gmra.mrb[0].mxu0 %v546
    %v1285 = vpop.f32.mrb[0].mxu0
    %v1286 = vadd.f32 0.0, %v1285
    %v1287 = vpop.f32.mrb[0].mxu0
    %1288 = vmatprep.mubr.f32.mxu0 0.0
    %1289 = vmatmul.mubr.f32.gmra.mrb[0].mxu0 %v549
    %v1290 = vpop.f32.mrb[0].mxu0
    %v1291 = vadd.f32 0.0, %v1290
    %v1292 = vpop.f32.mrb[0].mxu0
    %1293 = vmatprep.mubr.f32.mxu0 0.0
    %1294 = vmatmul.mubr.f32.gmra.mrb[0].mxu0 %v552
    %v1295 = vpop.f32.mrb[0].mxu0
    %v1296 = vadd.f32 0.0, %v1295
    %v1297 = vpop.f32.mrb[0].mxu0
    %1298 = vmatprep.mubr.f32.mxu0 0.0
    %1299 = vmatmul.mubr.f32.gmra.mrb[0].mxu0 %v555
    %v1300 = vpop.f32.mrb[0].mxu0
    %v1301 = vadd.f32 0.0, %v1300
    %v1302 = vpop.f32.mrb[0].mxu0
    %1303 = vmatprep.mubr.f32.mxu0 0.0
    %1304 = vmatmul.mubr.f32.gmra.mrb[0].mxu0 %v558
    %v1305 = vpop.f32.mrb[0].mxu0
    %v1306 = vadd.f32 0.0, %v1305
    %v1307 = vpop.f32.mrb[0].mxu0
    %1308 = vmatprep.mubr.f32.mxu0 0.0
    %1309 = vmatmul.mubr.f32.gmra.mrb[0].mxu0 %v561
    %v1310 = vpop.f32.mrb[0].mxu0
    %v1311 = vadd.f32 0.0, %v1310
    %v1312 = vpop.f32.mrb[0].mxu0
    %1313 = vmatprep.mubr.f32.mxu0 0.0
    %1314 = vmatmul.mubr.f32.gmra.mrb[0].mxu0 %v564
    %v1315 = vpop.f32.mrb[0].mxu0
    %v1316 = vadd.f32 0.0, %v1315
    %v1317 = vpop.f32.mrb[0].mxu0
    %1318 = vmatprep.mubr.f32.mxu0 0.0
    %1319 = vmatmul.mubr.f32.gmra.mrb[0].mxu0 %v567
    %v1320 = vpop.f32.mrb[0].mxu0
    %v1321 = vadd.f32 0.0, %v1320
    %v1322 = vpop.f32.mrb[0].mxu0
    %1323 = vmatprep.mubr.f32.mxu0 0.0
    %1324 = vmatmul.mubr.f32.gmra.mrb[0].mxu0 %v570
    %v1325 = vpop.f32.mrb[0].mxu0
    %v1326 = vadd.f32 0.0, %v1325
    %v1327 = vpop.f32.mrb[0].mxu0
    %1328 = vmatprep.mubr.f32.mxu0 0.0
    %1329 = vmatmul.mubr.f32.gmra.mrb[0].mxu0 %v573
    %v1330 = vpop.f32.mrb[0].mxu0
    %v1331 = vadd.f32 0.0, %v1330
    %v1332 = vpop.f32.mrb[0].mxu0
    %1333 = vmatprep.mubr.f32.mxu0 0.0
    %1334 = vmatmul.mubr.f32.gmra.mrb[0].mxu0 %v576
    %v1335 = vpop.f32.mrb[0].mxu0
    %v1336 = vadd.f32 0.0, %v1335
    %v1337 = vpop.f32.mrb[0].mxu0
    %1338 = vmatprep.mubr.f32.mxu0 0.0
    %1339 = vmatmul.mubr.f32.gmra.mrb[0].mxu0 %v579
    %v1340 = vpop.f32.mrb[0].mxu0
    %v1341 = vadd.f32 0.0, %v1340
    %v1342 = vpop.f32.mrb[0].mxu0
    %1343 = vmatprep.mubr.f32.mxu0 0.0
    %1344 = vmatmul.mubr.f32.gmra.mrb[0].mxu0 %v582
    %v1345 = vpop.f32.mrb[0].mxu0
    %v1346 = vadd.f32 0.0, %v1345
    %v1347 = vpop.f32.mrb[0].mxu0
    %1348 = vmatprep.mubr.f32.mxu0 0.0
    %1349 = vmatmul.mubr.f32.gmra.mrb[0].mxu0 %v585
    %v1350 = vpop.f32.mrb[0].mxu0
    %v1351 = vadd.f32 0.0, %v1350
    %v1352 = vpop.f32.mrb[0].mxu0
    %1353 = vmatprep.mubr.f32.mxu0 0.0
    %1354 = vmatmul.mubr.f32.gmra.mrb[0].mxu0 %v588
    %v1355 = vpop.f32.mrb[0].mxu0
    %v1356 = vadd.f32 0.0, %v1355
    %v1357 = vpop.f32.mrb[0].mxu0
    %1358 = vmatprep.mubr.f32.mxu0 0.0
    %1359 = vmatmul.mubr.f32.gmra.mrb[0].mxu0 %v591
    %v1360 = vpop.f32.mrb[0].mxu0
    %v1361 = vadd.f32 0.0, %v1360
    %v1362 = vpop.f32.mrb[0].mxu0
    %1363 = vmatprep.mubr.f32.mxu0 0.0
    %1364 = vmatmul.mubr.f32.gmra.mrb[0].mxu0 %v594
    %v1365 = vpop.f32.mrb[0].mxu0
    %v1366 = vadd.f32 0.0, %v1365
    %v1367 = vpop.f32.mrb[0].mxu0
    %1368 = vmatprep.mubr.f32.mxu0 0.0
    %1369 = vmatmul.mubr.f32.gmra.mrb[0].mxu0 %v597
    %v1370 = vpop.f32.mrb[0].mxu0
    %v1371 = vadd.f32 0.0, %v1370
    %v1372 = vpop.f32.mrb[0].mxu0
    %1373 = vmatprep.mubr.f32.mxu0 0.0
    %1374 = vmatmul.mubr.f32.gmra.mrb[0].mxu0 %v600
    %v1375 = vpop.f32.mrb[0].mxu0
    %v1376 = vadd.f32 0.0, %v1375
    %v1377 = vpop.f32.mrb[0].mxu0
    %1378 = vmatprep.mubr.f32.mxu0 0.0
    %1379 = vmatmul.mubr.f32.gmra.mrb[0].mxu0 %v603
    %v1380 = vpop.f32.mrb[0].mxu0
    %v1381 = vadd.f32 0.0, %v1380
    %v1382 = vpop.f32.mrb[0].mxu0
    %1383 = vmatprep.mubr.f32.mxu0 0.0
    %1384 = vmatmul.mubr.f32.gmra.mrb[0].mxu0 %v606
    %v1385 = vpop.f32.mrb[0].mxu0
    %v1386 = vadd.f32 0.0, %v1385
    %v1387 = vpop.f32.mrb[0].mxu0
    %1388 = vmatprep.mubr.f32.mxu0 0.0
    %1389 = vmatmul.mubr.f32.gmra.mrb[0].mxu0 %v609
    %v1390 = vpop.f32.mrb[0].mxu0
    %v1391 = vadd.f32 0.0, %v1390
    %v1392 = vpop.f32.mrb[0].mxu0
    %1393 = vmatprep.mubr.f32.mxu0 0.0
    %1394 = vmatmul.mubr.f32.gmra.mrb[0].mxu0 %v612
    %v1395 = vpop.f32.mrb[0].mxu0
    %v1396 = vadd.f32 0.0, %v1395
    %v1397 = vpop.f32.mrb[0].mxu0
    %1398 = vdwg.mxu0
    %v1399 = vmax.f32 %v681, %v861
    %v1400 = vmax.f32 %v686, %v866
    %v1401 = vmax.f32 %v691, %v871
    %v1402 = vmax.f32 %v696, %v876
    %v1403 = vmax.f32 %v701, %v881
    %v1404 = vmax.f32 %v706, %v886
    %v1405 = vmax.f32 %v711, %v891
    %v1406 = vmax.f32 %v716, %v896
    %v1407 = vmax.f32 %v721, %v901
    %v1408 = vmax.f32 %v726, %v906
    %v1409 = vmax.f32 %v731, %v911
    %v1410 = vmax.f32 %v736, %v916
    %v1411 = vmax.f32 %v741, %v921
    %v1412 = vmax.f32 %v746, %v926
    %v1413 = vmax.f32 %v751, %v931
    %v1414 = vmax.f32 %v756, %v936
    %v1415 = vmax.f32 %v761, %v941
    %v1416 = vmax.f32 %v766, %v946
    %v1417 = vmax.f32 %v771, %v951
    %v1418 = vmax.f32 %v776, %v956
    %v1419 = vmax.f32 %v781, %v961
    %v1420 = vmax.f32 %v786, %v966
    %v1421 = vmax.f32 %v791, %v971
    %v1422 = vmax.f32 %v796, %v976
    %v1423 = vmax.f32 %v801, %v981
    %v1424 = vmax.f32 %v806, %v986
    %v1425 = vmax.f32 %v811, %v991
    %v1426 = vmax.f32 %v816, %v996
    %v1427 = vmax.f32 %v821, %v1001
    %v1428 = vmax.f32 %v826, %v1006
    %v1429 = vmax.f32 %v831, %v1011
    %v1430 = vmax.f32 %v836, %v1016
    %v1431 = vmax.f32 %v841, %v1021
    %v1432 = vmax.f32 %v846, %v1026
    %v1433 = vmax.f32 %v851, %v1031
    %v1434 = vmax.f32 %v856, %v1036
    %v1435 = vmax.f32 %v1041, %v1221
    %v1436 = vmax.f32 %v1046, %v1226
    %v1437 = vmax.f32 %v1051, %v1231
    %v1438 = vmax.f32 %v1056, %v1236
    %v1439 = vmax.f32 %v1061, %v1241
    %v1440 = vmax.f32 %v1066, %v1246
    %v1441 = vmax.f32 %v1071, %v1251
    %v1442 = vmax.f32 %v1076, %v1256
    %v1443 = vmax.f32 %v1081, %v1261
    %v1444 = vmax.f32 %v1086, %v1266
    %v1445 = vmax.f32 %v1091, %v1271
    %v1446 = vmax.f32 %v1096, %v1276
    %v1447 = vmax.f32 %v1101, %v1281
    %v1448 = vmax.f32 %v1106, %v1286
    %v1449 = vmax.f32 %v1111, %v1291
    %v1450 = vmax.f32 %v1116, %v1296
    %v1451 = vmax.f32 %v1121, %v1301
    %v1452 = vmax.f32 %v1126, %v1306
    %v1453 = vmax.f32 %v1131, %v1311
    %v1454 = vmax.f32 %v1136, %v1316
    %v1455 = vmax.f32 %v1141, %v1321
    %v1456 = vmax.f32 %v1146, %v1326
    %v1457 = vmax.f32 %v1151, %v1331
    %v1458 = vmax.f32 %v1156, %v1336
    %v1459 = vmax.f32 %v1161, %v1341
    %v1460 = vmax.f32 %v1166, %v1346
    %v1461 = vmax.f32 %v1171, %v1351
    %v1462 = vmax.f32 %v1176, %v1356
    %v1463 = vmax.f32 %v1181, %v1361
    %v1464 = vmax.f32 %v1186, %v1366
    %v1465 = vmax.f32 %v1191, %v1371
    %v1466 = vmax.f32 %v1196, %v1376
    %v1467 = vmax.f32 %v1201, %v1381
    %v1468 = vmax.f32 %v1206, %v1386
    %v1469 = vmax.f32 %v1211, %v1391
    %v1470 = vmax.f32 %v1216, %v1396
    %v1471 = vmax.f32 %v1399, %v1435
    %v1472 = vmax.f32 %v1400, %v1436
    %v1473 = vmax.f32 %v1401, %v1437
    %v1474 = vmax.f32 %v1402, %v1438
    %v1475 = vmax.f32 %v1403, %v1439
    %v1476 = vmax.f32 %v1404, %v1440
    %v1477 = vmax.f32 %v1405, %v1441
    %v1478 = vmax.f32 %v1406, %v1442
    %v1479 = vmax.f32 %v1407, %v1443
    %v1480 = vmax.f32 %v1408, %v1444
    %v1481 = vmax.f32 %v1409, %v1445
    %v1482 = vmax.f32 %v1410, %v1446
    %v1483 = vmax.f32 %v1411, %v1447
    %v1484 = vmax.f32 %v1412, %v1448
    %v1485 = vmax.f32 %v1413, %v1449
    %v1486 = vmax.f32 %v1414, %v1450
    %v1487 = vmax.f32 %v1415, %v1451
    %v1488 = vmax.f32 %v1416, %v1452
    %v1489 = vmax.f32 %v1417, %v1453
    %v1490 = vmax.f32 %v1418, %v1454
    %v1491 = vmax.f32 %v1419, %v1455
    %v1492 = vmax.f32 %v1420, %v1456
    %v1493 = vmax.f32 %v1421, %v1457
    %v1494 = vmax.f32 %v1422, %v1458
    %v1495 = vmax.f32 %v1423, %v1459
    %v1496 = vmax.f32 %v1424, %v1460
    %v1497 = vmax.f32 %v1425, %v1461
    %v1498 = vmax.f32 %v1426, %v1462
    %v1499 = vmax.f32 %v1427, %v1463
    %v1500 = vmax.f32 %v1428, %v1464
    %v1501 = vmax.f32 %v1429, %v1465
    %v1502 = vmax.f32 %v1430, %v1466
    %v1503 = vmax.f32 %v1431, %v1467
    %v1504 = vmax.f32 %v1432, %v1468
    %v1505 = vmax.f32 %v1433, %v1469
    %v1506 = vmax.f32 %v1434, %v1470
    %v1507 = vld [vmem:[%s2] sm:$0x1]
    %v1509 = vlaneseq
    %v1510 = vshrl.u32 %v1509, 7
    %v1511 = vsub.s32 0, %v1510
    %v1512 = vrot.slane %v1507, %v1511
    %v1514 = vadd.f32 %v1471, %v1512
    %v1515 = vadd.f32 %v1472, %v1512
    %v1516 = vadd.f32 %v1473, %v1512
    %v1517 = vadd.f32 %v1474, %v1512
    %v1518 = vadd.f32 %v1475, %v1512
    %v1519 = vadd.f32 %v1476, %v1512
    %v1520 = vadd.f32 %v1477, %v1512
    %v1521 = vadd.f32 %v1478, %v1512
    %v1522 = vadd.f32 %v1479, %v1512
    %v1523 = vadd.f32 %v1480, %v1512
    %v1524 = vadd.f32 %v1481, %v1512
    %v1525 = vadd.f32 %v1482, %v1512
    %v1526 = vadd.f32 %v1483, %v1512
    %v1527 = vadd.f32 %v1484, %v1512
    %v1528 = vadd.f32 %v1485, %v1512
    %v1529 = vadd.f32 %v1486, %v1512
    %v1530 = vadd.f32 %v1487, %v1512
    %v1531 = vadd.f32 %v1488, %v1512
    %v1532 = vadd.f32 %v1489, %v1512
    %v1533 = vadd.f32 %v1490, %v1512
    %v1534 = vadd.f32 %v1491, %v1512
    %v1535 = vadd.f32 %v1492, %v1512
    %v1536 = vadd.f32 %v1493, %v1512
    %v1537 = vadd.f32 %v1494, %v1512
    %v1538 = vadd.f32 %v1495, %v1512
    %v1539 = vadd.f32 %v1496, %v1512
    %v1540 = vadd.f32 %v1497, %v1512
    %v1541 = vadd.f32 %v1498, %v1512
    %v1542 = vadd.f32 %v1499, %v1512
    %v1543 = vadd.f32 %v1500, %v1512
    %v1544 = vadd.f32 %v1501, %v1512
    %v1545 = vadd.f32 %v1502, %v1512
    %v1546 = vadd.f32 %v1503, %v1512
    %v1547 = vadd.f32 %v1504, %v1512
    %v1548 = vadd.f32 %v1505, %v1512
    %v1549 = vadd.f32 %v1506, %v1512
    %v1550 = vmax.f32 %v1514, 0.0
    %v1551 = vmax.f32 %v1515, 0.0
    %v1552 = vmax.f32 %v1516, 0.0
    %v1553 = vmax.f32 %v1517, 0.0
    %v1554 = vmax.f32 %v1518, 0.0
    %v1555 = vmax.f32 %v1519, 0.0
    %v1556 = vmax.f32 %v1520, 0.0
    %v1557 = vmax.f32 %v1521, 0.0
    %v1558 = vmax.f32 %v1522, 0.0
    %v1559 = vmax.f32 %v1523, 0.0
    %v1560 = vmax.f32 %v1524, 0.0
    %v1561 = vmax.f32 %v1525, 0.0
    %v1562 = vmax.f32 %v1526, 0.0
    %v1563 = vmax.f32 %v1527, 0.0
    %v1564 = vmax.f32 %v1528, 0.0
    %v1565 = vmax.f32 %v1529, 0.0
    %v1566 = vmax.f32 %v1530, 0.0
    %v1567 = vmax.f32 %v1531, 0.0
    %v1568 = vmax.f32 %v1532, 0.0
    %v1569 = vmax.f32 %v1533, 0.0
    %v1570 = vmax.f32 %v1534, 0.0
    %v1571 = vmax.f32 %v1535, 0.0
    %v1572 = vmax.f32 %v1536, 0.0
    %v1573 = vmax.f32 %v1537, 0.0
    %v1574 = vmax.f32 %v1538, 0.0
    %v1575 = vmax.f32 %v1539, 0.0
    %v1576 = vmax.f32 %v1540, 0.0
    %v1577 = vmax.f32 %v1541, 0.0
    %v1578 = vmax.f32 %v1542, 0.0
    %v1579 = vmax.f32 %v1543, 0.0
    %v1580 = vmax.f32 %v1544, 0.0
    %v1581 = vmax.f32 %v1545, 0.0
    %v1582 = vmax.f32 %v1546, 0.0
    %v1583 = vmax.f32 %v1547, 0.0
    %v1584 = vmax.f32 %v1548, 0.0
    %v1585 = vmax.f32 %v1549, 0.0
    %v1586 = vld [vmem:[%s3] sm:$0xff]
    %v1587 = vld [vmem:[%s3 + $0x8] sm:$0xff]
    %v1588 = vld [vmem:[%s3 + $0x10] sm:$0xff]
    %v1589 = vld [vmem:[%s3 + $0x18] sm:$0xff]
    %s1590 = scalar_lea.vmem %s3, 160
    %v1591 = vld [vmem:[%s1590] sm:$0xff]
    %v1592 = vld [vmem:[%s1590 + $0x8] sm:$0xff]
    %v1593 = vld [vmem:[%s1590 + $0x10] sm:$0xff]
    %v1594 = vld [vmem:[%s1590 + $0x18] sm:$0xff]
    %v1596 = vsel %vm181, %v1553, 0
    %v1599 = vsel %vm181, %v1554, 0
    %v1602 = vsel %vm181, %v1556, 0
    %v1605 = vsel %vm181, %v1557, 0
    %v1608 = vsel %vm181, %v1559, 0
    %v1611 = vsel %vm181, %v1560, 0
    %v1614 = vsel %vm181, %v1562, 0
    %v1617 = vsel %vm181, %v1563, 0
    %v1620 = vsel %vm181, %v1565, 0
    %v1623 = vsel %vm181, %v1566, 0
    %v1626 = vsel %vm181, %v1568, 0
    %v1629 = vsel %vm181, %v1569, 0
    %v1632 = vsel %vm181, %v1571, 0
    %v1635 = vsel %vm181, %v1572, 0
    %v1638 = vsel %vm181, %v1574, 0
    %v1641 = vsel %vm181, %v1575, 0
    %1643 = vmatprep.subr.mxu0 0.0
    %1644 = vmatpush1.msra.mxu0 %v1591
    %1645 = vmatprep.subr.mxu0 0.0
    %1646 = vmatpush1.msra.mxu0 %v1592
    %1647 = vmatprep.subr.mxu0 0.0
    %1648 = vmatpush1.msra.mxu0 %v1593
    %1649 = vmatprep.subr.mxu0 0.0
    %1650 = vmatpush1.msra.mxu0 %v1594
    %1651 = vmatprep.subr.mxu0 0.0
    %1652 = vmatpush1.msra.mxu0 0.0
    %1653 = vmatprep.subr.mxu0 0.0
    %1654 = vmatpush1.msra.mxu0 0.0
    %1655 = vmatprep.subr.mxu0 0.0
    %1656 = vmatpush1.msra.mxu0 0.0
    %1657 = vmatprep.subr.mxu0 0.0
    %1658 = vmatpush1.msra.mxu0 0.0
    %1659 = vmatprep.subr.mxu0 0.0
    %1660 = vmatpush1.msra.mxu0 0.0
    %1661 = vmatprep.subr.mxu0 0.0
    %1662 = vmatpush1.msra.mxu0 0.0
    %1663 = vmatprep.subr.mxu0 0.0
    %1664 = vmatpush1.msra.mxu0 0.0
    %1665 = vmatprep.subr.mxu0 0.0
    %1666 = vmatpush1.msra.mxu0 0.0
    %1667 = vmatprep.subr.mxu0 0.0
    %1668 = vmatpush1.msra.mxu0 0.0
    %1669 = vmatprep.subr.mxu0 0.0
    %1670 = vmatpush1.msra.mxu0 0.0
    %1671 = vmatprep.subr.mxu0 0.0
    %1672 = vmatpush1.msra.mxu0 0.0
    %1673 = vmatprep.subr.mxu0 0.0
    %1674 = vmatpush1.msra.mxu0 0.0
    %1675 = vmatprep.subr.mxu0 0.0
    %1676 = vmatpush1.msra.mxu0 0.0
    %1677 = vmatprep.subr.mxu0 0.0
    %1678 = vmatpush1.msra.mxu0 0.0
    %1679 = vmatprep.subr.mxu0 0.0
    %1680 = vmatpush1.msra.mxu0 0.0
    %1681 = vmatprep.subr.mxu0 0.0
    %1682 = vmatpush1.msra.mxu0 0.0
    %1683 = vmatprep.subr.mxu0 0.0
    %1684 = vmatpush1.msra.mxu0 0.0
    %1685 = vmatprep.subr.mxu0 0.0
    %1686 = vmatpush1.msra.mxu0 0.0
    %1687 = vmatprep.subr.mxu0 0.0
    %1688 = vmatpush1.msra.mxu0 0.0
    %1689 = vmatprep.subr.mxu0 0.0
    %1690 = vmatpush1.msra.mxu0 0.0
    %1691 = vmatprep.subr.mxu0 0.0
    %1692 = vmatpush1.msra.mxu0 0.0
    %1693 = vmatprep.subr.mxu0 0.0
    %1694 = vmatpush1.msra.mxu0 0.0
    %1695 = vmatprep.subr.mxu0 0.0
    %1696 = vmatpush1.msra.mxu0 0.0
    %1697 = vmatprep.subr.mxu0 0.0
    %1698 = vmatpush1.msra.mxu0 0.0
    %1699 = vmatprep.subr.mxu0 0.0
    %1700 = vmatpush1.msra.mxu0 0.0
    %1701 = vmatprep.subr.mxu0 0.0
    %1702 = vmatpush1.msra.mxu0 0.0
    %1703 = vmatprep.subr.mxu0 0.0
    %1704 = vmatpush1.msra.mxu0 0.0
    %1705 = vmatprep.subr.mxu0 0.0
    %1706 = vmatpush1.msra.mxu0 0.0
    %1707 = vmatprep.mubr.f32.mxu0 0.0
    %1708 = vmatmul.mubr.f32.gmra.mrb[0].mxu0 %v1596
    %v1709 = vpop.f32.mrb[0].mxu0
    %v1710 = vadd.f32 0.0, %v1709
    %v1711 = vpop.f32.mrb[0].mxu0
    %1712 = vmatprep.mubr.f32.mxu0 0.0
    %1713 = vmatmul.mubr.f32.gmra.mrb[0].mxu0 %v1599
    %v1714 = vpop.f32.mrb[0].mxu0
    %v1715 = vadd.f32 0.0, %v1714
    %v1716 = vpop.f32.mrb[0].mxu0
    %1717 = vmatprep.mubr.f32.mxu0 0.0
    %1718 = vmatmul.mubr.f32.gmra.mrb[0].mxu0 %v1602
    %v1719 = vpop.f32.mrb[0].mxu0
    %v1720 = vadd.f32 0.0, %v1719
    %v1721 = vpop.f32.mrb[0].mxu0
    %1722 = vmatprep.mubr.f32.mxu0 0.0
    %1723 = vmatmul.mubr.f32.gmra.mrb[0].mxu0 %v1605
    %v1724 = vpop.f32.mrb[0].mxu0
    %v1725 = vadd.f32 0.0, %v1724
    %v1726 = vpop.f32.mrb[0].mxu0
    %1727 = vmatprep.mubr.f32.mxu0 0.0
    %1728 = vmatmul.mubr.f32.gmra.mrb[0].mxu0 %v1608
    %v1729 = vpop.f32.mrb[0].mxu0
    %v1730 = vadd.f32 0.0, %v1729
    %v1731 = vpop.f32.mrb[0].mxu0
    %1732 = vmatprep.mubr.f32.mxu0 0.0
    %1733 = vmatmul.mubr.f32.gmra.mrb[0].mxu0 %v1611
    %v1734 = vpop.f32.mrb[0].mxu0
    %v1735 = vadd.f32 0.0, %v1734
    %v1736 = vpop.f32.mrb[0].mxu0
    %1737 = vmatprep.mubr.f32.mxu0 0.0
    %1738 = vmatmul.mubr.f32.gmra.mrb[0].mxu0 %v1614
    %v1739 = vpop.f32.mrb[0].mxu0
    %v1740 = vadd.f32 0.0, %v1739
    %v1741 = vpop.f32.mrb[0].mxu0
    %1742 = vmatprep.mubr.f32.mxu0 0.0
    %1743 = vmatmul.mubr.f32.gmra.mrb[0].mxu0 %v1617
    %v1744 = vpop.f32.mrb[0].mxu0
    %v1745 = vadd.f32 0.0, %v1744
    %v1746 = vpop.f32.mrb[0].mxu0
    %1747 = vmatprep.mubr.f32.mxu0 0.0
    %1748 = vmatmul.mubr.f32.gmra.mrb[0].mxu0 %v1620
    %v1749 = vpop.f32.mrb[0].mxu0
    %v1750 = vadd.f32 0.0, %v1749
    %v1751 = vpop.f32.mrb[0].mxu0
    %1752 = vmatprep.mubr.f32.mxu0 0.0
    %1753 = vmatmul.mubr.f32.gmra.mrb[0].mxu0 %v1623
    %v1754 = vpop.f32.mrb[0].mxu0
    %v1755 = vadd.f32 0.0, %v1754
    %v1756 = vpop.f32.mrb[0].mxu0
    %1757 = vmatprep.mubr.f32.mxu0 0.0
    %1758 = vmatmul.mubr.f32.gmra.mrb[0].mxu0 %v1626
    %v1759 = vpop.f32.mrb[0].mxu0
    %v1760 = vadd.f32 0.0, %v1759
    %v1761 = vpop.f32.mrb[0].mxu0
    %1762 = vmatprep.mubr.f32.mxu0 0.0
    %1763 = vmatmul.mubr.f32.gmra.mrb[0].mxu0 %v1629
    %v1764 = vpop.f32.mrb[0].mxu0
    %v1765 = vadd.f32 0.0, %v1764
    %v1766 = vpop.f32.mrb[0].mxu0
    %1767 = vmatprep.mubr.f32.mxu0 0.0
    %1768 = vmatmul.mubr.f32.gmra.mrb[0].mxu0 %v1632
    %v1769 = vpop.f32.mrb[0].mxu0
    %v1770 = vadd.f32 0.0, %v1769
    %v1771 = vpop.f32.mrb[0].mxu0
    %1772 = vmatprep.mubr.f32.mxu0 0.0
    %1773 = vmatmul.mubr.f32.gmra.mrb[0].mxu0 %v1635
    %v1774 = vpop.f32.mrb[0].mxu0
    %v1775 = vadd.f32 0.0, %v1774
    %v1776 = vpop.f32.mrb[0].mxu0
    %1777 = vmatprep.mubr.f32.mxu0 0.0
    %1778 = vmatmul.mubr.f32.gmra.mrb[0].mxu0 %v1638
    %v1779 = vpop.f32.mrb[0].mxu0
    %v1780 = vadd.f32 0.0, %v1779
    %v1781 = vpop.f32.mrb[0].mxu0
    %1782 = vmatprep.mubr.f32.mxu0 0.0
    %1783 = vmatmul.mubr.f32.gmra.mrb[0].mxu0 %v1641
    %v1784 = vpop.f32.mrb[0].mxu0
    %v1785 = vadd.f32 0.0, %v1784
    %v1786 = vpop.f32.mrb[0].mxu0
    %1787 = vdwg.mxu0
    %v1789 = vsel %vm181, %v1550, 0
    %v1792 = vsel %vm181, %v1551, 0
    %1794 = vmatprep.subr.mxu0 0.0
    %1795 = vmatpush1.msra.mxu0 %v1586
    %1796 = vmatprep.subr.mxu0 0.0
    %1797 = vmatpush1.msra.mxu0 %v1587
    %1798 = vmatprep.subr.mxu0 0.0
    %1799 = vmatpush1.msra.mxu0 %v1588
    %1800 = vmatprep.subr.mxu0 0.0
    %1801 = vmatpush1.msra.mxu0 %v1589
    %1802 = vmatprep.subr.mxu0 0.0
    %1803 = vmatpush1.msra.mxu0 0.0
    %1804 = vmatprep.subr.mxu0 0.0
    %1805 = vmatpush1.msra.mxu0 0.0
    %1806 = vmatprep.subr.mxu0 0.0
    %1807 = vmatpush1.msra.mxu0 0.0
    %1808 = vmatprep.subr.mxu0 0.0
    %1809 = vmatpush1.msra.mxu0 0.0
    %1810 = vmatprep.subr.mxu0 0.0
    %1811 = vmatpush1.msra.mxu0 0.0
    %1812 = vmatprep.subr.mxu0 0.0
    %1813 = vmatpush1.msra.mxu0 0.0
    %1814 = vmatprep.subr.mxu0 0.0
    %1815 = vmatpush1.msra.mxu0 0.0
    %1816 = vmatprep.subr.mxu0 0.0
    %1817 = vmatpush1.msra.mxu0 0.0
    %1818 = vmatprep.subr.mxu0 0.0
    %1819 = vmatpush1.msra.mxu0 0.0
    %1820 = vmatprep.subr.mxu0 0.0
    %1821 = vmatpush1.msra.mxu0 0.0
    %1822 = vmatprep.subr.mxu0 0.0
    %1823 = vmatpush1.msra.mxu0 0.0
    %1824 = vmatprep.subr.mxu0 0.0
    %1825 = vmatpush1.msra.mxu0 0.0
    %1826 = vmatprep.subr.mxu0 0.0
    %1827 = vmatpush1.msra.mxu0 0.0
    %1828 = vmatprep.subr.mxu0 0.0
    %1829 = vmatpush1.msra.mxu0 0.0
    %1830 = vmatprep.subr.mxu0 0.0
    %1831 = vmatpush1.msra.mxu0 0.0
    %1832 = vmatprep.subr.mxu0 0.0
    %1833 = vmatpush1.msra.mxu0 0.0
    %1834 = vmatprep.subr.mxu0 0.0
    %1835 = vmatpush1.msra.mxu0 0.0
    %1836 = vmatprep.subr.mxu0 0.0
    %1837 = vmatpush1.msra.mxu0 0.0
    %1838 = vmatprep.subr.mxu0 0.0
    %1839 = vmatpush1.msra.mxu0 0.0
    %1840 = vmatprep.subr.mxu0 0.0
    %1841 = vmatpush1.msra.mxu0 0.0
    %1842 = vmatprep.subr.mxu0 0.0
    %1843 = vmatpush1.msra.mxu0 0.0
    %1844 = vmatprep.subr.mxu0 0.0
    %1845 = vmatpush1.msra.mxu0 0.0
    %1846 = vmatprep.subr.mxu0 0.0
    %1847 = vmatpush1.msra.mxu0 0.0
    %1848 = vmatprep.subr.mxu0 0.0
    %1849 = vmatpush1.msra.mxu0 0.0
    %1850 = vmatprep.subr.mxu0 0.0
    %1851 = vmatpush1.msra.mxu0 0.0
    %1852 = vmatprep.subr.mxu0 0.0
    %1853 = vmatpush1.msra.mxu0 0.0
    %1854 = vmatprep.subr.mxu0 0.0
    %1855 = vmatpush1.msra.mxu0 0.0
    %1856 = vmatprep.subr.mxu0 0.0
    %1857 = vmatpush1.msra.mxu0 0.0
    %1858 = vmatprep.mubr.f32.mxu0 0.0
    %1859 = vmatmul.mubr.f32.gmra.mrb[0].mxu0 %v1789
    %v1860 = vpop.f32.mrb[0].mxu0
    %v1861 = vadd.f32 %v1710, %v1860
    %v1862 = vpop.f32.mrb[0].mxu0
    %1863 = vmatprep.mubr.f32.mxu0 0.0
    %1864 = vmatmul.mubr.f32.gmra.mrb[0].mxu0 %v1792
    %v1865 = vpop.f32.mrb[0].mxu0
    %v1866 = vadd.f32 %v1715, %v1865
    %v1867 = vpop.f32.mrb[0].mxu0
    %1868 = vmatprep.mubr.f32.mxu0 0.0
    %1869 = vmatmul.mubr.f32.gmra.mrb[0].mxu0 %v1596
    %v1870 = vpop.f32.mrb[0].mxu0
    %v1871 = vadd.f32 %v1720, %v1870
    %v1872 = vpop.f32.mrb[0].mxu0
    %1873 = vmatprep.mubr.f32.mxu0 0.0
    %1874 = vmatmul.mubr.f32.gmra.mrb[0].mxu0 %v1599
    %v1875 = vpop.f32.mrb[0].mxu0
    %v1876 = vadd.f32 %v1725, %v1875
    %v1877 = vpop.f32.mrb[0].mxu0
    %1878 = vmatprep.mubr.f32.mxu0 0.0
    %1879 = vmatmul.mubr.f32.gmra.mrb[0].mxu0 %v1602
    %v1880 = vpop.f32.mrb[0].mxu0
    %v1881 = vadd.f32 %v1730, %v1880
    %v1882 = vpop.f32.mrb[0].mxu0
    %1883 = vmatprep.mubr.f32.mxu0 0.0
    %1884 = vmatmul.mubr.f32.gmra.mrb[0].mxu0 %v1605
    %v1885 = vpop.f32.mrb[0].mxu0
    %v1886 = vadd.f32 %v1735, %v1885
    %v1887 = vpop.f32.mrb[0].mxu0
    %1888 = vmatprep.mubr.f32.mxu0 0.0
    %1889 = vmatmul.mubr.f32.gmra.mrb[0].mxu0 %v1608
    %v1890 = vpop.f32.mrb[0].mxu0
    %v1891 = vadd.f32 %v1740, %v1890
    %v1892 = vpop.f32.mrb[0].mxu0
    %1893 = vmatprep.mubr.f32.mxu0 0.0
    %1894 = vmatmul.mubr.f32.gmra.mrb[0].mxu0 %v1611
    %v1895 = vpop.f32.mrb[0].mxu0
    %v1896 = vadd.f32 %v1745, %v1895
    %v1897 = vpop.f32.mrb[0].mxu0
    %1898 = vmatprep.mubr.f32.mxu0 0.0
    %1899 = vmatmul.mubr.f32.gmra.mrb[0].mxu0 %v1614
    %v1900 = vpop.f32.mrb[0].mxu0
    %v1901 = vadd.f32 %v1750, %v1900
    %v1902 = vpop.f32.mrb[0].mxu0
    %1903 = vmatprep.mubr.f32.mxu0 0.0
    %1904 = vmatmul.mubr.f32.gmra.mrb[0].mxu0 %v1617
    %v1905 = vpop.f32.mrb[0].mxu0
    %v1906 = vadd.f32 %v1755, %v1905
    %v1907 = vpop.f32.mrb[0].mxu0
    %1908 = vmatprep.mubr.f32.mxu0 0.0
    %1909 = vmatmul.mubr.f32.gmra.mrb[0].mxu0 %v1620
    %v1910 = vpop.f32.mrb[0].mxu0
    %v1911 = vadd.f32 %v1760, %v1910
    %v1912 = vpop.f32.mrb[0].mxu0
    %1913 = vmatprep.mubr.f32.mxu0 0.0
    %1914 = vmatmul.mubr.f32.gmra.mrb[0].mxu0 %v1623
    %v1915 = vpop.f32.mrb[0].mxu0
    %v1916 = vadd.f32 %v1765, %v1915
    %v1917 = vpop.f32.mrb[0].mxu0
    %1918 = vmatprep.mubr.f32.mxu0 0.0
    %1919 = vmatmul.mubr.f32.gmra.mrb[0].mxu0 %v1626
    %v1920 = vpop.f32.mrb[0].mxu0
    %v1921 = vadd.f32 %v1770, %v1920
    %v1922 = vpop.f32.mrb[0].mxu0
    %1923 = vmatprep.mubr.f32.mxu0 0.0
    %1924 = vmatmul.mubr.f32.gmra.mrb[0].mxu0 %v1629
    %v1925 = vpop.f32.mrb[0].mxu0
    %v1926 = vadd.f32 %v1775, %v1925
    %v1927 = vpop.f32.mrb[0].mxu0
    %1928 = vmatprep.mubr.f32.mxu0 0.0
    %1929 = vmatmul.mubr.f32.gmra.mrb[0].mxu0 %v1632
    %v1930 = vpop.f32.mrb[0].mxu0
    %v1931 = vadd.f32 %v1780, %v1930
    %v1932 = vpop.f32.mrb[0].mxu0
    %1933 = vmatprep.mubr.f32.mxu0 0.0
    %1934 = vmatmul.mubr.f32.gmra.mrb[0].mxu0 %v1635
    %v1935 = vpop.f32.mrb[0].mxu0
    %v1936 = vadd.f32 %v1785, %v1935
    %v1937 = vpop.f32.mrb[0].mxu0
    %1938 = vdwg.mxu0
    %s1939 = scalar_lea.vmem %s3, 320
    %v1940 = vld [vmem:[%s1939] sm:$0xff]
    %v1941 = vld [vmem:[%s1939 + $0x8] sm:$0xff]
    %v1942 = vld [vmem:[%s1939 + $0x10] sm:$0xff]
    %v1943 = vld [vmem:[%s1939 + $0x18] sm:$0xff]
    %v1945 = vsel %vm181, %v1577, 0
    %v1948 = vsel %vm181, %v1578, 0
    %1950 = vmatprep.subr.mxu0 0.0
    %1951 = vmatpush1.msra.mxu0 %v1940
    %1952 = vmatprep.subr.mxu0 0.0
    %1953 = vmatpush1.msra.mxu0 %v1941
    %1954 = vmatprep.subr.mxu0 0.0
    %1955 = vmatpush1.msra.mxu0 %v1942
    %1956 = vmatprep.subr.mxu0 0.0
    %1957 = vmatpush1.msra.mxu0 %v1943
    %1958 = vmatprep.subr.mxu0 0.0
    %1959 = vmatpush1.msra.mxu0 0.0
    %1960 = vmatprep.subr.mxu0 0.0
    %1961 = vmatpush1.msra.mxu0 0.0
    %1962 = vmatprep.subr.mxu0 0.0
    %1963 = vmatpush1.msra.mxu0 0.0
    %1964 = vmatprep.subr.mxu0 0.0
    %1965 = vmatpush1.msra.mxu0 0.0
    %1966 = vmatprep.subr.mxu0 0.0
    %1967 = vmatpush1.msra.mxu0 0.0
    %1968 = vmatprep.subr.mxu0 0.0
    %1969 = vmatpush1.msra.mxu0 0.0
    %1970 = vmatprep.subr.mxu0 0.0
    %1971 = vmatpush1.msra.mxu0 0.0
    %1972 = vmatprep.subr.mxu0 0.0
    %1973 = vmatpush1.msra.mxu0 0.0
    %1974 = vmatprep.subr.mxu0 0.0
    %1975 = vmatpush1.msra.mxu0 0.0
    %1976 = vmatprep.subr.mxu0 0.0
    %1977 = vmatpush1.msra.mxu0 0.0
    %1978 = vmatprep.subr.mxu0 0.0
    %1979 = vmatpush1.msra.mxu0 0.0
    %1980 = vmatprep.subr.mxu0 0.0
    %1981 = vmatpush1.msra.mxu0 0.0
    %1982 = vmatprep.subr.mxu0 0.0
    %1983 = vmatpush1.msra.mxu0 0.0
    %1984 = vmatprep.subr.mxu0 0.0
    %1985 = vmatpush1.msra.mxu0 0.0
    %1986 = vmatprep.subr.mxu0 0.0
    %1987 = vmatpush1.msra.mxu0 0.0
    %1988 = vmatprep.subr.mxu0 0.0
    %1989 = vmatpush1.msra.mxu0 0.0
    %1990 = vmatprep.subr.mxu0 0.0
    %1991 = vmatpush1.msra.mxu0 0.0
    %1992 = vmatprep.subr.mxu0 0.0
    %1993 = vmatpush1.msra.mxu0 0.0
    %1994 = vmatprep.subr.mxu0 0.0
    %1995 = vmatpush1.msra.mxu0 0.0
    %1996 = vmatprep.subr.mxu0 0.0
    %1997 = vmatpush1.msra.mxu0 0.0
    %1998 = vmatprep.subr.mxu0 0.0
    %1999 = vmatpush1.msra.mxu0 0.0
    %2000 = vmatprep.subr.mxu0 0.0
    %2001 = vmatpush1.msra.mxu0 0.0
    %2002 = vmatprep.subr.mxu0 0.0
    %2003 = vmatpush1.msra.mxu0 0.0
    %2004 = vmatprep.subr.mxu0 0.0
    %2005 = vmatpush1.msra.mxu0 0.0
    %2006 = vmatprep.subr.mxu0 0.0
    %2007 = vmatpush1.msra.mxu0 0.0
    %2008 = vmatprep.subr.mxu0 0.0
    %2009 = vmatpush1.msra.mxu0 0.0
    %2010 = vmatprep.subr.mxu0 0.0
    %2011 = vmatpush1.msra.mxu0 0.0
    %2012 = vmatprep.subr.mxu0 0.0
    %2013 = vmatpush1.msra.mxu0 0.0
    %2014 = vmatprep.mubr.f32.mxu0 0.0
    %2015 = vmatmul.mubr.f32.gmra.mrb[0].mxu0 %v1602
    %v2016 = vpop.f32.mrb[0].mxu0
    %v2017 = vadd.f32 0.0, %v2016
    %v2018 = vpop.f32.mrb[0].mxu0
    %2019 = vmatprep.mubr.f32.mxu0 0.0
    %2020 = vmatmul.mubr.f32.gmra.mrb[0].mxu0 %v1605
    %v2021 = vpop.f32.mrb[0].mxu0
    %v2022 = vadd.f32 0.0, %v2021
    %v2023 = vpop.f32.mrb[0].mxu0
    %2024 = vmatprep.mubr.f32.mxu0 0.0
    %2025 = vmatmul.mubr.f32.gmra.mrb[0].mxu0 %v1608
    %v2026 = vpop.f32.mrb[0].mxu0
    %v2027 = vadd.f32 0.0, %v2026
    %v2028 = vpop.f32.mrb[0].mxu0
    %2029 = vmatprep.mubr.f32.mxu0 0.0
    %2030 = vmatmul.mubr.f32.gmra.mrb[0].mxu0 %v1611
    %v2031 = vpop.f32.mrb[0].mxu0
    %v2032 = vadd.f32 0.0, %v2031
    %v2033 = vpop.f32.mrb[0].mxu0
    %2034 = vmatprep.mubr.f32.mxu0 0.0
    %2035 = vmatmul.mubr.f32.gmra.mrb[0].mxu0 %v1614
    %v2036 = vpop.f32.mrb[0].mxu0
    %v2037 = vadd.f32 0.0, %v2036
    %v2038 = vpop.f32.mrb[0].mxu0
    %2039 = vmatprep.mubr.f32.mxu0 0.0
    %2040 = vmatmul.mubr.f32.gmra.mrb[0].mxu0 %v1617
    %v2041 = vpop.f32.mrb[0].mxu0
    %v2042 = vadd.f32 0.0, %v2041
    %v2043 = vpop.f32.mrb[0].mxu0
    %2044 = vmatprep.mubr.f32.mxu0 0.0
    %2045 = vmatmul.mubr.f32.gmra.mrb[0].mxu0 %v1620
    %v2046 = vpop.f32.mrb[0].mxu0
    %v2047 = vadd.f32 0.0, %v2046
    %v2048 = vpop.f32.mrb[0].mxu0
    %2049 = vmatprep.mubr.f32.mxu0 0.0
    %2050 = vmatmul.mubr.f32.gmra.mrb[0].mxu0 %v1623
    %v2051 = vpop.f32.mrb[0].mxu0
    %v2052 = vadd.f32 0.0, %v2051
    %v2053 = vpop.f32.mrb[0].mxu0
    %2054 = vmatprep.mubr.f32.mxu0 0.0
    %2055 = vmatmul.mubr.f32.gmra.mrb[0].mxu0 %v1626
    %v2056 = vpop.f32.mrb[0].mxu0
    %v2057 = vadd.f32 0.0, %v2056
    %v2058 = vpop.f32.mrb[0].mxu0
    %2059 = vmatprep.mubr.f32.mxu0 0.0
    %2060 = vmatmul.mubr.f32.gmra.mrb[0].mxu0 %v1629
    %v2061 = vpop.f32.mrb[0].mxu0
    %v2062 = vadd.f32 0.0, %v2061
    %v2063 = vpop.f32.mrb[0].mxu0
    %2064 = vmatprep.mubr.f32.mxu0 0.0
    %2065 = vmatmul.mubr.f32.gmra.mrb[0].mxu0 %v1632
    %v2066 = vpop.f32.mrb[0].mxu0
    %v2067 = vadd.f32 0.0, %v2066
    %v2068 = vpop.f32.mrb[0].mxu0
    %2069 = vmatprep.mubr.f32.mxu0 0.0
    %2070 = vmatmul.mubr.f32.gmra.mrb[0].mxu0 %v1635
    %v2071 = vpop.f32.mrb[0].mxu0
    %v2072 = vadd.f32 0.0, %v2071
    %v2073 = vpop.f32.mrb[0].mxu0
    %2074 = vmatprep.mubr.f32.mxu0 0.0
    %2075 = vmatmul.mubr.f32.gmra.mrb[0].mxu0 %v1638
    %v2076 = vpop.f32.mrb[0].mxu0
    %v2077 = vadd.f32 0.0, %v2076
    %v2078 = vpop.f32.mrb[0].mxu0
    %2079 = vmatprep.mubr.f32.mxu0 0.0
    %2080 = vmatmul.mubr.f32.gmra.mrb[0].mxu0 %v1641
    %v2081 = vpop.f32.mrb[0].mxu0
    %v2082 = vadd.f32 0.0, %v2081
    %v2083 = vpop.f32.mrb[0].mxu0
    %2084 = vmatprep.mubr.f32.mxu0 0.0
    %2085 = vmatmul.mubr.f32.gmra.mrb[0].mxu0 %v1945
    %v2086 = vpop.f32.mrb[0].mxu0
    %v2087 = vadd.f32 0.0, %v2086
    %v2088 = vpop.f32.mrb[0].mxu0
    %2089 = vmatprep.mubr.f32.mxu0 0.0
    %2090 = vmatmul.mubr.f32.gmra.mrb[0].mxu0 %v1948
    %v2091 = vpop.f32.mrb[0].mxu0
    %v2092 = vadd.f32 0.0, %v2091
    %v2093 = vpop.f32.mrb[0].mxu0
    %2094 = vdwg.mxu0
    %v2095 = vadd.f32 %v1861, %v2017
    %v2096 = vadd.f32 %v1866, %v2022
    %v2097 = vadd.f32 %v1871, %v2027
    %v2098 = vadd.f32 %v1876, %v2032
    %v2099 = vadd.f32 %v1881, %v2037
    %v2100 = vadd.f32 %v1886, %v2042
    %v2101 = vadd.f32 %v1891, %v2047
    %v2102 = vadd.f32 %v1896, %v2052
    %v2103 = vadd.f32 %v1901, %v2057
    %v2104 = vadd.f32 %v1906, %v2062
    %v2105 = vadd.f32 %v1911, %v2067
    %v2106 = vadd.f32 %v1916, %v2072
    %v2107 = vadd.f32 %v1921, %v2077
    %v2108 = vadd.f32 %v1926, %v2082
    %v2109 = vadd.f32 %v1931, %v2087
    %v2110 = vadd.f32 %v1936, %v2092
    %s2111 = scalar_lea.vmem %s3, 480
    %v2112 = vld [vmem:[%s2111] sm:$0xff]
    %v2113 = vld [vmem:[%s2111 + $0x8] sm:$0xff]
    %v2114 = vld [vmem:[%s2111 + $0x10] sm:$0xff]
    %v2115 = vld [vmem:[%s2111 + $0x18] sm:$0xff]
    %v2117 = vsel %vm181, %v1580, 0
    %v2120 = vsel %vm181, %v1581, 0
    %2122 = vmatprep.subr.mxu0 0.0
    %2123 = vmatpush1.msra.mxu0 %v2112
    %2124 = vmatprep.subr.mxu0 0.0
    %2125 = vmatpush1.msra.mxu0 %v2113
    %2126 = vmatprep.subr.mxu0 0.0
    %2127 = vmatpush1.msra.mxu0 %v2114
    %2128 = vmatprep.subr.mxu0 0.0
    %2129 = vmatpush1.msra.mxu0 %v2115
    %2130 = vmatprep.subr.mxu0 0.0
    %2131 = vmatpush1.msra.mxu0 0.0
    %2132 = vmatprep.subr.mxu0 0.0
    %2133 = vmatpush1.msra.mxu0 0.0
    %2134 = vmatprep.subr.mxu0 0.0
    %2135 = vmatpush1.msra.mxu0 0.0
    %2136 = vmatprep.subr.mxu0 0.0
    %2137 = vmatpush1.msra.mxu0 0.0
    %2138 = vmatprep.subr.mxu0 0.0
    %2139 = vmatpush1.msra.mxu0 0.0
    %2140 = vmatprep.subr.mxu0 0.0
    %2141 = vmatpush1.msra.mxu0 0.0
    %2142 = vmatprep.subr.mxu0 0.0
    %2143 = vmatpush1.msra.mxu0 0.0
    %2144 = vmatprep.subr.mxu0 0.0
    %2145 = vmatpush1.msra.mxu0 0.0
    %2146 = vmatprep.subr.mxu0 0.0
    %2147 = vmatpush1.msra.mxu0 0.0
    %2148 = vmatprep.subr.mxu0 0.0
    %2149 = vmatpush1.msra.mxu0 0.0
    %2150 = vmatprep.subr.mxu0 0.0
    %2151 = vmatpush1.msra.mxu0 0.0
    %2152 = vmatprep.subr.mxu0 0.0
    %2153 = vmatpush1.msra.mxu0 0.0
    %2154 = vmatprep.subr.mxu0 0.0
    %2155 = vmatpush1.msra.mxu0 0.0
    %2156 = vmatprep.subr.mxu0 0.0
    %2157 = vmatpush1.msra.mxu0 0.0
    %2158 = vmatprep.subr.mxu0 0.0
    %2159 = vmatpush1.msra.mxu0 0.0
    %2160 = vmatprep.subr.mxu0 0.0
    %2161 = vmatpush1.msra.mxu0 0.0
    %2162 = vmatprep.subr.mxu0 0.0
    %2163 = vmatpush1.msra.mxu0 0.0
    %2164 = vmatprep.subr.mxu0 0.0
    %2165 = vmatpush1.msra.mxu0 0.0
    %2166 = vmatprep.subr.mxu0 0.0
    %2167 = vmatpush1.msra.mxu0 0.0
    %2168 = vmatprep.subr.mxu0 0.0
    %2169 = vmatpush1.msra.mxu0 0.0
    %2170 = vmatprep.subr.mxu0 0.0
    %2171 = vmatpush1.msra.mxu0 0.0
    %2172 = vmatprep.subr.mxu0 0.0
    %2173 = vmatpush1.msra.mxu0 0.0
    %2174 = vmatprep.subr.mxu0 0.0
    %2175 = vmatpush1.msra.mxu0 0.0
    %2176 = vmatprep.subr.mxu0 0.0
    %2177 = vmatpush1.msra.mxu0 0.0
    %2178 = vmatprep.subr.mxu0 0.0
    %2179 = vmatpush1.msra.mxu0 0.0
    %2180 = vmatprep.subr.mxu0 0.0
    %2181 = vmatpush1.msra.mxu0 0.0
    %2182 = vmatprep.subr.mxu0 0.0
    %2183 = vmatpush1.msra.mxu0 0.0
    %2184 = vmatprep.subr.mxu0 0.0
    %2185 = vmatpush1.msra.mxu0 0.0
    %2186 = vmatprep.mubr.f32.mxu0 0.0
    %2187 = vmatmul.mubr.f32.gmra.mrb[0].mxu0 %v1608
    %v2188 = vpop.f32.mrb[0].mxu0
    %v2189 = vadd.f32 0.0, %v2188
    %v2190 = vpop.f32.mrb[0].mxu0
    %2191 = vmatprep.mubr.f32.mxu0 0.0
    %2192 = vmatmul.mubr.f32.gmra.mrb[0].mxu0 %v1611
    %v2193 = vpop.f32.mrb[0].mxu0
    %v2194 = vadd.f32 0.0, %v2193
    %v2195 = vpop.f32.mrb[0].mxu0
    %2196 = vmatprep.mubr.f32.mxu0 0.0
    %2197 = vmatmul.mubr.f32.gmra.mrb[0].mxu0 %v1614
    %v2198 = vpop.f32.mrb[0].mxu0
    %v2199 = vadd.f32 0.0, %v2198
    %v2200 = vpop.f32.mrb[0].mxu0
    %2201 = vmatprep.mubr.f32.mxu0 0.0
    %2202 = vmatmul.mubr.f32.gmra.mrb[0].mxu0 %v1617
    %v2203 = vpop.f32.mrb[0].mxu0
    %v2204 = vadd.f32 0.0, %v2203
    %v2205 = vpop.f32.mrb[0].mxu0
    %2206 = vmatprep.mubr.f32.mxu0 0.0
    %2207 = vmatmul.mubr.f32.gmra.mrb[0].mxu0 %v1620
    %v2208 = vpop.f32.mrb[0].mxu0
    %v2209 = vadd.f32 0.0, %v2208
    %v2210 = vpop.f32.mrb[0].mxu0
    %2211 = vmatprep.mubr.f32.mxu0 0.0
    %2212 = vmatmul.mubr.f32.gmra.mrb[0].mxu0 %v1623
    %v2213 = vpop.f32.mrb[0].mxu0
    %v2214 = vadd.f32 0.0, %v2213
    %v2215 = vpop.f32.mrb[0].mxu0
    %2216 = vmatprep.mubr.f32.mxu0 0.0
    %2217 = vmatmul.mubr.f32.gmra.mrb[0].mxu0 %v1626
    %v2218 = vpop.f32.mrb[0].mxu0
    %v2219 = vadd.f32 0.0, %v2218
    %v2220 = vpop.f32.mrb[0].mxu0
    %2221 = vmatprep.mubr.f32.mxu0 0.0
    %2222 = vmatmul.mubr.f32.gmra.mrb[0].mxu0 %v1629
    %v2223 = vpop.f32.mrb[0].mxu0
    %v2224 = vadd.f32 0.0, %v2223
    %v2225 = vpop.f32.mrb[0].mxu0
    %2226 = vmatprep.mubr.f32.mxu0 0.0
    %2227 = vmatmul.mubr.f32.gmra.mrb[0].mxu0 %v1632
    %v2228 = vpop.f32.mrb[0].mxu0
    %v2229 = vadd.f32 0.0, %v2228
    %v2230 = vpop.f32.mrb[0].mxu0
    %2231 = vmatprep.mubr.f32.mxu0 0.0
    %2232 = vmatmul.mubr.f32.gmra.mrb[0].mxu0 %v1635
    %v2233 = vpop.f32.mrb[0].mxu0
    %v2234 = vadd.f32 0.0, %v2233
    %v2235 = vpop.f32.mrb[0].mxu0
    %2236 = vmatprep.mubr.f32.mxu0 0.0
    %2237 = vmatmul.mubr.f32.gmra.mrb[0].mxu0 %v1638
    %v2238 = vpop.f32.mrb[0].mxu0
    %v2239 = vadd.f32 0.0, %v2238
    %v2240 = vpop.f32.mrb[0].mxu0
    %2241 = vmatprep.mubr.f32.mxu0 0.0
    %2242 = vmatmul.mubr.f32.gmra.mrb[0].mxu0 %v1641
    %v2243 = vpop.f32.mrb[0].mxu0
    %v2244 = vadd.f32 0.0, %v2243
    %v2245 = vpop.f32.mrb[0].mxu0
    %2246 = vmatprep.mubr.f32.mxu0 0.0
    %2247 = vmatmul.mubr.f32.gmra.mrb[0].mxu0 %v1945
    %v2248 = vpop.f32.mrb[0].mxu0
    %v2249 = vadd.f32 0.0, %v2248
    %v2250 = vpop.f32.mrb[0].mxu0
    %2251 = vmatprep.mubr.f32.mxu0 0.0
    %2252 = vmatmul.mubr.f32.gmra.mrb[0].mxu0 %v1948
    %v2253 = vpop.f32.mrb[0].mxu0
    %v2254 = vadd.f32 0.0, %v2253
    %v2255 = vpop.f32.mrb[0].mxu0
    %2256 = vmatprep.mubr.f32.mxu0 0.0
    %2257 = vmatmul.mubr.f32.gmra.mrb[0].mxu0 %v2117
    %v2258 = vpop.f32.mrb[0].mxu0
    %v2259 = vadd.f32 0.0, %v2258
    %v2260 = vpop.f32.mrb[0].mxu0
    %2261 = vmatprep.mubr.f32.mxu0 0.0
    %2262 = vmatmul.mubr.f32.gmra.mrb[0].mxu0 %v2120
    %v2263 = vpop.f32.mrb[0].mxu0
    %v2264 = vadd.f32 0.0, %v2263
    %v2265 = vpop.f32.mrb[0].mxu0
    %2266 = vdwg.mxu0
    %v2267 = vadd.f32 %v2095, %v2189
    %v2268 = vadd.f32 %v2096, %v2194
    %v2269 = vadd.f32 %v2097, %v2199
    %v2270 = vadd.f32 %v2098, %v2204
    %v2271 = vadd.f32 %v2099, %v2209
    %v2272 = vadd.f32 %v2100, %v2214
    %v2273 = vadd.f32 %v2101, %v2219
    %v2274 = vadd.f32 %v2102, %v2224
    %v2275 = vadd.f32 %v2103, %v2229
    %v2276 = vadd.f32 %v2104, %v2234
    %v2277 = vadd.f32 %v2105, %v2239
    %v2278 = vadd.f32 %v2106, %v2244
    %v2279 = vadd.f32 %v2107, %v2249
    %v2280 = vadd.f32 %v2108, %v2254
    %v2281 = vadd.f32 %v2109, %v2259
    %v2282 = vadd.f32 %v2110, %v2264
    %s2283 = scalar_lea.vmem %s3, 640
    %v2284 = vld [vmem:[%s2283] sm:$0xff]
    %v2285 = vld [vmem:[%s2283 + $0x8] sm:$0xff]
    %v2286 = vld [vmem:[%s2283 + $0x10] sm:$0xff]
    %v2287 = vld [vmem:[%s2283 + $0x18] sm:$0xff]
    %v2289 = vsel %vm181, %v1583, 0
    %v2292 = vsel %vm181, %v1584, 0
    %2294 = vmatprep.subr.mxu0 0.0
    %2295 = vmatpush1.msra.mxu0 %v2284
    %2296 = vmatprep.subr.mxu0 0.0
    %2297 = vmatpush1.msra.mxu0 %v2285
    %2298 = vmatprep.subr.mxu0 0.0
    %2299 = vmatpush1.msra.mxu0 %v2286
    %2300 = vmatprep.subr.mxu0 0.0
    %2301 = vmatpush1.msra.mxu0 %v2287
    %2302 = vmatprep.subr.mxu0 0.0
    %2303 = vmatpush1.msra.mxu0 0.0
    %2304 = vmatprep.subr.mxu0 0.0
    %2305 = vmatpush1.msra.mxu0 0.0
    %2306 = vmatprep.subr.mxu0 0.0
    %2307 = vmatpush1.msra.mxu0 0.0
    %2308 = vmatprep.subr.mxu0 0.0
    %2309 = vmatpush1.msra.mxu0 0.0
    %2310 = vmatprep.subr.mxu0 0.0
    %2311 = vmatpush1.msra.mxu0 0.0
    %2312 = vmatprep.subr.mxu0 0.0
    %2313 = vmatpush1.msra.mxu0 0.0
    %2314 = vmatprep.subr.mxu0 0.0
    %2315 = vmatpush1.msra.mxu0 0.0
    %2316 = vmatprep.subr.mxu0 0.0
    %2317 = vmatpush1.msra.mxu0 0.0
    %2318 = vmatprep.subr.mxu0 0.0
    %2319 = vmatpush1.msra.mxu0 0.0
    %2320 = vmatprep.subr.mxu0 0.0
    %2321 = vmatpush1.msra.mxu0 0.0
    %2322 = vmatprep.subr.mxu0 0.0
    %2323 = vmatpush1.msra.mxu0 0.0
    %2324 = vmatprep.subr.mxu0 0.0
    %2325 = vmatpush1.msra.mxu0 0.0
    %2326 = vmatprep.subr.mxu0 0.0
    %2327 = vmatpush1.msra.mxu0 0.0
    %2328 = vmatprep.subr.mxu0 0.0
    %2329 = vmatpush1.msra.mxu0 0.0
    %2330 = vmatprep.subr.mxu0 0.0
    %2331 = vmatpush1.msra.mxu0 0.0
    %2332 = vmatprep.subr.mxu0 0.0
    %2333 = vmatpush1.msra.mxu0 0.0
    %2334 = vmatprep.subr.mxu0 0.0
    %2335 = vmatpush1.msra.mxu0 0.0
    %2336 = vmatprep.subr.mxu0 0.0
    %2337 = vmatpush1.msra.mxu0 0.0
    %2338 = vmatprep.subr.mxu0 0.0
    %2339 = vmatpush1.msra.mxu0 0.0
    %2340 = vmatprep.subr.mxu0 0.0
    %2341 = vmatpush1.msra.mxu0 0.0
    %2342 = vmatprep.subr.mxu0 0.0
    %2343 = vmatpush1.msra.mxu0 0.0
    %2344 = vmatprep.subr.mxu0 0.0
    %2345 = vmatpush1.msra.mxu0 0.0
    %2346 = vmatprep.subr.mxu0 0.0
    %2347 = vmatpush1.msra.mxu0 0.0
    %2348 = vmatprep.subr.mxu0 0.0
    %2349 = vmatpush1.msra.mxu0 0.0
    %2350 = vmatprep.subr.mxu0 0.0
    %2351 = vmatpush1.msra.mxu0 0.0
    %2352 = vmatprep.subr.mxu0 0.0
    %2353 = vmatpush1.msra.mxu0 0.0
    %2354 = vmatprep.subr.mxu0 0.0
    %2355 = vmatpush1.msra.mxu0 0.0
    %2356 = vmatprep.subr.mxu0 0.0
    %2357 = vmatpush1.msra.mxu0 0.0
    %2358 = vmatprep.mubr.f32.mxu0 0.0
    %2359 = vmatmul.mubr.f32.gmra.mrb[0].mxu0 %v1614
    %v2360 = vpop.f32.mrb[0].mxu0
    %v2361 = vadd.f32 0.0, %v2360
    %v2362 = vpop.f32.mrb[0].mxu0
    %2363 = vmatprep.mubr.f32.mxu0 0.0
    %2364 = vmatmul.mubr.f32.gmra.mrb[0].mxu0 %v1617
    %v2365 = vpop.f32.mrb[0].mxu0
    %v2366 = vadd.f32 0.0, %v2365
    %v2367 = vpop.f32.mrb[0].mxu0
    %2368 = vmatprep.mubr.f32.mxu0 0.0
    %2369 = vmatmul.mubr.f32.gmra.mrb[0].mxu0 %v1620
    %v2370 = vpop.f32.mrb[0].mxu0
    %v2371 = vadd.f32 0.0, %v2370
    %v2372 = vpop.f32.mrb[0].mxu0
    %2373 = vmatprep.mubr.f32.mxu0 0.0
    %2374 = vmatmul.mubr.f32.gmra.mrb[0].mxu0 %v1623
    %v2375 = vpop.f32.mrb[0].mxu0
    %v2376 = vadd.f32 0.0, %v2375
    %v2377 = vpop.f32.mrb[0].mxu0
    %2378 = vmatprep.mubr.f32.mxu0 0.0
    %2379 = vmatmul.mubr.f32.gmra.mrb[0].mxu0 %v1626
    %v2380 = vpop.f32.mrb[0].mxu0
    %v2381 = vadd.f32 0.0, %v2380
    %v2382 = vpop.f32.mrb[0].mxu0
    %2383 = vmatprep.mubr.f32.mxu0 0.0
    %2384 = vmatmul.mubr.f32.gmra.mrb[0].mxu0 %v1629
    %v2385 = vpop.f32.mrb[0].mxu0
    %v2386 = vadd.f32 0.0, %v2385
    %v2387 = vpop.f32.mrb[0].mxu0
    %2388 = vmatprep.mubr.f32.mxu0 0.0
    %2389 = vmatmul.mubr.f32.gmra.mrb[0].mxu0 %v1632
    %v2390 = vpop.f32.mrb[0].mxu0
    %v2391 = vadd.f32 0.0, %v2390
    %v2392 = vpop.f32.mrb[0].mxu0
    %2393 = vmatprep.mubr.f32.mxu0 0.0
    %2394 = vmatmul.mubr.f32.gmra.mrb[0].mxu0 %v1635
    %v2395 = vpop.f32.mrb[0].mxu0
    %v2396 = vadd.f32 0.0, %v2395
    %v2397 = vpop.f32.mrb[0].mxu0
    %2398 = vmatprep.mubr.f32.mxu0 0.0
    %2399 = vmatmul.mubr.f32.gmra.mrb[0].mxu0 %v1638
    %v2400 = vpop.f32.mrb[0].mxu0
    %v2401 = vadd.f32 0.0, %v2400
    %v2402 = vpop.f32.mrb[0].mxu0
    %2403 = vmatprep.mubr.f32.mxu0 0.0
    %2404 = vmatmul.mubr.f32.gmra.mrb[0].mxu0 %v1641
    %v2405 = vpop.f32.mrb[0].mxu0
    %v2406 = vadd.f32 0.0, %v2405
    %v2407 = vpop.f32.mrb[0].mxu0
    %2408 = vmatprep.mubr.f32.mxu0 0.0
    %2409 = vmatmul.mubr.f32.gmra.mrb[0].mxu0 %v1945
    %v2410 = vpop.f32.mrb[0].mxu0
    %v2411 = vadd.f32 0.0, %v2410
    %v2412 = vpop.f32.mrb[0].mxu0
    %2413 = vmatprep.mubr.f32.mxu0 0.0
    %2414 = vmatmul.mubr.f32.gmra.mrb[0].mxu0 %v1948
    %v2415 = vpop.f32.mrb[0].mxu0
    %v2416 = vadd.f32 0.0, %v2415
    %v2417 = vpop.f32.mrb[0].mxu0
    %2418 = vmatprep.mubr.f32.mxu0 0.0
    %2419 = vmatmul.mubr.f32.gmra.mrb[0].mxu0 %v2117
    %v2420 = vpop.f32.mrb[0].mxu0
    %v2421 = vadd.f32 0.0, %v2420
    %v2422 = vpop.f32.mrb[0].mxu0
    %2423 = vmatprep.mubr.f32.mxu0 0.0
    %2424 = vmatmul.mubr.f32.gmra.mrb[0].mxu0 %v2120
    %v2425 = vpop.f32.mrb[0].mxu0
    %v2426 = vadd.f32 0.0, %v2425
    %v2427 = vpop.f32.mrb[0].mxu0
    %2428 = vmatprep.mubr.f32.mxu0 0.0
    %2429 = vmatmul.mubr.f32.gmra.mrb[0].mxu0 %v2289
    %v2430 = vpop.f32.mrb[0].mxu0
    %v2431 = vadd.f32 0.0, %v2430
    %v2432 = vpop.f32.mrb[0].mxu0
    %2433 = vmatprep.mubr.f32.mxu0 0.0
    %2434 = vmatmul.mubr.f32.gmra.mrb[0].mxu0 %v2292
    %v2435 = vpop.f32.mrb[0].mxu0
    %v2436 = vadd.f32 0.0, %v2435
    %v2437 = vpop.f32.mrb[0].mxu0
    %2438 = vdwg.mxu0
    %v2439 = vadd.f32 %v2267, %v2361
    %v2440 = vadd.f32 %v2268, %v2366
    %v2441 = vadd.f32 %v2269, %v2371
    %v2442 = vadd.f32 %v2270, %v2376
    %v2443 = vadd.f32 %v2271, %v2381
    %v2444 = vadd.f32 %v2272, %v2386
    %v2445 = vadd.f32 %v2273, %v2391
    %v2446 = vadd.f32 %v2274, %v2396
    %v2447 = vadd.f32 %v2275, %v2401
    %v2448 = vadd.f32 %v2276, %v2406
    %v2449 = vadd.f32 %v2277, %v2411
    %v2450 = vadd.f32 %v2278, %v2416
    %v2451 = vadd.f32 %v2279, %v2421
    %v2452 = vadd.f32 %v2280, %v2426
    %v2453 = vadd.f32 %v2281, %v2431
    %v2454 = vadd.f32 %v2282, %v2436
    %vm2467 = vcmask 1045504
    %v2468 = vrot.slane %v1550, 2
    %v2469 = vrot.slane %v1551, 2
    %v2470 = vsel %vm2467, %v2468, %v2469
    %v2471 = vrot.slane %v1552, 2
    %v2472 = vsel %vm2467, %v2469, %v2471
    %v2473 = vrot.slane %v1553, 2
    %v2474 = vrot.slane %v1554, 2
    %v2475 = vsel %vm2467, %v2473, %v2474
    %v2476 = vrot.slane %v1555, 2
    %v2477 = vsel %vm2467, %v2474, %v2476
    %v2478 = vrot.slane %v1556, 2
    %v2479 = vrot.slane %v1557, 2
    %v2480 = vsel %vm2467, %v2478, %v2479
    %v2481 = vrot.slane %v1558, 2
    %v2482 = vsel %vm2467, %v2479, %v2481
    %v2483 = vrot.slane %v1559, 2
    %v2484 = vrot.slane %v1560, 2
    %v2485 = vsel %vm2467, %v2483, %v2484
    %v2486 = vrot.slane %v1561, 2
    %v2487 = vsel %vm2467, %v2484, %v2486
    %v2488 = vrot.slane %v1562, 2
    %v2489 = vrot.slane %v1563, 2
    %v2490 = vsel %vm2467, %v2488, %v2489
    %v2491 = vrot.slane %v1564, 2
    %v2492 = vsel %vm2467, %v2489, %v2491
    %v2493 = vrot.slane %v1565, 2
    %v2494 = vrot.slane %v1566, 2
    %v2495 = vsel %vm2467, %v2493, %v2494
    %v2496 = vrot.slane %v1567, 2
    %v2497 = vsel %vm2467, %v2494, %v2496
    %v2498 = vrot.slane %v1568, 2
    %v2499 = vrot.slane %v1569, 2
    %v2500 = vsel %vm2467, %v2498, %v2499
    %v2501 = vrot.slane %v1570, 2
    %v2502 = vsel %vm2467, %v2499, %v2501
    %v2503 = vrot.slane %v1571, 2
    %v2504 = vrot.slane %v1572, 2
    %v2505 = vsel %vm2467, %v2503, %v2504
    %v2506 = vrot.slane %v1573, 2
    %v2507 = vsel %vm2467, %v2504, %v2506
    %v2508 = vrot.slane %v1574, 2
    %v2509 = vrot.slane %v1575, 2
    %v2510 = vsel %vm2467, %v2508, %v2509
    %v2511 = vrot.slane %v1576, 2
    %v2512 = vsel %vm2467, %v2509, %v2511
    %v2513 = vrot.slane %v1577, 2
    %v2514 = vrot.slane %v1578, 2
    %v2515 = vsel %vm2467, %v2513, %v2514
    %v2516 = vrot.slane %v1579, 2
    %v2517 = vsel %vm2467, %v2514, %v2516
    %v2518 = vrot.slane %v1580, 2
    %v2519 = vrot.slane %v1581, 2
    %v2520 = vsel %vm2467, %v2518, %v2519
    %v2521 = vrot.slane %v1582, 2
    %v2522 = vsel %vm2467, %v2519, %v2521
    %v2523 = vrot.slane %v1583, 2
    %v2524 = vrot.slane %v1584, 2
    %v2525 = vsel %vm2467, %v2523, %v2524
    %v2526 = vrot.slane %v1585, 2
    %v2527 = vsel %vm2467, %v2524, %v2526
    %s2528 = scalar_lea.vmem %s3, 32
    %v2529 = vld [vmem:[%s2528] sm:$0xff]
    %v2530 = vld [vmem:[%s2528 + $0x8] sm:$0xff]
    %v2531 = vld [vmem:[%s2528 + $0x10] sm:$0xff]
    %v2532 = vld [vmem:[%s2528 + $0x18] sm:$0xff]
    %v2533 = vsel %vm181, %v2470, 0
    %v2535 = vsel %vm181, %v2472, 0
    %v2537 = vsel %vm181, %v2475, 0
    %v2539 = vsel %vm181, %v2477, 0
    %v2541 = vsel %vm181, %v2480, 0
    %v2543 = vsel %vm181, %v2482, 0
    %v2545 = vsel %vm181, %v2485, 0
    %v2547 = vsel %vm181, %v2487, 0
    %v2549 = vsel %vm181, %v2490, 0
    %v2551 = vsel %vm181, %v2492, 0
    %v2553 = vsel %vm181, %v2495, 0
    %v2555 = vsel %vm181, %v2497, 0
    %v2557 = vsel %vm181, %v2500, 0
    %v2559 = vsel %vm181, %v2502, 0
    %v2561 = vsel %vm181, %v2505, 0
    %v2563 = vsel %vm181, %v2507, 0
    %2565 = vmatprep.subr.mxu0 0.0
    %2566 = vmatpush1.msra.mxu0 %v2529
    %2567 = vmatprep.subr.mxu0 0.0
    %2568 = vmatpush1.msra.mxu0 %v2530
    %2569 = vmatprep.subr.mxu0 0.0
    %2570 = vmatpush1.msra.mxu0 %v2531
    %2571 = vmatprep.subr.mxu0 0.0
    %2572 = vmatpush1.msra.mxu0 %v2532
    %2573 = vmatprep.subr.mxu0 0.0
    %2574 = vmatpush1.msra.mxu0 0.0
    %2575 = vmatprep.subr.mxu0 0.0
    %2576 = vmatpush1.msra.mxu0 0.0
    %2577 = vmatprep.subr.mxu0 0.0
    %2578 = vmatpush1.msra.mxu0 0.0
    %2579 = vmatprep.subr.mxu0 0.0
    %2580 = vmatpush1.msra.mxu0 0.0
    %2581 = vmatprep.subr.mxu0 0.0
    %2582 = vmatpush1.msra.mxu0 0.0
    %2583 = vmatprep.subr.mxu0 0.0
    %2584 = vmatpush1.msra.mxu0 0.0
    %2585 = vmatprep.subr.mxu0 0.0
    %2586 = vmatpush1.msra.mxu0 0.0
    %2587 = vmatprep.subr.mxu0 0.0
    %2588 = vmatpush1.msra.mxu0 0.0
    %2589 = vmatprep.subr.mxu0 0.0
    %2590 = vmatpush1.msra.mxu0 0.0
    %2591 = vmatprep.subr.mxu0 0.0
    %2592 = vmatpush1.msra.mxu0 0.0
    %2593 = vmatprep.subr.mxu0 0.0
    %2594 = vmatpush1.msra.mxu0 0.0
    %2595 = vmatprep.subr.mxu0 0.0
    %2596 = vmatpush1.msra.mxu0 0.0
    %2597 = vmatprep.subr.mxu0 0.0
    %2598 = vmatpush1.msra.mxu0 0.0
    %2599 = vmatprep.subr.mxu0 0.0
    %2600 = vmatpush1.msra.mxu0 0.0
    %2601 = vmatprep.subr.mxu0 0.0
    %2602 = vmatpush1.msra.mxu0 0.0
    %2603 = vmatprep.subr.mxu0 0.0
    %2604 = vmatpush1.msra.mxu0 0.0
    %2605 = vmatprep.subr.mxu0 0.0
    %2606 = vmatpush1.msra.mxu0 0.0
    %2607 = vmatprep.subr.mxu0 0.0
    %2608 = vmatpush1.msra.mxu0 0.0
    %2609 = vmatprep.subr.mxu0 0.0
    %2610 = vmatpush1.msra.mxu0 0.0
    %2611 = vmatprep.subr.mxu0 0.0
    %2612 = vmatpush1.msra.mxu0 0.0
    %2613 = vmatprep.subr.mxu0 0.0
    %2614 = vmatpush1.msra.mxu0 0.0
    %2615 = vmatprep.subr.mxu0 0.0
    %2616 = vmatpush1.msra.mxu0 0.0
    %2617 = vmatprep.subr.mxu0 0.0
    %2618 = vmatpush1.msra.mxu0 0.0
    %2619 = vmatprep.subr.mxu0 0.0
    %2620 = vmatpush1.msra.mxu0 0.0
    %2621 = vmatprep.subr.mxu0 0.0
    %2622 = vmatpush1.msra.mxu0 0.0
    %2623 = vmatprep.subr.mxu0 0.0
    %2624 = vmatpush1.msra.mxu0 0.0
    %2625 = vmatprep.subr.mxu0 0.0
    %2626 = vmatpush1.msra.mxu0 0.0
    %2627 = vmatprep.subr.mxu0 0.0
    %2628 = vmatpush1.msra.mxu0 0.0
    %2629 = vmatprep.mubr.f32.mxu0 0.0
    %2630 = vmatmul.mubr.f32.gmra.mrb[0].mxu0 %v2533
    %v2631 = vpop.f32.mrb[0].mxu0
    %v2632 = vadd.f32 0.0, %v2631
    %v2633 = vpop.f32.mrb[0].mxu0
    %2634 = vmatprep.mubr.f32.mxu0 0.0
    %2635 = vmatmul.mubr.f32.gmra.mrb[0].mxu0 %v2535
    %v2636 = vpop.f32.mrb[0].mxu0
    %v2637 = vadd.f32 0.0, %v2636
    %v2638 = vpop.f32.mrb[0].mxu0
    %2639 = vmatprep.mubr.f32.mxu0 0.0
    %2640 = vmatmul.mubr.f32.gmra.mrb[0].mxu0 %v2537
    %v2641 = vpop.f32.mrb[0].mxu0
    %v2642 = vadd.f32 0.0, %v2641
    %v2643 = vpop.f32.mrb[0].mxu0
    %2644 = vmatprep.mubr.f32.mxu0 0.0
    %2645 = vmatmul.mubr.f32.gmra.mrb[0].mxu0 %v2539
    %v2646 = vpop.f32.mrb[0].mxu0
    %v2647 = vadd.f32 0.0, %v2646
    %v2648 = vpop.f32.mrb[0].mxu0
    %2649 = vmatprep.mubr.f32.mxu0 0.0
    %2650 = vmatmul.mubr.f32.gmra.mrb[0].mxu0 %v2541
    %v2651 = vpop.f32.mrb[0].mxu0
    %v2652 = vadd.f32 0.0, %v2651
    %v2653 = vpop.f32.mrb[0].mxu0
    %2654 = vmatprep.mubr.f32.mxu0 0.0
    %2655 = vmatmul.mubr.f32.gmra.mrb[0].mxu0 %v2543
    %v2656 = vpop.f32.mrb[0].mxu0
    %v2657 = vadd.f32 0.0, %v2656
    %v2658 = vpop.f32.mrb[0].mxu0
    %2659 = vmatprep.mubr.f32.mxu0 0.0
    %2660 = vmatmul.mubr.f32.gmra.mrb[0].mxu0 %v2545
    %v2661 = vpop.f32.mrb[0].mxu0
    %v2662 = vadd.f32 0.0, %v2661
    %v2663 = vpop.f32.mrb[0].mxu0
    %2664 = vmatprep.mubr.f32.mxu0 0.0
    %2665 = vmatmul.mubr.f32.gmra.mrb[0].mxu0 %v2547
    %v2666 = vpop.f32.mrb[0].mxu0
    %v2667 = vadd.f32 0.0, %v2666
    %v2668 = vpop.f32.mrb[0].mxu0
    %2669 = vmatprep.mubr.f32.mxu0 0.0
    %2670 = vmatmul.mubr.f32.gmra.mrb[0].mxu0 %v2549
    %v2671 = vpop.f32.mrb[0].mxu0
    %v2672 = vadd.f32 0.0, %v2671
    %v2673 = vpop.f32.mrb[0].mxu0
    %2674 = vmatprep.mubr.f32.mxu0 0.0
    %2675 = vmatmul.mubr.f32.gmra.mrb[0].mxu0 %v2551
    %v2676 = vpop.f32.mrb[0].mxu0
    %v2677 = vadd.f32 0.0, %v2676
    %v2678 = vpop.f32.mrb[0].mxu0
    %2679 = vmatprep.mubr.f32.mxu0 0.0
    %2680 = vmatmul.mubr.f32.gmra.mrb[0].mxu0 %v2553
    %v2681 = vpop.f32.mrb[0].mxu0
    %v2682 = vadd.f32 0.0, %v2681
    %v2683 = vpop.f32.mrb[0].mxu0
    %2684 = vmatprep.mubr.f32.mxu0 0.0
    %2685 = vmatmul.mubr.f32.gmra.mrb[0].mxu0 %v2555
    %v2686 = vpop.f32.mrb[0].mxu0
    %v2687 = vadd.f32 0.0, %v2686
    %v2688 = vpop.f32.mrb[0].mxu0
    %2689 = vmatprep.mubr.f32.mxu0 0.0
    %2690 = vmatmul.mubr.f32.gmra.mrb[0].mxu0 %v2557
    %v2691 = vpop.f32.mrb[0].mxu0
    %v2692 = vadd.f32 0.0, %v2691
    %v2693 = vpop.f32.mrb[0].mxu0
    %2694 = vmatprep.mubr.f32.mxu0 0.0
    %2695 = vmatmul.mubr.f32.gmra.mrb[0].mxu0 %v2559
    %v2696 = vpop.f32.mrb[0].mxu0
    %v2697 = vadd.f32 0.0, %v2696
    %v2698 = vpop.f32.mrb[0].mxu0
    %2699 = vmatprep.mubr.f32.mxu0 0.0
    %2700 = vmatmul.mubr.f32.gmra.mrb[0].mxu0 %v2561
    %v2701 = vpop.f32.mrb[0].mxu0
    %v2702 = vadd.f32 0.0, %v2701
    %v2703 = vpop.f32.mrb[0].mxu0
    %2704 = vmatprep.mubr.f32.mxu0 0.0
    %2705 = vmatmul.mubr.f32.gmra.mrb[0].mxu0 %v2563
    %v2706 = vpop.f32.mrb[0].mxu0
    %v2707 = vadd.f32 0.0, %v2706
    %v2708 = vpop.f32.mrb[0].mxu0
    %2709 = vdwg.mxu0
    %v2710 = vadd.f32 %v2439, %v2632
    %v2711 = vadd.f32 %v2440, %v2637
    %v2712 = vadd.f32 %v2441, %v2642
    %v2713 = vadd.f32 %v2442, %v2647
    %v2714 = vadd.f32 %v2443, %v2652
    %v2715 = vadd.f32 %v2444, %v2657
    %v2716 = vadd.f32 %v2445, %v2662
    %v2717 = vadd.f32 %v2446, %v2667
    %v2718 = vadd.f32 %v2447, %v2672
    %v2719 = vadd.f32 %v2448, %v2677
    %v2720 = vadd.f32 %v2449, %v2682
    %v2721 = vadd.f32 %v2450, %v2687
    %v2722 = vadd.f32 %v2451, %v2692
    %v2723 = vadd.f32 %v2452, %v2697
    %v2724 = vadd.f32 %v2453, %v2702
    %v2725 = vadd.f32 %v2454, %v2707
    %s2726 = scalar_lea.vmem %s3, 192
    %v2727 = vld [vmem:[%s2726] sm:$0xff]
    %v2728 = vld [vmem:[%s2726 + $0x8] sm:$0xff]
    %v2729 = vld [vmem:[%s2726 + $0x10] sm:$0xff]
    %v2730 = vld [vmem:[%s2726 + $0x18] sm:$0xff]
    %v2731 = vsel %vm181, %v2510, 0
    %v2733 = vsel %vm181, %v2512, 0
    %2735 = vmatprep.subr.mxu0 0.0
    %2736 = vmatpush1.msra.mxu0 %v2727
    %2737 = vmatprep.subr.mxu0 0.0
    %2738 = vmatpush1.msra.mxu0 %v2728
    %2739 = vmatprep.subr.mxu0 0.0
    %2740 = vmatpush1.msra.mxu0 %v2729
    %2741 = vmatprep.subr.mxu0 0.0
    %2742 = vmatpush1.msra.mxu0 %v2730
    %2743 = vmatprep.subr.mxu0 0.0
    %2744 = vmatpush1.msra.mxu0 0.0
    %2745 = vmatprep.subr.mxu0 0.0
    %2746 = vmatpush1.msra.mxu0 0.0
    %2747 = vmatprep.subr.mxu0 0.0
    %2748 = vmatpush1.msra.mxu0 0.0
    %2749 = vmatprep.subr.mxu0 0.0
    %2750 = vmatpush1.msra.mxu0 0.0
    %2751 = vmatprep.subr.mxu0 0.0
    %2752 = vmatpush1.msra.mxu0 0.0
    %2753 = vmatprep.subr.mxu0 0.0
    %2754 = vmatpush1.msra.mxu0 0.0
    %2755 = vmatprep.subr.mxu0 0.0
    %2756 = vmatpush1.msra.mxu0 0.0
    %2757 = vmatprep.subr.mxu0 0.0
    %2758 = vmatpush1.msra.mxu0 0.0
    %2759 = vmatprep.subr.mxu0 0.0
    %2760 = vmatpush1.msra.mxu0 0.0
    %2761 = vmatprep.subr.mxu0 0.0
    %2762 = vmatpush1.msra.mxu0 0.0
    %2763 = vmatprep.subr.mxu0 0.0
    %2764 = vmatpush1.msra.mxu0 0.0
    %2765 = vmatprep.subr.mxu0 0.0
    %2766 = vmatpush1.msra.mxu0 0.0
    %2767 = vmatprep.subr.mxu0 0.0
    %2768 = vmatpush1.msra.mxu0 0.0
    %2769 = vmatprep.subr.mxu0 0.0
    %2770 = vmatpush1.msra.mxu0 0.0
    %2771 = vmatprep.subr.mxu0 0.0
    %2772 = vmatpush1.msra.mxu0 0.0
    %2773 = vmatprep.subr.mxu0 0.0
    %2774 = vmatpush1.msra.mxu0 0.0
    %2775 = vmatprep.subr.mxu0 0.0
    %2776 = vmatpush1.msra.mxu0 0.0
    %2777 = vmatprep.subr.mxu0 0.0
    %2778 = vmatpush1.msra.mxu0 0.0
    %2779 = vmatprep.subr.mxu0 0.0
    %2780 = vmatpush1.msra.mxu0 0.0
    %2781 = vmatprep.subr.mxu0 0.0
    %2782 = vmatpush1.msra.mxu0 0.0
    %2783 = vmatprep.subr.mxu0 0.0
    %2784 = vmatpush1.msra.mxu0 0.0
    %2785 = vmatprep.subr.mxu0 0.0
    %2786 = vmatpush1.msra.mxu0 0.0
    %2787 = vmatprep.subr.mxu0 0.0
    %2788 = vmatpush1.msra.mxu0 0.0
    %2789 = vmatprep.subr.mxu0 0.0
    %2790 = vmatpush1.msra.mxu0 0.0
    %2791 = vmatprep.subr.mxu0 0.0
    %2792 = vmatpush1.msra.mxu0 0.0
    %2793 = vmatprep.subr.mxu0 0.0
    %2794 = vmatpush1.msra.mxu0 0.0
    %2795 = vmatprep.subr.mxu0 0.0
    %2796 = vmatpush1.msra.mxu0 0.0
    %2797 = vmatprep.subr.mxu0 0.0
    %2798 = vmatpush1.msra.mxu0 0.0
    %2799 = vmatprep.mubr.f32.mxu0 0.0
    %2800 = vmatmul.mubr.f32.gmra.mrb[0].mxu0 %v2537
    %v2801 = vpop.f32.mrb[0].mxu0
    %v2802 = vadd.f32 0.0, %v2801
    %v2803 = vpop.f32.mrb[0].mxu0
    %2804 = vmatprep.mubr.f32.mxu0 0.0
    %2805 = vmatmul.mubr.f32.gmra.mrb[0].mxu0 %v2539
    %v2806 = vpop.f32.mrb[0].mxu0
    %v2807 = vadd.f32 0.0, %v2806
    %v2808 = vpop.f32.mrb[0].mxu0
    %2809 = vmatprep.mubr.f32.mxu0 0.0
    %2810 = vmatmul.mubr.f32.gmra.mrb[0].mxu0 %v2541
    %v2811 = vpop.f32.mrb[0].mxu0
    %v2812 = vadd.f32 0.0, %v2811
    %v2813 = vpop.f32.mrb[0].mxu0
    %2814 = vmatprep.mubr.f32.mxu0 0.0
    %2815 = vmatmul.mubr.f32.gmra.mrb[0].mxu0 %v2543
    %v2816 = vpop.f32.mrb[0].mxu0
    %v2817 = vadd.f32 0.0, %v2816
    %v2818 = vpop.f32.mrb[0].mxu0
    %2819 = vmatprep.mubr.f32.mxu0 0.0
    %2820 = vmatmul.mubr.f32.gmra.mrb[0].mxu0 %v2545
    %v2821 = vpop.f32.mrb[0].mxu0
    %v2822 = vadd.f32 0.0, %v2821
    %v2823 = vpop.f32.mrb[0].mxu0
    %2824 = vmatprep.mubr.f32.mxu0 0.0
    %2825 = vmatmul.mubr.f32.gmra.mrb[0].mxu0 %v2547
    %v2826 = vpop.f32.mrb[0].mxu0
    %v2827 = vadd.f32 0.0, %v2826
    %v2828 = vpop.f32.mrb[0].mxu0
    %2829 = vmatprep.mubr.f32.mxu0 0.0
    %2830 = vmatmul.mubr.f32.gmra.mrb[0].mxu0 %v2549
    %v2831 = vpop.f32.mrb[0].mxu0
    %v2832 = vadd.f32 0.0, %v2831
    %v2833 = vpop.f32.mrb[0].mxu0
    %2834 = vmatprep.mubr.f32.mxu0 0.0
    %2835 = vmatmul.mubr.f32.gmra.mrb[0].mxu0 %v2551
    %v2836 = vpop.f32.mrb[0].mxu0
    %v2837 = vadd.f32 0.0, %v2836
    %v2838 = vpop.f32.mrb[0].mxu0
    %2839 = vmatprep.mubr.f32.mxu0 0.0
    %2840 = vmatmul.mubr.f32.gmra.mrb[0].mxu0 %v2553
    %v2841 = vpop.f32.mrb[0].mxu0
    %v2842 = vadd.f32 0.0, %v2841
    %v2843 = vpop.f32.mrb[0].mxu0
    %2844 = vmatprep.mubr.f32.mxu0 0.0
    %2845 = vmatmul.mubr.f32.gmra.mrb[0].mxu0 %v2555
    %v2846 = vpop.f32.mrb[0].mxu0
    %v2847 = vadd.f32 0.0, %v2846
    %v2848 = vpop.f32.mrb[0].mxu0
    %2849 = vmatprep.mubr.f32.mxu0 0.0
    %2850 = vmatmul.mubr.f32.gmra.mrb[0].mxu0 %v2557
    %v2851 = vpop.f32.mrb[0].mxu0
    %v2852 = vadd.f32 0.0, %v2851
    %v2853 = vpop.f32.mrb[0].mxu0
    %2854 = vmatprep.mubr.f32.mxu0 0.0
    %2855 = vmatmul.mubr.f32.gmra.mrb[0].mxu0 %v2559
    %v2856 = vpop.f32.mrb[0].mxu0
    %v2857 = vadd.f32 0.0, %v2856
    %v2858 = vpop.f32.mrb[0].mxu0
    %2859 = vmatprep.mubr.f32.mxu0 0.0
    %2860 = vmatmul.mubr.f32.gmra.mrb[0].mxu0 %v2561
    %v2861 = vpop.f32.mrb[0].mxu0
    %v2862 = vadd.f32 0.0, %v2861
    %v2863 = vpop.f32.mrb[0].mxu0
    %2864 = vmatprep.mubr.f32.mxu0 0.0
    %2865 = vmatmul.mubr.f32.gmra.mrb[0].mxu0 %v2563
    %v2866 = vpop.f32.mrb[0].mxu0
    %v2867 = vadd.f32 0.0, %v2866
    %v2868 = vpop.f32.mrb[0].mxu0
    %2869 = vmatprep.mubr.f32.mxu0 0.0
    %2870 = vmatmul.mubr.f32.gmra.mrb[0].mxu0 %v2731
    %v2871 = vpop.f32.mrb[0].mxu0
    %v2872 = vadd.f32 0.0, %v2871
    %v2873 = vpop.f32.mrb[0].mxu0
    %2874 = vmatprep.mubr.f32.mxu0 0.0
    %2875 = vmatmul.mubr.f32.gmra.mrb[0].mxu0 %v2733
    %v2876 = vpop.f32.mrb[0].mxu0
    %v2877 = vadd.f32 0.0, %v2876
    %v2878 = vpop.f32.mrb[0].mxu0
    %2879 = vdwg.mxu0
    %v2880 = vadd.f32 %v2710, %v2802
    %v2881 = vadd.f32 %v2711, %v2807
    %v2882 = vadd.f32 %v2712, %v2812
    %v2883 = vadd.f32 %v2713, %v2817
    %v2884 = vadd.f32 %v2714, %v2822
    %v2885 = vadd.f32 %v2715, %v2827
    %v2886 = vadd.f32 %v2716, %v2832
    %v2887 = vadd.f32 %v2717, %v2837
    %v2888 = vadd.f32 %v2718, %v2842
    %v2889 = vadd.f32 %v2719, %v2847
    %v2890 = vadd.f32 %v2720, %v2852
    %v2891 = vadd.f32 %v2721, %v2857
    %v2892 = vadd.f32 %v2722, %v2862
    %v2893 = vadd.f32 %v2723, %v2867
    %v2894 = vadd.f32 %v2724, %v2872
    %v2895 = vadd.f32 %v2725, %v2877
    %s2896 = scalar_lea.vmem %s3, 352
    %v2897 = vld [vmem:[%s2896] sm:$0xff]
    %v2898 = vld [vmem:[%s2896 + $0x8] sm:$0xff]
    %v2899 = vld [vmem:[%s2896 + $0x10] sm:$0xff]
    %v2900 = vld [vmem:[%s2896 + $0x18] sm:$0xff]
    %v2901 = vsel %vm181, %v2515, 0
    %v2903 = vsel %vm181, %v2517, 0
    %2905 = vmatprep.subr.mxu0 0.0
    %2906 = vmatpush1.msra.mxu0 %v2897
    %2907 = vmatprep.subr.mxu0 0.0
    %2908 = vmatpush1.msra.mxu0 %v2898
    %2909 = vmatprep.subr.mxu0 0.0
    %2910 = vmatpush1.msra.mxu0 %v2899
    %2911 = vmatprep.subr.mxu0 0.0
    %2912 = vmatpush1.msra.mxu0 %v2900
    %2913 = vmatprep.subr.mxu0 0.0
    %2914 = vmatpush1.msra.mxu0 0.0
    %2915 = vmatprep.subr.mxu0 0.0
    %2916 = vmatpush1.msra.mxu0 0.0
    %2917 = vmatprep.subr.mxu0 0.0
    %2918 = vmatpush1.msra.mxu0 0.0
    %2919 = vmatprep.subr.mxu0 0.0
    %2920 = vmatpush1.msra.mxu0 0.0
    %2921 = vmatprep.subr.mxu0 0.0
    %2922 = vmatpush1.msra.mxu0 0.0
    %2923 = vmatprep.subr.mxu0 0.0
    %2924 = vmatpush1.msra.mxu0 0.0
    %2925 = vmatprep.subr.mxu0 0.0
    %2926 = vmatpush1.msra.mxu0 0.0
    %2927 = vmatprep.subr.mxu0 0.0
    %2928 = vmatpush1.msra.mxu0 0.0
    %2929 = vmatprep.subr.mxu0 0.0
    %2930 = vmatpush1.msra.mxu0 0.0
    %2931 = vmatprep.subr.mxu0 0.0
    %2932 = vmatpush1.msra.mxu0 0.0
    %2933 = vmatprep.subr.mxu0 0.0
    %2934 = vmatpush1.msra.mxu0 0.0
    %2935 = vmatprep.subr.mxu0 0.0
    %2936 = vmatpush1.msra.mxu0 0.0
    %2937 = vmatprep.subr.mxu0 0.0
    %2938 = vmatpush1.msra.mxu0 0.0
    %2939 = vmatprep.subr.mxu0 0.0
    %2940 = vmatpush1.msra.mxu0 0.0
    %2941 = vmatprep.subr.mxu0 0.0
    %2942 = vmatpush1.msra.mxu0 0.0
    %2943 = vmatprep.subr.mxu0 0.0
    %2944 = vmatpush1.msra.mxu0 0.0
    %2945 = vmatprep.subr.mxu0 0.0
    %2946 = vmatpush1.msra.mxu0 0.0
    %2947 = vmatprep.subr.mxu0 0.0
    %2948 = vmatpush1.msra.mxu0 0.0
    %2949 = vmatprep.subr.mxu0 0.0
    %2950 = vmatpush1.msra.mxu0 0.0
    %2951 = vmatprep.subr.mxu0 0.0
    %2952 = vmatpush1.msra.mxu0 0.0
    %2953 = vmatprep.subr.mxu0 0.0
    %2954 = vmatpush1.msra.mxu0 0.0
    %2955 = vmatprep.subr.mxu0 0.0
    %2956 = vmatpush1.msra.mxu0 0.0
    %2957 = vmatprep.subr.mxu0 0.0
    %2958 = vmatpush1.msra.mxu0 0.0
    %2959 = vmatprep.subr.mxu0 0.0
    %2960 = vmatpush1.msra.mxu0 0.0
    %2961 = vmatprep.subr.mxu0 0.0
    %2962 = vmatpush1.msra.mxu0 0.0
    %2963 = vmatprep.subr.mxu0 0.0
    %2964 = vmatpush1.msra.mxu0 0.0
    %2965 = vmatprep.subr.mxu0 0.0
    %2966 = vmatpush1.msra.mxu0 0.0
    %2967 = vmatprep.subr.mxu0 0.0
    %2968 = vmatpush1.msra.mxu0 0.0
    %2969 = vmatprep.mubr.f32.mxu0 0.0
    %2970 = vmatmul.mubr.f32.gmra.mrb[0].mxu0 %v2541
    %v2971 = vpop.f32.mrb[0].mxu0
    %v2972 = vadd.f32 0.0, %v2971
    %v2973 = vpop.f32.mrb[0].mxu0
    %2974 = vmatprep.mubr.f32.mxu0 0.0
    %2975 = vmatmul.mubr.f32.gmra.mrb[0].mxu0 %v2543
    %v2976 = vpop.f32.mrb[0].mxu0
    %v2977 = vadd.f32 0.0, %v2976
    %v2978 = vpop.f32.mrb[0].mxu0
    %2979 = vmatprep.mubr.f32.mxu0 0.0
    %2980 = vmatmul.mubr.f32.gmra.mrb[0].mxu0 %v2545
    %v2981 = vpop.f32.mrb[0].mxu0
    %v2982 = vadd.f32 0.0, %v2981
    %v2983 = vpop.f32.mrb[0].mxu0
    %2984 = vmatprep.mubr.f32.mxu0 0.0
    %2985 = vmatmul.mubr.f32.gmra.mrb[0].mxu0 %v2547
    %v2986 = vpop.f32.mrb[0].mxu0
    %v2987 = vadd.f32 0.0, %v2986
    %v2988 = vpop.f32.mrb[0].mxu0
    %2989 = vmatprep.mubr.f32.mxu0 0.0
    %2990 = vmatmul.mubr.f32.gmra.mrb[0].mxu0 %v2549
    %v2991 = vpop.f32.mrb[0].mxu0
    %v2992 = vadd.f32 0.0, %v2991
    %v2993 = vpop.f32.mrb[0].mxu0
    %2994 = vmatprep.mubr.f32.mxu0 0.0
    %2995 = vmatmul.mubr.f32.gmra.mrb[0].mxu0 %v2551
    %v2996 = vpop.f32.mrb[0].mxu0
    %v2997 = vadd.f32 0.0, %v2996
    %v2998 = vpop.f32.mrb[0].mxu0
    %2999 = vmatprep.mubr.f32.mxu0 0.0
    %3000 = vmatmul.mubr.f32.gmra.mrb[0].mxu0 %v2553
    %v3001 = vpop.f32.mrb[0].mxu0
    %v3002 = vadd.f32 0.0, %v3001
    %v3003 = vpop.f32.mrb[0].mxu0
    %3004 = vmatprep.mubr.f32.mxu0 0.0
    %3005 = vmatmul.mubr.f32.gmra.mrb[0].mxu0 %v2555
    %v3006 = vpop.f32.mrb[0].mxu0
    %v3007 = vadd.f32 0.0, %v3006
    %v3008 = vpop.f32.mrb[0].mxu0
    %3009 = vmatprep.mubr.f32.mxu0 0.0
    %3010 = vmatmul.mubr.f32.gmra.mrb[0].mxu0 %v2557
    %v3011 = vpop.f32.mrb[0].mxu0
    %v3012 = vadd.f32 0.0, %v3011
    %v3013 = vpop.f32.mrb[0].mxu0
    %3014 = vmatprep.mubr.f32.mxu0 0.0
    %3015 = vmatmul.mubr.f32.gmra.mrb[0].mxu0 %v2559
    %v3016 = vpop.f32.mrb[0].mxu0
    %v3017 = vadd.f32 0.0, %v3016
    %v3018 = vpop.f32.mrb[0].mxu0
    %3019 = vmatprep.mubr.f32.mxu0 0.0
    %3020 = vmatmul.mubr.f32.gmra.mrb[0].mxu0 %v2561
    %v3021 = vpop.f32.mrb[0].mxu0
    %v3022 = vadd.f32 0.0, %v3021
    %v3023 = vpop.f32.mrb[0].mxu0
    %3024 = vmatprep.mubr.f32.mxu0 0.0
    %3025 = vmatmul.mubr.f32.gmra.mrb[0].mxu0 %v2563
    %v3026 = vpop.f32.mrb[0].mxu0
    %v3027 = vadd.f32 0.0, %v3026
    %v3028 = vpop.f32.mrb[0].mxu0
    %3029 = vmatprep.mubr.f32.mxu0 0.0
    %3030 = vmatmul.mubr.f32.gmra.mrb[0].mxu0 %v2731
    %v3031 = vpop.f32.mrb[0].mxu0
    %v3032 = vadd.f32 0.0, %v3031
    %v3033 = vpop.f32.mrb[0].mxu0
    %3034 = vmatprep.mubr.f32.mxu0 0.0
    %3035 = vmatmul.mubr.f32.gmra.mrb[0].mxu0 %v2733
    %v3036 = vpop.f32.mrb[0].mxu0
    %v3037 = vadd.f32 0.0, %v3036
    %v3038 = vpop.f32.mrb[0].mxu0
    %3039 = vmatprep.mubr.f32.mxu0 0.0
    %3040 = vmatmul.mubr.f32.gmra.mrb[0].mxu0 %v2901
    %v3041 = vpop.f32.mrb[0].mxu0
    %v3042 = vadd.f32 0.0, %v3041
    %v3043 = vpop.f32.mrb[0].mxu0
    %3044 = vmatprep.mubr.f32.mxu0 0.0
    %3045 = vmatmul.mubr.f32.gmra.mrb[0].mxu0 %v2903
    %v3046 = vpop.f32.mrb[0].mxu0
    %v3047 = vadd.f32 0.0, %v3046
    %v3048 = vpop.f32.mrb[0].mxu0
    %3049 = vdwg.mxu0
    %v3050 = vadd.f32 %v2880, %v2972
    %v3051 = vadd.f32 %v2881, %v2977
    %v3052 = vadd.f32 %v2882, %v2982
    %v3053 = vadd.f32 %v2883, %v2987
    %v3054 = vadd.f32 %v2884, %v2992
    %v3055 = vadd.f32 %v2885, %v2997
    %v3056 = vadd.f32 %v2886, %v3002
    %v3057 = vadd.f32 %v2887, %v3007
    %v3058 = vadd.f32 %v2888, %v3012
    %v3059 = vadd.f32 %v2889, %v3017
    %v3060 = vadd.f32 %v2890, %v3022
    %v3061 = vadd.f32 %v2891, %v3027
    %v3062 = vadd.f32 %v2892, %v3032
    %v3063 = vadd.f32 %v2893, %v3037
    %v3064 = vadd.f32 %v2894, %v3042
    %v3065 = vadd.f32 %v2895, %v3047
    %s3066 = scalar_lea.vmem %s3, 512
    %v3067 = vld [vmem:[%s3066] sm:$0xff]
    %v3068 = vld [vmem:[%s3066 + $0x8] sm:$0xff]
    %v3069 = vld [vmem:[%s3066 + $0x10] sm:$0xff]
    %v3070 = vld [vmem:[%s3066 + $0x18] sm:$0xff]
    %v3071 = vsel %vm181, %v2520, 0
    %v3073 = vsel %vm181, %v2522, 0
    %3075 = vmatprep.subr.mxu0 0.0
    %3076 = vmatpush1.msra.mxu0 %v3067
    %3077 = vmatprep.subr.mxu0 0.0
    %3078 = vmatpush1.msra.mxu0 %v3068
    %3079 = vmatprep.subr.mxu0 0.0
    %3080 = vmatpush1.msra.mxu0 %v3069
    %3081 = vmatprep.subr.mxu0 0.0
    %3082 = vmatpush1.msra.mxu0 %v3070
    %3083 = vmatprep.subr.mxu0 0.0
    %3084 = vmatpush1.msra.mxu0 0.0
    %3085 = vmatprep.subr.mxu0 0.0
    %3086 = vmatpush1.msra.mxu0 0.0
    %3087 = vmatprep.subr.mxu0 0.0
    %3088 = vmatpush1.msra.mxu0 0.0
    %3089 = vmatprep.subr.mxu0 0.0
    %3090 = vmatpush1.msra.mxu0 0.0
    %3091 = vmatprep.subr.mxu0 0.0
    %3092 = vmatpush1.msra.mxu0 0.0
    %3093 = vmatprep.subr.mxu0 0.0
    %3094 = vmatpush1.msra.mxu0 0.0
    %3095 = vmatprep.subr.mxu0 0.0
    %3096 = vmatpush1.msra.mxu0 0.0
    %3097 = vmatprep.subr.mxu0 0.0
    %3098 = vmatpush1.msra.mxu0 0.0
    %3099 = vmatprep.subr.mxu0 0.0
    %3100 = vmatpush1.msra.mxu0 0.0
    %3101 = vmatprep.subr.mxu0 0.0
    %3102 = vmatpush1.msra.mxu0 0.0
    %3103 = vmatprep.subr.mxu0 0.0
    %3104 = vmatpush1.msra.mxu0 0.0
    %3105 = vmatprep.subr.mxu0 0.0
    %3106 = vmatpush1.msra.mxu0 0.0
    %3107 = vmatprep.subr.mxu0 0.0
    %3108 = vmatpush1.msra.mxu0 0.0
    %3109 = vmatprep.subr.mxu0 0.0
    %3110 = vmatpush1.msra.mxu0 0.0
    %3111 = vmatprep.subr.mxu0 0.0
    %3112 = vmatpush1.msra.mxu0 0.0
    %3113 = vmatprep.subr.mxu0 0.0
    %3114 = vmatpush1.msra.mxu0 0.0
    %3115 = vmatprep.subr.mxu0 0.0
    %3116 = vmatpush1.msra.mxu0 0.0
    %3117 = vmatprep.subr.mxu0 0.0
    %3118 = vmatpush1.msra.mxu0 0.0
    %3119 = vmatprep.subr.mxu0 0.0
    %3120 = vmatpush1.msra.mxu0 0.0
    %3121 = vmatprep.subr.mxu0 0.0
    %3122 = vmatpush1.msra.mxu0 0.0
    %3123 = vmatprep.subr.mxu0 0.0
    %3124 = vmatpush1.msra.mxu0 0.0
    %3125 = vmatprep.subr.mxu0 0.0
    %3126 = vmatpush1.msra.mxu0 0.0
    %3127 = vmatprep.subr.mxu0 0.0
    %3128 = vmatpush1.msra.mxu0 0.0
    %3129 = vmatprep.subr.mxu0 0.0
    %3130 = vmatpush1.msra.mxu0 0.0
    %3131 = vmatprep.subr.mxu0 0.0
    %3132 = vmatpush1.msra.mxu0 0.0
    %3133 = vmatprep.subr.mxu0 0.0
    %3134 = vmatpush1.msra.mxu0 0.0
    %3135 = vmatprep.subr.mxu0 0.0
    %3136 = vmatpush1.msra.mxu0 0.0
    %3137 = vmatprep.subr.mxu0 0.0
    %3138 = vmatpush1.msra.mxu0 0.0
    %3139 = vmatprep.mubr.f32.mxu0 0.0
    %3140 = vmatmul.mubr.f32.gmra.mrb[0].mxu0 %v2545
    %v3141 = vpop.f32.mrb[0].mxu0
    %v3142 = vadd.f32 0.0, %v3141
    %v3143 = vpop.f32.mrb[0].mxu0
    %3144 = vmatprep.mubr.f32.mxu0 0.0
    %3145 = vmatmul.mubr.f32.gmra.mrb[0].mxu0 %v2547
    %v3146 = vpop.f32.mrb[0].mxu0
    %v3147 = vadd.f32 0.0, %v3146
    %v3148 = vpop.f32.mrb[0].mxu0
    %3149 = vmatprep.mubr.f32.mxu0 0.0
    %3150 = vmatmul.mubr.f32.gmra.mrb[0].mxu0 %v2549
    %v3151 = vpop.f32.mrb[0].mxu0
    %v3152 = vadd.f32 0.0, %v3151
    %v3153 = vpop.f32.mrb[0].mxu0
    %3154 = vmatprep.mubr.f32.mxu0 0.0
    %3155 = vmatmul.mubr.f32.gmra.mrb[0].mxu0 %v2551
    %v3156 = vpop.f32.mrb[0].mxu0
    %v3157 = vadd.f32 0.0, %v3156
    %v3158 = vpop.f32.mrb[0].mxu0
    %3159 = vmatprep.mubr.f32.mxu0 0.0
    %3160 = vmatmul.mubr.f32.gmra.mrb[0].mxu0 %v2553
    %v3161 = vpop.f32.mrb[0].mxu0
    %v3162 = vadd.f32 0.0, %v3161
    %v3163 = vpop.f32.mrb[0].mxu0
    %3164 = vmatprep.mubr.f32.mxu0 0.0
    %3165 = vmatmul.mubr.f32.gmra.mrb[0].mxu0 %v2555
    %v3166 = vpop.f32.mrb[0].mxu0
    %v3167 = vadd.f32 0.0, %v3166
    %v3168 = vpop.f32.mrb[0].mxu0
    %3169 = vmatprep.mubr.f32.mxu0 0.0
    %3170 = vmatmul.mubr.f32.gmra.mrb[0].mxu0 %v2557
    %v3171 = vpop.f32.mrb[0].mxu0
    %v3172 = vadd.f32 0.0, %v3171
    %v3173 = vpop.f32.mrb[0].mxu0
    %3174 = vmatprep.mubr.f32.mxu0 0.0
    %3175 = vmatmul.mubr.f32.gmra.mrb[0].mxu0 %v2559
    %v3176 = vpop.f32.mrb[0].mxu0
    %v3177 = vadd.f32 0.0, %v3176
    %v3178 = vpop.f32.mrb[0].mxu0
    %3179 = vmatprep.mubr.f32.mxu0 0.0
    %3180 = vmatmul.mubr.f32.gmra.mrb[0].mxu0 %v2561
    %v3181 = vpop.f32.mrb[0].mxu0
    %v3182 = vadd.f32 0.0, %v3181
    %v3183 = vpop.f32.mrb[0].mxu0
    %3184 = vmatprep.mubr.f32.mxu0 0.0
    %3185 = vmatmul.mubr.f32.gmra.mrb[0].mxu0 %v2563
    %v3186 = vpop.f32.mrb[0].mxu0
    %v3187 = vadd.f32 0.0, %v3186
    %v3188 = vpop.f32.mrb[0].mxu0
    %3189 = vmatprep.mubr.f32.mxu0 0.0
    %3190 = vmatmul.mubr.f32.gmra.mrb[0].mxu0 %v2731
    %v3191 = vpop.f32.mrb[0].mxu0
    %v3192 = vadd.f32 0.0, %v3191
    %v3193 = vpop.f32.mrb[0].mxu0
    %3194 = vmatprep.mubr.f32.mxu0 0.0
    %3195 = vmatmul.mubr.f32.gmra.mrb[0].mxu0 %v2733
    %v3196 = vpop.f32.mrb[0].mxu0
    %v3197 = vadd.f32 0.0, %v3196
    %v3198 = vpop.f32.mrb[0].mxu0
    %3199 = vmatprep.mubr.f32.mxu0 0.0
    %3200 = vmatmul.mubr.f32.gmra.mrb[0].mxu0 %v2901
    %v3201 = vpop.f32.mrb[0].mxu0
    %v3202 = vadd.f32 0.0, %v3201
    %v3203 = vpop.f32.mrb[0].mxu0
    %3204 = vmatprep.mubr.f32.mxu0 0.0
    %3205 = vmatmul.mubr.f32.gmra.mrb[0].mxu0 %v2903
    %v3206 = vpop.f32.mrb[0].mxu0
    %v3207 = vadd.f32 0.0, %v3206
    %v3208 = vpop.f32.mrb[0].mxu0
    %3209 = vmatprep.mubr.f32.mxu0 0.0
    %3210 = vmatmul.mubr.f32.gmra.mrb[0].mxu0 %v3071
    %v3211 = vpop.f32.mrb[0].mxu0
    %v3212 = vadd.f32 0.0, %v3211
    %v3213 = vpop.f32.mrb[0].mxu0
    %3214 = vmatprep.mubr.f32.mxu0 0.0
    %3215 = vmatmul.mubr.f32.gmra.mrb[0].mxu0 %v3073
    %v3216 = vpop.f32.mrb[0].mxu0
    %v3217 = vadd.f32 0.0, %v3216
    %v3218 = vpop.f32.mrb[0].mxu0
    %3219 = vdwg.mxu0
    %v3220 = vadd.f32 %v3050, %v3142
    %v3221 = vadd.f32 %v3051, %v3147
    %v3222 = vadd.f32 %v3052, %v3152
    %v3223 = vadd.f32 %v3053, %v3157
    %v3224 = vadd.f32 %v3054, %v3162
    %v3225 = vadd.f32 %v3055, %v3167
    %v3226 = vadd.f32 %v3056, %v3172
    %v3227 = vadd.f32 %v3057, %v3177
    %v3228 = vadd.f32 %v3058, %v3182
    %v3229 = vadd.f32 %v3059, %v3187
    %v3230 = vadd.f32 %v3060, %v3192
    %v3231 = vadd.f32 %v3061, %v3197
    %v3232 = vadd.f32 %v3062, %v3202
    %v3233 = vadd.f32 %v3063, %v3207
    %v3234 = vadd.f32 %v3064, %v3212
    %v3235 = vadd.f32 %v3065, %v3217
    %s3236 = scalar_lea.vmem %s3, 672
    %v3237 = vld [vmem:[%s3236] sm:$0xff]
    %v3238 = vld [vmem:[%s3236 + $0x8] sm:$0xff]
    %v3239 = vld [vmem:[%s3236 + $0x10] sm:$0xff]
    %v3240 = vld [vmem:[%s3236 + $0x18] sm:$0xff]
    %v3241 = vsel %vm181, %v2525, 0
    %v3243 = vsel %vm181, %v2527, 0
    %3245 = vmatprep.subr.mxu0 0.0
    %3246 = vmatpush1.msra.mxu0 %v3237
    %3247 = vmatprep.subr.mxu0 0.0
    %3248 = vmatpush1.msra.mxu0 %v3238
    %3249 = vmatprep.subr.mxu0 0.0
    %3250 = vmatpush1.msra.mxu0 %v3239
    %3251 = vmatprep.subr.mxu0 0.0
    %3252 = vmatpush1.msra.mxu0 %v3240
    %3253 = vmatprep.subr.mxu0 0.0
    %3254 = vmatpush1.msra.mxu0 0.0
    %3255 = vmatprep.subr.mxu0 0.0
    %3256 = vmatpush1.msra.mxu0 0.0
    %3257 = vmatprep.subr.mxu0 0.0
    %3258 = vmatpush1.msra.mxu0 0.0
    %3259 = vmatprep.subr.mxu0 0.0
    %3260 = vmatpush1.msra.mxu0 0.0
    %3261 = vmatprep.subr.mxu0 0.0
    %3262 = vmatpush1.msra.mxu0 0.0
    %3263 = vmatprep.subr.mxu0 0.0
    %3264 = vmatpush1.msra.mxu0 0.0
    %3265 = vmatprep.subr.mxu0 0.0
    %3266 = vmatpush1.msra.mxu0 0.0
    %3267 = vmatprep.subr.mxu0 0.0
    %3268 = vmatpush1.msra.mxu0 0.0
    %3269 = vmatprep.subr.mxu0 0.0
    %3270 = vmatpush1.msra.mxu0 0.0
    %3271 = vmatprep.subr.mxu0 0.0
    %3272 = vmatpush1.msra.mxu0 0.0
    %3273 = vmatprep.subr.mxu0 0.0
    %3274 = vmatpush1.msra.mxu0 0.0
    %3275 = vmatprep.subr.mxu0 0.0
    %3276 = vmatpush1.msra.mxu0 0.0
    %3277 = vmatprep.subr.mxu0 0.0
    %3278 = vmatpush1.msra.mxu0 0.0
    %3279 = vmatprep.subr.mxu0 0.0
    %3280 = vmatpush1.msra.mxu0 0.0
    %3281 = vmatprep.subr.mxu0 0.0
    %3282 = vmatpush1.msra.mxu0 0.0
    %3283 = vmatprep.subr.mxu0 0.0
    %3284 = vmatpush1.msra.mxu0 0.0
    %3285 = vmatprep.subr.mxu0 0.0
    %3286 = vmatpush1.msra.mxu0 0.0
    %3287 = vmatprep.subr.mxu0 0.0
    %3288 = vmatpush1.msra.mxu0 0.0
    %3289 = vmatprep.subr.mxu0 0.0
    %3290 = vmatpush1.msra.mxu0 0.0
    %3291 = vmatprep.subr.mxu0 0.0
    %3292 = vmatpush1.msra.mxu0 0.0
    %3293 = vmatprep.subr.mxu0 0.0
    %3294 = vmatpush1.msra.mxu0 0.0
    %3295 = vmatprep.subr.mxu0 0.0
    %3296 = vmatpush1.msra.mxu0 0.0
    %3297 = vmatprep.subr.mxu0 0.0
    %3298 = vmatpush1.msra.mxu0 0.0
    %3299 = vmatprep.subr.mxu0 0.0
    %3300 = vmatpush1.msra.mxu0 0.0
    %3301 = vmatprep.subr.mxu0 0.0
    %3302 = vmatpush1.msra.mxu0 0.0
    %3303 = vmatprep.subr.mxu0 0.0
    %3304 = vmatpush1.msra.mxu0 0.0
    %3305 = vmatprep.subr.mxu0 0.0
    %3306 = vmatpush1.msra.mxu0 0.0
    %3307 = vmatprep.subr.mxu0 0.0
    %3308 = vmatpush1.msra.mxu0 0.0
    %3309 = vmatprep.mubr.f32.mxu0 0.0
    %3310 = vmatmul.mubr.f32.gmra.mrb[0].mxu0 %v2549
    %v3311 = vpop.f32.mrb[0].mxu0
    %v3312 = vadd.f32 0.0, %v3311
    %v3313 = vpop.f32.mrb[0].mxu0
    %3314 = vmatprep.mubr.f32.mxu0 0.0
    %3315 = vmatmul.mubr.f32.gmra.mrb[0].mxu0 %v2551
    %v3316 = vpop.f32.mrb[0].mxu0
    %v3317 = vadd.f32 0.0, %v3316
    %v3318 = vpop.f32.mrb[0].mxu0
    %3319 = vmatprep.mubr.f32.mxu0 0.0
    %3320 = vmatmul.mubr.f32.gmra.mrb[0].mxu0 %v2553
    %v3321 = vpop.f32.mrb[0].mxu0
    %v3322 = vadd.f32 0.0, %v3321
    %v3323 = vpop.f32.mrb[0].mxu0
    %3324 = vmatprep.mubr.f32.mxu0 0.0
    %3325 = vmatmul.mubr.f32.gmra.mrb[0].mxu0 %v2555
    %v3326 = vpop.f32.mrb[0].mxu0
    %v3327 = vadd.f32 0.0, %v3326
    %v3328 = vpop.f32.mrb[0].mxu0
    %3329 = vmatprep.mubr.f32.mxu0 0.0
    %3330 = vmatmul.mubr.f32.gmra.mrb[0].mxu0 %v2557
    %v3331 = vpop.f32.mrb[0].mxu0
    %v3332 = vadd.f32 0.0, %v3331
    %v3333 = vpop.f32.mrb[0].mxu0
    %3334 = vmatprep.mubr.f32.mxu0 0.0
    %3335 = vmatmul.mubr.f32.gmra.mrb[0].mxu0 %v2559
    %v3336 = vpop.f32.mrb[0].mxu0
    %v3337 = vadd.f32 0.0, %v3336
    %v3338 = vpop.f32.mrb[0].mxu0
    %3339 = vmatprep.mubr.f32.mxu0 0.0
    %3340 = vmatmul.mubr.f32.gmra.mrb[0].mxu0 %v2561
    %v3341 = vpop.f32.mrb[0].mxu0
    %v3342 = vadd.f32 0.0, %v3341
    %v3343 = vpop.f32.mrb[0].mxu0
    %3344 = vmatprep.mubr.f32.mxu0 0.0
    %3345 = vmatmul.mubr.f32.gmra.mrb[0].mxu0 %v2563
    %v3346 = vpop.f32.mrb[0].mxu0
    %v3347 = vadd.f32 0.0, %v3346
    %v3348 = vpop.f32.mrb[0].mxu0
    %3349 = vmatprep.mubr.f32.mxu0 0.0
    %3350 = vmatmul.mubr.f32.gmra.mrb[0].mxu0 %v2731
    %v3351 = vpop.f32.mrb[0].mxu0
    %v3352 = vadd.f32 0.0, %v3351
    %v3353 = vpop.f32.mrb[0].mxu0
    %3354 = vmatprep.mubr.f32.mxu0 0.0
    %3355 = vmatmul.mubr.f32.gmra.mrb[0].mxu0 %v2733
    %v3356 = vpop.f32.mrb[0].mxu0
    %v3357 = vadd.f32 0.0, %v3356
    %v3358 = vpop.f32.mrb[0].mxu0
    %3359 = vmatprep.mubr.f32.mxu0 0.0
    %3360 = vmatmul.mubr.f32.gmra.mrb[0].mxu0 %v2901
    %v3361 = vpop.f32.mrb[0].mxu0
    %v3362 = vadd.f32 0.0, %v3361
    %v3363 = vpop.f32.mrb[0].mxu0
    %3364 = vmatprep.mubr.f32.mxu0 0.0
    %3365 = vmatmul.mubr.f32.gmra.mrb[0].mxu0 %v2903
    %v3366 = vpop.f32.mrb[0].mxu0
    %v3367 = vadd.f32 0.0, %v3366
    %v3368 = vpop.f32.mrb[0].mxu0
    %3369 = vmatprep.mubr.f32.mxu0 0.0
    %3370 = vmatmul.mubr.f32.gmra.mrb[0].mxu0 %v3071
    %v3371 = vpop.f32.mrb[0].mxu0
    %v3372 = vadd.f32 0.0, %v3371
    %v3373 = vpop.f32.mrb[0].mxu0
    %3374 = vmatprep.mubr.f32.mxu0 0.0
    %3375 = vmatmul.mubr.f32.gmra.mrb[0].mxu0 %v3073
    %v3376 = vpop.f32.mrb[0].mxu0
    %v3377 = vadd.f32 0.0, %v3376
    %v3378 = vpop.f32.mrb[0].mxu0
    %3379 = vmatprep.mubr.f32.mxu0 0.0
    %3380 = vmatmul.mubr.f32.gmra.mrb[0].mxu0 %v3241
    %v3381 = vpop.f32.mrb[0].mxu0
    %v3382 = vadd.f32 0.0, %v3381
    %v3383 = vpop.f32.mrb[0].mxu0
    %3384 = vmatprep.mubr.f32.mxu0 0.0
    %3385 = vmatmul.mubr.f32.gmra.mrb[0].mxu0 %v3243
    %v3386 = vpop.f32.mrb[0].mxu0
    %v3387 = vadd.f32 0.0, %v3386
    %v3388 = vpop.f32.mrb[0].mxu0
    %3389 = vdwg.mxu0
    %v3390 = vadd.f32 %v3220, %v3312
    %v3391 = vadd.f32 %v3221, %v3317
    %v3392 = vadd.f32 %v3222, %v3322
    %v3393 = vadd.f32 %v3223, %v3327
    %v3394 = vadd.f32 %v3224, %v3332
    %v3395 = vadd.f32 %v3225, %v3337
    %v3396 = vadd.f32 %v3226, %v3342
    %v3397 = vadd.f32 %v3227, %v3347
    %v3398 = vadd.f32 %v3228, %v3352
    %v3399 = vadd.f32 %v3229, %v3357
    %v3400 = vadd.f32 %v3230, %v3362
    %v3401 = vadd.f32 %v3231, %v3367
    %v3402 = vadd.f32 %v3232, %v3372
    %v3403 = vadd.f32 %v3233, %v3377
    %v3404 = vadd.f32 %v3234, %v3382
    %v3405 = vadd.f32 %v3235, %v3387
    %vm3406 = vcmask 1043456
    %v3407 = vrot.slane %v1550, 4
    %v3408 = vrot.slane %v1551, 4
    %v3409 = vsel %vm3406, %v3407, %v3408
    %v3410 = vrot.slane %v1552, 4
    %v3411 = vsel %vm3406, %v3408, %v3410
    %v3412 = vrot.slane %v1553, 4
    %v3413 = vrot.slane %v1554, 4
    %v3414 = vsel %vm3406, %v3412, %v3413
    %v3415 = vrot.slane %v1555, 4
    %v3416 = vsel %vm3406, %v3413, %v3415
    %v3417 = vrot.slane %v1556, 4
    %v3418 = vrot.slane %v1557, 4
    %v3419 = vsel %vm3406, %v3417, %v3418
    %v3420 = vrot.slane %v1558, 4
    %v3421 = vsel %vm3406, %v3418, %v3420
    %v3422 = vrot.slane %v1559, 4
    %v3423 = vrot.slane %v1560, 4
    %v3424 = vsel %vm3406, %v3422, %v3423
    %v3425 = vrot.slane %v1561, 4
    %v3426 = vsel %vm3406, %v3423, %v3425
    %v3427 = vrot.slane %v1562, 4
    %v3428 = vrot.slane %v1563, 4
    %v3429 = vsel %vm3406, %v3427, %v3428
    %v3430 = vrot.slane %v1564, 4
    %v3431 = vsel %vm3406, %v3428, %v3430
    %v3432 = vrot.slane %v1565, 4
    %v3433 = vrot.slane %v1566, 4
    %v3434 = vsel %vm3406, %v3432, %v3433
    %v3435 = vrot.slane %v1567, 4
    %v3436 = vsel %vm3406, %v3433, %v3435
    %v3437 = vrot.slane %v1568, 4
    %v3438 = vrot.slane %v1569, 4
    %v3439 = vsel %vm3406, %v3437, %v3438
    %v3440 = vrot.slane %v1570, 4
    %v3441 = vsel %vm3406, %v3438, %v3440
    %v3442 = vrot.slane %v1571, 4
    %v3443 = vrot.slane %v1572, 4
    %v3444 = vsel %vm3406, %v3442, %v3443
    %v3445 = vrot.slane %v1573, 4
    %v3446 = vsel %vm3406, %v3443, %v3445
    %v3447 = vrot.slane %v1574, 4
    %v3448 = vrot.slane %v1575, 4
    %v3449 = vsel %vm3406, %v3447, %v3448
    %v3450 = vrot.slane %v1576, 4
    %v3451 = vsel %vm3406, %v3448, %v3450
    %v3452 = vrot.slane %v1577, 4
    %v3453 = vrot.slane %v1578, 4
    %v3454 = vsel %vm3406, %v3452, %v3453
    %v3455 = vrot.slane %v1579, 4
    %v3456 = vsel %vm3406, %v3453, %v3455
    %v3457 = vrot.slane %v1580, 4
    %v3458 = vrot.slane %v1581, 4
    %v3459 = vsel %vm3406, %v3457, %v3458
    %v3460 = vrot.slane %v1582, 4
    %v3461 = vsel %vm3406, %v3458, %v3460
    %v3462 = vrot.slane %v1583, 4
    %v3463 = vrot.slane %v1584, 4
    %v3464 = vsel %vm3406, %v3462, %v3463
    %v3465 = vrot.slane %v1585, 4
    %v3466 = vsel %vm3406, %v3463, %v3465
    %s3467 = scalar_lea.vmem %s3, 64
    %v3468 = vld [vmem:[%s3467] sm:$0xff]
    %v3469 = vld [vmem:[%s3467 + $0x8] sm:$0xff]
    %v3470 = vld [vmem:[%s3467 + $0x10] sm:$0xff]
    %v3471 = vld [vmem:[%s3467 + $0x18] sm:$0xff]
    %v3472 = vsel %vm181, %v3409, 0
    %v3474 = vsel %vm181, %v3411, 0
    %v3476 = vsel %vm181, %v3414, 0
    %v3478 = vsel %vm181, %v3416, 0
    %v3480 = vsel %vm181, %v3419, 0
    %v3482 = vsel %vm181, %v3421, 0
    %v3484 = vsel %vm181, %v3424, 0
    %v3486 = vsel %vm181, %v3426, 0
    %v3488 = vsel %vm181, %v3429, 0
    %v3490 = vsel %vm181, %v3431, 0
    %v3492 = vsel %vm181, %v3434, 0
    %v3494 = vsel %vm181, %v3436, 0
    %v3496 = vsel %vm181, %v3439, 0
    %v3498 = vsel %vm181, %v3441, 0
    %v3500 = vsel %vm181, %v3444, 0
    %v3502 = vsel %vm181, %v3446, 0
    %3504 = vmatprep.subr.mxu0 0.0
    %3505 = vmatpush1.msra.mxu0 %v3468
    %3506 = vmatprep.subr.mxu0 0.0
    %3507 = vmatpush1.msra.mxu0 %v3469
    %3508 = vmatprep.subr.mxu0 0.0
    %3509 = vmatpush1.msra.mxu0 %v3470
    %3510 = vmatprep.subr.mxu0 0.0
    %3511 = vmatpush1.msra.mxu0 %v3471
    %3512 = vmatprep.subr.mxu0 0.0
    %3513 = vmatpush1.msra.mxu0 0.0
    %3514 = vmatprep.subr.mxu0 0.0
    %3515 = vmatpush1.msra.mxu0 0.0
    %3516 = vmatprep.subr.mxu0 0.0
    %3517 = vmatpush1.msra.mxu0 0.0
    %3518 = vmatprep.subr.mxu0 0.0
    %3519 = vmatpush1.msra.mxu0 0.0
    %3520 = vmatprep.subr.mxu0 0.0
    %3521 = vmatpush1.msra.mxu0 0.0
    %3522 = vmatprep.subr.mxu0 0.0
    %3523 = vmatpush1.msra.mxu0 0.0
    %3524 = vmatprep.subr.mxu0 0.0
    %3525 = vmatpush1.msra.mxu0 0.0
    %3526 = vmatprep.subr.mxu0 0.0
    %3527 = vmatpush1.msra.mxu0 0.0
    %3528 = vmatprep.subr.mxu0 0.0
    %3529 = vmatpush1.msra.mxu0 0.0
    %3530 = vmatprep.subr.mxu0 0.0
    %3531 = vmatpush1.msra.mxu0 0.0
    %3532 = vmatprep.subr.mxu0 0.0
    %3533 = vmatpush1.msra.mxu0 0.0
    %3534 = vmatprep.subr.mxu0 0.0
    %3535 = vmatpush1.msra.mxu0 0.0
    %3536 = vmatprep.subr.mxu0 0.0
    %3537 = vmatpush1.msra.mxu0 0.0
    %3538 = vmatprep.subr.mxu0 0.0
    %3539 = vmatpush1.msra.mxu0 0.0
    %3540 = vmatprep.subr.mxu0 0.0
    %3541 = vmatpush1.msra.mxu0 0.0
    %3542 = vmatprep.subr.mxu0 0.0
    %3543 = vmatpush1.msra.mxu0 0.0
    %3544 = vmatprep.subr.mxu0 0.0
    %3545 = vmatpush1.msra.mxu0 0.0
    %3546 = vmatprep.subr.mxu0 0.0
    %3547 = vmatpush1.msra.mxu0 0.0
    %3548 = vmatprep.subr.mxu0 0.0
    %3549 = vmatpush1.msra.mxu0 0.0
    %3550 = vmatprep.subr.mxu0 0.0
    %3551 = vmatpush1.msra.mxu0 0.0
    %3552 = vmatprep.subr.mxu0 0.0
    %3553 = vmatpush1.msra.mxu0 0.0
    %3554 = vmatprep.subr.mxu0 0.0
    %3555 = vmatpush1.msra.mxu0 0.0
    %3556 = vmatprep.subr.mxu0 0.0
    %3557 = vmatpush1.msra.mxu0 0.0
    %3558 = vmatprep.subr.mxu0 0.0
    %3559 = vmatpush1.msra.mxu0 0.0
    %3560 = vmatprep.subr.mxu0 0.0
    %3561 = vmatpush1.msra.mxu0 0.0
    %3562 = vmatprep.subr.mxu0 0.0
    %3563 = vmatpush1.msra.mxu0 0.0
    %3564 = vmatprep.subr.mxu0 0.0
    %3565 = vmatpush1.msra.mxu0 0.0
    %3566 = vmatprep.subr.mxu0 0.0
    %3567 = vmatpush1.msra.mxu0 0.0
    %3568 = vmatprep.mubr.f32.mxu0 0.0
    %3569 = vmatmul.mubr.f32.gmra.mrb[0].mxu0 %v3472
    %v3570 = vpop.f32.mrb[0].mxu0
    %v3571 = vadd.f32 0.0, %v3570
    %v3572 = vpop.f32.mrb[0].mxu0
    %3573 = vmatprep.mubr.f32.mxu0 0.0
    %3574 = vmatmul.mubr.f32.gmra.mrb[0].mxu0 %v3474
    %v3575 = vpop.f32.mrb[0].mxu0
    %v3576 = vadd.f32 0.0, %v3575
    %v3577 = vpop.f32.mrb[0].mxu0
    %3578 = vmatprep.mubr.f32.mxu0 0.0
    %3579 = vmatmul.mubr.f32.gmra.mrb[0].mxu0 %v3476
    %v3580 = vpop.f32.mrb[0].mxu0
    %v3581 = vadd.f32 0.0, %v3580
    %v3582 = vpop.f32.mrb[0].mxu0
    %3583 = vmatprep.mubr.f32.mxu0 0.0
    %3584 = vmatmul.mubr.f32.gmra.mrb[0].mxu0 %v3478
    %v3585 = vpop.f32.mrb[0].mxu0
    %v3586 = vadd.f32 0.0, %v3585
    %v3587 = vpop.f32.mrb[0].mxu0
    %3588 = vmatprep.mubr.f32.mxu0 0.0
    %3589 = vmatmul.mubr.f32.gmra.mrb[0].mxu0 %v3480
    %v3590 = vpop.f32.mrb[0].mxu0
    %v3591 = vadd.f32 0.0, %v3590
    %v3592 = vpop.f32.mrb[0].mxu0
    %3593 = vmatprep.mubr.f32.mxu0 0.0
    %3594 = vmatmul.mubr.f32.gmra.mrb[0].mxu0 %v3482
    %v3595 = vpop.f32.mrb[0].mxu0
    %v3596 = vadd.f32 0.0, %v3595
    %v3597 = vpop.f32.mrb[0].mxu0
    %3598 = vmatprep.mubr.f32.mxu0 0.0
    %3599 = vmatmul.mubr.f32.gmra.mrb[0].mxu0 %v3484
    %v3600 = vpop.f32.mrb[0].mxu0
    %v3601 = vadd.f32 0.0, %v3600
    %v3602 = vpop.f32.mrb[0].mxu0
    %3603 = vmatprep.mubr.f32.mxu0 0.0
    %3604 = vmatmul.mubr.f32.gmra.mrb[0].mxu0 %v3486
    %v3605 = vpop.f32.mrb[0].mxu0
    %v3606 = vadd.f32 0.0, %v3605
    %v3607 = vpop.f32.mrb[0].mxu0
    %3608 = vmatprep.mubr.f32.mxu0 0.0
    %3609 = vmatmul.mubr.f32.gmra.mrb[0].mxu0 %v3488
    %v3610 = vpop.f32.mrb[0].mxu0
    %v3611 = vadd.f32 0.0, %v3610
    %v3612 = vpop.f32.mrb[0].mxu0
    %3613 = vmatprep.mubr.f32.mxu0 0.0
    %3614 = vmatmul.mubr.f32.gmra.mrb[0].mxu0 %v3490
    %v3615 = vpop.f32.mrb[0].mxu0
    %v3616 = vadd.f32 0.0, %v3615
    %v3617 = vpop.f32.mrb[0].mxu0
    %3618 = vmatprep.mubr.f32.mxu0 0.0
    %3619 = vmatmul.mubr.f32.gmra.mrb[0].mxu0 %v3492
    %v3620 = vpop.f32.mrb[0].mxu0
    %v3621 = vadd.f32 0.0, %v3620
    %v3622 = vpop.f32.mrb[0].mxu0
    %3623 = vmatprep.mubr.f32.mxu0 0.0
    %3624 = vmatmul.mubr.f32.gmra.mrb[0].mxu0 %v3494
    %v3625 = vpop.f32.mrb[0].mxu0
    %v3626 = vadd.f32 0.0, %v3625
    %v3627 = vpop.f32.mrb[0].mxu0
    %3628 = vmatprep.mubr.f32.mxu0 0.0
    %3629 = vmatmul.mubr.f32.gmra.mrb[0].mxu0 %v3496
    %v3630 = vpop.f32.mrb[0].mxu0
    %v3631 = vadd.f32 0.0, %v3630
    %v3632 = vpop.f32.mrb[0].mxu0
    %3633 = vmatprep.mubr.f32.mxu0 0.0
    %3634 = vmatmul.mubr.f32.gmra.mrb[0].mxu0 %v3498
    %v3635 = vpop.f32.mrb[0].mxu0
    %v3636 = vadd.f32 0.0, %v3635
    %v3637 = vpop.f32.mrb[0].mxu0
    %3638 = vmatprep.mubr.f32.mxu0 0.0
    %3639 = vmatmul.mubr.f32.gmra.mrb[0].mxu0 %v3500
    %v3640 = vpop.f32.mrb[0].mxu0
    %v3641 = vadd.f32 0.0, %v3640
    %v3642 = vpop.f32.mrb[0].mxu0
    %3643 = vmatprep.mubr.f32.mxu0 0.0
    %3644 = vmatmul.mubr.f32.gmra.mrb[0].mxu0 %v3502
    %v3645 = vpop.f32.mrb[0].mxu0
    %v3646 = vadd.f32 0.0, %v3645
    %v3647 = vpop.f32.mrb[0].mxu0
    %3648 = vdwg.mxu0
    %v3649 = vadd.f32 %v3390, %v3571
    %v3650 = vadd.f32 %v3391, %v3576
    %v3651 = vadd.f32 %v3392, %v3581
    %v3652 = vadd.f32 %v3393, %v3586
    %v3653 = vadd.f32 %v3394, %v3591
    %v3654 = vadd.f32 %v3395, %v3596
    %v3655 = vadd.f32 %v3396, %v3601
    %v3656 = vadd.f32 %v3397, %v3606
    %v3657 = vadd.f32 %v3398, %v3611
    %v3658 = vadd.f32 %v3399, %v3616
    %v3659 = vadd.f32 %v3400, %v3621
    %v3660 = vadd.f32 %v3401, %v3626
    %v3661 = vadd.f32 %v3402, %v3631
    %v3662 = vadd.f32 %v3403, %v3636
    %v3663 = vadd.f32 %v3404, %v3641
    %v3664 = vadd.f32 %v3405, %v3646
    %s3665 = scalar_lea.vmem %s3, 224
    %v3666 = vld [vmem:[%s3665] sm:$0xff]
    %v3667 = vld [vmem:[%s3665 + $0x8] sm:$0xff]
    %v3668 = vld [vmem:[%s3665 + $0x10] sm:$0xff]
    %v3669 = vld [vmem:[%s3665 + $0x18] sm:$0xff]
    %v3670 = vsel %vm181, %v3449, 0
    %v3672 = vsel %vm181, %v3451, 0
    %3674 = vmatprep.subr.mxu0 0.0
    %3675 = vmatpush1.msra.mxu0 %v3666
    %3676 = vmatprep.subr.mxu0 0.0
    %3677 = vmatpush1.msra.mxu0 %v3667
    %3678 = vmatprep.subr.mxu0 0.0
    %3679 = vmatpush1.msra.mxu0 %v3668
    %3680 = vmatprep.subr.mxu0 0.0
    %3681 = vmatpush1.msra.mxu0 %v3669
    %3682 = vmatprep.subr.mxu0 0.0
    %3683 = vmatpush1.msra.mxu0 0.0
    %3684 = vmatprep.subr.mxu0 0.0
    %3685 = vmatpush1.msra.mxu0 0.0
    %3686 = vmatprep.subr.mxu0 0.0
    %3687 = vmatpush1.msra.mxu0 0.0
    %3688 = vmatprep.subr.mxu0 0.0
    %3689 = vmatpush1.msra.mxu0 0.0
    %3690 = vmatprep.subr.mxu0 0.0
    %3691 = vmatpush1.msra.mxu0 0.0
    %3692 = vmatprep.subr.mxu0 0.0
    %3693 = vmatpush1.msra.mxu0 0.0
    %3694 = vmatprep.subr.mxu0 0.0
    %3695 = vmatpush1.msra.mxu0 0.0
    %3696 = vmatprep.subr.mxu0 0.0
    %3697 = vmatpush1.msra.mxu0 0.0
    %3698 = vmatprep.subr.mxu0 0.0
    %3699 = vmatpush1.msra.mxu0 0.0
    %3700 = vmatprep.subr.mxu0 0.0
    %3701 = vmatpush1.msra.mxu0 0.0
    %3702 = vmatprep.subr.mxu0 0.0
    %3703 = vmatpush1.msra.mxu0 0.0
    %3704 = vmatprep.subr.mxu0 0.0
    %3705 = vmatpush1.msra.mxu0 0.0
    %3706 = vmatprep.subr.mxu0 0.0
    %3707 = vmatpush1.msra.mxu0 0.0
    %3708 = vmatprep.subr.mxu0 0.0
    %3709 = vmatpush1.msra.mxu0 0.0
    %3710 = vmatprep.subr.mxu0 0.0
    %3711 = vmatpush1.msra.mxu0 0.0
    %3712 = vmatprep.subr.mxu0 0.0
    %3713 = vmatpush1.msra.mxu0 0.0
    %3714 = vmatprep.subr.mxu0 0.0
    %3715 = vmatpush1.msra.mxu0 0.0
    %3716 = vmatprep.subr.mxu0 0.0
    %3717 = vmatpush1.msra.mxu0 0.0
    %3718 = vmatprep.subr.mxu0 0.0
    %3719 = vmatpush1.msra.mxu0 0.0
    %3720 = vmatprep.subr.mxu0 0.0
    %3721 = vmatpush1.msra.mxu0 0.0
    %3722 = vmatprep.subr.mxu0 0.0
    %3723 = vmatpush1.msra.mxu0 0.0
    %3724 = vmatprep.subr.mxu0 0.0
    %3725 = vmatpush1.msra.mxu0 0.0
    %3726 = vmatprep.subr.mxu0 0.0
    %3727 = vmatpush1.msra.mxu0 0.0
    %3728 = vmatprep.subr.mxu0 0.0
    %3729 = vmatpush1.msra.mxu0 0.0
    %3730 = vmatprep.subr.mxu0 0.0
    %3731 = vmatpush1.msra.mxu0 0.0
    %3732 = vmatprep.subr.mxu0 0.0
    %3733 = vmatpush1.msra.mxu0 0.0
    %3734 = vmatprep.subr.mxu0 0.0
    %3735 = vmatpush1.msra.mxu0 0.0
    %3736 = vmatprep.subr.mxu0 0.0
    %3737 = vmatpush1.msra.mxu0 0.0
    %3738 = vmatprep.mubr.f32.mxu0 0.0
    %3739 = vmatmul.mubr.f32.gmra.mrb[0].mxu0 %v3476
    %v3740 = vpop.f32.mrb[0].mxu0
    %v3741 = vadd.f32 0.0, %v3740
    %v3742 = vpop.f32.mrb[0].mxu0
    %3743 = vmatprep.mubr.f32.mxu0 0.0
    %3744 = vmatmul.mubr.f32.gmra.mrb[0].mxu0 %v3478
    %v3745 = vpop.f32.mrb[0].mxu0
    %v3746 = vadd.f32 0.0, %v3745
    %v3747 = vpop.f32.mrb[0].mxu0
    %3748 = vmatprep.mubr.f32.mxu0 0.0
    %3749 = vmatmul.mubr.f32.gmra.mrb[0].mxu0 %v3480
    %v3750 = vpop.f32.mrb[0].mxu0
    %v3751 = vadd.f32 0.0, %v3750
    %v3752 = vpop.f32.mrb[0].mxu0
    %3753 = vmatprep.mubr.f32.mxu0 0.0
    %3754 = vmatmul.mubr.f32.gmra.mrb[0].mxu0 %v3482
    %v3755 = vpop.f32.mrb[0].mxu0
    %v3756 = vadd.f32 0.0, %v3755
    %v3757 = vpop.f32.mrb[0].mxu0
    %3758 = vmatprep.mubr.f32.mxu0 0.0
    %3759 = vmatmul.mubr.f32.gmra.mrb[0].mxu0 %v3484
    %v3760 = vpop.f32.mrb[0].mxu0
    %v3761 = vadd.f32 0.0, %v3760
    %v3762 = vpop.f32.mrb[0].mxu0
    %3763 = vmatprep.mubr.f32.mxu0 0.0
    %3764 = vmatmul.mubr.f32.gmra.mrb[0].mxu0 %v3486
    %v3765 = vpop.f32.mrb[0].mxu0
    %v3766 = vadd.f32 0.0, %v3765
    %v3767 = vpop.f32.mrb[0].mxu0
    %3768 = vmatprep.mubr.f32.mxu0 0.0
    %3769 = vmatmul.mubr.f32.gmra.mrb[0].mxu0 %v3488
    %v3770 = vpop.f32.mrb[0].mxu0
    %v3771 = vadd.f32 0.0, %v3770
    %v3772 = vpop.f32.mrb[0].mxu0
    %3773 = vmatprep.mubr.f32.mxu0 0.0
    %3774 = vmatmul.mubr.f32.gmra.mrb[0].mxu0 %v3490
    %v3775 = vpop.f32.mrb[0].mxu0
    %v3776 = vadd.f32 0.0, %v3775
    %v3777 = vpop.f32.mrb[0].mxu0
    %3778 = vmatprep.mubr.f32.mxu0 0.0
    %3779 = vmatmul.mubr.f32.gmra.mrb[0].mxu0 %v3492
    %v3780 = vpop.f32.mrb[0].mxu0
    %v3781 = vadd.f32 0.0, %v3780
    %v3782 = vpop.f32.mrb[0].mxu0
    %3783 = vmatprep.mubr.f32.mxu0 0.0
    %3784 = vmatmul.mubr.f32.gmra.mrb[0].mxu0 %v3494
    %v3785 = vpop.f32.mrb[0].mxu0
    %v3786 = vadd.f32 0.0, %v3785
    %v3787 = vpop.f32.mrb[0].mxu0
    %3788 = vmatprep.mubr.f32.mxu0 0.0
    %3789 = vmatmul.mubr.f32.gmra.mrb[0].mxu0 %v3496
    %v3790 = vpop.f32.mrb[0].mxu0
    %v3791 = vadd.f32 0.0, %v3790
    %v3792 = vpop.f32.mrb[0].mxu0
    %3793 = vmatprep.mubr.f32.mxu0 0.0
    %3794 = vmatmul.mubr.f32.gmra.mrb[0].mxu0 %v3498
    %v3795 = vpop.f32.mrb[0].mxu0
    %v3796 = vadd.f32 0.0, %v3795
    %v3797 = vpop.f32.mrb[0].mxu0
    %3798 = vmatprep.mubr.f32.mxu0 0.0
    %3799 = vmatmul.mubr.f32.gmra.mrb[0].mxu0 %v3500
    %v3800 = vpop.f32.mrb[0].mxu0
    %v3801 = vadd.f32 0.0, %v3800
    %v3802 = vpop.f32.mrb[0].mxu0
    %3803 = vmatprep.mubr.f32.mxu0 0.0
    %3804 = vmatmul.mubr.f32.gmra.mrb[0].mxu0 %v3502
    %v3805 = vpop.f32.mrb[0].mxu0
    %v3806 = vadd.f32 0.0, %v3805
    %v3807 = vpop.f32.mrb[0].mxu0
    %3808 = vmatprep.mubr.f32.mxu0 0.0
    %3809 = vmatmul.mubr.f32.gmra.mrb[0].mxu0 %v3670
    %v3810 = vpop.f32.mrb[0].mxu0
    %v3811 = vadd.f32 0.0, %v3810
    %v3812 = vpop.f32.mrb[0].mxu0
    %3813 = vmatprep.mubr.f32.mxu0 0.0
    %3814 = vmatmul.mubr.f32.gmra.mrb[0].mxu0 %v3672
    %v3815 = vpop.f32.mrb[0].mxu0
    %v3816 = vadd.f32 0.0, %v3815
    %v3817 = vpop.f32.mrb[0].mxu0
    %3818 = vdwg.mxu0
    %v3819 = vadd.f32 %v3649, %v3741
    %v3820 = vadd.f32 %v3650, %v3746
    %v3821 = vadd.f32 %v3651, %v3751
    %v3822 = vadd.f32 %v3652, %v3756
    %v3823 = vadd.f32 %v3653, %v3761
    %v3824 = vadd.f32 %v3654, %v3766
    %v3825 = vadd.f32 %v3655, %v3771
    %v3826 = vadd.f32 %v3656, %v3776
    %v3827 = vadd.f32 %v3657, %v3781
    %v3828 = vadd.f32 %v3658, %v3786
    %v3829 = vadd.f32 %v3659, %v3791
    %v3830 = vadd.f32 %v3660, %v3796
    %v3831 = vadd.f32 %v3661, %v3801
    %v3832 = vadd.f32 %v3662, %v3806
    %v3833 = vadd.f32 %v3663, %v3811
    %v3834 = vadd.f32 %v3664, %v3816
    %s3835 = scalar_lea.vmem %s3, 384
    %v3836 = vld [vmem:[%s3835] sm:$0xff]
    %v3837 = vld [vmem:[%s3835 + $0x8] sm:$0xff]
    %v3838 = vld [vmem:[%s3835 + $0x10] sm:$0xff]
    %v3839 = vld [vmem:[%s3835 + $0x18] sm:$0xff]
    %v3840 = vsel %vm181, %v3454, 0
    %v3842 = vsel %vm181, %v3456, 0
    %3844 = vmatprep.subr.mxu0 0.0
    %3845 = vmatpush1.msra.mxu0 %v3836
    %3846 = vmatprep.subr.mxu0 0.0
    %3847 = vmatpush1.msra.mxu0 %v3837
    %3848 = vmatprep.subr.mxu0 0.0
    %3849 = vmatpush1.msra.mxu0 %v3838
    %3850 = vmatprep.subr.mxu0 0.0
    %3851 = vmatpush1.msra.mxu0 %v3839
    %3852 = vmatprep.subr.mxu0 0.0
    %3853 = vmatpush1.msra.mxu0 0.0
    %3854 = vmatprep.subr.mxu0 0.0
    %3855 = vmatpush1.msra.mxu0 0.0
    %3856 = vmatprep.subr.mxu0 0.0
    %3857 = vmatpush1.msra.mxu0 0.0
    %3858 = vmatprep.subr.mxu0 0.0
    %3859 = vmatpush1.msra.mxu0 0.0
    %3860 = vmatprep.subr.mxu0 0.0
    %3861 = vmatpush1.msra.mxu0 0.0
    %3862 = vmatprep.subr.mxu0 0.0
    %3863 = vmatpush1.msra.mxu0 0.0
    %3864 = vmatprep.subr.mxu0 0.0
    %3865 = vmatpush1.msra.mxu0 0.0
    %3866 = vmatprep.subr.mxu0 0.0
    %3867 = vmatpush1.msra.mxu0 0.0
    %3868 = vmatprep.subr.mxu0 0.0
    %3869 = vmatpush1.msra.mxu0 0.0
    %3870 = vmatprep.subr.mxu0 0.0
    %3871 = vmatpush1.msra.mxu0 0.0
    %3872 = vmatprep.subr.mxu0 0.0
    %3873 = vmatpush1.msra.mxu0 0.0
    %3874 = vmatprep.subr.mxu0 0.0
    %3875 = vmatpush1.msra.mxu0 0.0
    %3876 = vmatprep.subr.mxu0 0.0
    %3877 = vmatpush1.msra.mxu0 0.0
    %3878 = vmatprep.subr.mxu0 0.0
    %3879 = vmatpush1.msra.mxu0 0.0
    %3880 = vmatprep.subr.mxu0 0.0
    %3881 = vmatpush1.msra.mxu0 0.0
    %3882 = vmatprep.subr.mxu0 0.0
    %3883 = vmatpush1.msra.mxu0 0.0
    %3884 = vmatprep.subr.mxu0 0.0
    %3885 = vmatpush1.msra.mxu0 0.0
    %3886 = vmatprep.subr.mxu0 0.0
    %3887 = vmatpush1.msra.mxu0 0.0
    %3888 = vmatprep.subr.mxu0 0.0
    %3889 = vmatpush1.msra.mxu0 0.0
    %3890 = vmatprep.subr.mxu0 0.0
    %3891 = vmatpush1.msra.mxu0 0.0
    %3892 = vmatprep.subr.mxu0 0.0
    %3893 = vmatpush1.msra.mxu0 0.0
    %3894 = vmatprep.subr.mxu0 0.0
    %3895 = vmatpush1.msra.mxu0 0.0
    %3896 = vmatprep.subr.mxu0 0.0
    %3897 = vmatpush1.msra.mxu0 0.0
    %3898 = vmatprep.subr.mxu0 0.0
    %3899 = vmatpush1.msra.mxu0 0.0
    %3900 = vmatprep.subr.mxu0 0.0
    %3901 = vmatpush1.msra.mxu0 0.0
    %3902 = vmatprep.subr.mxu0 0.0
    %3903 = vmatpush1.msra.mxu0 0.0
    %3904 = vmatprep.subr.mxu0 0.0
    %3905 = vmatpush1.msra.mxu0 0.0
    %3906 = vmatprep.subr.mxu0 0.0
    %3907 = vmatpush1.msra.mxu0 0.0
    %3908 = vmatprep.mubr.f32.mxu0 0.0
    %3909 = vmatmul.mubr.f32.gmra.mrb[0].mxu0 %v3480
    %v3910 = vpop.f32.mrb[0].mxu0
    %v3911 = vadd.f32 0.0, %v3910
    %v3912 = vpop.f32.mrb[0].mxu0
    %3913 = vmatprep.mubr.f32.mxu0 0.0
    %3914 = vmatmul.mubr.f32.gmra.mrb[0].mxu0 %v3482
    %v3915 = vpop.f32.mrb[0].mxu0
    %v3916 = vadd.f32 0.0, %v3915
    %v3917 = vpop.f32.mrb[0].mxu0
    %3918 = vmatprep.mubr.f32.mxu0 0.0
    %3919 = vmatmul.mubr.f32.gmra.mrb[0].mxu0 %v3484
    %v3920 = vpop.f32.mrb[0].mxu0
    %v3921 = vadd.f32 0.0, %v3920
    %v3922 = vpop.f32.mrb[0].mxu0
    %3923 = vmatprep.mubr.f32.mxu0 0.0
    %3924 = vmatmul.mubr.f32.gmra.mrb[0].mxu0 %v3486
    %v3925 = vpop.f32.mrb[0].mxu0
    %v3926 = vadd.f32 0.0, %v3925
    %v3927 = vpop.f32.mrb[0].mxu0
    %3928 = vmatprep.mubr.f32.mxu0 0.0
    %3929 = vmatmul.mubr.f32.gmra.mrb[0].mxu0 %v3488
    %v3930 = vpop.f32.mrb[0].mxu0
    %v3931 = vadd.f32 0.0, %v3930
    %v3932 = vpop.f32.mrb[0].mxu0
    %3933 = vmatprep.mubr.f32.mxu0 0.0
    %3934 = vmatmul.mubr.f32.gmra.mrb[0].mxu0 %v3490
    %v3935 = vpop.f32.mrb[0].mxu0
    %v3936 = vadd.f32 0.0, %v3935
    %v3937 = vpop.f32.mrb[0].mxu0
    %3938 = vmatprep.mubr.f32.mxu0 0.0
    %3939 = vmatmul.mubr.f32.gmra.mrb[0].mxu0 %v3492
    %v3940 = vpop.f32.mrb[0].mxu0
    %v3941 = vadd.f32 0.0, %v3940
    %v3942 = vpop.f32.mrb[0].mxu0
    %3943 = vmatprep.mubr.f32.mxu0 0.0
    %3944 = vmatmul.mubr.f32.gmra.mrb[0].mxu0 %v3494
    %v3945 = vpop.f32.mrb[0].mxu0
    %v3946 = vadd.f32 0.0, %v3945
    %v3947 = vpop.f32.mrb[0].mxu0
    %3948 = vmatprep.mubr.f32.mxu0 0.0
    %3949 = vmatmul.mubr.f32.gmra.mrb[0].mxu0 %v3496
    %v3950 = vpop.f32.mrb[0].mxu0
    %v3951 = vadd.f32 0.0, %v3950
    %v3952 = vpop.f32.mrb[0].mxu0
    %3953 = vmatprep.mubr.f32.mxu0 0.0
    %3954 = vmatmul.mubr.f32.gmra.mrb[0].mxu0 %v3498
    %v3955 = vpop.f32.mrb[0].mxu0
    %v3956 = vadd.f32 0.0, %v3955
    %v3957 = vpop.f32.mrb[0].mxu0
    %3958 = vmatprep.mubr.f32.mxu0 0.0
    %3959 = vmatmul.mubr.f32.gmra.mrb[0].mxu0 %v3500
    %v3960 = vpop.f32.mrb[0].mxu0
    %v3961 = vadd.f32 0.0, %v3960
    %v3962 = vpop.f32.mrb[0].mxu0
    %3963 = vmatprep.mubr.f32.mxu0 0.0
    %3964 = vmatmul.mubr.f32.gmra.mrb[0].mxu0 %v3502
    %v3965 = vpop.f32.mrb[0].mxu0
    %v3966 = vadd.f32 0.0, %v3965
    %v3967 = vpop.f32.mrb[0].mxu0
    %3968 = vmatprep.mubr.f32.mxu0 0.0
    %3969 = vmatmul.mubr.f32.gmra.mrb[0].mxu0 %v3670
    %v3970 = vpop.f32.mrb[0].mxu0
    %v3971 = vadd.f32 0.0, %v3970
    %v3972 = vpop.f32.mrb[0].mxu0
    %3973 = vmatprep.mubr.f32.mxu0 0.0
    %3974 = vmatmul.mubr.f32.gmra.mrb[0].mxu0 %v3672
    %v3975 = vpop.f32.mrb[0].mxu0
    %v3976 = vadd.f32 0.0, %v3975
    %v3977 = vpop.f32.mrb[0].mxu0
    %3978 = vmatprep.mubr.f32.mxu0 0.0
    %3979 = vmatmul.mubr.f32.gmra.mrb[0].mxu0 %v3840
    %v3980 = vpop.f32.mrb[0].mxu0
    %v3981 = vadd.f32 0.0, %v3980
    %v3982 = vpop.f32.mrb[0].mxu0
    %3983 = vmatprep.mubr.f32.mxu0 0.0
    %3984 = vmatmul.mubr.f32.gmra.mrb[0].mxu0 %v3842
    %v3985 = vpop.f32.mrb[0].mxu0
    %v3986 = vadd.f32 0.0, %v3985
    %v3987 = vpop.f32.mrb[0].mxu0
    %3988 = vdwg.mxu0
    %v3989 = vadd.f32 %v3819, %v3911
    %v3990 = vadd.f32 %v3820, %v3916
    %v3991 = vadd.f32 %v3821, %v3921
    %v3992 = vadd.f32 %v3822, %v3926
    %v3993 = vadd.f32 %v3823, %v3931
    %v3994 = vadd.f32 %v3824, %v3936
    %v3995 = vadd.f32 %v3825, %v3941
    %v3996 = vadd.f32 %v3826, %v3946
    %v3997 = vadd.f32 %v3827, %v3951
    %v3998 = vadd.f32 %v3828, %v3956
    %v3999 = vadd.f32 %v3829, %v3961
    %v4000 = vadd.f32 %v3830, %v3966
    %v4001 = vadd.f32 %v3831, %v3971
    %v4002 = vadd.f32 %v3832, %v3976
    %v4003 = vadd.f32 %v3833, %v3981
    %v4004 = vadd.f32 %v3834, %v3986
    %s4005 = scalar_lea.vmem %s3, 544
    %v4006 = vld [vmem:[%s4005] sm:$0xff]
    %v4007 = vld [vmem:[%s4005 + $0x8] sm:$0xff]
    %v4008 = vld [vmem:[%s4005 + $0x10] sm:$0xff]
    %v4009 = vld [vmem:[%s4005 + $0x18] sm:$0xff]
    %v4010 = vsel %vm181, %v3459, 0
    %v4012 = vsel %vm181, %v3461, 0
    %4014 = vmatprep.subr.mxu0 0.0
    %4015 = vmatpush1.msra.mxu0 %v4006
    %4016 = vmatprep.subr.mxu0 0.0
    %4017 = vmatpush1.msra.mxu0 %v4007
    %4018 = vmatprep.subr.mxu0 0.0
    %4019 = vmatpush1.msra.mxu0 %v4008
    %4020 = vmatprep.subr.mxu0 0.0
    %4021 = vmatpush1.msra.mxu0 %v4009
    %4022 = vmatprep.subr.mxu0 0.0
    %4023 = vmatpush1.msra.mxu0 0.0
    %4024 = vmatprep.subr.mxu0 0.0
    %4025 = vmatpush1.msra.mxu0 0.0
    %4026 = vmatprep.subr.mxu0 0.0
    %4027 = vmatpush1.msra.mxu0 0.0
    %4028 = vmatprep.subr.mxu0 0.0
    %4029 = vmatpush1.msra.mxu0 0.0
    %4030 = vmatprep.subr.mxu0 0.0
    %4031 = vmatpush1.msra.mxu0 0.0
    %4032 = vmatprep.subr.mxu0 0.0
    %4033 = vmatpush1.msra.mxu0 0.0
    %4034 = vmatprep.subr.mxu0 0.0
    %4035 = vmatpush1.msra.mxu0 0.0
    %4036 = vmatprep.subr.mxu0 0.0
    %4037 = vmatpush1.msra.mxu0 0.0
    %4038 = vmatprep.subr.mxu0 0.0
    %4039 = vmatpush1.msra.mxu0 0.0
    %4040 = vmatprep.subr.mxu0 0.0
    %4041 = vmatpush1.msra.mxu0 0.0
    %4042 = vmatprep.subr.mxu0 0.0
    %4043 = vmatpush1.msra.mxu0 0.0
    %4044 = vmatprep.subr.mxu0 0.0
    %4045 = vmatpush1.msra.mxu0 0.0
    %4046 = vmatprep.subr.mxu0 0.0
    %4047 = vmatpush1.msra.mxu0 0.0
    %4048 = vmatprep.subr.mxu0 0.0
    %4049 = vmatpush1.msra.mxu0 0.0
    %4050 = vmatprep.subr.mxu0 0.0
    %4051 = vmatpush1.msra.mxu0 0.0
    %4052 = vmatprep.subr.mxu0 0.0
    %4053 = vmatpush1.msra.mxu0 0.0
    %4054 = vmatprep.subr.mxu0 0.0
    %4055 = vmatpush1.msra.mxu0 0.0
    %4056 = vmatprep.subr.mxu0 0.0
    %4057 = vmatpush1.msra.mxu0 0.0
    %4058 = vmatprep.subr.mxu0 0.0
    %4059 = vmatpush1.msra.mxu0 0.0
    %4060 = vmatprep.subr.mxu0 0.0
    %4061 = vmatpush1.msra.mxu0 0.0
    %4062 = vmatprep.subr.mxu0 0.0
    %4063 = vmatpush1.msra.mxu0 0.0
    %4064 = vmatprep.subr.mxu0 0.0
    %4065 = vmatpush1.msra.mxu0 0.0
    %4066 = vmatprep.subr.mxu0 0.0
    %4067 = vmatpush1.msra.mxu0 0.0
    %4068 = vmatprep.subr.mxu0 0.0
    %4069 = vmatpush1.msra.mxu0 0.0
    %4070 = vmatprep.subr.mxu0 0.0
    %4071 = vmatpush1.msra.mxu0 0.0
    %4072 = vmatprep.subr.mxu0 0.0
    %4073 = vmatpush1.msra.mxu0 0.0
    %4074 = vmatprep.subr.mxu0 0.0
    %4075 = vmatpush1.msra.mxu0 0.0
    %4076 = vmatprep.subr.mxu0 0.0
    %4077 = vmatpush1.msra.mxu0 0.0
    %4078 = vmatprep.mubr.f32.mxu0 0.0
    %4079 = vmatmul.mubr.f32.gmra.mrb[0].mxu0 %v3484
    %v4080 = vpop.f32.mrb[0].mxu0
    %v4081 = vadd.f32 0.0, %v4080
    %v4082 = vpop.f32.mrb[0].mxu0
    %4083 = vmatprep.mubr.f32.mxu0 0.0
    %4084 = vmatmul.mubr.f32.gmra.mrb[0].mxu0 %v3486
    %v4085 = vpop.f32.mrb[0].mxu0
    %v4086 = vadd.f32 0.0, %v4085
    %v4087 = vpop.f32.mrb[0].mxu0
    %4088 = vmatprep.mubr.f32.mxu0 0.0
    %4089 = vmatmul.mubr.f32.gmra.mrb[0].mxu0 %v3488
    %v4090 = vpop.f32.mrb[0].mxu0
    %v4091 = vadd.f32 0.0, %v4090
    %v4092 = vpop.f32.mrb[0].mxu0
    %4093 = vmatprep.mubr.f32.mxu0 0.0
    %4094 = vmatmul.mubr.f32.gmra.mrb[0].mxu0 %v3490
    %v4095 = vpop.f32.mrb[0].mxu0
    %v4096 = vadd.f32 0.0, %v4095
    %v4097 = vpop.f32.mrb[0].mxu0
    %4098 = vmatprep.mubr.f32.mxu0 0.0
    %4099 = vmatmul.mubr.f32.gmra.mrb[0].mxu0 %v3492
    %v4100 = vpop.f32.mrb[0].mxu0
    %v4101 = vadd.f32 0.0, %v4100
    %v4102 = vpop.f32.mrb[0].mxu0
    %4103 = vmatprep.mubr.f32.mxu0 0.0
    %4104 = vmatmul.mubr.f32.gmra.mrb[0].mxu0 %v3494
    %v4105 = vpop.f32.mrb[0].mxu0
    %v4106 = vadd.f32 0.0, %v4105
    %v4107 = vpop.f32.mrb[0].mxu0
    %4108 = vmatprep.mubr.f32.mxu0 0.0
    %4109 = vmatmul.mubr.f32.gmra.mrb[0].mxu0 %v3496
    %v4110 = vpop.f32.mrb[0].mxu0
    %v4111 = vadd.f32 0.0, %v4110
    %v4112 = vpop.f32.mrb[0].mxu0
    %4113 = vmatprep.mubr.f32.mxu0 0.0
    %4114 = vmatmul.mubr.f32.gmra.mrb[0].mxu0 %v3498
    %v4115 = vpop.f32.mrb[0].mxu0
    %v4116 = vadd.f32 0.0, %v4115
    %v4117 = vpop.f32.mrb[0].mxu0
    %4118 = vmatprep.mubr.f32.mxu0 0.0
    %4119 = vmatmul.mubr.f32.gmra.mrb[0].mxu0 %v3500
    %v4120 = vpop.f32.mrb[0].mxu0
    %v4121 = vadd.f32 0.0, %v4120
    %v4122 = vpop.f32.mrb[0].mxu0
    %4123 = vmatprep.mubr.f32.mxu0 0.0
    %4124 = vmatmul.mubr.f32.gmra.mrb[0].mxu0 %v3502
    %v4125 = vpop.f32.mrb[0].mxu0
    %v4126 = vadd.f32 0.0, %v4125
    %v4127 = vpop.f32.mrb[0].mxu0
    %4128 = vmatprep.mubr.f32.mxu0 0.0
    %4129 = vmatmul.mubr.f32.gmra.mrb[0].mxu0 %v3670
    %v4130 = vpop.f32.mrb[0].mxu0
    %v4131 = vadd.f32 0.0, %v4130
    %v4132 = vpop.f32.mrb[0].mxu0
    %4133 = vmatprep.mubr.f32.mxu0 0.0
    %4134 = vmatmul.mubr.f32.gmra.mrb[0].mxu0 %v3672
    %v4135 = vpop.f32.mrb[0].mxu0
    %v4136 = vadd.f32 0.0, %v4135
    %v4137 = vpop.f32.mrb[0].mxu0
    %4138 = vmatprep.mubr.f32.mxu0 0.0
    %4139 = vmatmul.mubr.f32.gmra.mrb[0].mxu0 %v3840
    %v4140 = vpop.f32.mrb[0].mxu0
    %v4141 = vadd.f32 0.0, %v4140
    %v4142 = vpop.f32.mrb[0].mxu0
    %4143 = vmatprep.mubr.f32.mxu0 0.0
    %4144 = vmatmul.mubr.f32.gmra.mrb[0].mxu0 %v3842
    %v4145 = vpop.f32.mrb[0].mxu0
    %v4146 = vadd.f32 0.0, %v4145
    %v4147 = vpop.f32.mrb[0].mxu0
    %4148 = vmatprep.mubr.f32.mxu0 0.0
    %4149 = vmatmul.mubr.f32.gmra.mrb[0].mxu0 %v4010
    %v4150 = vpop.f32.mrb[0].mxu0
    %v4151 = vadd.f32 0.0, %v4150
    %v4152 = vpop.f32.mrb[0].mxu0
    %4153 = vmatprep.mubr.f32.mxu0 0.0
    %4154 = vmatmul.mubr.f32.gmra.mrb[0].mxu0 %v4012
    %v4155 = vpop.f32.mrb[0].mxu0
    %v4156 = vadd.f32 0.0, %v4155
    %v4157 = vpop.f32.mrb[0].mxu0
    %4158 = vdwg.mxu0
    %v4159 = vadd.f32 %v3989, %v4081
    %v4160 = vadd.f32 %v3990, %v4086
    %v4161 = vadd.f32 %v3991, %v4091
    %v4162 = vadd.f32 %v3992, %v4096
    %v4163 = vadd.f32 %v3993, %v4101
    %v4164 = vadd.f32 %v3994, %v4106
    %v4165 = vadd.f32 %v3995, %v4111
    %v4166 = vadd.f32 %v3996, %v4116
    %v4167 = vadd.f32 %v3997, %v4121
    %v4168 = vadd.f32 %v3998, %v4126
    %v4169 = vadd.f32 %v3999, %v4131
    %v4170 = vadd.f32 %v4000, %v4136
    %v4171 = vadd.f32 %v4001, %v4141
    %v4172 = vadd.f32 %v4002, %v4146
    %v4173 = vadd.f32 %v4003, %v4151
    %v4174 = vadd.f32 %v4004, %v4156
    %s4175 = scalar_lea.vmem %s3, 704
    %v4176 = vld [vmem:[%s4175] sm:$0xff]
    %v4177 = vld [vmem:[%s4175 + $0x8] sm:$0xff]
    %v4178 = vld [vmem:[%s4175 + $0x10] sm:$0xff]
    %v4179 = vld [vmem:[%s4175 + $0x18] sm:$0xff]
    %v4180 = vsel %vm181, %v3464, 0
    %v4182 = vsel %vm181, %v3466, 0
    %4184 = vmatprep.subr.mxu0 0.0
    %4185 = vmatpush1.msra.mxu0 %v4176
    %4186 = vmatprep.subr.mxu0 0.0
    %4187 = vmatpush1.msra.mxu0 %v4177
    %4188 = vmatprep.subr.mxu0 0.0
    %4189 = vmatpush1.msra.mxu0 %v4178
    %4190 = vmatprep.subr.mxu0 0.0
    %4191 = vmatpush1.msra.mxu0 %v4179
    %4192 = vmatprep.subr.mxu0 0.0
    %4193 = vmatpush1.msra.mxu0 0.0
    %4194 = vmatprep.subr.mxu0 0.0
    %4195 = vmatpush1.msra.mxu0 0.0
    %4196 = vmatprep.subr.mxu0 0.0
    %4197 = vmatpush1.msra.mxu0 0.0
    %4198 = vmatprep.subr.mxu0 0.0
    %4199 = vmatpush1.msra.mxu0 0.0
    %4200 = vmatprep.subr.mxu0 0.0
    %4201 = vmatpush1.msra.mxu0 0.0
    %4202 = vmatprep.subr.mxu0 0.0
    %4203 = vmatpush1.msra.mxu0 0.0
    %4204 = vmatprep.subr.mxu0 0.0
    %4205 = vmatpush1.msra.mxu0 0.0
    %4206 = vmatprep.subr.mxu0 0.0
    %4207 = vmatpush1.msra.mxu0 0.0
    %4208 = vmatprep.subr.mxu0 0.0
    %4209 = vmatpush1.msra.mxu0 0.0
    %4210 = vmatprep.subr.mxu0 0.0
    %4211 = vmatpush1.msra.mxu0 0.0
    %4212 = vmatprep.subr.mxu0 0.0
    %4213 = vmatpush1.msra.mxu0 0.0
    %4214 = vmatprep.subr.mxu0 0.0
    %4215 = vmatpush1.msra.mxu0 0.0
    %4216 = vmatprep.subr.mxu0 0.0
    %4217 = vmatpush1.msra.mxu0 0.0
    %4218 = vmatprep.subr.mxu0 0.0
    %4219 = vmatpush1.msra.mxu0 0.0
    %4220 = vmatprep.subr.mxu0 0.0
    %4221 = vmatpush1.msra.mxu0 0.0
    %4222 = vmatprep.subr.mxu0 0.0
    %4223 = vmatpush1.msra.mxu0 0.0
    %4224 = vmatprep.subr.mxu0 0.0
    %4225 = vmatpush1.msra.mxu0 0.0
    %4226 = vmatprep.subr.mxu0 0.0
    %4227 = vmatpush1.msra.mxu0 0.0
    %4228 = vmatprep.subr.mxu0 0.0
    %4229 = vmatpush1.msra.mxu0 0.0
    %4230 = vmatprep.subr.mxu0 0.0
    %4231 = vmatpush1.msra.mxu0 0.0
    %4232 = vmatprep.subr.mxu0 0.0
    %4233 = vmatpush1.msra.mxu0 0.0
    %4234 = vmatprep.subr.mxu0 0.0
    %4235 = vmatpush1.msra.mxu0 0.0
    %4236 = vmatprep.subr.mxu0 0.0
    %4237 = vmatpush1.msra.mxu0 0.0
    %4238 = vmatprep.subr.mxu0 0.0
    %4239 = vmatpush1.msra.mxu0 0.0
    %4240 = vmatprep.subr.mxu0 0.0
    %4241 = vmatpush1.msra.mxu0 0.0
    %4242 = vmatprep.subr.mxu0 0.0
    %4243 = vmatpush1.msra.mxu0 0.0
    %4244 = vmatprep.subr.mxu0 0.0
    %4245 = vmatpush1.msra.mxu0 0.0
    %4246 = vmatprep.subr.mxu0 0.0
    %4247 = vmatpush1.msra.mxu0 0.0
    %4248 = vmatprep.mubr.f32.mxu0 0.0
    %4249 = vmatmul.mubr.f32.gmra.mrb[0].mxu0 %v3488
    %v4250 = vpop.f32.mrb[0].mxu0
    %v4251 = vadd.f32 0.0, %v4250
    %v4252 = vpop.f32.mrb[0].mxu0
    %4253 = vmatprep.mubr.f32.mxu0 0.0
    %4254 = vmatmul.mubr.f32.gmra.mrb[0].mxu0 %v3490
    %v4255 = vpop.f32.mrb[0].mxu0
    %v4256 = vadd.f32 0.0, %v4255
    %v4257 = vpop.f32.mrb[0].mxu0
    %4258 = vmatprep.mubr.f32.mxu0 0.0
    %4259 = vmatmul.mubr.f32.gmra.mrb[0].mxu0 %v3492
    %v4260 = vpop.f32.mrb[0].mxu0
    %v4261 = vadd.f32 0.0, %v4260
    %v4262 = vpop.f32.mrb[0].mxu0
    %4263 = vmatprep.mubr.f32.mxu0 0.0
    %4264 = vmatmul.mubr.f32.gmra.mrb[0].mxu0 %v3494
    %v4265 = vpop.f32.mrb[0].mxu0
    %v4266 = vadd.f32 0.0, %v4265
    %v4267 = vpop.f32.mrb[0].mxu0
    %4268 = vmatprep.mubr.f32.mxu0 0.0
    %4269 = vmatmul.mubr.f32.gmra.mrb[0].mxu0 %v3496
    %v4270 = vpop.f32.mrb[0].mxu0
    %v4271 = vadd.f32 0.0, %v4270
    %v4272 = vpop.f32.mrb[0].mxu0
    %4273 = vmatprep.mubr.f32.mxu0 0.0
    %4274 = vmatmul.mubr.f32.gmra.mrb[0].mxu0 %v3498
    %v4275 = vpop.f32.mrb[0].mxu0
    %v4276 = vadd.f32 0.0, %v4275
    %v4277 = vpop.f32.mrb[0].mxu0
    %4278 = vmatprep.mubr.f32.mxu0 0.0
    %4279 = vmatmul.mubr.f32.gmra.mrb[0].mxu0 %v3500
    %v4280 = vpop.f32.mrb[0].mxu0
    %v4281 = vadd.f32 0.0, %v4280
    %v4282 = vpop.f32.mrb[0].mxu0
    %4283 = vmatprep.mubr.f32.mxu0 0.0
    %4284 = vmatmul.mubr.f32.gmra.mrb[0].mxu0 %v3502
    %v4285 = vpop.f32.mrb[0].mxu0
    %v4286 = vadd.f32 0.0, %v4285
    %v4287 = vpop.f32.mrb[0].mxu0
    %4288 = vmatprep.mubr.f32.mxu0 0.0
    %4289 = vmatmul.mubr.f32.gmra.mrb[0].mxu0 %v3670
    %v4290 = vpop.f32.mrb[0].mxu0
    %v4291 = vadd.f32 0.0, %v4290
    %v4292 = vpop.f32.mrb[0].mxu0
    %4293 = vmatprep.mubr.f32.mxu0 0.0
    %4294 = vmatmul.mubr.f32.gmra.mrb[0].mxu0 %v3672
    %v4295 = vpop.f32.mrb[0].mxu0
    %v4296 = vadd.f32 0.0, %v4295
    %v4297 = vpop.f32.mrb[0].mxu0
    %4298 = vmatprep.mubr.f32.mxu0 0.0
    %4299 = vmatmul.mubr.f32.gmra.mrb[0].mxu0 %v3840
    %v4300 = vpop.f32.mrb[0].mxu0
    %v4301 = vadd.f32 0.0, %v4300
    %v4302 = vpop.f32.mrb[0].mxu0
    %4303 = vmatprep.mubr.f32.mxu0 0.0
    %4304 = vmatmul.mubr.f32.gmra.mrb[0].mxu0 %v3842
    %v4305 = vpop.f32.mrb[0].mxu0
    %v4306 = vadd.f32 0.0, %v4305
    %v4307 = vpop.f32.mrb[0].mxu0
    %4308 = vmatprep.mubr.f32.mxu0 0.0
    %4309 = vmatmul.mubr.f32.gmra.mrb[0].mxu0 %v4010
    %v4310 = vpop.f32.mrb[0].mxu0
    %v4311 = vadd.f32 0.0, %v4310
    %v4312 = vpop.f32.mrb[0].mxu0
    %4313 = vmatprep.mubr.f32.mxu0 0.0
    %4314 = vmatmul.mubr.f32.gmra.mrb[0].mxu0 %v4012
    %v4315 = vpop.f32.mrb[0].mxu0
    %v4316 = vadd.f32 0.0, %v4315
    %v4317 = vpop.f32.mrb[0].mxu0
    %4318 = vmatprep.mubr.f32.mxu0 0.0
    %4319 = vmatmul.mubr.f32.gmra.mrb[0].mxu0 %v4180
    %v4320 = vpop.f32.mrb[0].mxu0
    %v4321 = vadd.f32 0.0, %v4320
    %v4322 = vpop.f32.mrb[0].mxu0
    %4323 = vmatprep.mubr.f32.mxu0 0.0
    %4324 = vmatmul.mubr.f32.gmra.mrb[0].mxu0 %v4182
    %v4325 = vpop.f32.mrb[0].mxu0
    %v4326 = vadd.f32 0.0, %v4325
    %v4327 = vpop.f32.mrb[0].mxu0
    %4328 = vdwg.mxu0
    %v4329 = vadd.f32 %v4159, %v4251
    %v4330 = vadd.f32 %v4160, %v4256
    %v4331 = vadd.f32 %v4161, %v4261
    %v4332 = vadd.f32 %v4162, %v4266
    %v4333 = vadd.f32 %v4163, %v4271
    %v4334 = vadd.f32 %v4164, %v4276
    %v4335 = vadd.f32 %v4165, %v4281
    %v4336 = vadd.f32 %v4166, %v4286
    %v4337 = vadd.f32 %v4167, %v4291
    %v4338 = vadd.f32 %v4168, %v4296
    %v4339 = vadd.f32 %v4169, %v4301
    %v4340 = vadd.f32 %v4170, %v4306
    %v4341 = vadd.f32 %v4171, %v4311
    %v4342 = vadd.f32 %v4172, %v4316
    %v4343 = vadd.f32 %v4173, %v4321
    %v4344 = vadd.f32 %v4174, %v4326
    %vm4345 = vcmask 1041408
    %v4346 = vrot.slane %v1550, 6
    %v4347 = vrot.slane %v1551, 6
    %v4348 = vsel %vm4345, %v4346, %v4347
    %v4349 = vrot.slane %v1552, 6
    %v4350 = vsel %vm4345, %v4347, %v4349
    %v4351 = vrot.slane %v1553, 6
    %v4352 = vrot.slane %v1554, 6
    %v4353 = vsel %vm4345, %v4351, %v4352
    %v4354 = vrot.slane %v1555, 6
    %v4355 = vsel %vm4345, %v4352, %v4354
    %v4356 = vrot.slane %v1556, 6
    %v4357 = vrot.slane %v1557, 6
    %v4358 = vsel %vm4345, %v4356, %v4357
    %v4359 = vrot.slane %v1558, 6
    %v4360 = vsel %vm4345, %v4357, %v4359
    %v4361 = vrot.slane %v1559, 6
    %v4362 = vrot.slane %v1560, 6
    %v4363 = vsel %vm4345, %v4361, %v4362
    %v4364 = vrot.slane %v1561, 6
    %v4365 = vsel %vm4345, %v4362, %v4364
    %v4366 = vrot.slane %v1562, 6
    %v4367 = vrot.slane %v1563, 6
    %v4368 = vsel %vm4345, %v4366, %v4367
    %v4369 = vrot.slane %v1564, 6
    %v4370 = vsel %vm4345, %v4367, %v4369
    %v4371 = vrot.slane %v1565, 6
    %v4372 = vrot.slane %v1566, 6
    %v4373 = vsel %vm4345, %v4371, %v4372
    %v4374 = vrot.slane %v1567, 6
    %v4375 = vsel %vm4345, %v4372, %v4374
    %v4376 = vrot.slane %v1568, 6
    %v4377 = vrot.slane %v1569, 6
    %v4378 = vsel %vm4345, %v4376, %v4377
    %v4379 = vrot.slane %v1570, 6
    %v4380 = vsel %vm4345, %v4377, %v4379
    %v4381 = vrot.slane %v1571, 6
    %v4382 = vrot.slane %v1572, 6
    %v4383 = vsel %vm4345, %v4381, %v4382
    %v4384 = vrot.slane %v1573, 6
    %v4385 = vsel %vm4345, %v4382, %v4384
    %v4386 = vrot.slane %v1574, 6
    %v4387 = vrot.slane %v1575, 6
    %v4388 = vsel %vm4345, %v4386, %v4387
    %v4389 = vrot.slane %v1576, 6
    %v4390 = vsel %vm4345, %v4387, %v4389
    %v4391 = vrot.slane %v1577, 6
    %v4392 = vrot.slane %v1578, 6
    %v4393 = vsel %vm4345, %v4391, %v4392
    %v4394 = vrot.slane %v1579, 6
    %v4395 = vsel %vm4345, %v4392, %v4394
    %v4396 = vrot.slane %v1580, 6
    %v4397 = vrot.slane %v1581, 6
    %v4398 = vsel %vm4345, %v4396, %v4397
    %v4399 = vrot.slane %v1582, 6
    %v4400 = vsel %vm4345, %v4397, %v4399
    %v4401 = vrot.slane %v1583, 6
    %v4402 = vrot.slane %v1584, 6
    %v4403 = vsel %vm4345, %v4401, %v4402
    %v4404 = vrot.slane %v1585, 6
    %v4405 = vsel %vm4345, %v4402, %v4404
    %s4406 = scalar_lea.vmem %s3, 96
    %v4407 = vld [vmem:[%s4406] sm:$0xff]
    %v4408 = vld [vmem:[%s4406 + $0x8] sm:$0xff]
    %v4409 = vld [vmem:[%s4406 + $0x10] sm:$0xff]
    %v4410 = vld [vmem:[%s4406 + $0x18] sm:$0xff]
    %v4411 = vsel %vm181, %v4348, 0
    %v4413 = vsel %vm181, %v4350, 0
    %v4415 = vsel %vm181, %v4353, 0
    %v4417 = vsel %vm181, %v4355, 0
    %v4419 = vsel %vm181, %v4358, 0
    %v4421 = vsel %vm181, %v4360, 0
    %v4423 = vsel %vm181, %v4363, 0
    %v4425 = vsel %vm181, %v4365, 0
    %v4427 = vsel %vm181, %v4368, 0
    %v4429 = vsel %vm181, %v4370, 0
    %v4431 = vsel %vm181, %v4373, 0
    %v4433 = vsel %vm181, %v4375, 0
    %v4435 = vsel %vm181, %v4378, 0
    %v4437 = vsel %vm181, %v4380, 0
    %v4439 = vsel %vm181, %v4383, 0
    %v4441 = vsel %vm181, %v4385, 0
    %4443 = vmatprep.subr.mxu0 0.0
    %4444 = vmatpush1.msra.mxu0 %v4407
    %4445 = vmatprep.subr.mxu0 0.0
    %4446 = vmatpush1.msra.mxu0 %v4408
    %4447 = vmatprep.subr.mxu0 0.0
    %4448 = vmatpush1.msra.mxu0 %v4409
    %4449 = vmatprep.subr.mxu0 0.0
    %4450 = vmatpush1.msra.mxu0 %v4410
    %4451 = vmatprep.subr.mxu0 0.0
    %4452 = vmatpush1.msra.mxu0 0.0
    %4453 = vmatprep.subr.mxu0 0.0
    %4454 = vmatpush1.msra.mxu0 0.0
    %4455 = vmatprep.subr.mxu0 0.0
    %4456 = vmatpush1.msra.mxu0 0.0
    %4457 = vmatprep.subr.mxu0 0.0
    %4458 = vmatpush1.msra.mxu0 0.0
    %4459 = vmatprep.subr.mxu0 0.0
    %4460 = vmatpush1.msra.mxu0 0.0
    %4461 = vmatprep.subr.mxu0 0.0
    %4462 = vmatpush1.msra.mxu0 0.0
    %4463 = vmatprep.subr.mxu0 0.0
    %4464 = vmatpush1.msra.mxu0 0.0
    %4465 = vmatprep.subr.mxu0 0.0
    %4466 = vmatpush1.msra.mxu0 0.0
    %4467 = vmatprep.subr.mxu0 0.0
    %4468 = vmatpush1.msra.mxu0 0.0
    %4469 = vmatprep.subr.mxu0 0.0
    %4470 = vmatpush1.msra.mxu0 0.0
    %4471 = vmatprep.subr.mxu0 0.0
    %4472 = vmatpush1.msra.mxu0 0.0
    %4473 = vmatprep.subr.mxu0 0.0
    %4474 = vmatpush1.msra.mxu0 0.0
    %4475 = vmatprep.subr.mxu0 0.0
    %4476 = vmatpush1.msra.mxu0 0.0
    %4477 = vmatprep.subr.mxu0 0.0
    %4478 = vmatpush1.msra.mxu0 0.0
    %4479 = vmatprep.subr.mxu0 0.0
    %4480 = vmatpush1.msra.mxu0 0.0
    %4481 = vmatprep.subr.mxu0 0.0
    %4482 = vmatpush1.msra.mxu0 0.0
    %4483 = vmatprep.subr.mxu0 0.0
    %4484 = vmatpush1.msra.mxu0 0.0
    %4485 = vmatprep.subr.mxu0 0.0
    %4486 = vmatpush1.msra.mxu0 0.0
    %4487 = vmatprep.subr.mxu0 0.0
    %4488 = vmatpush1.msra.mxu0 0.0
    %4489 = vmatprep.subr.mxu0 0.0
    %4490 = vmatpush1.msra.mxu0 0.0
    %4491 = vmatprep.subr.mxu0 0.0
    %4492 = vmatpush1.msra.mxu0 0.0
    %4493 = vmatprep.subr.mxu0 0.0
    %4494 = vmatpush1.msra.mxu0 0.0
    %4495 = vmatprep.subr.mxu0 0.0
    %4496 = vmatpush1.msra.mxu0 0.0
    %4497 = vmatprep.subr.mxu0 0.0
    %4498 = vmatpush1.msra.mxu0 0.0
    %4499 = vmatprep.subr.mxu0 0.0
    %4500 = vmatpush1.msra.mxu0 0.0
    %4501 = vmatprep.subr.mxu0 0.0
    %4502 = vmatpush1.msra.mxu0 0.0
    %4503 = vmatprep.subr.mxu0 0.0
    %4504 = vmatpush1.msra.mxu0 0.0
    %4505 = vmatprep.subr.mxu0 0.0
    %4506 = vmatpush1.msra.mxu0 0.0
    %4507 = vmatprep.mubr.f32.mxu0 0.0
    %4508 = vmatmul.mubr.f32.gmra.mrb[0].mxu0 %v4411
    %v4509 = vpop.f32.mrb[0].mxu0
    %v4510 = vadd.f32 0.0, %v4509
    %v4511 = vpop.f32.mrb[0].mxu0
    %4512 = vmatprep.mubr.f32.mxu0 0.0
    %4513 = vmatmul.mubr.f32.gmra.mrb[0].mxu0 %v4413
    %v4514 = vpop.f32.mrb[0].mxu0
    %v4515 = vadd.f32 0.0, %v4514
    %v4516 = vpop.f32.mrb[0].mxu0
    %4517 = vmatprep.mubr.f32.mxu0 0.0
    %4518 = vmatmul.mubr.f32.gmra.mrb[0].mxu0 %v4415
    %v4519 = vpop.f32.mrb[0].mxu0
    %v4520 = vadd.f32 0.0, %v4519
    %v4521 = vpop.f32.mrb[0].mxu0
    %4522 = vmatprep.mubr.f32.mxu0 0.0
    %4523 = vmatmul.mubr.f32.gmra.mrb[0].mxu0 %v4417
    %v4524 = vpop.f32.mrb[0].mxu0
    %v4525 = vadd.f32 0.0, %v4524
    %v4526 = vpop.f32.mrb[0].mxu0
    %4527 = vmatprep.mubr.f32.mxu0 0.0
    %4528 = vmatmul.mubr.f32.gmra.mrb[0].mxu0 %v4419
    %v4529 = vpop.f32.mrb[0].mxu0
    %v4530 = vadd.f32 0.0, %v4529
    %v4531 = vpop.f32.mrb[0].mxu0
    %4532 = vmatprep.mubr.f32.mxu0 0.0
    %4533 = vmatmul.mubr.f32.gmra.mrb[0].mxu0 %v4421
    %v4534 = vpop.f32.mrb[0].mxu0
    %v4535 = vadd.f32 0.0, %v4534
    %v4536 = vpop.f32.mrb[0].mxu0
    %4537 = vmatprep.mubr.f32.mxu0 0.0
    %4538 = vmatmul.mubr.f32.gmra.mrb[0].mxu0 %v4423
    %v4539 = vpop.f32.mrb[0].mxu0
    %v4540 = vadd.f32 0.0, %v4539
    %v4541 = vpop.f32.mrb[0].mxu0
    %4542 = vmatprep.mubr.f32.mxu0 0.0
    %4543 = vmatmul.mubr.f32.gmra.mrb[0].mxu0 %v4425
    %v4544 = vpop.f32.mrb[0].mxu0
    %v4545 = vadd.f32 0.0, %v4544
    %v4546 = vpop.f32.mrb[0].mxu0
    %4547 = vmatprep.mubr.f32.mxu0 0.0
    %4548 = vmatmul.mubr.f32.gmra.mrb[0].mxu0 %v4427
    %v4549 = vpop.f32.mrb[0].mxu0
    %v4550 = vadd.f32 0.0, %v4549
    %v4551 = vpop.f32.mrb[0].mxu0
    %4552 = vmatprep.mubr.f32.mxu0 0.0
    %4553 = vmatmul.mubr.f32.gmra.mrb[0].mxu0 %v4429
    %v4554 = vpop.f32.mrb[0].mxu0
    %v4555 = vadd.f32 0.0, %v4554
    %v4556 = vpop.f32.mrb[0].mxu0
    %4557 = vmatprep.mubr.f32.mxu0 0.0
    %4558 = vmatmul.mubr.f32.gmra.mrb[0].mxu0 %v4431
    %v4559 = vpop.f32.mrb[0].mxu0
    %v4560 = vadd.f32 0.0, %v4559
    %v4561 = vpop.f32.mrb[0].mxu0
    %4562 = vmatprep.mubr.f32.mxu0 0.0
    %4563 = vmatmul.mubr.f32.gmra.mrb[0].mxu0 %v4433
    %v4564 = vpop.f32.mrb[0].mxu0
    %v4565 = vadd.f32 0.0, %v4564
    %v4566 = vpop.f32.mrb[0].mxu0
    %4567 = vmatprep.mubr.f32.mxu0 0.0
    %4568 = vmatmul.mubr.f32.gmra.mrb[0].mxu0 %v4435
    %v4569 = vpop.f32.mrb[0].mxu0
    %v4570 = vadd.f32 0.0, %v4569
    %v4571 = vpop.f32.mrb[0].mxu0
    %4572 = vmatprep.mubr.f32.mxu0 0.0
    %4573 = vmatmul.mubr.f32.gmra.mrb[0].mxu0 %v4437
    %v4574 = vpop.f32.mrb[0].mxu0
    %v4575 = vadd.f32 0.0, %v4574
    %v4576 = vpop.f32.mrb[0].mxu0
    %4577 = vmatprep.mubr.f32.mxu0 0.0
    %4578 = vmatmul.mubr.f32.gmra.mrb[0].mxu0 %v4439
    %v4579 = vpop.f32.mrb[0].mxu0
    %v4580 = vadd.f32 0.0, %v4579
    %v4581 = vpop.f32.mrb[0].mxu0
    %4582 = vmatprep.mubr.f32.mxu0 0.0
    %4583 = vmatmul.mubr.f32.gmra.mrb[0].mxu0 %v4441
    %v4584 = vpop.f32.mrb[0].mxu0
    %v4585 = vadd.f32 0.0, %v4584
    %v4586 = vpop.f32.mrb[0].mxu0
    %4587 = vdwg.mxu0
    %v4588 = vadd.f32 %v4329, %v4510
    %v4589 = vadd.f32 %v4330, %v4515
    %v4590 = vadd.f32 %v4331, %v4520
    %v4591 = vadd.f32 %v4332, %v4525
    %v4592 = vadd.f32 %v4333, %v4530
    %v4593 = vadd.f32 %v4334, %v4535
    %v4594 = vadd.f32 %v4335, %v4540
    %v4595 = vadd.f32 %v4336, %v4545
    %v4596 = vadd.f32 %v4337, %v4550
    %v4597 = vadd.f32 %v4338, %v4555
    %v4598 = vadd.f32 %v4339, %v4560
    %v4599 = vadd.f32 %v4340, %v4565
    %v4600 = vadd.f32 %v4341, %v4570
    %v4601 = vadd.f32 %v4342, %v4575
    %v4602 = vadd.f32 %v4343, %v4580
    %v4603 = vadd.f32 %v4344, %v4585
    %s4604 = scalar_lea.vmem %s3, 256
    %v4605 = vld [vmem:[%s4604] sm:$0xff]
    %v4606 = vld [vmem:[%s4604 + $0x8] sm:$0xff]
    %v4607 = vld [vmem:[%s4604 + $0x10] sm:$0xff]
    %v4608 = vld [vmem:[%s4604 + $0x18] sm:$0xff]
    %v4609 = vsel %vm181, %v4388, 0
    %v4611 = vsel %vm181, %v4390, 0
    %4613 = vmatprep.subr.mxu0 0.0
    %4614 = vmatpush1.msra.mxu0 %v4605
    %4615 = vmatprep.subr.mxu0 0.0
    %4616 = vmatpush1.msra.mxu0 %v4606
    %4617 = vmatprep.subr.mxu0 0.0
    %4618 = vmatpush1.msra.mxu0 %v4607
    %4619 = vmatprep.subr.mxu0 0.0
    %4620 = vmatpush1.msra.mxu0 %v4608
    %4621 = vmatprep.subr.mxu0 0.0
    %4622 = vmatpush1.msra.mxu0 0.0
    %4623 = vmatprep.subr.mxu0 0.0
    %4624 = vmatpush1.msra.mxu0 0.0
    %4625 = vmatprep.subr.mxu0 0.0
    %4626 = vmatpush1.msra.mxu0 0.0
    %4627 = vmatprep.subr.mxu0 0.0
    %4628 = vmatpush1.msra.mxu0 0.0
    %4629 = vmatprep.subr.mxu0 0.0
    %4630 = vmatpush1.msra.mxu0 0.0
    %4631 = vmatprep.subr.mxu0 0.0
    %4632 = vmatpush1.msra.mxu0 0.0
    %4633 = vmatprep.subr.mxu0 0.0
    %4634 = vmatpush1.msra.mxu0 0.0
    %4635 = vmatprep.subr.mxu0 0.0
    %4636 = vmatpush1.msra.mxu0 0.0
    %4637 = vmatprep.subr.mxu0 0.0
    %4638 = vmatpush1.msra.mxu0 0.0
    %4639 = vmatprep.subr.mxu0 0.0
    %4640 = vmatpush1.msra.mxu0 0.0
    %4641 = vmatprep.subr.mxu0 0.0
    %4642 = vmatpush1.msra.mxu0 0.0
    %4643 = vmatprep.subr.mxu0 0.0
    %4644 = vmatpush1.msra.mxu0 0.0
    %4645 = vmatprep.subr.mxu0 0.0
    %4646 = vmatpush1.msra.mxu0 0.0
    %4647 = vmatprep.subr.mxu0 0.0
    %4648 = vmatpush1.msra.mxu0 0.0
    %4649 = vmatprep.subr.mxu0 0.0
    %4650 = vmatpush1.msra.mxu0 0.0
    %4651 = vmatprep.subr.mxu0 0.0
    %4652 = vmatpush1.msra.mxu0 0.0
    %4653 = vmatprep.subr.mxu0 0.0
    %4654 = vmatpush1.msra.mxu0 0.0
    %4655 = vmatprep.subr.mxu0 0.0
    %4656 = vmatpush1.msra.mxu0 0.0
    %4657 = vmatprep.subr.mxu0 0.0
    %4658 = vmatpush1.msra.mxu0 0.0
    %4659 = vmatprep.subr.mxu0 0.0
    %4660 = vmatpush1.msra.mxu0 0.0
    %4661 = vmatprep.subr.mxu0 0.0
    %4662 = vmatpush1.msra.mxu0 0.0
    %4663 = vmatprep.subr.mxu0 0.0
    %4664 = vmatpush1.msra.mxu0 0.0
    %4665 = vmatprep.subr.mxu0 0.0
    %4666 = vmatpush1.msra.mxu0 0.0
    %4667 = vmatprep.subr.mxu0 0.0
    %4668 = vmatpush1.msra.mxu0 0.0
    %4669 = vmatprep.subr.mxu0 0.0
    %4670 = vmatpush1.msra.mxu0 0.0
    %4671 = vmatprep.subr.mxu0 0.0
    %4672 = vmatpush1.msra.mxu0 0.0
    %4673 = vmatprep.subr.mxu0 0.0
    %4674 = vmatpush1.msra.mxu0 0.0
    %4675 = vmatprep.subr.mxu0 0.0
    %4676 = vmatpush1.msra.mxu0 0.0
    %4677 = vmatprep.mubr.f32.mxu0 0.0
    %4678 = vmatmul.mubr.f32.gmra.mrb[0].mxu0 %v4415
    %v4679 = vpop.f32.mrb[0].mxu0
    %v4680 = vadd.f32 0.0, %v4679
    %v4681 = vpop.f32.mrb[0].mxu0
    %4682 = vmatprep.mubr.f32.mxu0 0.0
    %4683 = vmatmul.mubr.f32.gmra.mrb[0].mxu0 %v4417
    %v4684 = vpop.f32.mrb[0].mxu0
    %v4685 = vadd.f32 0.0, %v4684
    %v4686 = vpop.f32.mrb[0].mxu0
    %4687 = vmatprep.mubr.f32.mxu0 0.0
    %4688 = vmatmul.mubr.f32.gmra.mrb[0].mxu0 %v4419
    %v4689 = vpop.f32.mrb[0].mxu0
    %v4690 = vadd.f32 0.0, %v4689
    %v4691 = vpop.f32.mrb[0].mxu0
    %4692 = vmatprep.mubr.f32.mxu0 0.0
    %4693 = vmatmul.mubr.f32.gmra.mrb[0].mxu0 %v4421
    %v4694 = vpop.f32.mrb[0].mxu0
    %v4695 = vadd.f32 0.0, %v4694
    %v4696 = vpop.f32.mrb[0].mxu0
    %4697 = vmatprep.mubr.f32.mxu0 0.0
    %4698 = vmatmul.mubr.f32.gmra.mrb[0].mxu0 %v4423
    %v4699 = vpop.f32.mrb[0].mxu0
    %v4700 = vadd.f32 0.0, %v4699
    %v4701 = vpop.f32.mrb[0].mxu0
    %4702 = vmatprep.mubr.f32.mxu0 0.0
    %4703 = vmatmul.mubr.f32.gmra.mrb[0].mxu0 %v4425
    %v4704 = vpop.f32.mrb[0].mxu0
    %v4705 = vadd.f32 0.0, %v4704
    %v4706 = vpop.f32.mrb[0].mxu0
    %4707 = vmatprep.mubr.f32.mxu0 0.0
    %4708 = vmatmul.mubr.f32.gmra.mrb[0].mxu0 %v4427
    %v4709 = vpop.f32.mrb[0].mxu0
    %v4710 = vadd.f32 0.0, %v4709
    %v4711 = vpop.f32.mrb[0].mxu0
    %4712 = vmatprep.mubr.f32.mxu0 0.0
    %4713 = vmatmul.mubr.f32.gmra.mrb[0].mxu0 %v4429
    %v4714 = vpop.f32.mrb[0].mxu0
    %v4715 = vadd.f32 0.0, %v4714
    %v4716 = vpop.f32.mrb[0].mxu0
    %4717 = vmatprep.mubr.f32.mxu0 0.0
    %4718 = vmatmul.mubr.f32.gmra.mrb[0].mxu0 %v4431
    %v4719 = vpop.f32.mrb[0].mxu0
    %v4720 = vadd.f32 0.0, %v4719
    %v4721 = vpop.f32.mrb[0].mxu0
    %4722 = vmatprep.mubr.f32.mxu0 0.0
    %4723 = vmatmul.mubr.f32.gmra.mrb[0].mxu0 %v4433
    %v4724 = vpop.f32.mrb[0].mxu0
    %v4725 = vadd.f32 0.0, %v4724
    %v4726 = vpop.f32.mrb[0].mxu0
    %4727 = vmatprep.mubr.f32.mxu0 0.0
    %4728 = vmatmul.mubr.f32.gmra.mrb[0].mxu0 %v4435
    %v4729 = vpop.f32.mrb[0].mxu0
    %v4730 = vadd.f32 0.0, %v4729
    %v4731 = vpop.f32.mrb[0].mxu0
    %4732 = vmatprep.mubr.f32.mxu0 0.0
    %4733 = vmatmul.mubr.f32.gmra.mrb[0].mxu0 %v4437
    %v4734 = vpop.f32.mrb[0].mxu0
    %v4735 = vadd.f32 0.0, %v4734
    %v4736 = vpop.f32.mrb[0].mxu0
    %4737 = vmatprep.mubr.f32.mxu0 0.0
    %4738 = vmatmul.mubr.f32.gmra.mrb[0].mxu0 %v4439
    %v4739 = vpop.f32.mrb[0].mxu0
    %v4740 = vadd.f32 0.0, %v4739
    %v4741 = vpop.f32.mrb[0].mxu0
    %4742 = vmatprep.mubr.f32.mxu0 0.0
    %4743 = vmatmul.mubr.f32.gmra.mrb[0].mxu0 %v4441
    %v4744 = vpop.f32.mrb[0].mxu0
    %v4745 = vadd.f32 0.0, %v4744
    %v4746 = vpop.f32.mrb[0].mxu0
    %4747 = vmatprep.mubr.f32.mxu0 0.0
    %4748 = vmatmul.mubr.f32.gmra.mrb[0].mxu0 %v4609
    %v4749 = vpop.f32.mrb[0].mxu0
    %v4750 = vadd.f32 0.0, %v4749
    %v4751 = vpop.f32.mrb[0].mxu0
    %4752 = vmatprep.mubr.f32.mxu0 0.0
    %4753 = vmatmul.mubr.f32.gmra.mrb[0].mxu0 %v4611
    %v4754 = vpop.f32.mrb[0].mxu0
    %v4755 = vadd.f32 0.0, %v4754
    %v4756 = vpop.f32.mrb[0].mxu0
    %4757 = vdwg.mxu0
    %v4758 = vadd.f32 %v4588, %v4680
    %v4759 = vadd.f32 %v4589, %v4685
    %v4760 = vadd.f32 %v4590, %v4690
    %v4761 = vadd.f32 %v4591, %v4695
    %v4762 = vadd.f32 %v4592, %v4700
    %v4763 = vadd.f32 %v4593, %v4705
    %v4764 = vadd.f32 %v4594, %v4710
    %v4765 = vadd.f32 %v4595, %v4715
    %v4766 = vadd.f32 %v4596, %v4720
    %v4767 = vadd.f32 %v4597, %v4725
    %v4768 = vadd.f32 %v4598, %v4730
    %v4769 = vadd.f32 %v4599, %v4735
    %v4770 = vadd.f32 %v4600, %v4740
    %v4771 = vadd.f32 %v4601, %v4745
    %v4772 = vadd.f32 %v4602, %v4750
    %v4773 = vadd.f32 %v4603, %v4755
    %s4774 = scalar_lea.vmem %s3, 416
    %v4775 = vld [vmem:[%s4774] sm:$0xff]
    %v4776 = vld [vmem:[%s4774 + $0x8] sm:$0xff]
    %v4777 = vld [vmem:[%s4774 + $0x10] sm:$0xff]
    %v4778 = vld [vmem:[%s4774 + $0x18] sm:$0xff]
    %v4779 = vsel %vm181, %v4393, 0
    %v4781 = vsel %vm181, %v4395, 0
    %4783 = vmatprep.subr.mxu0 0.0
    %4784 = vmatpush1.msra.mxu0 %v4775
    %4785 = vmatprep.subr.mxu0 0.0
    %4786 = vmatpush1.msra.mxu0 %v4776
    %4787 = vmatprep.subr.mxu0 0.0
    %4788 = vmatpush1.msra.mxu0 %v4777
    %4789 = vmatprep.subr.mxu0 0.0
    %4790 = vmatpush1.msra.mxu0 %v4778
    %4791 = vmatprep.subr.mxu0 0.0
    %4792 = vmatpush1.msra.mxu0 0.0
    %4793 = vmatprep.subr.mxu0 0.0
    %4794 = vmatpush1.msra.mxu0 0.0
    %4795 = vmatprep.subr.mxu0 0.0
    %4796 = vmatpush1.msra.mxu0 0.0
    %4797 = vmatprep.subr.mxu0 0.0
    %4798 = vmatpush1.msra.mxu0 0.0
    %4799 = vmatprep.subr.mxu0 0.0
    %4800 = vmatpush1.msra.mxu0 0.0
    %4801 = vmatprep.subr.mxu0 0.0
    %4802 = vmatpush1.msra.mxu0 0.0
    %4803 = vmatprep.subr.mxu0 0.0
    %4804 = vmatpush1.msra.mxu0 0.0
    %4805 = vmatprep.subr.mxu0 0.0
    %4806 = vmatpush1.msra.mxu0 0.0
    %4807 = vmatprep.subr.mxu0 0.0
    %4808 = vmatpush1.msra.mxu0 0.0
    %4809 = vmatprep.subr.mxu0 0.0
    %4810 = vmatpush1.msra.mxu0 0.0
    %4811 = vmatprep.subr.mxu0 0.0
    %4812 = vmatpush1.msra.mxu0 0.0
    %4813 = vmatprep.subr.mxu0 0.0
    %4814 = vmatpush1.msra.mxu0 0.0
    %4815 = vmatprep.subr.mxu0 0.0
    %4816 = vmatpush1.msra.mxu0 0.0
    %4817 = vmatprep.subr.mxu0 0.0
    %4818 = vmatpush1.msra.mxu0 0.0
    %4819 = vmatprep.subr.mxu0 0.0
    %4820 = vmatpush1.msra.mxu0 0.0
    %4821 = vmatprep.subr.mxu0 0.0
    %4822 = vmatpush1.msra.mxu0 0.0
    %4823 = vmatprep.subr.mxu0 0.0
    %4824 = vmatpush1.msra.mxu0 0.0
    %4825 = vmatprep.subr.mxu0 0.0
    %4826 = vmatpush1.msra.mxu0 0.0
    %4827 = vmatprep.subr.mxu0 0.0
    %4828 = vmatpush1.msra.mxu0 0.0
    %4829 = vmatprep.subr.mxu0 0.0
    %4830 = vmatpush1.msra.mxu0 0.0
    %4831 = vmatprep.subr.mxu0 0.0
    %4832 = vmatpush1.msra.mxu0 0.0
    %4833 = vmatprep.subr.mxu0 0.0
    %4834 = vmatpush1.msra.mxu0 0.0
    %4835 = vmatprep.subr.mxu0 0.0
    %4836 = vmatpush1.msra.mxu0 0.0
    %4837 = vmatprep.subr.mxu0 0.0
    %4838 = vmatpush1.msra.mxu0 0.0
    %4839 = vmatprep.subr.mxu0 0.0
    %4840 = vmatpush1.msra.mxu0 0.0
    %4841 = vmatprep.subr.mxu0 0.0
    %4842 = vmatpush1.msra.mxu0 0.0
    %4843 = vmatprep.subr.mxu0 0.0
    %4844 = vmatpush1.msra.mxu0 0.0
    %4845 = vmatprep.subr.mxu0 0.0
    %4846 = vmatpush1.msra.mxu0 0.0
    %4847 = vmatprep.mubr.f32.mxu0 0.0
    %4848 = vmatmul.mubr.f32.gmra.mrb[0].mxu0 %v4419
    %v4849 = vpop.f32.mrb[0].mxu0
    %v4850 = vadd.f32 0.0, %v4849
    %v4851 = vpop.f32.mrb[0].mxu0
    %4852 = vmatprep.mubr.f32.mxu0 0.0
    %4853 = vmatmul.mubr.f32.gmra.mrb[0].mxu0 %v4421
    %v4854 = vpop.f32.mrb[0].mxu0
    %v4855 = vadd.f32 0.0, %v4854
    %v4856 = vpop.f32.mrb[0].mxu0
    %4857 = vmatprep.mubr.f32.mxu0 0.0
    %4858 = vmatmul.mubr.f32.gmra.mrb[0].mxu0 %v4423
    %v4859 = vpop.f32.mrb[0].mxu0
    %v4860 = vadd.f32 0.0, %v4859
    %v4861 = vpop.f32.mrb[0].mxu0
    %4862 = vmatprep.mubr.f32.mxu0 0.0
    %4863 = vmatmul.mubr.f32.gmra.mrb[0].mxu0 %v4425
    %v4864 = vpop.f32.mrb[0].mxu0
    %v4865 = vadd.f32 0.0, %v4864
    %v4866 = vpop.f32.mrb[0].mxu0
    %4867 = vmatprep.mubr.f32.mxu0 0.0
    %4868 = vmatmul.mubr.f32.gmra.mrb[0].mxu0 %v4427
    %v4869 = vpop.f32.mrb[0].mxu0
    %v4870 = vadd.f32 0.0, %v4869
    %v4871 = vpop.f32.mrb[0].mxu0
    %4872 = vmatprep.mubr.f32.mxu0 0.0
    %4873 = vmatmul.mubr.f32.gmra.mrb[0].mxu0 %v4429
    %v4874 = vpop.f32.mrb[0].mxu0
    %v4875 = vadd.f32 0.0, %v4874
    %v4876 = vpop.f32.mrb[0].mxu0
    %4877 = vmatprep.mubr.f32.mxu0 0.0
    %4878 = vmatmul.mubr.f32.gmra.mrb[0].mxu0 %v4431
    %v4879 = vpop.f32.mrb[0].mxu0
    %v4880 = vadd.f32 0.0, %v4879
    %v4881 = vpop.f32.mrb[0].mxu0
    %4882 = vmatprep.mubr.f32.mxu0 0.0
    %4883 = vmatmul.mubr.f32.gmra.mrb[0].mxu0 %v4433
    %v4884 = vpop.f32.mrb[0].mxu0
    %v4885 = vadd.f32 0.0, %v4884
    %v4886 = vpop.f32.mrb[0].mxu0
    %4887 = vmatprep.mubr.f32.mxu0 0.0
    %4888 = vmatmul.mubr.f32.gmra.mrb[0].mxu0 %v4435
    %v4889 = vpop.f32.mrb[0].mxu0
    %v4890 = vadd.f32 0.0, %v4889
    %v4891 = vpop.f32.mrb[0].mxu0
    %4892 = vmatprep.mubr.f32.mxu0 0.0
    %4893 = vmatmul.mubr.f32.gmra.mrb[0].mxu0 %v4437
    %v4894 = vpop.f32.mrb[0].mxu0
    %v4895 = vadd.f32 0.0, %v4894
    %v4896 = vpop.f32.mrb[0].mxu0
    %4897 = vmatprep.mubr.f32.mxu0 0.0
    %4898 = vmatmul.mubr.f32.gmra.mrb[0].mxu0 %v4439
    %v4899 = vpop.f32.mrb[0].mxu0
    %v4900 = vadd.f32 0.0, %v4899
    %v4901 = vpop.f32.mrb[0].mxu0
    %4902 = vmatprep.mubr.f32.mxu0 0.0
    %4903 = vmatmul.mubr.f32.gmra.mrb[0].mxu0 %v4441
    %v4904 = vpop.f32.mrb[0].mxu0
    %v4905 = vadd.f32 0.0, %v4904
    %v4906 = vpop.f32.mrb[0].mxu0
    %4907 = vmatprep.mubr.f32.mxu0 0.0
    %4908 = vmatmul.mubr.f32.gmra.mrb[0].mxu0 %v4609
    %v4909 = vpop.f32.mrb[0].mxu0
    %v4910 = vadd.f32 0.0, %v4909
    %v4911 = vpop.f32.mrb[0].mxu0
    %4912 = vmatprep.mubr.f32.mxu0 0.0
    %4913 = vmatmul.mubr.f32.gmra.mrb[0].mxu0 %v4611
    %v4914 = vpop.f32.mrb[0].mxu0
    %v4915 = vadd.f32 0.0, %v4914
    %v4916 = vpop.f32.mrb[0].mxu0
    %4917 = vmatprep.mubr.f32.mxu0 0.0
    %4918 = vmatmul.mubr.f32.gmra.mrb[0].mxu0 %v4779
    %v4919 = vpop.f32.mrb[0].mxu0
    %v4920 = vadd.f32 0.0, %v4919
    %v4921 = vpop.f32.mrb[0].mxu0
    %4922 = vmatprep.mubr.f32.mxu0 0.0
    %4923 = vmatmul.mubr.f32.gmra.mrb[0].mxu0 %v4781
    %v4924 = vpop.f32.mrb[0].mxu0
    %v4925 = vadd.f32 0.0, %v4924
    %v4926 = vpop.f32.mrb[0].mxu0
    %4927 = vdwg.mxu0
    %v4928 = vadd.f32 %v4758, %v4850
    %v4929 = vadd.f32 %v4759, %v4855
    %v4930 = vadd.f32 %v4760, %v4860
    %v4931 = vadd.f32 %v4761, %v4865
    %v4932 = vadd.f32 %v4762, %v4870
    %v4933 = vadd.f32 %v4763, %v4875
    %v4934 = vadd.f32 %v4764, %v4880
    %v4935 = vadd.f32 %v4765, %v4885
    %v4936 = vadd.f32 %v4766, %v4890
    %v4937 = vadd.f32 %v4767, %v4895
    %v4938 = vadd.f32 %v4768, %v4900
    %v4939 = vadd.f32 %v4769, %v4905
    %v4940 = vadd.f32 %v4770, %v4910
    %v4941 = vadd.f32 %v4771, %v4915
    %v4942 = vadd.f32 %v4772, %v4920
    %v4943 = vadd.f32 %v4773, %v4925
    %s4944 = scalar_lea.vmem %s3, 576
    %v4945 = vld [vmem:[%s4944] sm:$0xff]
    %v4946 = vld [vmem:[%s4944 + $0x8] sm:$0xff]
    %v4947 = vld [vmem:[%s4944 + $0x10] sm:$0xff]
    %v4948 = vld [vmem:[%s4944 + $0x18] sm:$0xff]
    %v4949 = vsel %vm181, %v4398, 0
    %v4951 = vsel %vm181, %v4400, 0
    %4953 = vmatprep.subr.mxu0 0.0
    %4954 = vmatpush1.msra.mxu0 %v4945
    %4955 = vmatprep.subr.mxu0 0.0
    %4956 = vmatpush1.msra.mxu0 %v4946
    %4957 = vmatprep.subr.mxu0 0.0
    %4958 = vmatpush1.msra.mxu0 %v4947
    %4959 = vmatprep.subr.mxu0 0.0
    %4960 = vmatpush1.msra.mxu0 %v4948
    %4961 = vmatprep.subr.mxu0 0.0
    %4962 = vmatpush1.msra.mxu0 0.0
    %4963 = vmatprep.subr.mxu0 0.0
    %4964 = vmatpush1.msra.mxu0 0.0
    %4965 = vmatprep.subr.mxu0 0.0
    %4966 = vmatpush1.msra.mxu0 0.0
    %4967 = vmatprep.subr.mxu0 0.0
    %4968 = vmatpush1.msra.mxu0 0.0
    %4969 = vmatprep.subr.mxu0 0.0
    %4970 = vmatpush1.msra.mxu0 0.0
    %4971 = vmatprep.subr.mxu0 0.0
    %4972 = vmatpush1.msra.mxu0 0.0
    %4973 = vmatprep.subr.mxu0 0.0
    %4974 = vmatpush1.msra.mxu0 0.0
    %4975 = vmatprep.subr.mxu0 0.0
    %4976 = vmatpush1.msra.mxu0 0.0
    %4977 = vmatprep.subr.mxu0 0.0
    %4978 = vmatpush1.msra.mxu0 0.0
    %4979 = vmatprep.subr.mxu0 0.0
    %4980 = vmatpush1.msra.mxu0 0.0
    %4981 = vmatprep.subr.mxu0 0.0
    %4982 = vmatpush1.msra.mxu0 0.0
    %4983 = vmatprep.subr.mxu0 0.0
    %4984 = vmatpush1.msra.mxu0 0.0
    %4985 = vmatprep.subr.mxu0 0.0
    %4986 = vmatpush1.msra.mxu0 0.0
    %4987 = vmatprep.subr.mxu0 0.0
    %4988 = vmatpush1.msra.mxu0 0.0
    %4989 = vmatprep.subr.mxu0 0.0
    %4990 = vmatpush1.msra.mxu0 0.0
    %4991 = vmatprep.subr.mxu0 0.0
    %4992 = vmatpush1.msra.mxu0 0.0
    %4993 = vmatprep.subr.mxu0 0.0
    %4994 = vmatpush1.msra.mxu0 0.0
    %4995 = vmatprep.subr.mxu0 0.0
    %4996 = vmatpush1.msra.mxu0 0.0
    %4997 = vmatprep.subr.mxu0 0.0
    %4998 = vmatpush1.msra.mxu0 0.0
    %4999 = vmatprep.subr.mxu0 0.0
    %5000 = vmatpush1.msra.mxu0 0.0
    %5001 = vmatprep.subr.mxu0 0.0
    %5002 = vmatpush1.msra.mxu0 0.0
    %5003 = vmatprep.subr.mxu0 0.0
    %5004 = vmatpush1.msra.mxu0 0.0
    %5005 = vmatprep.subr.mxu0 0.0
    %5006 = vmatpush1.msra.mxu0 0.0
    %5007 = vmatprep.subr.mxu0 0.0
    %5008 = vmatpush1.msra.mxu0 0.0
    %5009 = vmatprep.subr.mxu0 0.0
    %5010 = vmatpush1.msra.mxu0 0.0
    %5011 = vmatprep.subr.mxu0 0.0
    %5012 = vmatpush1.msra.mxu0 0.0
    %5013 = vmatprep.subr.mxu0 0.0
    %5014 = vmatpush1.msra.mxu0 0.0
    %5015 = vmatprep.subr.mxu0 0.0
    %5016 = vmatpush1.msra.mxu0 0.0
    %5017 = vmatprep.mubr.f32.mxu0 0.0
    %5018 = vmatmul.mubr.f32.gmra.mrb[0].mxu0 %v4423
    %v5019 = vpop.f32.mrb[0].mxu0
    %v5020 = vadd.f32 0.0, %v5019
    %v5021 = vpop.f32.mrb[0].mxu0
    %5022 = vmatprep.mubr.f32.mxu0 0.0
    %5023 = vmatmul.mubr.f32.gmra.mrb[0].mxu0 %v4425
    %v5024 = vpop.f32.mrb[0].mxu0
    %v5025 = vadd.f32 0.0, %v5024
    %v5026 = vpop.f32.mrb[0].mxu0
    %5027 = vmatprep.mubr.f32.mxu0 0.0
    %5028 = vmatmul.mubr.f32.gmra.mrb[0].mxu0 %v4427
    %v5029 = vpop.f32.mrb[0].mxu0
    %v5030 = vadd.f32 0.0, %v5029
    %v5031 = vpop.f32.mrb[0].mxu0
    %5032 = vmatprep.mubr.f32.mxu0 0.0
    %5033 = vmatmul.mubr.f32.gmra.mrb[0].mxu0 %v4429
    %v5034 = vpop.f32.mrb[0].mxu0
    %v5035 = vadd.f32 0.0, %v5034
    %v5036 = vpop.f32.mrb[0].mxu0
    %5037 = vmatprep.mubr.f32.mxu0 0.0
    %5038 = vmatmul.mubr.f32.gmra.mrb[0].mxu0 %v4431
    %v5039 = vpop.f32.mrb[0].mxu0
    %v5040 = vadd.f32 0.0, %v5039
    %v5041 = vpop.f32.mrb[0].mxu0
    %5042 = vmatprep.mubr.f32.mxu0 0.0
    %5043 = vmatmul.mubr.f32.gmra.mrb[0].mxu0 %v4433
    %v5044 = vpop.f32.mrb[0].mxu0
    %v5045 = vadd.f32 0.0, %v5044
    %v5046 = vpop.f32.mrb[0].mxu0
    %5047 = vmatprep.mubr.f32.mxu0 0.0
    %5048 = vmatmul.mubr.f32.gmra.mrb[0].mxu0 %v4435
    %v5049 = vpop.f32.mrb[0].mxu0
    %v5050 = vadd.f32 0.0, %v5049
    %v5051 = vpop.f32.mrb[0].mxu0
    %5052 = vmatprep.mubr.f32.mxu0 0.0
    %5053 = vmatmul.mubr.f32.gmra.mrb[0].mxu0 %v4437
    %v5054 = vpop.f32.mrb[0].mxu0
    %v5055 = vadd.f32 0.0, %v5054
    %v5056 = vpop.f32.mrb[0].mxu0
    %5057 = vmatprep.mubr.f32.mxu0 0.0
    %5058 = vmatmul.mubr.f32.gmra.mrb[0].mxu0 %v4439
    %v5059 = vpop.f32.mrb[0].mxu0
    %v5060 = vadd.f32 0.0, %v5059
    %v5061 = vpop.f32.mrb[0].mxu0
    %5062 = vmatprep.mubr.f32.mxu0 0.0
    %5063 = vmatmul.mubr.f32.gmra.mrb[0].mxu0 %v4441
    %v5064 = vpop.f32.mrb[0].mxu0
    %v5065 = vadd.f32 0.0, %v5064
    %v5066 = vpop.f32.mrb[0].mxu0
    %5067 = vmatprep.mubr.f32.mxu0 0.0
    %5068 = vmatmul.mubr.f32.gmra.mrb[0].mxu0 %v4609
    %v5069 = vpop.f32.mrb[0].mxu0
    %v5070 = vadd.f32 0.0, %v5069
    %v5071 = vpop.f32.mrb[0].mxu0
    %5072 = vmatprep.mubr.f32.mxu0 0.0
    %5073 = vmatmul.mubr.f32.gmra.mrb[0].mxu0 %v4611
    %v5074 = vpop.f32.mrb[0].mxu0
    %v5075 = vadd.f32 0.0, %v5074
    %v5076 = vpop.f32.mrb[0].mxu0
    %5077 = vmatprep.mubr.f32.mxu0 0.0
    %5078 = vmatmul.mubr.f32.gmra.mrb[0].mxu0 %v4779
    %v5079 = vpop.f32.mrb[0].mxu0
    %v5080 = vadd.f32 0.0, %v5079
    %v5081 = vpop.f32.mrb[0].mxu0
    %5082 = vmatprep.mubr.f32.mxu0 0.0
    %5083 = vmatmul.mubr.f32.gmra.mrb[0].mxu0 %v4781
    %v5084 = vpop.f32.mrb[0].mxu0
    %v5085 = vadd.f32 0.0, %v5084
    %v5086 = vpop.f32.mrb[0].mxu0
    %5087 = vmatprep.mubr.f32.mxu0 0.0
    %5088 = vmatmul.mubr.f32.gmra.mrb[0].mxu0 %v4949
    %v5089 = vpop.f32.mrb[0].mxu0
    %v5090 = vadd.f32 0.0, %v5089
    %v5091 = vpop.f32.mrb[0].mxu0
    %5092 = vmatprep.mubr.f32.mxu0 0.0
    %5093 = vmatmul.mubr.f32.gmra.mrb[0].mxu0 %v4951
    %v5094 = vpop.f32.mrb[0].mxu0
    %v5095 = vadd.f32 0.0, %v5094
    %v5096 = vpop.f32.mrb[0].mxu0
    %5097 = vdwg.mxu0
    %v5098 = vadd.f32 %v4928, %v5020
    %v5099 = vadd.f32 %v4929, %v5025
    %v5100 = vadd.f32 %v4930, %v5030
    %v5101 = vadd.f32 %v4931, %v5035
    %v5102 = vadd.f32 %v4932, %v5040
    %v5103 = vadd.f32 %v4933, %v5045
    %v5104 = vadd.f32 %v4934, %v5050
    %v5105 = vadd.f32 %v4935, %v5055
    %v5106 = vadd.f32 %v4936, %v5060
    %v5107 = vadd.f32 %v4937, %v5065
    %v5108 = vadd.f32 %v4938, %v5070
    %v5109 = vadd.f32 %v4939, %v5075
    %v5110 = vadd.f32 %v4940, %v5080
    %v5111 = vadd.f32 %v4941, %v5085
    %v5112 = vadd.f32 %v4942, %v5090
    %v5113 = vadd.f32 %v4943, %v5095
    %s5114 = scalar_lea.vmem %s3, 736
    %v5115 = vld [vmem:[%s5114] sm:$0xff]
    %v5116 = vld [vmem:[%s5114 + $0x8] sm:$0xff]
    %v5117 = vld [vmem:[%s5114 + $0x10] sm:$0xff]
    %v5118 = vld [vmem:[%s5114 + $0x18] sm:$0xff]
    %v5119 = vsel %vm181, %v4403, 0
    %v5121 = vsel %vm181, %v4405, 0
    %5123 = vmatprep.subr.mxu0 0.0
    %5124 = vmatpush1.msra.mxu0 %v5115
    %5125 = vmatprep.subr.mxu0 0.0
    %5126 = vmatpush1.msra.mxu0 %v5116
    %5127 = vmatprep.subr.mxu0 0.0
    %5128 = vmatpush1.msra.mxu0 %v5117
    %5129 = vmatprep.subr.mxu0 0.0
    %5130 = vmatpush1.msra.mxu0 %v5118
    %5131 = vmatprep.subr.mxu0 0.0
    %5132 = vmatpush1.msra.mxu0 0.0
    %5133 = vmatprep.subr.mxu0 0.0
    %5134 = vmatpush1.msra.mxu0 0.0
    %5135 = vmatprep.subr.mxu0 0.0
    %5136 = vmatpush1.msra.mxu0 0.0
    %5137 = vmatprep.subr.mxu0 0.0
    %5138 = vmatpush1.msra.mxu0 0.0
    %5139 = vmatprep.subr.mxu0 0.0
    %5140 = vmatpush1.msra.mxu0 0.0
    %5141 = vmatprep.subr.mxu0 0.0
    %5142 = vmatpush1.msra.mxu0 0.0
    %5143 = vmatprep.subr.mxu0 0.0
    %5144 = vmatpush1.msra.mxu0 0.0
    %5145 = vmatprep.subr.mxu0 0.0
    %5146 = vmatpush1.msra.mxu0 0.0
    %5147 = vmatprep.subr.mxu0 0.0
    %5148 = vmatpush1.msra.mxu0 0.0
    %5149 = vmatprep.subr.mxu0 0.0
    %5150 = vmatpush1.msra.mxu0 0.0
    %5151 = vmatprep.subr.mxu0 0.0
    %5152 = vmatpush1.msra.mxu0 0.0
    %5153 = vmatprep.subr.mxu0 0.0
    %5154 = vmatpush1.msra.mxu0 0.0
    %5155 = vmatprep.subr.mxu0 0.0
    %5156 = vmatpush1.msra.mxu0 0.0
    %5157 = vmatprep.subr.mxu0 0.0
    %5158 = vmatpush1.msra.mxu0 0.0
    %5159 = vmatprep.subr.mxu0 0.0
    %5160 = vmatpush1.msra.mxu0 0.0
    %5161 = vmatprep.subr.mxu0 0.0
    %5162 = vmatpush1.msra.mxu0 0.0
    %5163 = vmatprep.subr.mxu0 0.0
    %5164 = vmatpush1.msra.mxu0 0.0
    %5165 = vmatprep.subr.mxu0 0.0
    %5166 = vmatpush1.msra.mxu0 0.0
    %5167 = vmatprep.subr.mxu0 0.0
    %5168 = vmatpush1.msra.mxu0 0.0
    %5169 = vmatprep.subr.mxu0 0.0
    %5170 = vmatpush1.msra.mxu0 0.0
    %5171 = vmatprep.subr.mxu0 0.0
    %5172 = vmatpush1.msra.mxu0 0.0
    %5173 = vmatprep.subr.mxu0 0.0
    %5174 = vmatpush1.msra.mxu0 0.0
    %5175 = vmatprep.subr.mxu0 0.0
    %5176 = vmatpush1.msra.mxu0 0.0
    %5177 = vmatprep.subr.mxu0 0.0
    %5178 = vmatpush1.msra.mxu0 0.0
    %5179 = vmatprep.subr.mxu0 0.0
    %5180 = vmatpush1.msra.mxu0 0.0
    %5181 = vmatprep.subr.mxu0 0.0
    %5182 = vmatpush1.msra.mxu0 0.0
    %5183 = vmatprep.subr.mxu0 0.0
    %5184 = vmatpush1.msra.mxu0 0.0
    %5185 = vmatprep.subr.mxu0 0.0
    %5186 = vmatpush1.msra.mxu0 0.0
    %5187 = vmatprep.mubr.f32.mxu0 0.0
    %5188 = vmatmul.mubr.f32.gmra.mrb[0].mxu0 %v4427
    %v5189 = vpop.f32.mrb[0].mxu0
    %v5190 = vadd.f32 0.0, %v5189
    %v5191 = vpop.f32.mrb[0].mxu0
    %5192 = vmatprep.mubr.f32.mxu0 0.0
    %5193 = vmatmul.mubr.f32.gmra.mrb[0].mxu0 %v4429
    %v5194 = vpop.f32.mrb[0].mxu0
    %v5195 = vadd.f32 0.0, %v5194
    %v5196 = vpop.f32.mrb[0].mxu0
    %5197 = vmatprep.mubr.f32.mxu0 0.0
    %5198 = vmatmul.mubr.f32.gmra.mrb[0].mxu0 %v4431
    %v5199 = vpop.f32.mrb[0].mxu0
    %v5200 = vadd.f32 0.0, %v5199
    %v5201 = vpop.f32.mrb[0].mxu0
    %5202 = vmatprep.mubr.f32.mxu0 0.0
    %5203 = vmatmul.mubr.f32.gmra.mrb[0].mxu0 %v4433
    %v5204 = vpop.f32.mrb[0].mxu0
    %v5205 = vadd.f32 0.0, %v5204
    %v5206 = vpop.f32.mrb[0].mxu0
    %5207 = vmatprep.mubr.f32.mxu0 0.0
    %5208 = vmatmul.mubr.f32.gmra.mrb[0].mxu0 %v4435
    %v5209 = vpop.f32.mrb[0].mxu0
    %v5210 = vadd.f32 0.0, %v5209
    %v5211 = vpop.f32.mrb[0].mxu0
    %5212 = vmatprep.mubr.f32.mxu0 0.0
    %5213 = vmatmul.mubr.f32.gmra.mrb[0].mxu0 %v4437
    %v5214 = vpop.f32.mrb[0].mxu0
    %v5215 = vadd.f32 0.0, %v5214
    %v5216 = vpop.f32.mrb[0].mxu0
    %5217 = vmatprep.mubr.f32.mxu0 0.0
    %5218 = vmatmul.mubr.f32.gmra.mrb[0].mxu0 %v4439
    %v5219 = vpop.f32.mrb[0].mxu0
    %v5220 = vadd.f32 0.0, %v5219
    %v5221 = vpop.f32.mrb[0].mxu0
    %5222 = vmatprep.mubr.f32.mxu0 0.0
    %5223 = vmatmul.mubr.f32.gmra.mrb[0].mxu0 %v4441
    %v5224 = vpop.f32.mrb[0].mxu0
    %v5225 = vadd.f32 0.0, %v5224
    %v5226 = vpop.f32.mrb[0].mxu0
    %5227 = vmatprep.mubr.f32.mxu0 0.0
    %5228 = vmatmul.mubr.f32.gmra.mrb[0].mxu0 %v4609
    %v5229 = vpop.f32.mrb[0].mxu0
    %v5230 = vadd.f32 0.0, %v5229
    %v5231 = vpop.f32.mrb[0].mxu0
    %5232 = vmatprep.mubr.f32.mxu0 0.0
    %5233 = vmatmul.mubr.f32.gmra.mrb[0].mxu0 %v4611
    %v5234 = vpop.f32.mrb[0].mxu0
    %v5235 = vadd.f32 0.0, %v5234
    %v5236 = vpop.f32.mrb[0].mxu0
    %5237 = vmatprep.mubr.f32.mxu0 0.0
    %5238 = vmatmul.mubr.f32.gmra.mrb[0].mxu0 %v4779
    %v5239 = vpop.f32.mrb[0].mxu0
    %v5240 = vadd.f32 0.0, %v5239
    %v5241 = vpop.f32.mrb[0].mxu0
    %5242 = vmatprep.mubr.f32.mxu0 0.0
    %5243 = vmatmul.mubr.f32.gmra.mrb[0].mxu0 %v4781
    %v5244 = vpop.f32.mrb[0].mxu0
    %v5245 = vadd.f32 0.0, %v5244
    %v5246 = vpop.f32.mrb[0].mxu0
    %5247 = vmatprep.mubr.f32.mxu0 0.0
    %5248 = vmatmul.mubr.f32.gmra.mrb[0].mxu0 %v4949
    %v5249 = vpop.f32.mrb[0].mxu0
    %v5250 = vadd.f32 0.0, %v5249
    %v5251 = vpop.f32.mrb[0].mxu0
    %5252 = vmatprep.mubr.f32.mxu0 0.0
    %5253 = vmatmul.mubr.f32.gmra.mrb[0].mxu0 %v4951
    %v5254 = vpop.f32.mrb[0].mxu0
    %v5255 = vadd.f32 0.0, %v5254
    %v5256 = vpop.f32.mrb[0].mxu0
    %5257 = vmatprep.mubr.f32.mxu0 0.0
    %5258 = vmatmul.mubr.f32.gmra.mrb[0].mxu0 %v5119
    %v5259 = vpop.f32.mrb[0].mxu0
    %v5260 = vadd.f32 0.0, %v5259
    %v5261 = vpop.f32.mrb[0].mxu0
    %5262 = vmatprep.mubr.f32.mxu0 0.0
    %5263 = vmatmul.mubr.f32.gmra.mrb[0].mxu0 %v5121
    %v5264 = vpop.f32.mrb[0].mxu0
    %v5265 = vadd.f32 0.0, %v5264
    %v5266 = vpop.f32.mrb[0].mxu0
    %5267 = vdwg.mxu0
    %v5268 = vadd.f32 %v5098, %v5190
    %v5269 = vadd.f32 %v5099, %v5195
    %v5270 = vadd.f32 %v5100, %v5200
    %v5271 = vadd.f32 %v5101, %v5205
    %v5272 = vadd.f32 %v5102, %v5210
    %v5273 = vadd.f32 %v5103, %v5215
    %v5274 = vadd.f32 %v5104, %v5220
    %v5275 = vadd.f32 %v5105, %v5225
    %v5276 = vadd.f32 %v5106, %v5230
    %v5277 = vadd.f32 %v5107, %v5235
    %v5278 = vadd.f32 %v5108, %v5240
    %v5279 = vadd.f32 %v5109, %v5245
    %v5280 = vadd.f32 %v5110, %v5250
    %v5281 = vadd.f32 %v5111, %v5255
    %v5282 = vadd.f32 %v5112, %v5260
    %v5283 = vadd.f32 %v5113, %v5265
    %s5284 = scalar_lea.vmem %s3, 128
    %v5285 = vld [vmem:[%s5284] sm:$0xff]
    %v5286 = vld [vmem:[%s5284 + $0x8] sm:$0xff]
    %v5287 = vld [vmem:[%s5284 + $0x10] sm:$0xff]
    %v5288 = vld [vmem:[%s5284 + $0x18] sm:$0xff]
    %v5289 = vsel %vm181, %v1552, 0
    %v5291 = vsel %vm181, %v1555, 0
    %v5293 = vsel %vm181, %v1558, 0
    %v5295 = vsel %vm181, %v1561, 0
    %v5297 = vsel %vm181, %v1564, 0
    %v5299 = vsel %vm181, %v1567, 0
    %v5301 = vsel %vm181, %v1570, 0
    %v5303 = vsel %vm181, %v1573, 0
    %5305 = vmatprep.subr.mxu0 0.0
    %5306 = vmatpush1.msra.mxu0 %v5285
    %5307 = vmatprep.subr.mxu0 0.0
    %5308 = vmatpush1.msra.mxu0 %v5286
    %5309 = vmatprep.subr.mxu0 0.0
    %5310 = vmatpush1.msra.mxu0 %v5287
    %5311 = vmatprep.subr.mxu0 0.0
    %5312 = vmatpush1.msra.mxu0 %v5288
    %5313 = vmatprep.subr.mxu0 0.0
    %5314 = vmatpush1.msra.mxu0 0.0
    %5315 = vmatprep.subr.mxu0 0.0
    %5316 = vmatpush1.msra.mxu0 0.0
    %5317 = vmatprep.subr.mxu0 0.0
    %5318 = vmatpush1.msra.mxu0 0.0
    %5319 = vmatprep.subr.mxu0 0.0
    %5320 = vmatpush1.msra.mxu0 0.0
    %5321 = vmatprep.subr.mxu0 0.0
    %5322 = vmatpush1.msra.mxu0 0.0
    %5323 = vmatprep.subr.mxu0 0.0
    %5324 = vmatpush1.msra.mxu0 0.0
    %5325 = vmatprep.subr.mxu0 0.0
    %5326 = vmatpush1.msra.mxu0 0.0
    %5327 = vmatprep.subr.mxu0 0.0
    %5328 = vmatpush1.msra.mxu0 0.0
    %5329 = vmatprep.subr.mxu0 0.0
    %5330 = vmatpush1.msra.mxu0 0.0
    %5331 = vmatprep.subr.mxu0 0.0
    %5332 = vmatpush1.msra.mxu0 0.0
    %5333 = vmatprep.subr.mxu0 0.0
    %5334 = vmatpush1.msra.mxu0 0.0
    %5335 = vmatprep.subr.mxu0 0.0
    %5336 = vmatpush1.msra.mxu0 0.0
    %5337 = vmatprep.subr.mxu0 0.0
    %5338 = vmatpush1.msra.mxu0 0.0
    %5339 = vmatprep.subr.mxu0 0.0
    %5340 = vmatpush1.msra.mxu0 0.0
    %5341 = vmatprep.subr.mxu0 0.0
    %5342 = vmatpush1.msra.mxu0 0.0
    %5343 = vmatprep.subr.mxu0 0.0
    %5344 = vmatpush1.msra.mxu0 0.0
    %5345 = vmatprep.subr.mxu0 0.0
    %5346 = vmatpush1.msra.mxu0 0.0
    %5347 = vmatprep.subr.mxu0 0.0
    %5348 = vmatpush1.msra.mxu0 0.0
    %5349 = vmatprep.subr.mxu0 0.0
    %5350 = vmatpush1.msra.mxu0 0.0
    %5351 = vmatprep.subr.mxu0 0.0
    %5352 = vmatpush1.msra.mxu0 0.0
    %5353 = vmatprep.subr.mxu0 0.0
    %5354 = vmatpush1.msra.mxu0 0.0
    %5355 = vmatprep.subr.mxu0 0.0
    %5356 = vmatpush1.msra.mxu0 0.0
    %5357 = vmatprep.subr.mxu0 0.0
    %5358 = vmatpush1.msra.mxu0 0.0
    %5359 = vmatprep.subr.mxu0 0.0
    %5360 = vmatpush1.msra.mxu0 0.0
    %5361 = vmatprep.subr.mxu0 0.0
    %5362 = vmatpush1.msra.mxu0 0.0
    %5363 = vmatprep.subr.mxu0 0.0
    %5364 = vmatpush1.msra.mxu0 0.0
    %5365 = vmatprep.subr.mxu0 0.0
    %5366 = vmatpush1.msra.mxu0 0.0
    %5367 = vmatprep.subr.mxu0 0.0
    %5368 = vmatpush1.msra.mxu0 0.0
    %5369 = vmatprep.mubr.f32.mxu0 0.0
    %5370 = vmatmul.mubr.f32.gmra.mrb[0].mxu0 %v1792
    %v5371 = vpop.f32.mrb[0].mxu0
    %v5372 = vadd.f32 0.0, %v5371
    %v5373 = vpop.f32.mrb[0].mxu0
    %5374 = vmatprep.mubr.f32.mxu0 0.0
    %5375 = vmatmul.mubr.f32.gmra.mrb[0].mxu0 %v5289
    %v5376 = vpop.f32.mrb[0].mxu0
    %v5377 = vadd.f32 0.0, %v5376
    %v5378 = vpop.f32.mrb[0].mxu0
    %5379 = vmatprep.mubr.f32.mxu0 0.0
    %5380 = vmatmul.mubr.f32.gmra.mrb[0].mxu0 %v1599
    %v5381 = vpop.f32.mrb[0].mxu0
    %v5382 = vadd.f32 0.0, %v5381
    %v5383 = vpop.f32.mrb[0].mxu0
    %5384 = vmatprep.mubr.f32.mxu0 0.0
    %5385 = vmatmul.mubr.f32.gmra.mrb[0].mxu0 %v5291
    %v5386 = vpop.f32.mrb[0].mxu0
    %v5387 = vadd.f32 0.0, %v5386
    %v5388 = vpop.f32.mrb[0].mxu0
    %5389 = vmatprep.mubr.f32.mxu0 0.0
    %5390 = vmatmul.mubr.f32.gmra.mrb[0].mxu0 %v1605
    %v5391 = vpop.f32.mrb[0].mxu0
    %v5392 = vadd.f32 0.0, %v5391
    %v5393 = vpop.f32.mrb[0].mxu0
    %5394 = vmatprep.mubr.f32.mxu0 0.0
    %5395 = vmatmul.mubr.f32.gmra.mrb[0].mxu0 %v5293
    %v5396 = vpop.f32.mrb[0].mxu0
    %v5397 = vadd.f32 0.0, %v5396
    %v5398 = vpop.f32.mrb[0].mxu0
    %5399 = vmatprep.mubr.f32.mxu0 0.0
    %5400 = vmatmul.mubr.f32.gmra.mrb[0].mxu0 %v1611
    %v5401 = vpop.f32.mrb[0].mxu0
    %v5402 = vadd.f32 0.0, %v5401
    %v5403 = vpop.f32.mrb[0].mxu0
    %5404 = vmatprep.mubr.f32.mxu0 0.0
    %5405 = vmatmul.mubr.f32.gmra.mrb[0].mxu0 %v5295
    %v5406 = vpop.f32.mrb[0].mxu0
    %v5407 = vadd.f32 0.0, %v5406
    %v5408 = vpop.f32.mrb[0].mxu0
    %5409 = vmatprep.mubr.f32.mxu0 0.0
    %5410 = vmatmul.mubr.f32.gmra.mrb[0].mxu0 %v1617
    %v5411 = vpop.f32.mrb[0].mxu0
    %v5412 = vadd.f32 0.0, %v5411
    %v5413 = vpop.f32.mrb[0].mxu0
    %5414 = vmatprep.mubr.f32.mxu0 0.0
    %5415 = vmatmul.mubr.f32.gmra.mrb[0].mxu0 %v5297
    %v5416 = vpop.f32.mrb[0].mxu0
    %v5417 = vadd.f32 0.0, %v5416
    %v5418 = vpop.f32.mrb[0].mxu0
    %5419 = vmatprep.mubr.f32.mxu0 0.0
    %5420 = vmatmul.mubr.f32.gmra.mrb[0].mxu0 %v1623
    %v5421 = vpop.f32.mrb[0].mxu0
    %v5422 = vadd.f32 0.0, %v5421
    %v5423 = vpop.f32.mrb[0].mxu0
    %5424 = vmatprep.mubr.f32.mxu0 0.0
    %5425 = vmatmul.mubr.f32.gmra.mrb[0].mxu0 %v5299
    %v5426 = vpop.f32.mrb[0].mxu0
    %v5427 = vadd.f32 0.0, %v5426
    %v5428 = vpop.f32.mrb[0].mxu0
    %5429 = vmatprep.mubr.f32.mxu0 0.0
    %5430 = vmatmul.mubr.f32.gmra.mrb[0].mxu0 %v1629
    %v5431 = vpop.f32.mrb[0].mxu0
    %v5432 = vadd.f32 0.0, %v5431
    %v5433 = vpop.f32.mrb[0].mxu0
    %5434 = vmatprep.mubr.f32.mxu0 0.0
    %5435 = vmatmul.mubr.f32.gmra.mrb[0].mxu0 %v5301
    %v5436 = vpop.f32.mrb[0].mxu0
    %v5437 = vadd.f32 0.0, %v5436
    %v5438 = vpop.f32.mrb[0].mxu0
    %5439 = vmatprep.mubr.f32.mxu0 0.0
    %5440 = vmatmul.mubr.f32.gmra.mrb[0].mxu0 %v1635
    %v5441 = vpop.f32.mrb[0].mxu0
    %v5442 = vadd.f32 0.0, %v5441
    %v5443 = vpop.f32.mrb[0].mxu0
    %5444 = vmatprep.mubr.f32.mxu0 0.0
    %5445 = vmatmul.mubr.f32.gmra.mrb[0].mxu0 %v5303
    %v5446 = vpop.f32.mrb[0].mxu0
    %v5447 = vadd.f32 0.0, %v5446
    %v5448 = vpop.f32.mrb[0].mxu0
    %5449 = vdwg.mxu0
    %v5450 = vadd.f32 %v5268, %v5372
    %v5451 = vadd.f32 %v5269, %v5377
    %v5452 = vadd.f32 %v5270, %v5382
    %v5453 = vadd.f32 %v5271, %v5387
    %v5454 = vadd.f32 %v5272, %v5392
    %v5455 = vadd.f32 %v5273, %v5397
    %v5456 = vadd.f32 %v5274, %v5402
    %v5457 = vadd.f32 %v5275, %v5407
    %v5458 = vadd.f32 %v5276, %v5412
    %v5459 = vadd.f32 %v5277, %v5417
    %v5460 = vadd.f32 %v5278, %v5422
    %v5461 = vadd.f32 %v5279, %v5427
    %v5462 = vadd.f32 %v5280, %v5432
    %v5463 = vadd.f32 %v5281, %v5437
    %v5464 = vadd.f32 %v5282, %v5442
    %v5465 = vadd.f32 %v5283, %v5447
    %s5466 = scalar_lea.vmem %s3, 288
    %v5467 = vld [vmem:[%s5466] sm:$0xff]
    %v5468 = vld [vmem:[%s5466 + $0x8] sm:$0xff]
    %v5469 = vld [vmem:[%s5466 + $0x10] sm:$0xff]
    %v5470 = vld [vmem:[%s5466 + $0x18] sm:$0xff]
    %v5471 = vsel %vm181, %v1576, 0
    %5473 = vmatprep.subr.mxu0 0.0
    %5474 = vmatpush1.msra.mxu0 %v5467
    %5475 = vmatprep.subr.mxu0 0.0
    %5476 = vmatpush1.msra.mxu0 %v5468
    %5477 = vmatprep.subr.mxu0 0.0
    %5478 = vmatpush1.msra.mxu0 %v5469
    %5479 = vmatprep.subr.mxu0 0.0
    %5480 = vmatpush1.msra.mxu0 %v5470
    %5481 = vmatprep.subr.mxu0 0.0
    %5482 = vmatpush1.msra.mxu0 0.0
    %5483 = vmatprep.subr.mxu0 0.0
    %5484 = vmatpush1.msra.mxu0 0.0
    %5485 = vmatprep.subr.mxu0 0.0
    %5486 = vmatpush1.msra.mxu0 0.0
    %5487 = vmatprep.subr.mxu0 0.0
    %5488 = vmatpush1.msra.mxu0 0.0
    %5489 = vmatprep.subr.mxu0 0.0
    %5490 = vmatpush1.msra.mxu0 0.0
    %5491 = vmatprep.subr.mxu0 0.0
    %5492 = vmatpush1.msra.mxu0 0.0
    %5493 = vmatprep.subr.mxu0 0.0
    %5494 = vmatpush1.msra.mxu0 0.0
    %5495 = vmatprep.subr.mxu0 0.0
    %5496 = vmatpush1.msra.mxu0 0.0
    %5497 = vmatprep.subr.mxu0 0.0
    %5498 = vmatpush1.msra.mxu0 0.0
    %5499 = vmatprep.subr.mxu0 0.0
    %5500 = vmatpush1.msra.mxu0 0.0
    %5501 = vmatprep.subr.mxu0 0.0
    %5502 = vmatpush1.msra.mxu0 0.0
    %5503 = vmatprep.subr.mxu0 0.0
    %5504 = vmatpush1.msra.mxu0 0.0
    %5505 = vmatprep.subr.mxu0 0.0
    %5506 = vmatpush1.msra.mxu0 0.0
    %5507 = vmatprep.subr.mxu0 0.0
    %5508 = vmatpush1.msra.mxu0 0.0
    %5509 = vmatprep.subr.mxu0 0.0
    %5510 = vmatpush1.msra.mxu0 0.0
    %5511 = vmatprep.subr.mxu0 0.0
    %5512 = vmatpush1.msra.mxu0 0.0
    %5513 = vmatprep.subr.mxu0 0.0
    %5514 = vmatpush1.msra.mxu0 0.0
    %5515 = vmatprep.subr.mxu0 0.0
    %5516 = vmatpush1.msra.mxu0 0.0
    %5517 = vmatprep.subr.mxu0 0.0
    %5518 = vmatpush1.msra.mxu0 0.0
    %5519 = vmatprep.subr.mxu0 0.0
    %5520 = vmatpush1.msra.mxu0 0.0
    %5521 = vmatprep.subr.mxu0 0.0
    %5522 = vmatpush1.msra.mxu0 0.0
    %5523 = vmatprep.subr.mxu0 0.0
    %5524 = vmatpush1.msra.mxu0 0.0
    %5525 = vmatprep.subr.mxu0 0.0
    %5526 = vmatpush1.msra.mxu0 0.0
    %5527 = vmatprep.subr.mxu0 0.0
    %5528 = vmatpush1.msra.mxu0 0.0
    %5529 = vmatprep.subr.mxu0 0.0
    %5530 = vmatpush1.msra.mxu0 0.0
    %5531 = vmatprep.subr.mxu0 0.0
    %5532 = vmatpush1.msra.mxu0 0.0
    %5533 = vmatprep.subr.mxu0 0.0
    %5534 = vmatpush1.msra.mxu0 0.0
    %5535 = vmatprep.subr.mxu0 0.0
    %5536 = vmatpush1.msra.mxu0 0.0
    %5537 = vmatprep.mubr.f32.mxu0 0.0
    %5538 = vmatmul.mubr.f32.gmra.mrb[0].mxu0 %v1599
    %v5539 = vpop.f32.mrb[0].mxu0
    %v5540 = vadd.f32 0.0, %v5539
    %v5541 = vpop.f32.mrb[0].mxu0
    %5542 = vmatprep.mubr.f32.mxu0 0.0
    %5543 = vmatmul.mubr.f32.gmra.mrb[0].mxu0 %v5291
    %v5544 = vpop.f32.mrb[0].mxu0
    %v5545 = vadd.f32 0.0, %v5544
    %v5546 = vpop.f32.mrb[0].mxu0
    %5547 = vmatprep.mubr.f32.mxu0 0.0
    %5548 = vmatmul.mubr.f32.gmra.mrb[0].mxu0 %v1605
    %v5549 = vpop.f32.mrb[0].mxu0
    %v5550 = vadd.f32 0.0, %v5549
    %v5551 = vpop.f32.mrb[0].mxu0
    %5552 = vmatprep.mubr.f32.mxu0 0.0
    %5553 = vmatmul.mubr.f32.gmra.mrb[0].mxu0 %v5293
    %v5554 = vpop.f32.mrb[0].mxu0
    %v5555 = vadd.f32 0.0, %v5554
    %v5556 = vpop.f32.mrb[0].mxu0
    %5557 = vmatprep.mubr.f32.mxu0 0.0
    %5558 = vmatmul.mubr.f32.gmra.mrb[0].mxu0 %v1611
    %v5559 = vpop.f32.mrb[0].mxu0
    %v5560 = vadd.f32 0.0, %v5559
    %v5561 = vpop.f32.mrb[0].mxu0
    %5562 = vmatprep.mubr.f32.mxu0 0.0
    %5563 = vmatmul.mubr.f32.gmra.mrb[0].mxu0 %v5295
    %v5564 = vpop.f32.mrb[0].mxu0
    %v5565 = vadd.f32 0.0, %v5564
    %v5566 = vpop.f32.mrb[0].mxu0
    %5567 = vmatprep.mubr.f32.mxu0 0.0
    %5568 = vmatmul.mubr.f32.gmra.mrb[0].mxu0 %v1617
    %v5569 = vpop.f32.mrb[0].mxu0
    %v5570 = vadd.f32 0.0, %v5569
    %v5571 = vpop.f32.mrb[0].mxu0
    %5572 = vmatprep.mubr.f32.mxu0 0.0
    %5573 = vmatmul.mubr.f32.gmra.mrb[0].mxu0 %v5297
    %v5574 = vpop.f32.mrb[0].mxu0
    %v5575 = vadd.f32 0.0, %v5574
    %v5576 = vpop.f32.mrb[0].mxu0
    %5577 = vmatprep.mubr.f32.mxu0 0.0
    %5578 = vmatmul.mubr.f32.gmra.mrb[0].mxu0 %v1623
    %v5579 = vpop.f32.mrb[0].mxu0
    %v5580 = vadd.f32 0.0, %v5579
    %v5581 = vpop.f32.mrb[0].mxu0
    %5582 = vmatprep.mubr.f32.mxu0 0.0
    %5583 = vmatmul.mubr.f32.gmra.mrb[0].mxu0 %v5299
    %v5584 = vpop.f32.mrb[0].mxu0
    %v5585 = vadd.f32 0.0, %v5584
    %v5586 = vpop.f32.mrb[0].mxu0
    %5587 = vmatprep.mubr.f32.mxu0 0.0
    %5588 = vmatmul.mubr.f32.gmra.mrb[0].mxu0 %v1629
    %v5589 = vpop.f32.mrb[0].mxu0
    %v5590 = vadd.f32 0.0, %v5589
    %v5591 = vpop.f32.mrb[0].mxu0
    %5592 = vmatprep.mubr.f32.mxu0 0.0
    %5593 = vmatmul.mubr.f32.gmra.mrb[0].mxu0 %v5301
    %v5594 = vpop.f32.mrb[0].mxu0
    %v5595 = vadd.f32 0.0, %v5594
    %v5596 = vpop.f32.mrb[0].mxu0
    %5597 = vmatprep.mubr.f32.mxu0 0.0
    %5598 = vmatmul.mubr.f32.gmra.mrb[0].mxu0 %v1635
    %v5599 = vpop.f32.mrb[0].mxu0
    %v5600 = vadd.f32 0.0, %v5599
    %v5601 = vpop.f32.mrb[0].mxu0
    %5602 = vmatprep.mubr.f32.mxu0 0.0
    %5603 = vmatmul.mubr.f32.gmra.mrb[0].mxu0 %v5303
    %v5604 = vpop.f32.mrb[0].mxu0
    %v5605 = vadd.f32 0.0, %v5604
    %v5606 = vpop.f32.mrb[0].mxu0
    %5607 = vmatprep.mubr.f32.mxu0 0.0
    %5608 = vmatmul.mubr.f32.gmra.mrb[0].mxu0 %v1641
    %v5609 = vpop.f32.mrb[0].mxu0
    %v5610 = vadd.f32 0.0, %v5609
    %v5611 = vpop.f32.mrb[0].mxu0
    %5612 = vmatprep.mubr.f32.mxu0 0.0
    %5613 = vmatmul.mubr.f32.gmra.mrb[0].mxu0 %v5471
    %v5614 = vpop.f32.mrb[0].mxu0
    %v5615 = vadd.f32 0.0, %v5614
    %v5616 = vpop.f32.mrb[0].mxu0
    %5617 = vdwg.mxu0
    %v5618 = vadd.f32 %v5450, %v5540
    %v5619 = vadd.f32 %v5451, %v5545
    %v5620 = vadd.f32 %v5452, %v5550
    %v5621 = vadd.f32 %v5453, %v5555
    %v5622 = vadd.f32 %v5454, %v5560
    %v5623 = vadd.f32 %v5455, %v5565
    %v5624 = vadd.f32 %v5456, %v5570
    %v5625 = vadd.f32 %v5457, %v5575
    %v5626 = vadd.f32 %v5458, %v5580
    %v5627 = vadd.f32 %v5459, %v5585
    %v5628 = vadd.f32 %v5460, %v5590
    %v5629 = vadd.f32 %v5461, %v5595
    %v5630 = vadd.f32 %v5462, %v5600
    %v5631 = vadd.f32 %v5463, %v5605
    %v5632 = vadd.f32 %v5464, %v5610
    %v5633 = vadd.f32 %v5465, %v5615
    %s5634 = scalar_lea.vmem %s3, 448
    %v5635 = vld [vmem:[%s5634] sm:$0xff]
    %v5636 = vld [vmem:[%s5634 + $0x8] sm:$0xff]
    %v5637 = vld [vmem:[%s5634 + $0x10] sm:$0xff]
    %v5638 = vld [vmem:[%s5634 + $0x18] sm:$0xff]
    %v5639 = vsel %vm181, %v1579, 0
    %5641 = vmatprep.subr.mxu0 0.0
    %5642 = vmatpush1.msra.mxu0 %v5635
    %5643 = vmatprep.subr.mxu0 0.0
    %5644 = vmatpush1.msra.mxu0 %v5636
    %5645 = vmatprep.subr.mxu0 0.0
    %5646 = vmatpush1.msra.mxu0 %v5637
    %5647 = vmatprep.subr.mxu0 0.0
    %5648 = vmatpush1.msra.mxu0 %v5638
    %5649 = vmatprep.subr.mxu0 0.0
    %5650 = vmatpush1.msra.mxu0 0.0
    %5651 = vmatprep.subr.mxu0 0.0
    %5652 = vmatpush1.msra.mxu0 0.0
    %5653 = vmatprep.subr.mxu0 0.0
    %5654 = vmatpush1.msra.mxu0 0.0
    %5655 = vmatprep.subr.mxu0 0.0
    %5656 = vmatpush1.msra.mxu0 0.0
    %5657 = vmatprep.subr.mxu0 0.0
    %5658 = vmatpush1.msra.mxu0 0.0
    %5659 = vmatprep.subr.mxu0 0.0
    %5660 = vmatpush1.msra.mxu0 0.0
    %5661 = vmatprep.subr.mxu0 0.0
    %5662 = vmatpush1.msra.mxu0 0.0
    %5663 = vmatprep.subr.mxu0 0.0
    %5664 = vmatpush1.msra.mxu0 0.0
    %5665 = vmatprep.subr.mxu0 0.0
    %5666 = vmatpush1.msra.mxu0 0.0
    %5667 = vmatprep.subr.mxu0 0.0
    %5668 = vmatpush1.msra.mxu0 0.0
    %5669 = vmatprep.subr.mxu0 0.0
    %5670 = vmatpush1.msra.mxu0 0.0
    %5671 = vmatprep.subr.mxu0 0.0
    %5672 = vmatpush1.msra.mxu0 0.0
    %5673 = vmatprep.subr.mxu0 0.0
    %5674 = vmatpush1.msra.mxu0 0.0
    %5675 = vmatprep.subr.mxu0 0.0
    %5676 = vmatpush1.msra.mxu0 0.0
    %5677 = vmatprep.subr.mxu0 0.0
    %5678 = vmatpush1.msra.mxu0 0.0
    %5679 = vmatprep.subr.mxu0 0.0
    %5680 = vmatpush1.msra.mxu0 0.0
    %5681 = vmatprep.subr.mxu0 0.0
    %5682 = vmatpush1.msra.mxu0 0.0
    %5683 = vmatprep.subr.mxu0 0.0
    %5684 = vmatpush1.msra.mxu0 0.0
    %5685 = vmatprep.subr.mxu0 0.0
    %5686 = vmatpush1.msra.mxu0 0.0
    %5687 = vmatprep.subr.mxu0 0.0
    %5688 = vmatpush1.msra.mxu0 0.0
    %5689 = vmatprep.subr.mxu0 0.0
    %5690 = vmatpush1.msra.mxu0 0.0
    %5691 = vmatprep.subr.mxu0 0.0
    %5692 = vmatpush1.msra.mxu0 0.0
    %5693 = vmatprep.subr.mxu0 0.0
    %5694 = vmatpush1.msra.mxu0 0.0
    %5695 = vmatprep.subr.mxu0 0.0
    %5696 = vmatpush1.msra.mxu0 0.0
    %5697 = vmatprep.subr.mxu0 0.0
    %5698 = vmatpush1.msra.mxu0 0.0
    %5699 = vmatprep.subr.mxu0 0.0
    %5700 = vmatpush1.msra.mxu0 0.0
    %5701 = vmatprep.subr.mxu0 0.0
    %5702 = vmatpush1.msra.mxu0 0.0
    %5703 = vmatprep.subr.mxu0 0.0
    %5704 = vmatpush1.msra.mxu0 0.0
    %5705 = vmatprep.mubr.f32.mxu0 0.0
    %5706 = vmatmul.mubr.f32.gmra.mrb[0].mxu0 %v1605
    %v5707 = vpop.f32.mrb[0].mxu0
    %v5708 = vadd.f32 0.0, %v5707
    %v5709 = vpop.f32.mrb[0].mxu0
    %5710 = vmatprep.mubr.f32.mxu0 0.0
    %5711 = vmatmul.mubr.f32.gmra.mrb[0].mxu0 %v5293
    %v5712 = vpop.f32.mrb[0].mxu0
    %v5713 = vadd.f32 0.0, %v5712
    %v5714 = vpop.f32.mrb[0].mxu0
    %5715 = vmatprep.mubr.f32.mxu0 0.0
    %5716 = vmatmul.mubr.f32.gmra.mrb[0].mxu0 %v1611
    %v5717 = vpop.f32.mrb[0].mxu0
    %v5718 = vadd.f32 0.0, %v5717
    %v5719 = vpop.f32.mrb[0].mxu0
    %5720 = vmatprep.mubr.f32.mxu0 0.0
    %5721 = vmatmul.mubr.f32.gmra.mrb[0].mxu0 %v5295
    %v5722 = vpop.f32.mrb[0].mxu0
    %v5723 = vadd.f32 0.0, %v5722
    %v5724 = vpop.f32.mrb[0].mxu0
    %5725 = vmatprep.mubr.f32.mxu0 0.0
    %5726 = vmatmul.mubr.f32.gmra.mrb[0].mxu0 %v1617
    %v5727 = vpop.f32.mrb[0].mxu0
    %v5728 = vadd.f32 0.0, %v5727
    %v5729 = vpop.f32.mrb[0].mxu0
    %5730 = vmatprep.mubr.f32.mxu0 0.0
    %5731 = vmatmul.mubr.f32.gmra.mrb[0].mxu0 %v5297
    %v5732 = vpop.f32.mrb[0].mxu0
    %v5733 = vadd.f32 0.0, %v5732
    %v5734 = vpop.f32.mrb[0].mxu0
    %5735 = vmatprep.mubr.f32.mxu0 0.0
    %5736 = vmatmul.mubr.f32.gmra.mrb[0].mxu0 %v1623
    %v5737 = vpop.f32.mrb[0].mxu0
    %v5738 = vadd.f32 0.0, %v5737
    %v5739 = vpop.f32.mrb[0].mxu0
    %5740 = vmatprep.mubr.f32.mxu0 0.0
    %5741 = vmatmul.mubr.f32.gmra.mrb[0].mxu0 %v5299
    %v5742 = vpop.f32.mrb[0].mxu0
    %v5743 = vadd.f32 0.0, %v5742
    %v5744 = vpop.f32.mrb[0].mxu0
    %5745 = vmatprep.mubr.f32.mxu0 0.0
    %5746 = vmatmul.mubr.f32.gmra.mrb[0].mxu0 %v1629
    %v5747 = vpop.f32.mrb[0].mxu0
    %v5748 = vadd.f32 0.0, %v5747
    %v5749 = vpop.f32.mrb[0].mxu0
    %5750 = vmatprep.mubr.f32.mxu0 0.0
    %5751 = vmatmul.mubr.f32.gmra.mrb[0].mxu0 %v5301
    %v5752 = vpop.f32.mrb[0].mxu0
    %v5753 = vadd.f32 0.0, %v5752
    %v5754 = vpop.f32.mrb[0].mxu0
    %5755 = vmatprep.mubr.f32.mxu0 0.0
    %5756 = vmatmul.mubr.f32.gmra.mrb[0].mxu0 %v1635
    %v5757 = vpop.f32.mrb[0].mxu0
    %v5758 = vadd.f32 0.0, %v5757
    %v5759 = vpop.f32.mrb[0].mxu0
    %5760 = vmatprep.mubr.f32.mxu0 0.0
    %5761 = vmatmul.mubr.f32.gmra.mrb[0].mxu0 %v5303
    %v5762 = vpop.f32.mrb[0].mxu0
    %v5763 = vadd.f32 0.0, %v5762
    %v5764 = vpop.f32.mrb[0].mxu0
    %5765 = vmatprep.mubr.f32.mxu0 0.0
    %5766 = vmatmul.mubr.f32.gmra.mrb[0].mxu0 %v1641
    %v5767 = vpop.f32.mrb[0].mxu0
    %v5768 = vadd.f32 0.0, %v5767
    %v5769 = vpop.f32.mrb[0].mxu0
    %5770 = vmatprep.mubr.f32.mxu0 0.0
    %5771 = vmatmul.mubr.f32.gmra.mrb[0].mxu0 %v5471
    %v5772 = vpop.f32.mrb[0].mxu0
    %v5773 = vadd.f32 0.0, %v5772
    %v5774 = vpop.f32.mrb[0].mxu0
    %5775 = vmatprep.mubr.f32.mxu0 0.0
    %5776 = vmatmul.mubr.f32.gmra.mrb[0].mxu0 %v1948
    %v5777 = vpop.f32.mrb[0].mxu0
    %v5778 = vadd.f32 0.0, %v5777
    %v5779 = vpop.f32.mrb[0].mxu0
    %5780 = vmatprep.mubr.f32.mxu0 0.0
    %5781 = vmatmul.mubr.f32.gmra.mrb[0].mxu0 %v5639
    %v5782 = vpop.f32.mrb[0].mxu0
    %v5783 = vadd.f32 0.0, %v5782
    %v5784 = vpop.f32.mrb[0].mxu0
    %5785 = vdwg.mxu0
    %v5786 = vadd.f32 %v5618, %v5708
    %v5787 = vadd.f32 %v5619, %v5713
    %v5788 = vadd.f32 %v5620, %v5718
    %v5789 = vadd.f32 %v5621, %v5723
    %v5790 = vadd.f32 %v5622, %v5728
    %v5791 = vadd.f32 %v5623, %v5733
    %v5792 = vadd.f32 %v5624, %v5738
    %v5793 = vadd.f32 %v5625, %v5743
    %v5794 = vadd.f32 %v5626, %v5748
    %v5795 = vadd.f32 %v5627, %v5753
    %v5796 = vadd.f32 %v5628, %v5758
    %v5797 = vadd.f32 %v5629, %v5763
    %v5798 = vadd.f32 %v5630, %v5768
    %v5799 = vadd.f32 %v5631, %v5773
    %v5800 = vadd.f32 %v5632, %v5778
    %v5801 = vadd.f32 %v5633, %v5783
    %s5802 = scalar_lea.vmem %s3, 608
    %v5803 = vld [vmem:[%s5802] sm:$0xff]
    %v5804 = vld [vmem:[%s5802 + $0x8] sm:$0xff]
    %v5805 = vld [vmem:[%s5802 + $0x10] sm:$0xff]
    %v5806 = vld [vmem:[%s5802 + $0x18] sm:$0xff]
    %v5807 = vsel %vm181, %v1582, 0
    %5809 = vmatprep.subr.mxu0 0.0
    %5810 = vmatpush1.msra.mxu0 %v5803
    %5811 = vmatprep.subr.mxu0 0.0
    %5812 = vmatpush1.msra.mxu0 %v5804
    %5813 = vmatprep.subr.mxu0 0.0
    %5814 = vmatpush1.msra.mxu0 %v5805
    %5815 = vmatprep.subr.mxu0 0.0
    %5816 = vmatpush1.msra.mxu0 %v5806
    %5817 = vmatprep.subr.mxu0 0.0
    %5818 = vmatpush1.msra.mxu0 0.0
    %5819 = vmatprep.subr.mxu0 0.0
    %5820 = vmatpush1.msra.mxu0 0.0
    %5821 = vmatprep.subr.mxu0 0.0
    %5822 = vmatpush1.msra.mxu0 0.0
    %5823 = vmatprep.subr.mxu0 0.0
    %5824 = vmatpush1.msra.mxu0 0.0
    %5825 = vmatprep.subr.mxu0 0.0
    %5826 = vmatpush1.msra.mxu0 0.0
    %5827 = vmatprep.subr.mxu0 0.0
    %5828 = vmatpush1.msra.mxu0 0.0
    %5829 = vmatprep.subr.mxu0 0.0
    %5830 = vmatpush1.msra.mxu0 0.0
    %5831 = vmatprep.subr.mxu0 0.0
    %5832 = vmatpush1.msra.mxu0 0.0
    %5833 = vmatprep.subr.mxu0 0.0
    %5834 = vmatpush1.msra.mxu0 0.0
    %5835 = vmatprep.subr.mxu0 0.0
    %5836 = vmatpush1.msra.mxu0 0.0
    %5837 = vmatprep.subr.mxu0 0.0
    %5838 = vmatpush1.msra.mxu0 0.0
    %5839 = vmatprep.subr.mxu0 0.0
    %5840 = vmatpush1.msra.mxu0 0.0
    %5841 = vmatprep.subr.mxu0 0.0
    %5842 = vmatpush1.msra.mxu0 0.0
    %5843 = vmatprep.subr.mxu0 0.0
    %5844 = vmatpush1.msra.mxu0 0.0
    %5845 = vmatprep.subr.mxu0 0.0
    %5846 = vmatpush1.msra.mxu0 0.0
    %5847 = vmatprep.subr.mxu0 0.0
    %5848 = vmatpush1.msra.mxu0 0.0
    %5849 = vmatprep.subr.mxu0 0.0
    %5850 = vmatpush1.msra.mxu0 0.0
    %5851 = vmatprep.subr.mxu0 0.0
    %5852 = vmatpush1.msra.mxu0 0.0
    %5853 = vmatprep.subr.mxu0 0.0
    %5854 = vmatpush1.msra.mxu0 0.0
    %5855 = vmatprep.subr.mxu0 0.0
    %5856 = vmatpush1.msra.mxu0 0.0
    %5857 = vmatprep.subr.mxu0 0.0
    %5858 = vmatpush1.msra.mxu0 0.0
    %5859 = vmatprep.subr.mxu0 0.0
    %5860 = vmatpush1.msra.mxu0 0.0
    %5861 = vmatprep.subr.mxu0 0.0
    %5862 = vmatpush1.msra.mxu0 0.0
    %5863 = vmatprep.subr.mxu0 0.0
    %5864 = vmatpush1.msra.mxu0 0.0
    %5865 = vmatprep.subr.mxu0 0.0
    %5866 = vmatpush1.msra.mxu0 0.0
    %5867 = vmatprep.subr.mxu0 0.0
    %5868 = vmatpush1.msra.mxu0 0.0
    %5869 = vmatprep.subr.mxu0 0.0
    %5870 = vmatpush1.msra.mxu0 0.0
    %5871 = vmatprep.subr.mxu0 0.0
    %5872 = vmatpush1.msra.mxu0 0.0
    %5873 = vmatprep.mubr.f32.mxu0 0.0
    %5874 = vmatmul.mubr.f32.gmra.mrb[0].mxu0 %v1611
    %v5875 = vpop.f32.mrb[0].mxu0
    %v5876 = vadd.f32 0.0, %v5875
    %v5877 = vpop.f32.mrb[0].mxu0
    %5878 = vmatprep.mubr.f32.mxu0 0.0
    %5879 = vmatmul.mubr.f32.gmra.mrb[0].mxu0 %v5295
    %v5880 = vpop.f32.mrb[0].mxu0
    %v5881 = vadd.f32 0.0, %v5880
    %v5882 = vpop.f32.mrb[0].mxu0
    %5883 = vmatprep.mubr.f32.mxu0 0.0
    %5884 = vmatmul.mubr.f32.gmra.mrb[0].mxu0 %v1617
    %v5885 = vpop.f32.mrb[0].mxu0
    %v5886 = vadd.f32 0.0, %v5885
    %v5887 = vpop.f32.mrb[0].mxu0
    %5888 = vmatprep.mubr.f32.mxu0 0.0
    %5889 = vmatmul.mubr.f32.gmra.mrb[0].mxu0 %v5297
    %v5890 = vpop.f32.mrb[0].mxu0
    %v5891 = vadd.f32 0.0, %v5890
    %v5892 = vpop.f32.mrb[0].mxu0
    %5893 = vmatprep.mubr.f32.mxu0 0.0
    %5894 = vmatmul.mubr.f32.gmra.mrb[0].mxu0 %v1623
    %v5895 = vpop.f32.mrb[0].mxu0
    %v5896 = vadd.f32 0.0, %v5895
    %v5897 = vpop.f32.mrb[0].mxu0
    %5898 = vmatprep.mubr.f32.mxu0 0.0
    %5899 = vmatmul.mubr.f32.gmra.mrb[0].mxu0 %v5299
    %v5900 = vpop.f32.mrb[0].mxu0
    %v5901 = vadd.f32 0.0, %v5900
    %v5902 = vpop.f32.mrb[0].mxu0
    %5903 = vmatprep.mubr.f32.mxu0 0.0
    %5904 = vmatmul.mubr.f32.gmra.mrb[0].mxu0 %v1629
    %v5905 = vpop.f32.mrb[0].mxu0
    %v5906 = vadd.f32 0.0, %v5905
    %v5907 = vpop.f32.mrb[0].mxu0
    %5908 = vmatprep.mubr.f32.mxu0 0.0
    %5909 = vmatmul.mubr.f32.gmra.mrb[0].mxu0 %v5301
    %v5910 = vpop.f32.mrb[0].mxu0
    %v5911 = vadd.f32 0.0, %v5910
    %v5912 = vpop.f32.mrb[0].mxu0
    %5913 = vmatprep.mubr.f32.mxu0 0.0
    %5914 = vmatmul.mubr.f32.gmra.mrb[0].mxu0 %v1635
    %v5915 = vpop.f32.mrb[0].mxu0
    %v5916 = vadd.f32 0.0, %v5915
    %v5917 = vpop.f32.mrb[0].mxu0
    %5918 = vmatprep.mubr.f32.mxu0 0.0
    %5919 = vmatmul.mubr.f32.gmra.mrb[0].mxu0 %v5303
    %v5920 = vpop.f32.mrb[0].mxu0
    %v5921 = vadd.f32 0.0, %v5920
    %v5922 = vpop.f32.mrb[0].mxu0
    %5923 = vmatprep.mubr.f32.mxu0 0.0
    %5924 = vmatmul.mubr.f32.gmra.mrb[0].mxu0 %v1641
    %v5925 = vpop.f32.mrb[0].mxu0
    %v5926 = vadd.f32 0.0, %v5925
    %v5927 = vpop.f32.mrb[0].mxu0
    %5928 = vmatprep.mubr.f32.mxu0 0.0
    %5929 = vmatmul.mubr.f32.gmra.mrb[0].mxu0 %v5471
    %v5930 = vpop.f32.mrb[0].mxu0
    %v5931 = vadd.f32 0.0, %v5930
    %v5932 = vpop.f32.mrb[0].mxu0
    %5933 = vmatprep.mubr.f32.mxu0 0.0
    %5934 = vmatmul.mubr.f32.gmra.mrb[0].mxu0 %v1948
    %v5935 = vpop.f32.mrb[0].mxu0
    %v5936 = vadd.f32 0.0, %v5935
    %v5937 = vpop.f32.mrb[0].mxu0
    %5938 = vmatprep.mubr.f32.mxu0 0.0
    %5939 = vmatmul.mubr.f32.gmra.mrb[0].mxu0 %v5639
    %v5940 = vpop.f32.mrb[0].mxu0
    %v5941 = vadd.f32 0.0, %v5940
    %v5942 = vpop.f32.mrb[0].mxu0
    %5943 = vmatprep.mubr.f32.mxu0 0.0
    %5944 = vmatmul.mubr.f32.gmra.mrb[0].mxu0 %v2120
    %v5945 = vpop.f32.mrb[0].mxu0
    %v5946 = vadd.f32 0.0, %v5945
    %v5947 = vpop.f32.mrb[0].mxu0
    %5948 = vmatprep.mubr.f32.mxu0 0.0
    %5949 = vmatmul.mubr.f32.gmra.mrb[0].mxu0 %v5807
    %v5950 = vpop.f32.mrb[0].mxu0
    %v5951 = vadd.f32 0.0, %v5950
    %v5952 = vpop.f32.mrb[0].mxu0
    %5953 = vdwg.mxu0
    %v5954 = vadd.f32 %v5786, %v5876
    %v5955 = vadd.f32 %v5787, %v5881
    %v5956 = vadd.f32 %v5788, %v5886
    %v5957 = vadd.f32 %v5789, %v5891
    %v5958 = vadd.f32 %v5790, %v5896
    %v5959 = vadd.f32 %v5791, %v5901
    %v5960 = vadd.f32 %v5792, %v5906
    %v5961 = vadd.f32 %v5793, %v5911
    %v5962 = vadd.f32 %v5794, %v5916
    %v5963 = vadd.f32 %v5795, %v5921
    %v5964 = vadd.f32 %v5796, %v5926
    %v5965 = vadd.f32 %v5797, %v5931
    %v5966 = vadd.f32 %v5798, %v5936
    %v5967 = vadd.f32 %v5799, %v5941
    %v5968 = vadd.f32 %v5800, %v5946
    %v5969 = vadd.f32 %v5801, %v5951
    %s5970 = scalar_lea.vmem %s3, 768
    %v5971 = vld [vmem:[%s5970] sm:$0xff]
    %v5972 = vld [vmem:[%s5970 + $0x8] sm:$0xff]
    %v5973 = vld [vmem:[%s5970 + $0x10] sm:$0xff]
    %v5974 = vld [vmem:[%s5970 + $0x18] sm:$0xff]
    %v5975 = vsel %vm181, %v1585, 0
    %5977 = vmatprep.subr.mxu0 0.0
    %5978 = vmatpush1.msra.mxu0 %v5971
    %5979 = vmatprep.subr.mxu0 0.0
    %5980 = vmatpush1.msra.mxu0 %v5972
    %5981 = vmatprep.subr.mxu0 0.0
    %5982 = vmatpush1.msra.mxu0 %v5973
    %5983 = vmatprep.subr.mxu0 0.0
    %5984 = vmatpush1.msra.mxu0 %v5974
    %5985 = vmatprep.subr.mxu0 0.0
    %5986 = vmatpush1.msra.mxu0 0.0
    %5987 = vmatprep.subr.mxu0 0.0
    %5988 = vmatpush1.msra.mxu0 0.0
    %5989 = vmatprep.subr.mxu0 0.0
    %5990 = vmatpush1.msra.mxu0 0.0
    %5991 = vmatprep.subr.mxu0 0.0
    %5992 = vmatpush1.msra.mxu0 0.0
    %5993 = vmatprep.subr.mxu0 0.0
    %5994 = vmatpush1.msra.mxu0 0.0
    %5995 = vmatprep.subr.mxu0 0.0
    %5996 = vmatpush1.msra.mxu0 0.0
    %5997 = vmatprep.subr.mxu0 0.0
    %5998 = vmatpush1.msra.mxu0 0.0
    %5999 = vmatprep.subr.mxu0 0.0
    %6000 = vmatpush1.msra.mxu0 0.0
    %6001 = vmatprep.subr.mxu0 0.0
    %6002 = vmatpush1.msra.mxu0 0.0
    %6003 = vmatprep.subr.mxu0 0.0
    %6004 = vmatpush1.msra.mxu0 0.0
    %6005 = vmatprep.subr.mxu0 0.0
    %6006 = vmatpush1.msra.mxu0 0.0
    %6007 = vmatprep.subr.mxu0 0.0
    %6008 = vmatpush1.msra.mxu0 0.0
    %6009 = vmatprep.subr.mxu0 0.0
    %6010 = vmatpush1.msra.mxu0 0.0
    %6011 = vmatprep.subr.mxu0 0.0
    %6012 = vmatpush1.msra.mxu0 0.0
    %6013 = vmatprep.subr.mxu0 0.0
    %6014 = vmatpush1.msra.mxu0 0.0
    %6015 = vmatprep.subr.mxu0 0.0
    %6016 = vmatpush1.msra.mxu0 0.0
    %6017 = vmatprep.subr.mxu0 0.0
    %6018 = vmatpush1.msra.mxu0 0.0
    %6019 = vmatprep.subr.mxu0 0.0
    %6020 = vmatpush1.msra.mxu0 0.0
    %6021 = vmatprep.subr.mxu0 0.0
    %6022 = vmatpush1.msra.mxu0 0.0
    %6023 = vmatprep.subr.mxu0 0.0
    %6024 = vmatpush1.msra.mxu0 0.0
    %6025 = vmatprep.subr.mxu0 0.0
    %6026 = vmatpush1.msra.mxu0 0.0
    %6027 = vmatprep.subr.mxu0 0.0
    %6028 = vmatpush1.msra.mxu0 0.0
    %6029 = vmatprep.subr.mxu0 0.0
    %6030 = vmatpush1.msra.mxu0 0.0
    %6031 = vmatprep.subr.mxu0 0.0
    %6032 = vmatpush1.msra.mxu0 0.0
    %6033 = vmatprep.subr.mxu0 0.0
    %6034 = vmatpush1.msra.mxu0 0.0
    %6035 = vmatprep.subr.mxu0 0.0
    %6036 = vmatpush1.msra.mxu0 0.0
    %6037 = vmatprep.subr.mxu0 0.0
    %6038 = vmatpush1.msra.mxu0 0.0
    %6039 = vmatprep.subr.mxu0 0.0
    %6040 = vmatpush1.msra.mxu0 0.0
    %6041 = vmatprep.mubr.f32.mxu0 0.0
    %6042 = vmatmul.mubr.f32.gmra.mrb[0].mxu0 %v1617
    %v6043 = vpop.f32.mrb[0].mxu0
    %v6044 = vadd.f32 0.0, %v6043
    %v6045 = vpop.f32.mrb[0].mxu0
    %6046 = vmatprep.mubr.f32.mxu0 0.0
    %6047 = vmatmul.mubr.f32.gmra.mrb[0].mxu0 %v5297
    %v6048 = vpop.f32.mrb[0].mxu0
    %v6049 = vadd.f32 0.0, %v6048
    %v6050 = vpop.f32.mrb[0].mxu0
    %6051 = vmatprep.mubr.f32.mxu0 0.0
    %6052 = vmatmul.mubr.f32.gmra.mrb[0].mxu0 %v1623
    %v6053 = vpop.f32.mrb[0].mxu0
    %v6054 = vadd.f32 0.0, %v6053
    %v6055 = vpop.f32.mrb[0].mxu0
    %6056 = vmatprep.mubr.f32.mxu0 0.0
    %6057 = vmatmul.mubr.f32.gmra.mrb[0].mxu0 %v5299
    %v6058 = vpop.f32.mrb[0].mxu0
    %v6059 = vadd.f32 0.0, %v6058
    %v6060 = vpop.f32.mrb[0].mxu0
    %6061 = vmatprep.mubr.f32.mxu0 0.0
    %6062 = vmatmul.mubr.f32.gmra.mrb[0].mxu0 %v1629
    %v6063 = vpop.f32.mrb[0].mxu0
    %v6064 = vadd.f32 0.0, %v6063
    %v6065 = vpop.f32.mrb[0].mxu0
    %6066 = vmatprep.mubr.f32.mxu0 0.0
    %6067 = vmatmul.mubr.f32.gmra.mrb[0].mxu0 %v5301
    %v6068 = vpop.f32.mrb[0].mxu0
    %v6069 = vadd.f32 0.0, %v6068
    %v6070 = vpop.f32.mrb[0].mxu0
    %6071 = vmatprep.mubr.f32.mxu0 0.0
    %6072 = vmatmul.mubr.f32.gmra.mrb[0].mxu0 %v1635
    %v6073 = vpop.f32.mrb[0].mxu0
    %v6074 = vadd.f32 0.0, %v6073
    %v6075 = vpop.f32.mrb[0].mxu0
    %6076 = vmatprep.mubr.f32.mxu0 0.0
    %6077 = vmatmul.mubr.f32.gmra.mrb[0].mxu0 %v5303
    %v6078 = vpop.f32.mrb[0].mxu0
    %v6079 = vadd.f32 0.0, %v6078
    %v6080 = vpop.f32.mrb[0].mxu0
    %6081 = vmatprep.mubr.f32.mxu0 0.0
    %6082 = vmatmul.mubr.f32.gmra.mrb[0].mxu0 %v1641
    %v6083 = vpop.f32.mrb[0].mxu0
    %v6084 = vadd.f32 0.0, %v6083
    %v6085 = vpop.f32.mrb[0].mxu0
    %6086 = vmatprep.mubr.f32.mxu0 0.0
    %6087 = vmatmul.mubr.f32.gmra.mrb[0].mxu0 %v5471
    %v6088 = vpop.f32.mrb[0].mxu0
    %v6089 = vadd.f32 0.0, %v6088
    %v6090 = vpop.f32.mrb[0].mxu0
    %6091 = vmatprep.mubr.f32.mxu0 0.0
    %6092 = vmatmul.mubr.f32.gmra.mrb[0].mxu0 %v1948
    %v6093 = vpop.f32.mrb[0].mxu0
    %v6094 = vadd.f32 0.0, %v6093
    %v6095 = vpop.f32.mrb[0].mxu0
    %6096 = vmatprep.mubr.f32.mxu0 0.0
    %6097 = vmatmul.mubr.f32.gmra.mrb[0].mxu0 %v5639
    %v6098 = vpop.f32.mrb[0].mxu0
    %v6099 = vadd.f32 0.0, %v6098
    %v6100 = vpop.f32.mrb[0].mxu0
    %6101 = vmatprep.mubr.f32.mxu0 0.0
    %6102 = vmatmul.mubr.f32.gmra.mrb[0].mxu0 %v2120
    %v6103 = vpop.f32.mrb[0].mxu0
    %v6104 = vadd.f32 0.0, %v6103
    %v6105 = vpop.f32.mrb[0].mxu0
    %6106 = vmatprep.mubr.f32.mxu0 0.0
    %6107 = vmatmul.mubr.f32.gmra.mrb[0].mxu0 %v5807
    %v6108 = vpop.f32.mrb[0].mxu0
    %v6109 = vadd.f32 0.0, %v6108
    %v6110 = vpop.f32.mrb[0].mxu0
    %6111 = vmatprep.mubr.f32.mxu0 0.0
    %6112 = vmatmul.mubr.f32.gmra.mrb[0].mxu0 %v2292
    %v6113 = vpop.f32.mrb[0].mxu0
    %v6114 = vadd.f32 0.0, %v6113
    %v6115 = vpop.f32.mrb[0].mxu0
    %6116 = vmatprep.mubr.f32.mxu0 0.0
    %6117 = vmatmul.mubr.f32.gmra.mrb[0].mxu0 %v5975
    %v6118 = vpop.f32.mrb[0].mxu0
    %v6119 = vadd.f32 0.0, %v6118
    %v6120 = vpop.f32.mrb[0].mxu0
    %6121 = vdwg.mxu0
    %v6122 = vadd.f32 %v5954, %v6044
    %v6123 = vadd.f32 %v5955, %v6049
    %v6124 = vadd.f32 %v5956, %v6054
    %v6125 = vadd.f32 %v5957, %v6059
    %v6126 = vadd.f32 %v5958, %v6064
    %v6127 = vadd.f32 %v5959, %v6069
    %v6128 = vadd.f32 %v5960, %v6074
    %v6129 = vadd.f32 %v5961, %v6079
    %v6130 = vadd.f32 %v5962, %v6084
    %v6131 = vadd.f32 %v5963, %v6089
    %v6132 = vadd.f32 %v5964, %v6094
    %v6133 = vadd.f32 %v5965, %v6099
    %v6134 = vadd.f32 %v5966, %v6104
    %v6135 = vadd.f32 %v5967, %v6109
    %v6136 = vadd.f32 %v5968, %v6114
    %v6137 = vadd.f32 %v5969, %v6119
    %v6138 = vld [vmem:[%s4] sm:$0x1]
    %v6140 = vlaneseq
    %v6141 = vshrl.u32 %v6140, 7
    %v6142 = vsub.s32 0, %v6141
    %v6143 = vrot.slane %v6138, %v6142
    %v6145 = vadd.f32 %v6122, %v6143
    %v6146 = vadd.f32 %v6123, %v6143
    %v6147 = vadd.f32 %v6124, %v6143
    %v6148 = vadd.f32 %v6125, %v6143
    %v6149 = vadd.f32 %v6126, %v6143
    %v6150 = vadd.f32 %v6127, %v6143
    %v6151 = vadd.f32 %v6128, %v6143
    %v6152 = vadd.f32 %v6129, %v6143
    %v6153 = vadd.f32 %v6130, %v6143
    %v6154 = vadd.f32 %v6131, %v6143
    %v6155 = vadd.f32 %v6132, %v6143
    %v6156 = vadd.f32 %v6133, %v6143
    %v6157 = vadd.f32 %v6134, %v6143
    %v6158 = vadd.f32 %v6135, %v6143
    %v6159 = vadd.f32 %v6136, %v6143
    %v6160 = vadd.f32 %v6137, %v6143
    %v6161 = vmax.f32 %v6145, %v6147
    %v6162 = vmax.f32 %v6146, %v6148
    %v6163 = vmax.f32 %v6149, %v6151
    %v6164 = vmax.f32 %v6150, %v6152
    %v6165 = vmax.f32 %v6153, %v6155
    %v6166 = vmax.f32 %v6154, %v6156
    %v6167 = vmax.f32 %v6157, %v6159
    %v6168 = vmax.f32 %v6158, %v6160
    %v6170 = vrot.slane %v6161, 2
    %v6172 = vmax.f32 %v6161, %v6170
    %v6173 = vmax.f32 %v6172, 0.0
    %v6174 = vld [vmem:[%s5] sm:$0xff]
    %v6175 = vld [vmem:[%s5 + $0x8] sm:$0xff]
    %v6176 = vld [vmem:[%s5 + $0x10] sm:$0xff]
    %v6177 = vld [vmem:[%s5 + $0x18] sm:$0xff]
    %s6178 = scalar_lea.vmem %s5, 32
    %v6179 = vld [vmem:[%s6178] sm:$0xff]
    %v6180 = vld [vmem:[%s6178 + $0x8] sm:$0xff]
    %v6181 = vld [vmem:[%s6178 + $0x10] sm:$0xff]
    %v6182 = vld [vmem:[%s6178 + $0x18] sm:$0xff]
    %v6184 = vrot.slane %v6173, 4
    %v6185 = vsel %vm181, %v6184, 0
    %6187 = vmatprep.subr.mxu0 0.0
    %6188 = vmatpush1.msra.mxu0 %v6179
    %6189 = vmatprep.subr.mxu0 0.0
    %6190 = vmatpush1.msra.mxu0 %v6180
    %6191 = vmatprep.subr.mxu0 0.0
    %6192 = vmatpush1.msra.mxu0 %v6181
    %6193 = vmatprep.subr.mxu0 0.0
    %6194 = vmatpush1.msra.mxu0 %v6182
    %6195 = vmatprep.subr.mxu0 0.0
    %6196 = vmatpush1.msra.mxu0 0.0
    %6197 = vmatprep.subr.mxu0 0.0
    %6198 = vmatpush1.msra.mxu0 0.0
    %6199 = vmatprep.subr.mxu0 0.0
    %6200 = vmatpush1.msra.mxu0 0.0
    %6201 = vmatprep.subr.mxu0 0.0
    %6202 = vmatpush1.msra.mxu0 0.0
    %6203 = vmatprep.subr.mxu0 0.0
    %6204 = vmatpush1.msra.mxu0 0.0
    %6205 = vmatprep.subr.mxu0 0.0
    %6206 = vmatpush1.msra.mxu0 0.0
    %6207 = vmatprep.subr.mxu0 0.0
    %6208 = vmatpush1.msra.mxu0 0.0
    %6209 = vmatprep.subr.mxu0 0.0
    %6210 = vmatpush1.msra.mxu0 0.0
    %6211 = vmatprep.subr.mxu0 0.0
    %6212 = vmatpush1.msra.mxu0 0.0
    %6213 = vmatprep.subr.mxu0 0.0
    %6214 = vmatpush1.msra.mxu0 0.0
    %6215 = vmatprep.subr.mxu0 0.0
    %6216 = vmatpush1.msra.mxu0 0.0
    %6217 = vmatprep.subr.mxu0 0.0
    %6218 = vmatpush1.msra.mxu0 0.0
    %6219 = vmatprep.subr.mxu0 0.0
    %6220 = vmatpush1.msra.mxu0 0.0
    %6221 = vmatprep.subr.mxu0 0.0
    %6222 = vmatpush1.msra.mxu0 0.0
    %6223 = vmatprep.subr.mxu0 0.0
    %6224 = vmatpush1.msra.mxu0 0.0
    %6225 = vmatprep.subr.mxu0 0.0
    %6226 = vmatpush1.msra.mxu0 0.0
    %6227 = vmatprep.subr.mxu0 0.0
    %6228 = vmatpush1.msra.mxu0 0.0
    %6229 = vmatprep.subr.mxu0 0.0
    %6230 = vmatpush1.msra.mxu0 0.0
    %6231 = vmatprep.subr.mxu0 0.0
    %6232 = vmatpush1.msra.mxu0 0.0
    %6233 = vmatprep.subr.mxu0 0.0
    %6234 = vmatpush1.msra.mxu0 0.0
    %6235 = vmatprep.subr.mxu0 0.0
    %6236 = vmatpush1.msra.mxu0 0.0
    %6237 = vmatprep.subr.mxu0 0.0
    %6238 = vmatpush1.msra.mxu0 0.0
    %6239 = vmatprep.subr.mxu0 0.0
    %6240 = vmatpush1.msra.mxu0 0.0
    %6241 = vmatprep.subr.mxu0 0.0
    %6242 = vmatpush1.msra.mxu0 0.0
    %6243 = vmatprep.subr.mxu0 0.0
    %6244 = vmatpush1.msra.mxu0 0.0
    %6245 = vmatprep.subr.mxu0 0.0
    %6246 = vmatpush1.msra.mxu0 0.0
    %6247 = vmatprep.subr.mxu0 0.0
    %6248 = vmatpush1.msra.mxu0 0.0
    %6249 = vmatprep.subr.mxu0 0.0
    %6250 = vmatpush1.msra.mxu0 0.0
    %6251 = vmatprep.mubr.f32.mxu0 0.0
    %6252 = vmatmul.mubr.f32.gmra.mrb[0].mxu0 %v6185
    %v6253 = vpop.f32.mrb[0].mxu0
    %v6254 = vadd.f32 0.0, %v6253
    %v6255 = vpop.f32.mrb[0].mxu0
    %6256 = vdwg.mxu0
    %v6257 = vsel %vm181, %v6173, 0
    %6259 = vmatprep.subr.mxu0 0.0
    %6260 = vmatpush1.msra.mxu0 %v6174
    %6261 = vmatprep.subr.mxu0 0.0
    %6262 = vmatpush1.msra.mxu0 %v6175
    %6263 = vmatprep.subr.mxu0 0.0
    %6264 = vmatpush1.msra.mxu0 %v6176
    %6265 = vmatprep.subr.mxu0 0.0
    %6266 = vmatpush1.msra.mxu0 %v6177
    %6267 = vmatprep.subr.mxu0 0.0
    %6268 = vmatpush1.msra.mxu0 0.0
    %6269 = vmatprep.subr.mxu0 0.0
    %6270 = vmatpush1.msra.mxu0 0.0
    %6271 = vmatprep.subr.mxu0 0.0
    %6272 = vmatpush1.msra.mxu0 0.0
    %6273 = vmatprep.subr.mxu0 0.0
    %6274 = vmatpush1.msra.mxu0 0.0
    %6275 = vmatprep.subr.mxu0 0.0
    %6276 = vmatpush1.msra.mxu0 0.0
    %6277 = vmatprep.subr.mxu0 0.0
    %6278 = vmatpush1.msra.mxu0 0.0
    %6279 = vmatprep.subr.mxu0 0.0
    %6280 = vmatpush1.msra.mxu0 0.0
    %6281 = vmatprep.subr.mxu0 0.0
    %6282 = vmatpush1.msra.mxu0 0.0
    %6283 = vmatprep.subr.mxu0 0.0
    %6284 = vmatpush1.msra.mxu0 0.0
    %6285 = vmatprep.subr.mxu0 0.0
    %6286 = vmatpush1.msra.mxu0 0.0
    %6287 = vmatprep.subr.mxu0 0.0
    %6288 = vmatpush1.msra.mxu0 0.0
    %6289 = vmatprep.subr.mxu0 0.0
    %6290 = vmatpush1.msra.mxu0 0.0
    %6291 = vmatprep.subr.mxu0 0.0
    %6292 = vmatpush1.msra.mxu0 0.0
    %6293 = vmatprep.subr.mxu0 0.0
    %6294 = vmatpush1.msra.mxu0 0.0
    %6295 = vmatprep.subr.mxu0 0.0
    %6296 = vmatpush1.msra.mxu0 0.0
    %6297 = vmatprep.subr.mxu0 0.0
    %6298 = vmatpush1.msra.mxu0 0.0
    %6299 = vmatprep.subr.mxu0 0.0
    %6300 = vmatpush1.msra.mxu0 0.0
    %6301 = vmatprep.subr.mxu0 0.0
    %6302 = vmatpush1.msra.mxu0 0.0
    %6303 = vmatprep.subr.mxu0 0.0
    %6304 = vmatpush1.msra.mxu0 0.0
    %6305 = vmatprep.subr.mxu0 0.0
    %6306 = vmatpush1.msra.mxu0 0.0
    %6307 = vmatprep.subr.mxu0 0.0
    %6308 = vmatpush1.msra.mxu0 0.0
    %6309 = vmatprep.subr.mxu0 0.0
    %6310 = vmatpush1.msra.mxu0 0.0
    %6311 = vmatprep.subr.mxu0 0.0
    %6312 = vmatpush1.msra.mxu0 0.0
    %6313 = vmatprep.subr.mxu0 0.0
    %6314 = vmatpush1.msra.mxu0 0.0
    %6315 = vmatprep.subr.mxu0 0.0
    %6316 = vmatpush1.msra.mxu0 0.0
    %6317 = vmatprep.subr.mxu0 0.0
    %6318 = vmatpush1.msra.mxu0 0.0
    %6319 = vmatprep.subr.mxu0 0.0
    %6320 = vmatpush1.msra.mxu0 0.0
    %6321 = vmatprep.subr.mxu0 0.0
    %6322 = vmatpush1.msra.mxu0 0.0
    %6323 = vmatprep.mubr.f32.mxu0 0.0
    %6324 = vmatmul.mubr.f32.gmra.mrb[0].mxu0 %v6257
    %v6325 = vpop.f32.mrb[0].mxu0
    %v6326 = vadd.f32 %v6254, %v6325
    %v6327 = vpop.f32.mrb[0].mxu0
    %6328 = vdwg.mxu0
    %v6330 = vrot.slane %v6162, 2
    %v6332 = vmax.f32 %v6162, %v6330
    %v6333 = vmax.f32 %v6332, 0.0
    %s6334 = scalar_lea.vmem %s5, 64
    %v6335 = vld [vmem:[%s6334] sm:$0xff]
    %v6336 = vld [vmem:[%s6334 + $0x8] sm:$0xff]
    %v6337 = vld [vmem:[%s6334 + $0x10] sm:$0xff]
    %v6338 = vld [vmem:[%s6334 + $0x18] sm:$0xff]
    %v6340 = vsel %vm181, %v6333, 0
    %6342 = vmatprep.subr.mxu0 0.0
    %6343 = vmatpush1.msra.mxu0 %v6335
    %6344 = vmatprep.subr.mxu0 0.0
    %6345 = vmatpush1.msra.mxu0 %v6336
    %6346 = vmatprep.subr.mxu0 0.0
    %6347 = vmatpush1.msra.mxu0 %v6337
    %6348 = vmatprep.subr.mxu0 0.0
    %6349 = vmatpush1.msra.mxu0 %v6338
    %6350 = vmatprep.subr.mxu0 0.0
    %6351 = vmatpush1.msra.mxu0 0.0
    %6352 = vmatprep.subr.mxu0 0.0
    %6353 = vmatpush1.msra.mxu0 0.0
    %6354 = vmatprep.subr.mxu0 0.0
    %6355 = vmatpush1.msra.mxu0 0.0
    %6356 = vmatprep.subr.mxu0 0.0
    %6357 = vmatpush1.msra.mxu0 0.0
    %6358 = vmatprep.subr.mxu0 0.0
    %6359 = vmatpush1.msra.mxu0 0.0
    %6360 = vmatprep.subr.mxu0 0.0
    %6361 = vmatpush1.msra.mxu0 0.0
    %6362 = vmatprep.subr.mxu0 0.0
    %6363 = vmatpush1.msra.mxu0 0.0
    %6364 = vmatprep.subr.mxu0 0.0
    %6365 = vmatpush1.msra.mxu0 0.0
    %6366 = vmatprep.subr.mxu0 0.0
    %6367 = vmatpush1.msra.mxu0 0.0
    %6368 = vmatprep.subr.mxu0 0.0
    %6369 = vmatpush1.msra.mxu0 0.0
    %6370 = vmatprep.subr.mxu0 0.0
    %6371 = vmatpush1.msra.mxu0 0.0
    %6372 = vmatprep.subr.mxu0 0.0
    %6373 = vmatpush1.msra.mxu0 0.0
    %6374 = vmatprep.subr.mxu0 0.0
    %6375 = vmatpush1.msra.mxu0 0.0
    %6376 = vmatprep.subr.mxu0 0.0
    %6377 = vmatpush1.msra.mxu0 0.0
    %6378 = vmatprep.subr.mxu0 0.0
    %6379 = vmatpush1.msra.mxu0 0.0
    %6380 = vmatprep.subr.mxu0 0.0
    %6381 = vmatpush1.msra.mxu0 0.0
    %6382 = vmatprep.subr.mxu0 0.0
    %6383 = vmatpush1.msra.mxu0 0.0
    %6384 = vmatprep.subr.mxu0 0.0
    %6385 = vmatpush1.msra.mxu0 0.0
    %6386 = vmatprep.subr.mxu0 0.0
    %6387 = vmatpush1.msra.mxu0 0.0
    %6388 = vmatprep.subr.mxu0 0.0
    %6389 = vmatpush1.msra.mxu0 0.0
    %6390 = vmatprep.subr.mxu0 0.0
    %6391 = vmatpush1.msra.mxu0 0.0
    %6392 = vmatprep.subr.mxu0 0.0
    %6393 = vmatpush1.msra.mxu0 0.0
    %6394 = vmatprep.subr.mxu0 0.0
    %6395 = vmatpush1.msra.mxu0 0.0
    %6396 = vmatprep.subr.mxu0 0.0
    %6397 = vmatpush1.msra.mxu0 0.0
    %6398 = vmatprep.subr.mxu0 0.0
    %6399 = vmatpush1.msra.mxu0 0.0
    %6400 = vmatprep.subr.mxu0 0.0
    %6401 = vmatpush1.msra.mxu0 0.0
    %6402 = vmatprep.subr.mxu0 0.0
    %6403 = vmatpush1.msra.mxu0 0.0
    %6404 = vmatprep.subr.mxu0 0.0
    %6405 = vmatpush1.msra.mxu0 0.0
    %6406 = vmatprep.mubr.f32.mxu0 0.0
    %6407 = vmatmul.mubr.f32.gmra.mrb[0].mxu0 %v6340
    %v6408 = vpop.f32.mrb[0].mxu0
    %v6409 = vadd.f32 0.0, %v6408
    %v6410 = vpop.f32.mrb[0].mxu0
    %6411 = vdwg.mxu0
    %v6412 = vadd.f32 %v6326, %v6409
    %s6413 = scalar_lea.vmem %s5, 96
    %v6414 = vld [vmem:[%s6413] sm:$0xff]
    %v6415 = vld [vmem:[%s6413 + $0x8] sm:$0xff]
    %v6416 = vld [vmem:[%s6413 + $0x10] sm:$0xff]
    %v6417 = vld [vmem:[%s6413 + $0x18] sm:$0xff]
    %v6418 = vrot.slane %v6333, 4
    %v6419 = vsel %vm181, %v6418, 0
    %6421 = vmatprep.subr.mxu0 0.0
    %6422 = vmatpush1.msra.mxu0 %v6414
    %6423 = vmatprep.subr.mxu0 0.0
    %6424 = vmatpush1.msra.mxu0 %v6415
    %6425 = vmatprep.subr.mxu0 0.0
    %6426 = vmatpush1.msra.mxu0 %v6416
    %6427 = vmatprep.subr.mxu0 0.0
    %6428 = vmatpush1.msra.mxu0 %v6417
    %6429 = vmatprep.subr.mxu0 0.0
    %6430 = vmatpush1.msra.mxu0 0.0
    %6431 = vmatprep.subr.mxu0 0.0
    %6432 = vmatpush1.msra.mxu0 0.0
    %6433 = vmatprep.subr.mxu0 0.0
    %6434 = vmatpush1.msra.mxu0 0.0
    %6435 = vmatprep.subr.mxu0 0.0
    %6436 = vmatpush1.msra.mxu0 0.0
    %6437 = vmatprep.subr.mxu0 0.0
    %6438 = vmatpush1.msra.mxu0 0.0
    %6439 = vmatprep.subr.mxu0 0.0
    %6440 = vmatpush1.msra.mxu0 0.0
    %6441 = vmatprep.subr.mxu0 0.0
    %6442 = vmatpush1.msra.mxu0 0.0
    %6443 = vmatprep.subr.mxu0 0.0
    %6444 = vmatpush1.msra.mxu0 0.0
    %6445 = vmatprep.subr.mxu0 0.0
    %6446 = vmatpush1.msra.mxu0 0.0
    %6447 = vmatprep.subr.mxu0 0.0
    %6448 = vmatpush1.msra.mxu0 0.0
    %6449 = vmatprep.subr.mxu0 0.0
    %6450 = vmatpush1.msra.mxu0 0.0
    %6451 = vmatprep.subr.mxu0 0.0
    %6452 = vmatpush1.msra.mxu0 0.0
    %6453 = vmatprep.subr.mxu0 0.0
    %6454 = vmatpush1.msra.mxu0 0.0
    %6455 = vmatprep.subr.mxu0 0.0
    %6456 = vmatpush1.msra.mxu0 0.0
    %6457 = vmatprep.subr.mxu0 0.0
    %6458 = vmatpush1.msra.mxu0 0.0
    %6459 = vmatprep.subr.mxu0 0.0
    %6460 = vmatpush1.msra.mxu0 0.0
    %6461 = vmatprep.subr.mxu0 0.0
    %6462 = vmatpush1.msra.mxu0 0.0
    %6463 = vmatprep.subr.mxu0 0.0
    %6464 = vmatpush1.msra.mxu0 0.0
    %6465 = vmatprep.subr.mxu0 0.0
    %6466 = vmatpush1.msra.mxu0 0.0
    %6467 = vmatprep.subr.mxu0 0.0
    %6468 = vmatpush1.msra.mxu0 0.0
    %6469 = vmatprep.subr.mxu0 0.0
    %6470 = vmatpush1.msra.mxu0 0.0
    %6471 = vmatprep.subr.mxu0 0.0
    %6472 = vmatpush1.msra.mxu0 0.0
    %6473 = vmatprep.subr.mxu0 0.0
    %6474 = vmatpush1.msra.mxu0 0.0
    %6475 = vmatprep.subr.mxu0 0.0
    %6476 = vmatpush1.msra.mxu0 0.0
    %6477 = vmatprep.subr.mxu0 0.0
    %6478 = vmatpush1.msra.mxu0 0.0
    %6479 = vmatprep.subr.mxu0 0.0
    %6480 = vmatpush1.msra.mxu0 0.0
    %6481 = vmatprep.subr.mxu0 0.0
    %6482 = vmatpush1.msra.mxu0 0.0
    %6483 = vmatprep.subr.mxu0 0.0
    %6484 = vmatpush1.msra.mxu0 0.0
    %6485 = vmatprep.mubr.f32.mxu0 0.0
    %6486 = vmatmul.mubr.f32.gmra.mrb[0].mxu0 %v6419
    %v6487 = vpop.f32.mrb[0].mxu0
    %v6488 = vadd.f32 0.0, %v6487
    %v6489 = vpop.f32.mrb[0].mxu0
    %6490 = vdwg.mxu0
    %v6491 = vadd.f32 %v6412, %v6488
    %v6493 = vrot.slane %v6163, 2
    %v6495 = vmax.f32 %v6163, %v6493
    %v6496 = vmax.f32 %v6495, 0.0
    %s6497 = scalar_lea.vmem %s5, 128
    %v6498 = vld [vmem:[%s6497] sm:$0xff]
    %v6499 = vld [vmem:[%s6497 + $0x8] sm:$0xff]
    %v6500 = vld [vmem:[%s6497 + $0x10] sm:$0xff]
    %v6501 = vld [vmem:[%s6497 + $0x18] sm:$0xff]
    %v6503 = vsel %vm181, %v6496, 0
    %6505 = vmatprep.subr.mxu0 0.0
    %6506 = vmatpush1.msra.mxu0 %v6498
    %6507 = vmatprep.subr.mxu0 0.0
    %6508 = vmatpush1.msra.mxu0 %v6499
    %6509 = vmatprep.subr.mxu0 0.0
    %6510 = vmatpush1.msra.mxu0 %v6500
    %6511 = vmatprep.subr.mxu0 0.0
    %6512 = vmatpush1.msra.mxu0 %v6501
    %6513 = vmatprep.subr.mxu0 0.0
    %6514 = vmatpush1.msra.mxu0 0.0
    %6515 = vmatprep.subr.mxu0 0.0
    %6516 = vmatpush1.msra.mxu0 0.0
    %6517 = vmatprep.subr.mxu0 0.0
    %6518 = vmatpush1.msra.mxu0 0.0
    %6519 = vmatprep.subr.mxu0 0.0
    %6520 = vmatpush1.msra.mxu0 0.0
    %6521 = vmatprep.subr.mxu0 0.0
    %6522 = vmatpush1.msra.mxu0 0.0
    %6523 = vmatprep.subr.mxu0 0.0
    %6524 = vmatpush1.msra.mxu0 0.0
    %6525 = vmatprep.subr.mxu0 0.0
    %6526 = vmatpush1.msra.mxu0 0.0
    %6527 = vmatprep.subr.mxu0 0.0
    %6528 = vmatpush1.msra.mxu0 0.0
    %6529 = vmatprep.subr.mxu0 0.0
    %6530 = vmatpush1.msra.mxu0 0.0
    %6531 = vmatprep.subr.mxu0 0.0
    %6532 = vmatpush1.msra.mxu0 0.0
    %6533 = vmatprep.subr.mxu0 0.0
    %6534 = vmatpush1.msra.mxu0 0.0
    %6535 = vmatprep.subr.mxu0 0.0
    %6536 = vmatpush1.msra.mxu0 0.0
    %6537 = vmatprep.subr.mxu0 0.0
    %6538 = vmatpush1.msra.mxu0 0.0
    %6539 = vmatprep.subr.mxu0 0.0
    %6540 = vmatpush1.msra.mxu0 0.0
    %6541 = vmatprep.subr.mxu0 0.0
    %6542 = vmatpush1.msra.mxu0 0.0
    %6543 = vmatprep.subr.mxu0 0.0
    %6544 = vmatpush1.msra.mxu0 0.0
    %6545 = vmatprep.subr.mxu0 0.0
    %6546 = vmatpush1.msra.mxu0 0.0
    %6547 = vmatprep.subr.mxu0 0.0
    %6548 = vmatpush1.msra.mxu0 0.0
    %6549 = vmatprep.subr.mxu0 0.0
    %6550 = vmatpush1.msra.mxu0 0.0
    %6551 = vmatprep.subr.mxu0 0.0
    %6552 = vmatpush1.msra.mxu0 0.0
    %6553 = vmatprep.subr.mxu0 0.0
    %6554 = vmatpush1.msra.mxu0 0.0
    %6555 = vmatprep.subr.mxu0 0.0
    %6556 = vmatpush1.msra.mxu0 0.0
    %6557 = vmatprep.subr.mxu0 0.0
    %6558 = vmatpush1.msra.mxu0 0.0
    %6559 = vmatprep.subr.mxu0 0.0
    %6560 = vmatpush1.msra.mxu0 0.0
    %6561 = vmatprep.subr.mxu0 0.0
    %6562 = vmatpush1.msra.mxu0 0.0
    %6563 = vmatprep.subr.mxu0 0.0
    %6564 = vmatpush1.msra.mxu0 0.0
    %6565 = vmatprep.subr.mxu0 0.0
    %6566 = vmatpush1.msra.mxu0 0.0
    %6567 = vmatprep.subr.mxu0 0.0
    %6568 = vmatpush1.msra.mxu0 0.0
    %6569 = vmatprep.mubr.f32.mxu0 0.0
    %6570 = vmatmul.mubr.f32.gmra.mrb[0].mxu0 %v6503
    %v6571 = vpop.f32.mrb[0].mxu0
    %v6572 = vadd.f32 0.0, %v6571
    %v6573 = vpop.f32.mrb[0].mxu0
    %6574 = vdwg.mxu0
    %v6575 = vadd.f32 %v6491, %v6572
    %s6576 = scalar_lea.vmem %s5, 160
    %v6577 = vld [vmem:[%s6576] sm:$0xff]
    %v6578 = vld [vmem:[%s6576 + $0x8] sm:$0xff]
    %v6579 = vld [vmem:[%s6576 + $0x10] sm:$0xff]
    %v6580 = vld [vmem:[%s6576 + $0x18] sm:$0xff]
    %v6581 = vrot.slane %v6496, 4
    %v6582 = vsel %vm181, %v6581, 0
    %6584 = vmatprep.subr.mxu0 0.0
    %6585 = vmatpush1.msra.mxu0 %v6577
    %6586 = vmatprep.subr.mxu0 0.0
    %6587 = vmatpush1.msra.mxu0 %v6578
    %6588 = vmatprep.subr.mxu0 0.0
    %6589 = vmatpush1.msra.mxu0 %v6579
    %6590 = vmatprep.subr.mxu0 0.0
    %6591 = vmatpush1.msra.mxu0 %v6580
    %6592 = vmatprep.subr.mxu0 0.0
    %6593 = vmatpush1.msra.mxu0 0.0
    %6594 = vmatprep.subr.mxu0 0.0
    %6595 = vmatpush1.msra.mxu0 0.0
    %6596 = vmatprep.subr.mxu0 0.0
    %6597 = vmatpush1.msra.mxu0 0.0
    %6598 = vmatprep.subr.mxu0 0.0
    %6599 = vmatpush1.msra.mxu0 0.0
    %6600 = vmatprep.subr.mxu0 0.0
    %6601 = vmatpush1.msra.mxu0 0.0
    %6602 = vmatprep.subr.mxu0 0.0
    %6603 = vmatpush1.msra.mxu0 0.0
    %6604 = vmatprep.subr.mxu0 0.0
    %6605 = vmatpush1.msra.mxu0 0.0
    %6606 = vmatprep.subr.mxu0 0.0
    %6607 = vmatpush1.msra.mxu0 0.0
    %6608 = vmatprep.subr.mxu0 0.0
    %6609 = vmatpush1.msra.mxu0 0.0
    %6610 = vmatprep.subr.mxu0 0.0
    %6611 = vmatpush1.msra.mxu0 0.0
    %6612 = vmatprep.subr.mxu0 0.0
    %6613 = vmatpush1.msra.mxu0 0.0
    %6614 = vmatprep.subr.mxu0 0.0
    %6615 = vmatpush1.msra.mxu0 0.0
    %6616 = vmatprep.subr.mxu0 0.0
    %6617 = vmatpush1.msra.mxu0 0.0
    %6618 = vmatprep.subr.mxu0 0.0
    %6619 = vmatpush1.msra.mxu0 0.0
    %6620 = vmatprep.subr.mxu0 0.0
    %6621 = vmatpush1.msra.mxu0 0.0
    %6622 = vmatprep.subr.mxu0 0.0
    %6623 = vmatpush1.msra.mxu0 0.0
    %6624 = vmatprep.subr.mxu0 0.0
    %6625 = vmatpush1.msra.mxu0 0.0
    %6626 = vmatprep.subr.mxu0 0.0
    %6627 = vmatpush1.msra.mxu0 0.0
    %6628 = vmatprep.subr.mxu0 0.0
    %6629 = vmatpush1.msra.mxu0 0.0
    %6630 = vmatprep.subr.mxu0 0.0
    %6631 = vmatpush1.msra.mxu0 0.0
    %6632 = vmatprep.subr.mxu0 0.0
    %6633 = vmatpush1.msra.mxu0 0.0
    %6634 = vmatprep.subr.mxu0 0.0
    %6635 = vmatpush1.msra.mxu0 0.0
    %6636 = vmatprep.subr.mxu0 0.0
    %6637 = vmatpush1.msra.mxu0 0.0
    %6638 = vmatprep.subr.mxu0 0.0
    %6639 = vmatpush1.msra.mxu0 0.0
    %6640 = vmatprep.subr.mxu0 0.0
    %6641 = vmatpush1.msra.mxu0 0.0
    %6642 = vmatprep.subr.mxu0 0.0
    %6643 = vmatpush1.msra.mxu0 0.0
    %6644 = vmatprep.subr.mxu0 0.0
    %6645 = vmatpush1.msra.mxu0 0.0
    %6646 = vmatprep.subr.mxu0 0.0
    %6647 = vmatpush1.msra.mxu0 0.0
    %6648 = vmatprep.mubr.f32.mxu0 0.0
    %6649 = vmatmul.mubr.f32.gmra.mrb[0].mxu0 %v6582
    %v6650 = vpop.f32.mrb[0].mxu0
    %v6651 = vadd.f32 0.0, %v6650
    %v6652 = vpop.f32.mrb[0].mxu0
    %6653 = vdwg.mxu0
    %v6654 = vadd.f32 %v6575, %v6651
    %v6656 = vrot.slane %v6164, 2
    %v6658 = vmax.f32 %v6164, %v6656
    %v6659 = vmax.f32 %v6658, 0.0
    %s6660 = scalar_lea.vmem %s5, 192
    %v6661 = vld [vmem:[%s6660] sm:$0xff]
    %v6662 = vld [vmem:[%s6660 + $0x8] sm:$0xff]
    %v6663 = vld [vmem:[%s6660 + $0x10] sm:$0xff]
    %v6664 = vld [vmem:[%s6660 + $0x18] sm:$0xff]
    %v6666 = vsel %vm181, %v6659, 0
    %6668 = vmatprep.subr.mxu0 0.0
    %6669 = vmatpush1.msra.mxu0 %v6661
    %6670 = vmatprep.subr.mxu0 0.0
    %6671 = vmatpush1.msra.mxu0 %v6662
    %6672 = vmatprep.subr.mxu0 0.0
    %6673 = vmatpush1.msra.mxu0 %v6663
    %6674 = vmatprep.subr.mxu0 0.0
    %6675 = vmatpush1.msra.mxu0 %v6664
    %6676 = vmatprep.subr.mxu0 0.0
    %6677 = vmatpush1.msra.mxu0 0.0
    %6678 = vmatprep.subr.mxu0 0.0
    %6679 = vmatpush1.msra.mxu0 0.0
    %6680 = vmatprep.subr.mxu0 0.0
    %6681 = vmatpush1.msra.mxu0 0.0
    %6682 = vmatprep.subr.mxu0 0.0
    %6683 = vmatpush1.msra.mxu0 0.0
    %6684 = vmatprep.subr.mxu0 0.0
    %6685 = vmatpush1.msra.mxu0 0.0
    %6686 = vmatprep.subr.mxu0 0.0
    %6687 = vmatpush1.msra.mxu0 0.0
    %6688 = vmatprep.subr.mxu0 0.0
    %6689 = vmatpush1.msra.mxu0 0.0
    %6690 = vmatprep.subr.mxu0 0.0
    %6691 = vmatpush1.msra.mxu0 0.0
    %6692 = vmatprep.subr.mxu0 0.0
    %6693 = vmatpush1.msra.mxu0 0.0
    %6694 = vmatprep.subr.mxu0 0.0
    %6695 = vmatpush1.msra.mxu0 0.0
    %6696 = vmatprep.subr.mxu0 0.0
    %6697 = vmatpush1.msra.mxu0 0.0
    %6698 = vmatprep.subr.mxu0 0.0
    %6699 = vmatpush1.msra.mxu0 0.0
    %6700 = vmatprep.subr.mxu0 0.0
    %6701 = vmatpush1.msra.mxu0 0.0
    %6702 = vmatprep.subr.mxu0 0.0
    %6703 = vmatpush1.msra.mxu0 0.0
    %6704 = vmatprep.subr.mxu0 0.0
    %6705 = vmatpush1.msra.mxu0 0.0
    %6706 = vmatprep.subr.mxu0 0.0
    %6707 = vmatpush1.msra.mxu0 0.0
    %6708 = vmatprep.subr.mxu0 0.0
    %6709 = vmatpush1.msra.mxu0 0.0
    %6710 = vmatprep.subr.mxu0 0.0
    %6711 = vmatpush1.msra.mxu0 0.0
    %6712 = vmatprep.subr.mxu0 0.0
    %6713 = vmatpush1.msra.mxu0 0.0
    %6714 = vmatprep.subr.mxu0 0.0
    %6715 = vmatpush1.msra.mxu0 0.0
    %6716 = vmatprep.subr.mxu0 0.0
    %6717 = vmatpush1.msra.mxu0 0.0
    %6718 = vmatprep.subr.mxu0 0.0
    %6719 = vmatpush1.msra.mxu0 0.0
    %6720 = vmatprep.subr.mxu0 0.0
    %6721 = vmatpush1.msra.mxu0 0.0
    %6722 = vmatprep.subr.mxu0 0.0
    %6723 = vmatpush1.msra.mxu0 0.0
    %6724 = vmatprep.subr.mxu0 0.0
    %6725 = vmatpush1.msra.mxu0 0.0
    %6726 = vmatprep.subr.mxu0 0.0
    %6727 = vmatpush1.msra.mxu0 0.0
    %6728 = vmatprep.subr.mxu0 0.0
    %6729 = vmatpush1.msra.mxu0 0.0
    %6730 = vmatprep.subr.mxu0 0.0
    %6731 = vmatpush1.msra.mxu0 0.0
    %6732 = vmatprep.mubr.f32.mxu0 0.0
    %6733 = vmatmul.mubr.f32.gmra.mrb[0].mxu0 %v6666
    %v6734 = vpop.f32.mrb[0].mxu0
    %v6735 = vadd.f32 0.0, %v6734
    %v6736 = vpop.f32.mrb[0].mxu0
    %6737 = vdwg.mxu0
    %v6738 = vadd.f32 %v6654, %v6735
    %s6739 = scalar_lea.vmem %s5, 224
    %v6740 = vld [vmem:[%s6739] sm:$0xff]
    %v6741 = vld [vmem:[%s6739 + $0x8] sm:$0xff]
    %v6742 = vld [vmem:[%s6739 + $0x10] sm:$0xff]
    %v6743 = vld [vmem:[%s6739 + $0x18] sm:$0xff]
    %v6744 = vrot.slane %v6659, 4
    %v6745 = vsel %vm181, %v6744, 0
    %6747 = vmatprep.subr.mxu0 0.0
    %6748 = vmatpush1.msra.mxu0 %v6740
    %6749 = vmatprep.subr.mxu0 0.0
    %6750 = vmatpush1.msra.mxu0 %v6741
    %6751 = vmatprep.subr.mxu0 0.0
    %6752 = vmatpush1.msra.mxu0 %v6742
    %6753 = vmatprep.subr.mxu0 0.0
    %6754 = vmatpush1.msra.mxu0 %v6743
    %6755 = vmatprep.subr.mxu0 0.0
    %6756 = vmatpush1.msra.mxu0 0.0
    %6757 = vmatprep.subr.mxu0 0.0
    %6758 = vmatpush1.msra.mxu0 0.0
    %6759 = vmatprep.subr.mxu0 0.0
    %6760 = vmatpush1.msra.mxu0 0.0
    %6761 = vmatprep.subr.mxu0 0.0
    %6762 = vmatpush1.msra.mxu0 0.0
    %6763 = vmatprep.subr.mxu0 0.0
    %6764 = vmatpush1.msra.mxu0 0.0
    %6765 = vmatprep.subr.mxu0 0.0
    %6766 = vmatpush1.msra.mxu0 0.0
    %6767 = vmatprep.subr.mxu0 0.0
    %6768 = vmatpush1.msra.mxu0 0.0
    %6769 = vmatprep.subr.mxu0 0.0
    %6770 = vmatpush1.msra.mxu0 0.0
    %6771 = vmatprep.subr.mxu0 0.0
    %6772 = vmatpush1.msra.mxu0 0.0
    %6773 = vmatprep.subr.mxu0 0.0
    %6774 = vmatpush1.msra.mxu0 0.0
    %6775 = vmatprep.subr.mxu0 0.0
    %6776 = vmatpush1.msra.mxu0 0.0
    %6777 = vmatprep.subr.mxu0 0.0
    %6778 = vmatpush1.msra.mxu0 0.0
    %6779 = vmatprep.subr.mxu0 0.0
    %6780 = vmatpush1.msra.mxu0 0.0
    %6781 = vmatprep.subr.mxu0 0.0
    %6782 = vmatpush1.msra.mxu0 0.0
    %6783 = vmatprep.subr.mxu0 0.0
    %6784 = vmatpush1.msra.mxu0 0.0
    %6785 = vmatprep.subr.mxu0 0.0
    %6786 = vmatpush1.msra.mxu0 0.0
    %6787 = vmatprep.subr.mxu0 0.0
    %6788 = vmatpush1.msra.mxu0 0.0
    %6789 = vmatprep.subr.mxu0 0.0
    %6790 = vmatpush1.msra.mxu0 0.0
    %6791 = vmatprep.subr.mxu0 0.0
    %6792 = vmatpush1.msra.mxu0 0.0
    %6793 = vmatprep.subr.mxu0 0.0
    %6794 = vmatpush1.msra.mxu0 0.0
    %6795 = vmatprep.subr.mxu0 0.0
    %6796 = vmatpush1.msra.mxu0 0.0
    %6797 = vmatprep.subr.mxu0 0.0
    %6798 = vmatpush1.msra.mxu0 0.0
    %6799 = vmatprep.subr.mxu0 0.0
    %6800 = vmatpush1.msra.mxu0 0.0
    %6801 = vmatprep.subr.mxu0 0.0
    %6802 = vmatpush1.msra.mxu0 0.0
    %6803 = vmatprep.subr.mxu0 0.0
    %6804 = vmatpush1.msra.mxu0 0.0
    %6805 = vmatprep.subr.mxu0 0.0
    %6806 = vmatpush1.msra.mxu0 0.0
    %6807 = vmatprep.subr.mxu0 0.0
    %6808 = vmatpush1.msra.mxu0 0.0
    %6809 = vmatprep.subr.mxu0 0.0
    %6810 = vmatpush1.msra.mxu0 0.0
    %6811 = vmatprep.mubr.f32.mxu0 0.0
    %6812 = vmatmul.mubr.f32.gmra.mrb[0].mxu0 %v6745
    %v6813 = vpop.f32.mrb[0].mxu0
    %v6814 = vadd.f32 0.0, %v6813
    %v6815 = vpop.f32.mrb[0].mxu0
    %6816 = vdwg.mxu0
    %v6817 = vadd.f32 %v6738, %v6814
    %v6819 = vrot.slane %v6165, 2
    %v6821 = vmax.f32 %v6165, %v6819
    %v6822 = vmax.f32 %v6821, 0.0
    %s6823 = scalar_lea.vmem %s5, 256
    %v6824 = vld [vmem:[%s6823] sm:$0xff]
    %v6825 = vld [vmem:[%s6823 + $0x8] sm:$0xff]
    %v6826 = vld [vmem:[%s6823 + $0x10] sm:$0xff]
    %v6827 = vld [vmem:[%s6823 + $0x18] sm:$0xff]
    %v6829 = vsel %vm181, %v6822, 0
    %6831 = vmatprep.subr.mxu0 0.0
    %6832 = vmatpush1.msra.mxu0 %v6824
    %6833 = vmatprep.subr.mxu0 0.0
    %6834 = vmatpush1.msra.mxu0 %v6825
    %6835 = vmatprep.subr.mxu0 0.0
    %6836 = vmatpush1.msra.mxu0 %v6826
    %6837 = vmatprep.subr.mxu0 0.0
    %6838 = vmatpush1.msra.mxu0 %v6827
    %6839 = vmatprep.subr.mxu0 0.0
    %6840 = vmatpush1.msra.mxu0 0.0
    %6841 = vmatprep.subr.mxu0 0.0
    %6842 = vmatpush1.msra.mxu0 0.0
    %6843 = vmatprep.subr.mxu0 0.0
    %6844 = vmatpush1.msra.mxu0 0.0
    %6845 = vmatprep.subr.mxu0 0.0
    %6846 = vmatpush1.msra.mxu0 0.0
    %6847 = vmatprep.subr.mxu0 0.0
    %6848 = vmatpush1.msra.mxu0 0.0
    %6849 = vmatprep.subr.mxu0 0.0
    %6850 = vmatpush1.msra.mxu0 0.0
    %6851 = vmatprep.subr.mxu0 0.0
    %6852 = vmatpush1.msra.mxu0 0.0
    %6853 = vmatprep.subr.mxu0 0.0
    %6854 = vmatpush1.msra.mxu0 0.0
    %6855 = vmatprep.subr.mxu0 0.0
    %6856 = vmatpush1.msra.mxu0 0.0
    %6857 = vmatprep.subr.mxu0 0.0
    %6858 = vmatpush1.msra.mxu0 0.0
    %6859 = vmatprep.subr.mxu0 0.0
    %6860 = vmatpush1.msra.mxu0 0.0
    %6861 = vmatprep.subr.mxu0 0.0
    %6862 = vmatpush1.msra.mxu0 0.0
    %6863 = vmatprep.subr.mxu0 0.0
    %6864 = vmatpush1.msra.mxu0 0.0
    %6865 = vmatprep.subr.mxu0 0.0
    %6866 = vmatpush1.msra.mxu0 0.0
    %6867 = vmatprep.subr.mxu0 0.0
    %6868 = vmatpush1.msra.mxu0 0.0
    %6869 = vmatprep.subr.mxu0 0.0
    %6870 = vmatpush1.msra.mxu0 0.0
    %6871 = vmatprep.subr.mxu0 0.0
    %6872 = vmatpush1.msra.mxu0 0.0
    %6873 = vmatprep.subr.mxu0 0.0
    %6874 = vmatpush1.msra.mxu0 0.0
    %6875 = vmatprep.subr.mxu0 0.0
    %6876 = vmatpush1.msra.mxu0 0.0
    %6877 = vmatprep.subr.mxu0 0.0
    %6878 = vmatpush1.msra.mxu0 0.0
    %6879 = vmatprep.subr.mxu0 0.0
    %6880 = vmatpush1.msra.mxu0 0.0
    %6881 = vmatprep.subr.mxu0 0.0
    %6882 = vmatpush1.msra.mxu0 0.0
    %6883 = vmatprep.subr.mxu0 0.0
    %6884 = vmatpush1.msra.mxu0 0.0
    %6885 = vmatprep.subr.mxu0 0.0
    %6886 = vmatpush1.msra.mxu0 0.0
    %6887 = vmatprep.subr.mxu0 0.0
    %6888 = vmatpush1.msra.mxu0 0.0
    %6889 = vmatprep.subr.mxu0 0.0
    %6890 = vmatpush1.msra.mxu0 0.0
    %6891 = vmatprep.subr.mxu0 0.0
    %6892 = vmatpush1.msra.mxu0 0.0
    %6893 = vmatprep.subr.mxu0 0.0
    %6894 = vmatpush1.msra.mxu0 0.0
    %6895 = vmatprep.mubr.f32.mxu0 0.0
    %6896 = vmatmul.mubr.f32.gmra.mrb[0].mxu0 %v6829
    %v6897 = vpop.f32.mrb[0].mxu0
    %v6898 = vadd.f32 0.0, %v6897
    %v6899 = vpop.f32.mrb[0].mxu0
    %6900 = vdwg.mxu0
    %v6901 = vadd.f32 %v6817, %v6898
    %s6902 = scalar_lea.vmem %s5, 288
    %v6903 = vld [vmem:[%s6902] sm:$0xff]
    %v6904 = vld [vmem:[%s6902 + $0x8] sm:$0xff]
    %v6905 = vld [vmem:[%s6902 + $0x10] sm:$0xff]
    %v6906 = vld [vmem:[%s6902 + $0x18] sm:$0xff]
    %v6907 = vrot.slane %v6822, 4
    %v6908 = vsel %vm181, %v6907, 0
    %6910 = vmatprep.subr.mxu0 0.0
    %6911 = vmatpush1.msra.mxu0 %v6903
    %6912 = vmatprep.subr.mxu0 0.0
    %6913 = vmatpush1.msra.mxu0 %v6904
    %6914 = vmatprep.subr.mxu0 0.0
    %6915 = vmatpush1.msra.mxu0 %v6905
    %6916 = vmatprep.subr.mxu0 0.0
    %6917 = vmatpush1.msra.mxu0 %v6906
    %6918 = vmatprep.subr.mxu0 0.0
    %6919 = vmatpush1.msra.mxu0 0.0
    %6920 = vmatprep.subr.mxu0 0.0
    %6921 = vmatpush1.msra.mxu0 0.0
    %6922 = vmatprep.subr.mxu0 0.0
    %6923 = vmatpush1.msra.mxu0 0.0
    %6924 = vmatprep.subr.mxu0 0.0
    %6925 = vmatpush1.msra.mxu0 0.0
    %6926 = vmatprep.subr.mxu0 0.0
    %6927 = vmatpush1.msra.mxu0 0.0
    %6928 = vmatprep.subr.mxu0 0.0
    %6929 = vmatpush1.msra.mxu0 0.0
    %6930 = vmatprep.subr.mxu0 0.0
    %6931 = vmatpush1.msra.mxu0 0.0
    %6932 = vmatprep.subr.mxu0 0.0
    %6933 = vmatpush1.msra.mxu0 0.0
    %6934 = vmatprep.subr.mxu0 0.0
    %6935 = vmatpush1.msra.mxu0 0.0
    %6936 = vmatprep.subr.mxu0 0.0
    %6937 = vmatpush1.msra.mxu0 0.0
    %6938 = vmatprep.subr.mxu0 0.0
    %6939 = vmatpush1.msra.mxu0 0.0
    %6940 = vmatprep.subr.mxu0 0.0
    %6941 = vmatpush1.msra.mxu0 0.0
    %6942 = vmatprep.subr.mxu0 0.0
    %6943 = vmatpush1.msra.mxu0 0.0
    %6944 = vmatprep.subr.mxu0 0.0
    %6945 = vmatpush1.msra.mxu0 0.0
    %6946 = vmatprep.subr.mxu0 0.0
    %6947 = vmatpush1.msra.mxu0 0.0
    %6948 = vmatprep.subr.mxu0 0.0
    %6949 = vmatpush1.msra.mxu0 0.0
    %6950 = vmatprep.subr.mxu0 0.0
    %6951 = vmatpush1.msra.mxu0 0.0
    %6952 = vmatprep.subr.mxu0 0.0
    %6953 = vmatpush1.msra.mxu0 0.0
    %6954 = vmatprep.subr.mxu0 0.0
    %6955 = vmatpush1.msra.mxu0 0.0
    %6956 = vmatprep.subr.mxu0 0.0
    %6957 = vmatpush1.msra.mxu0 0.0
    %6958 = vmatprep.subr.mxu0 0.0
    %6959 = vmatpush1.msra.mxu0 0.0
    %6960 = vmatprep.subr.mxu0 0.0
    %6961 = vmatpush1.msra.mxu0 0.0
    %6962 = vmatprep.subr.mxu0 0.0
    %6963 = vmatpush1.msra.mxu0 0.0
    %6964 = vmatprep.subr.mxu0 0.0
    %6965 = vmatpush1.msra.mxu0 0.0
    %6966 = vmatprep.subr.mxu0 0.0
    %6967 = vmatpush1.msra.mxu0 0.0
    %6968 = vmatprep.subr.mxu0 0.0
    %6969 = vmatpush1.msra.mxu0 0.0
    %6970 = vmatprep.subr.mxu0 0.0
    %6971 = vmatpush1.msra.mxu0 0.0
    %6972 = vmatprep.subr.mxu0 0.0
    %6973 = vmatpush1.msra.mxu0 0.0
    %6974 = vmatprep.mubr.f32.mxu0 0.0
    %6975 = vmatmul.mubr.f32.gmra.mrb[0].mxu0 %v6908
    %v6976 = vpop.f32.mrb[0].mxu0
    %v6977 = vadd.f32 0.0, %v6976
    %v6978 = vpop.f32.mrb[0].mxu0
    %6979 = vdwg.mxu0
    %v6980 = vadd.f32 %v6901, %v6977
    %v6982 = vrot.slane %v6166, 2
    %v6984 = vmax.f32 %v6166, %v6982
    %v6985 = vmax.f32 %v6984, 0.0
    %s6986 = scalar_lea.vmem %s5, 320
    %v6987 = vld [vmem:[%s6986] sm:$0xff]
    %v6988 = vld [vmem:[%s6986 + $0x8] sm:$0xff]
    %v6989 = vld [vmem:[%s6986 + $0x10] sm:$0xff]
    %v6990 = vld [vmem:[%s6986 + $0x18] sm:$0xff]
    %v6992 = vsel %vm181, %v6985, 0
    %6994 = vmatprep.subr.mxu0 0.0
    %6995 = vmatpush1.msra.mxu0 %v6987
    %6996 = vmatprep.subr.mxu0 0.0
    %6997 = vmatpush1.msra.mxu0 %v6988
    %6998 = vmatprep.subr.mxu0 0.0
    %6999 = vmatpush1.msra.mxu0 %v6989
    %7000 = vmatprep.subr.mxu0 0.0
    %7001 = vmatpush1.msra.mxu0 %v6990
    %7002 = vmatprep.subr.mxu0 0.0
    %7003 = vmatpush1.msra.mxu0 0.0
    %7004 = vmatprep.subr.mxu0 0.0
    %7005 = vmatpush1.msra.mxu0 0.0
    %7006 = vmatprep.subr.mxu0 0.0
    %7007 = vmatpush1.msra.mxu0 0.0
    %7008 = vmatprep.subr.mxu0 0.0
    %7009 = vmatpush1.msra.mxu0 0.0
    %7010 = vmatprep.subr.mxu0 0.0
    %7011 = vmatpush1.msra.mxu0 0.0
    %7012 = vmatprep.subr.mxu0 0.0
    %7013 = vmatpush1.msra.mxu0 0.0
    %7014 = vmatprep.subr.mxu0 0.0
    %7015 = vmatpush1.msra.mxu0 0.0
    %7016 = vmatprep.subr.mxu0 0.0
    %7017 = vmatpush1.msra.mxu0 0.0
    %7018 = vmatprep.subr.mxu0 0.0
    %7019 = vmatpush1.msra.mxu0 0.0
    %7020 = vmatprep.subr.mxu0 0.0
    %7021 = vmatpush1.msra.mxu0 0.0
    %7022 = vmatprep.subr.mxu0 0.0
    %7023 = vmatpush1.msra.mxu0 0.0
    %7024 = vmatprep.subr.mxu0 0.0
    %7025 = vmatpush1.msra.mxu0 0.0
    %7026 = vmatprep.subr.mxu0 0.0
    %7027 = vmatpush1.msra.mxu0 0.0
    %7028 = vmatprep.subr.mxu0 0.0
    %7029 = vmatpush1.msra.mxu0 0.0
    %7030 = vmatprep.subr.mxu0 0.0
    %7031 = vmatpush1.msra.mxu0 0.0
    %7032 = vmatprep.subr.mxu0 0.0
    %7033 = vmatpush1.msra.mxu0 0.0
    %7034 = vmatprep.subr.mxu0 0.0
    %7035 = vmatpush1.msra.mxu0 0.0
    %7036 = vmatprep.subr.mxu0 0.0
    %7037 = vmatpush1.msra.mxu0 0.0
    %7038 = vmatprep.subr.mxu0 0.0
    %7039 = vmatpush1.msra.mxu0 0.0
    %7040 = vmatprep.subr.mxu0 0.0
    %7041 = vmatpush1.msra.mxu0 0.0
    %7042 = vmatprep.subr.mxu0 0.0
    %7043 = vmatpush1.msra.mxu0 0.0
    %7044 = vmatprep.subr.mxu0 0.0
    %7045 = vmatpush1.msra.mxu0 0.0
    %7046 = vmatprep.subr.mxu0 0.0
    %7047 = vmatpush1.msra.mxu0 0.0
    %7048 = vmatprep.subr.mxu0 0.0
    %7049 = vmatpush1.msra.mxu0 0.0
    %7050 = vmatprep.subr.mxu0 0.0
    %7051 = vmatpush1.msra.mxu0 0.0
    %7052 = vmatprep.subr.mxu0 0.0
    %7053 = vmatpush1.msra.mxu0 0.0
    %7054 = vmatprep.subr.mxu0 0.0
    %7055 = vmatpush1.msra.mxu0 0.0
    %7056 = vmatprep.subr.mxu0 0.0
    %7057 = vmatpush1.msra.mxu0 0.0
    %7058 = vmatprep.mubr.f32.mxu0 0.0
    %7059 = vmatmul.mubr.f32.gmra.mrb[0].mxu0 %v6992
    %v7060 = vpop.f32.mrb[0].mxu0
    %v7061 = vadd.f32 0.0, %v7060
    %v7062 = vpop.f32.mrb[0].mxu0
    %7063 = vdwg.mxu0
    %v7064 = vadd.f32 %v6980, %v7061
    %s7065 = scalar_lea.vmem %s5, 352
    %v7066 = vld [vmem:[%s7065] sm:$0xff]
    %v7067 = vld [vmem:[%s7065 + $0x8] sm:$0xff]
    %v7068 = vld [vmem:[%s7065 + $0x10] sm:$0xff]
    %v7069 = vld [vmem:[%s7065 + $0x18] sm:$0xff]
    %v7070 = vrot.slane %v6985, 4
    %v7071 = vsel %vm181, %v7070, 0
    %7073 = vmatprep.subr.mxu0 0.0
    %7074 = vmatpush1.msra.mxu0 %v7066
    %7075 = vmatprep.subr.mxu0 0.0
    %7076 = vmatpush1.msra.mxu0 %v7067
    %7077 = vmatprep.subr.mxu0 0.0
    %7078 = vmatpush1.msra.mxu0 %v7068
    %7079 = vmatprep.subr.mxu0 0.0
    %7080 = vmatpush1.msra.mxu0 %v7069
    %7081 = vmatprep.subr.mxu0 0.0
    %7082 = vmatpush1.msra.mxu0 0.0
    %7083 = vmatprep.subr.mxu0 0.0
    %7084 = vmatpush1.msra.mxu0 0.0
    %7085 = vmatprep.subr.mxu0 0.0
    %7086 = vmatpush1.msra.mxu0 0.0
    %7087 = vmatprep.subr.mxu0 0.0
    %7088 = vmatpush1.msra.mxu0 0.0
    %7089 = vmatprep.subr.mxu0 0.0
    %7090 = vmatpush1.msra.mxu0 0.0
    %7091 = vmatprep.subr.mxu0 0.0
    %7092 = vmatpush1.msra.mxu0 0.0
    %7093 = vmatprep.subr.mxu0 0.0
    %7094 = vmatpush1.msra.mxu0 0.0
    %7095 = vmatprep.subr.mxu0 0.0
    %7096 = vmatpush1.msra.mxu0 0.0
    %7097 = vmatprep.subr.mxu0 0.0
    %7098 = vmatpush1.msra.mxu0 0.0
    %7099 = vmatprep.subr.mxu0 0.0
    %7100 = vmatpush1.msra.mxu0 0.0
    %7101 = vmatprep.subr.mxu0 0.0
    %7102 = vmatpush1.msra.mxu0 0.0
    %7103 = vmatprep.subr.mxu0 0.0
    %7104 = vmatpush1.msra.mxu0 0.0
    %7105 = vmatprep.subr.mxu0 0.0
    %7106 = vmatpush1.msra.mxu0 0.0
    %7107 = vmatprep.subr.mxu0 0.0
    %7108 = vmatpush1.msra.mxu0 0.0
    %7109 = vmatprep.subr.mxu0 0.0
    %7110 = vmatpush1.msra.mxu0 0.0
    %7111 = vmatprep.subr.mxu0 0.0
    %7112 = vmatpush1.msra.mxu0 0.0
    %7113 = vmatprep.subr.mxu0 0.0
    %7114 = vmatpush1.msra.mxu0 0.0
    %7115 = vmatprep.subr.mxu0 0.0
    %7116 = vmatpush1.msra.mxu0 0.0
    %7117 = vmatprep.subr.mxu0 0.0
    %7118 = vmatpush1.msra.mxu0 0.0
    %7119 = vmatprep.subr.mxu0 0.0
    %7120 = vmatpush1.msra.mxu0 0.0
    %7121 = vmatprep.subr.mxu0 0.0
    %7122 = vmatpush1.msra.mxu0 0.0
    %7123 = vmatprep.subr.mxu0 0.0
    %7124 = vmatpush1.msra.mxu0 0.0
    %7125 = vmatprep.subr.mxu0 0.0
    %7126 = vmatpush1.msra.mxu0 0.0
    %7127 = vmatprep.subr.mxu0 0.0
    %7128 = vmatpush1.msra.mxu0 0.0
    %7129 = vmatprep.subr.mxu0 0.0
    %7130 = vmatpush1.msra.mxu0 0.0
    %7131 = vmatprep.subr.mxu0 0.0
    %7132 = vmatpush1.msra.mxu0 0.0
    %7133 = vmatprep.subr.mxu0 0.0
    %7134 = vmatpush1.msra.mxu0 0.0
    %7135 = vmatprep.subr.mxu0 0.0
    %7136 = vmatpush1.msra.mxu0 0.0
    %7137 = vmatprep.mubr.f32.mxu0 0.0
    %7138 = vmatmul.mubr.f32.gmra.mrb[0].mxu0 %v7071
    %v7139 = vpop.f32.mrb[0].mxu0
    %v7140 = vadd.f32 0.0, %v7139
    %v7141 = vpop.f32.mrb[0].mxu0
    %7142 = vdwg.mxu0
    %v7143 = vadd.f32 %v7064, %v7140
    %v7145 = vrot.slane %v6167, 2
    %v7147 = vmax.f32 %v6167, %v7145
    %v7148 = vmax.f32 %v7147, 0.0
    %s7149 = scalar_lea.vmem %s5, 384
    %v7150 = vld [vmem:[%s7149] sm:$0xff]
    %v7151 = vld [vmem:[%s7149 + $0x8] sm:$0xff]
    %v7152 = vld [vmem:[%s7149 + $0x10] sm:$0xff]
    %v7153 = vld [vmem:[%s7149 + $0x18] sm:$0xff]
    %v7155 = vsel %vm181, %v7148, 0
    %7157 = vmatprep.subr.mxu0 0.0
    %7158 = vmatpush1.msra.mxu0 %v7150
    %7159 = vmatprep.subr.mxu0 0.0
    %7160 = vmatpush1.msra.mxu0 %v7151
    %7161 = vmatprep.subr.mxu0 0.0
    %7162 = vmatpush1.msra.mxu0 %v7152
    %7163 = vmatprep.subr.mxu0 0.0
    %7164 = vmatpush1.msra.mxu0 %v7153
    %7165 = vmatprep.subr.mxu0 0.0
    %7166 = vmatpush1.msra.mxu0 0.0
    %7167 = vmatprep.subr.mxu0 0.0
    %7168 = vmatpush1.msra.mxu0 0.0
    %7169 = vmatprep.subr.mxu0 0.0
    %7170 = vmatpush1.msra.mxu0 0.0
    %7171 = vmatprep.subr.mxu0 0.0
    %7172 = vmatpush1.msra.mxu0 0.0
    %7173 = vmatprep.subr.mxu0 0.0
    %7174 = vmatpush1.msra.mxu0 0.0
    %7175 = vmatprep.subr.mxu0 0.0
    %7176 = vmatpush1.msra.mxu0 0.0
    %7177 = vmatprep.subr.mxu0 0.0
    %7178 = vmatpush1.msra.mxu0 0.0
    %7179 = vmatprep.subr.mxu0 0.0
    %7180 = vmatpush1.msra.mxu0 0.0
    %7181 = vmatprep.subr.mxu0 0.0
    %7182 = vmatpush1.msra.mxu0 0.0
    %7183 = vmatprep.subr.mxu0 0.0
    %7184 = vmatpush1.msra.mxu0 0.0
    %7185 = vmatprep.subr.mxu0 0.0
    %7186 = vmatpush1.msra.mxu0 0.0
    %7187 = vmatprep.subr.mxu0 0.0
    %7188 = vmatpush1.msra.mxu0 0.0
    %7189 = vmatprep.subr.mxu0 0.0
    %7190 = vmatpush1.msra.mxu0 0.0
    %7191 = vmatprep.subr.mxu0 0.0
    %7192 = vmatpush1.msra.mxu0 0.0
    %7193 = vmatprep.subr.mxu0 0.0
    %7194 = vmatpush1.msra.mxu0 0.0
    %7195 = vmatprep.subr.mxu0 0.0
    %7196 = vmatpush1.msra.mxu0 0.0
    %7197 = vmatprep.subr.mxu0 0.0
    %7198 = vmatpush1.msra.mxu0 0.0
    %7199 = vmatprep.subr.mxu0 0.0
    %7200 = vmatpush1.msra.mxu0 0.0
    %7201 = vmatprep.subr.mxu0 0.0
    %7202 = vmatpush1.msra.mxu0 0.0
    %7203 = vmatprep.subr.mxu0 0.0
    %7204 = vmatpush1.msra.mxu0 0.0
    %7205 = vmatprep.subr.mxu0 0.0
    %7206 = vmatpush1.msra.mxu0 0.0
    %7207 = vmatprep.subr.mxu0 0.0
    %7208 = vmatpush1.msra.mxu0 0.0
    %7209 = vmatprep.subr.mxu0 0.0
    %7210 = vmatpush1.msra.mxu0 0.0
    %7211 = vmatprep.subr.mxu0 0.0
    %7212 = vmatpush1.msra.mxu0 0.0
    %7213 = vmatprep.subr.mxu0 0.0
    %7214 = vmatpush1.msra.mxu0 0.0
    %7215 = vmatprep.subr.mxu0 0.0
    %7216 = vmatpush1.msra.mxu0 0.0
    %7217 = vmatprep.subr.mxu0 0.0
    %7218 = vmatpush1.msra.mxu0 0.0
    %7219 = vmatprep.subr.mxu0 0.0
    %7220 = vmatpush1.msra.mxu0 0.0
    %7221 = vmatprep.mubr.f32.mxu0 0.0
    %7222 = vmatmul.mubr.f32.gmra.mrb[0].mxu0 %v7155
    %v7223 = vpop.f32.mrb[0].mxu0
    %v7224 = vadd.f32 0.0, %v7223
    %v7225 = vpop.f32.mrb[0].mxu0
    %7226 = vdwg.mxu0
    %v7227 = vadd.f32 %v7143, %v7224
    %s7228 = scalar_lea.vmem %s5, 416
    %v7229 = vld [vmem:[%s7228] sm:$0xff]
    %v7230 = vld [vmem:[%s7228 + $0x8] sm:$0xff]
    %v7231 = vld [vmem:[%s7228 + $0x10] sm:$0xff]
    %v7232 = vld [vmem:[%s7228 + $0x18] sm:$0xff]
    %v7233 = vrot.slane %v7148, 4
    %v7234 = vsel %vm181, %v7233, 0
    %7236 = vmatprep.subr.mxu0 0.0
    %7237 = vmatpush1.msra.mxu0 %v7229
    %7238 = vmatprep.subr.mxu0 0.0
    %7239 = vmatpush1.msra.mxu0 %v7230
    %7240 = vmatprep.subr.mxu0 0.0
    %7241 = vmatpush1.msra.mxu0 %v7231
    %7242 = vmatprep.subr.mxu0 0.0
    %7243 = vmatpush1.msra.mxu0 %v7232
    %7244 = vmatprep.subr.mxu0 0.0
    %7245 = vmatpush1.msra.mxu0 0.0
    %7246 = vmatprep.subr.mxu0 0.0
    %7247 = vmatpush1.msra.mxu0 0.0
    %7248 = vmatprep.subr.mxu0 0.0
    %7249 = vmatpush1.msra.mxu0 0.0
    %7250 = vmatprep.subr.mxu0 0.0
    %7251 = vmatpush1.msra.mxu0 0.0
    %7252 = vmatprep.subr.mxu0 0.0
    %7253 = vmatpush1.msra.mxu0 0.0
    %7254 = vmatprep.subr.mxu0 0.0
    %7255 = vmatpush1.msra.mxu0 0.0
    %7256 = vmatprep.subr.mxu0 0.0
    %7257 = vmatpush1.msra.mxu0 0.0
    %7258 = vmatprep.subr.mxu0 0.0
    %7259 = vmatpush1.msra.mxu0 0.0
    %7260 = vmatprep.subr.mxu0 0.0
    %7261 = vmatpush1.msra.mxu0 0.0
    %7262 = vmatprep.subr.mxu0 0.0
    %7263 = vmatpush1.msra.mxu0 0.0
    %7264 = vmatprep.subr.mxu0 0.0
    %7265 = vmatpush1.msra.mxu0 0.0
    %7266 = vmatprep.subr.mxu0 0.0
    %7267 = vmatpush1.msra.mxu0 0.0
    %7268 = vmatprep.subr.mxu0 0.0
    %7269 = vmatpush1.msra.mxu0 0.0
    %7270 = vmatprep.subr.mxu0 0.0
    %7271 = vmatpush1.msra.mxu0 0.0
    %7272 = vmatprep.subr.mxu0 0.0
    %7273 = vmatpush1.msra.mxu0 0.0
    %7274 = vmatprep.subr.mxu0 0.0
    %7275 = vmatpush1.msra.mxu0 0.0
    %7276 = vmatprep.subr.mxu0 0.0
    %7277 = vmatpush1.msra.mxu0 0.0
    %7278 = vmatprep.subr.mxu0 0.0
    %7279 = vmatpush1.msra.mxu0 0.0
    %7280 = vmatprep.subr.mxu0 0.0
    %7281 = vmatpush1.msra.mxu0 0.0
    %7282 = vmatprep.subr.mxu0 0.0
    %7283 = vmatpush1.msra.mxu0 0.0
    %7284 = vmatprep.subr.mxu0 0.0
    %7285 = vmatpush1.msra.mxu0 0.0
    %7286 = vmatprep.subr.mxu0 0.0
    %7287 = vmatpush1.msra.mxu0 0.0
    %7288 = vmatprep.subr.mxu0 0.0
    %7289 = vmatpush1.msra.mxu0 0.0
    %7290 = vmatprep.subr.mxu0 0.0
    %7291 = vmatpush1.msra.mxu0 0.0
    %7292 = vmatprep.subr.mxu0 0.0
    %7293 = vmatpush1.msra.mxu0 0.0
    %7294 = vmatprep.subr.mxu0 0.0
    %7295 = vmatpush1.msra.mxu0 0.0
    %7296 = vmatprep.subr.mxu0 0.0
    %7297 = vmatpush1.msra.mxu0 0.0
    %7298 = vmatprep.subr.mxu0 0.0
    %7299 = vmatpush1.msra.mxu0 0.0
    %7300 = vmatprep.mubr.f32.mxu0 0.0
    %7301 = vmatmul.mubr.f32.gmra.mrb[0].mxu0 %v7234
    %v7302 = vpop.f32.mrb[0].mxu0
    %v7303 = vadd.f32 0.0, %v7302
    %v7304 = vpop.f32.mrb[0].mxu0
    %7305 = vdwg.mxu0
    %v7306 = vadd.f32 %v7227, %v7303
    %v7308 = vrot.slane %v6168, 2
    %v7310 = vmax.f32 %v6168, %v7308
    %v7311 = vmax.f32 %v7310, 0.0
    %s7312 = scalar_lea.vmem %s5, 448
    %v7313 = vld [vmem:[%s7312] sm:$0xff]
    %v7314 = vld [vmem:[%s7312 + $0x8] sm:$0xff]
    %v7315 = vld [vmem:[%s7312 + $0x10] sm:$0xff]
    %v7316 = vld [vmem:[%s7312 + $0x18] sm:$0xff]
    %v7318 = vsel %vm181, %v7311, 0
    %7320 = vmatprep.subr.mxu0 0.0
    %7321 = vmatpush1.msra.mxu0 %v7313
    %7322 = vmatprep.subr.mxu0 0.0
    %7323 = vmatpush1.msra.mxu0 %v7314
    %7324 = vmatprep.subr.mxu0 0.0
    %7325 = vmatpush1.msra.mxu0 %v7315
    %7326 = vmatprep.subr.mxu0 0.0
    %7327 = vmatpush1.msra.mxu0 %v7316
    %7328 = vmatprep.subr.mxu0 0.0
    %7329 = vmatpush1.msra.mxu0 0.0
    %7330 = vmatprep.subr.mxu0 0.0
    %7331 = vmatpush1.msra.mxu0 0.0
    %7332 = vmatprep.subr.mxu0 0.0
    %7333 = vmatpush1.msra.mxu0 0.0
    %7334 = vmatprep.subr.mxu0 0.0
    %7335 = vmatpush1.msra.mxu0 0.0
    %7336 = vmatprep.subr.mxu0 0.0
    %7337 = vmatpush1.msra.mxu0 0.0
    %7338 = vmatprep.subr.mxu0 0.0
    %7339 = vmatpush1.msra.mxu0 0.0
    %7340 = vmatprep.subr.mxu0 0.0
    %7341 = vmatpush1.msra.mxu0 0.0
    %7342 = vmatprep.subr.mxu0 0.0
    %7343 = vmatpush1.msra.mxu0 0.0
    %7344 = vmatprep.subr.mxu0 0.0
    %7345 = vmatpush1.msra.mxu0 0.0
    %7346 = vmatprep.subr.mxu0 0.0
    %7347 = vmatpush1.msra.mxu0 0.0
    %7348 = vmatprep.subr.mxu0 0.0
    %7349 = vmatpush1.msra.mxu0 0.0
    %7350 = vmatprep.subr.mxu0 0.0
    %7351 = vmatpush1.msra.mxu0 0.0
    %7352 = vmatprep.subr.mxu0 0.0
    %7353 = vmatpush1.msra.mxu0 0.0
    %7354 = vmatprep.subr.mxu0 0.0
    %7355 = vmatpush1.msra.mxu0 0.0
    %7356 = vmatprep.subr.mxu0 0.0
    %7357 = vmatpush1.msra.mxu0 0.0
    %7358 = vmatprep.subr.mxu0 0.0
    %7359 = vmatpush1.msra.mxu0 0.0
    %7360 = vmatprep.subr.mxu0 0.0
    %7361 = vmatpush1.msra.mxu0 0.0
    %7362 = vmatprep.subr.mxu0 0.0
    %7363 = vmatpush1.msra.mxu0 0.0
    %7364 = vmatprep.subr.mxu0 0.0
    %7365 = vmatpush1.msra.mxu0 0.0
    %7366 = vmatprep.subr.mxu0 0.0
    %7367 = vmatpush1.msra.mxu0 0.0
    %7368 = vmatprep.subr.mxu0 0.0
    %7369 = vmatpush1.msra.mxu0 0.0
    %7370 = vmatprep.subr.mxu0 0.0
    %7371 = vmatpush1.msra.mxu0 0.0
    %7372 = vmatprep.subr.mxu0 0.0
    %7373 = vmatpush1.msra.mxu0 0.0
    %7374 = vmatprep.subr.mxu0 0.0
    %7375 = vmatpush1.msra.mxu0 0.0
    %7376 = vmatprep.subr.mxu0 0.0
    %7377 = vmatpush1.msra.mxu0 0.0
    %7378 = vmatprep.subr.mxu0 0.0
    %7379 = vmatpush1.msra.mxu0 0.0
    %7380 = vmatprep.subr.mxu0 0.0
    %7381 = vmatpush1.msra.mxu0 0.0
    %7382 = vmatprep.subr.mxu0 0.0
    %7383 = vmatpush1.msra.mxu0 0.0
    %7384 = vmatprep.mubr.f32.mxu0 0.0
    %7385 = vmatmul.mubr.f32.gmra.mrb[0].mxu0 %v7318
    %v7386 = vpop.f32.mrb[0].mxu0
    %v7387 = vadd.f32 0.0, %v7386
    %v7388 = vpop.f32.mrb[0].mxu0
    %7389 = vdwg.mxu0
    %v7390 = vadd.f32 %v7306, %v7387
    %s7391 = scalar_lea.vmem %s5, 480
    %v7392 = vld [vmem:[%s7391] sm:$0xff]
    %v7393 = vld [vmem:[%s7391 + $0x8] sm:$0xff]
    %v7394 = vld [vmem:[%s7391 + $0x10] sm:$0xff]
    %v7395 = vld [vmem:[%s7391 + $0x18] sm:$0xff]
    %v7396 = vrot.slane %v7311, 4
    %v7397 = vsel %vm181, %v7396, 0
    %7399 = vmatprep.subr.mxu0 0.0
    %7400 = vmatpush1.msra.mxu0 %v7392
    %7401 = vmatprep.subr.mxu0 0.0
    %7402 = vmatpush1.msra.mxu0 %v7393
    %7403 = vmatprep.subr.mxu0 0.0
    %7404 = vmatpush1.msra.mxu0 %v7394
    %7405 = vmatprep.subr.mxu0 0.0
    %7406 = vmatpush1.msra.mxu0 %v7395
    %7407 = vmatprep.subr.mxu0 0.0
    %7408 = vmatpush1.msra.mxu0 0.0
    %7409 = vmatprep.subr.mxu0 0.0
    %7410 = vmatpush1.msra.mxu0 0.0
    %7411 = vmatprep.subr.mxu0 0.0
    %7412 = vmatpush1.msra.mxu0 0.0
    %7413 = vmatprep.subr.mxu0 0.0
    %7414 = vmatpush1.msra.mxu0 0.0
    %7415 = vmatprep.subr.mxu0 0.0
    %7416 = vmatpush1.msra.mxu0 0.0
    %7417 = vmatprep.subr.mxu0 0.0
    %7418 = vmatpush1.msra.mxu0 0.0
    %7419 = vmatprep.subr.mxu0 0.0
    %7420 = vmatpush1.msra.mxu0 0.0
    %7421 = vmatprep.subr.mxu0 0.0
    %7422 = vmatpush1.msra.mxu0 0.0
    %7423 = vmatprep.subr.mxu0 0.0
    %7424 = vmatpush1.msra.mxu0 0.0
    %7425 = vmatprep.subr.mxu0 0.0
    %7426 = vmatpush1.msra.mxu0 0.0
    %7427 = vmatprep.subr.mxu0 0.0
    %7428 = vmatpush1.msra.mxu0 0.0
    %7429 = vmatprep.subr.mxu0 0.0
    %7430 = vmatpush1.msra.mxu0 0.0
    %7431 = vmatprep.subr.mxu0 0.0
    %7432 = vmatpush1.msra.mxu0 0.0
    %7433 = vmatprep.subr.mxu0 0.0
    %7434 = vmatpush1.msra.mxu0 0.0
    %7435 = vmatprep.subr.mxu0 0.0
    %7436 = vmatpush1.msra.mxu0 0.0
    %7437 = vmatprep.subr.mxu0 0.0
    %7438 = vmatpush1.msra.mxu0 0.0
    %7439 = vmatprep.subr.mxu0 0.0
    %7440 = vmatpush1.msra.mxu0 0.0
    %7441 = vmatprep.subr.mxu0 0.0
    %7442 = vmatpush1.msra.mxu0 0.0
    %7443 = vmatprep.subr.mxu0 0.0
    %7444 = vmatpush1.msra.mxu0 0.0
    %7445 = vmatprep.subr.mxu0 0.0
    %7446 = vmatpush1.msra.mxu0 0.0
    %7447 = vmatprep.subr.mxu0 0.0
    %7448 = vmatpush1.msra.mxu0 0.0
    %7449 = vmatprep.subr.mxu0 0.0
    %7450 = vmatpush1.msra.mxu0 0.0
    %7451 = vmatprep.subr.mxu0 0.0
    %7452 = vmatpush1.msra.mxu0 0.0
    %7453 = vmatprep.subr.mxu0 0.0
    %7454 = vmatpush1.msra.mxu0 0.0
    %7455 = vmatprep.subr.mxu0 0.0
    %7456 = vmatpush1.msra.mxu0 0.0
    %7457 = vmatprep.subr.mxu0 0.0
    %7458 = vmatpush1.msra.mxu0 0.0
    %7459 = vmatprep.subr.mxu0 0.0
    %7460 = vmatpush1.msra.mxu0 0.0
    %7461 = vmatprep.subr.mxu0 0.0
    %7462 = vmatpush1.msra.mxu0 0.0
    %7463 = vmatprep.mubr.f32.mxu0 0.0
    %7464 = vmatmul.mubr.f32.gmra.mrb[0].mxu0 %v7397
    %v7465 = vpop.f32.mrb[0].mxu0
    %v7466 = vadd.f32 0.0, %v7465
    %v7467 = vpop.f32.mrb[0].mxu0
    %7468 = vdwg.mxu0
    %v7469 = vadd.f32 %v7390, %v7466
    %v7470 = vld [vmem:[%s6] sm:$0x1]
    %v7472 = vlaneseq
    %v7473 = vshrl.u32 %v7472, 7
    %v7474 = vsub.s32 0, %v7473
    %v7475 = vrot.slane %v7470, %v7474
    %v7477 = vadd.f32 %v7469, %v7475
    %v7478 = vmax.f32 %v7477, 0.0
    %v7479 = vld [vmem:[%s7] sm:$0xff]
    %v7480 = vld [vmem:[%s7 + $0x8] sm:$0xff]
    %v7481 = vld [vmem:[%s7 + $0x10] sm:$0xff]
    %v7482 = vld [vmem:[%s7 + $0x18] sm:$0xff]
    %v7483 = vld [vmem:[%s7 + $0x20] sm:$0xff]
    %v7484 = vld [vmem:[%s7 + $0x28] sm:$0xff]
    %v7485 = vld [vmem:[%s7 + $0x30] sm:$0xff]
    %v7486 = vld [vmem:[%s7 + $0x38] sm:$0xff]
    %v7487 = vld [vmem:[%s8] sm:$0x1]
    %v7489 = vlaneseq
    %v7490 = vshrl.u32 %v7489, 7
    %v7491 = vsub.s32 0, %v7490
    %v7492 = vrot.slane %v7487, %v7491
    %vm7494 = vcmask 523264
    %v7496 = vsel %vm7494, %v7478, 0
    %7498 = vmatprep.subr.mxu0 0.0
    %7499 = vmatpush1.msra.mxu0 %v7479
    %7500 = vmatprep.subr.mxu0 0.0
    %7501 = vmatpush1.msra.mxu0 %v7480
    %7502 = vmatprep.subr.mxu0 0.0
    %7503 = vmatpush1.msra.mxu0 %v7481
    %7504 = vmatprep.subr.mxu0 0.0
    %7505 = vmatpush1.msra.mxu0 %v7482
    %7506 = vmatprep.subr.mxu0 0.0
    %7507 = vmatpush1.msra.mxu0 %v7483
    %7508 = vmatprep.subr.mxu0 0.0
    %7509 = vmatpush1.msra.mxu0 %v7484
    %7510 = vmatprep.subr.mxu0 0.0
    %7511 = vmatpush1.msra.mxu0 %v7485
    %7512 = vmatprep.subr.mxu0 0.0
    %7513 = vmatpush1.msra.mxu0 %v7486
    %7514 = vmatprep.subr.mxu0 0.0
    %7515 = vmatpush1.msra.mxu0 0.0
    %7516 = vmatprep.subr.mxu0 0.0
    %7517 = vmatpush1.msra.mxu0 0.0
    %7518 = vmatprep.subr.mxu0 0.0
    %7519 = vmatpush1.msra.mxu0 0.0
    %7520 = vmatprep.subr.mxu0 0.0
    %7521 = vmatpush1.msra.mxu0 0.0
    %7522 = vmatprep.subr.mxu0 0.0
    %7523 = vmatpush1.msra.mxu0 0.0
    %7524 = vmatprep.subr.mxu0 0.0
    %7525 = vmatpush1.msra.mxu0 0.0
    %7526 = vmatprep.subr.mxu0 0.0
    %7527 = vmatpush1.msra.mxu0 0.0
    %7528 = vmatprep.subr.mxu0 0.0
    %7529 = vmatpush1.msra.mxu0 0.0
    %7530 = vmatprep.subr.mxu0 0.0
    %7531 = vmatpush1.msra.mxu0 0.0
    %7532 = vmatprep.subr.mxu0 0.0
    %7533 = vmatpush1.msra.mxu0 0.0
    %7534 = vmatprep.subr.mxu0 0.0
    %7535 = vmatpush1.msra.mxu0 0.0
    %7536 = vmatprep.subr.mxu0 0.0
    %7537 = vmatpush1.msra.mxu0 0.0
    %7538 = vmatprep.subr.mxu0 0.0
    %7539 = vmatpush1.msra.mxu0 0.0
    %7540 = vmatprep.subr.mxu0 0.0
    %7541 = vmatpush1.msra.mxu0 0.0
    %7542 = vmatprep.subr.mxu0 0.0
    %7543 = vmatpush1.msra.mxu0 0.0
    %7544 = vmatprep.subr.mxu0 0.0
    %7545 = vmatpush1.msra.mxu0 0.0
    %7546 = vmatprep.subr.mxu0 0.0
    %7547 = vmatpush1.msra.mxu0 0.0
    %7548 = vmatprep.subr.mxu0 0.0
    %7549 = vmatpush1.msra.mxu0 0.0
    %7550 = vmatprep.subr.mxu0 0.0
    %7551 = vmatpush1.msra.mxu0 0.0
    %7552 = vmatprep.subr.mxu0 0.0
    %7553 = vmatpush1.msra.mxu0 0.0
    %7554 = vmatprep.subr.mxu0 0.0
    %7555 = vmatpush1.msra.mxu0 0.0
    %7556 = vmatprep.subr.mxu0 0.0
    %7557 = vmatpush1.msra.mxu0 0.0
    %7558 = vmatprep.subr.mxu0 0.0
    %7559 = vmatpush1.msra.mxu0 0.0
    %7560 = vmatprep.subr.mxu0 0.0
    %7561 = vmatpush1.msra.mxu0 0.0
    %7562 = vmatprep.mubr.f32.mxu0 0.0
    %7563 = vmatmul.mubr.f32.gmra.mrb[0].mxu0 %v7496
    %v7564 = vpop.f32.mrb[0].mxu0
    %v7565 = vadd.f32 %v7492, %v7564
    %v7566 = vpop.f32.mrb[0].mxu0
    %7567 = vdwg.mxu0
    %7568 = vst [vmem:[#allocation2] sm:$0x3] %v7565
    // Predicated region
    $region38: #{net_forward.1} parent=1 // pred_check
      _
    $region39: #{net_forward.1} parent=1 // pred_check_branch
      %7570 = sbr.rel (0) target = $region41
    $region40: #{net_forward.1} parent=1 // pred_region
      %s7572 = ssub.s32 32, 32
      %7573 = vsyncadd [#allocation3], %s7572
      %s7575 = sshll.u32 [#allocation2], 4
      %s7576 = int_to_ptr.vmem [resolvable:$true] %s7575
      %7578 = dma.vmem_to_hbm [thread:$0]  %s7576, 32, %s9, [#allocation3]
    $region41: #{net_forward.1} parent=1 // pred_fallthru
      _
    // Predicated region
    $region42: #{net_forward.1} parent=1 // pred_check
      _
    $region43: #{net_forward.1} parent=1 // pred_check_branch
      %7580 = sbr.rel (0) target = $region45
    $region44: #{net_forward.1} parent=1 // pred_region
      %7581 = dma.done [#allocation3], 32
    $region45: #{net_forward.1} parent=1 // pred_fallthru
      _
    %7582 = vsyncpa [#allocation3], 1

</llo_original>
